<compile_context>
chip_gen: v6e
topology: v6e:2x2x1
jax: 0.10.0
libtpu: 0.0.40
codegen_flags: <defaults>
</compile_context>

<pallas_src>
import functools

import jax
import jax.numpy as jnp
from jax.experimental import pallas as pl
from jax.experimental.pallas import tpu as pltpu


def _pick_tile(n: int, cap: int) -> int:
    """Largest multiple of 128 that divides n and is <= cap, else n itself."""
    best = None
    t = 128
    while t <= min(n, cap):
        if n % t == 0:
            best = t
        t += 128
    return best if best is not None else n


# ---------------------------------------------------------------------------
# Kernel 1: fused TNet encoder + head, tiled over points.
#   grid = (B, N // TN); channels on sublanes, points on lanes (no transpose
#   of x).  acc_ref is a (1024, 128) running-max accumulator over the
#   ("arbitrary", last) point-tile axis; the head runs once per sample on the
#   final point tile and writes the (C*C, 1) affine directly.
# ---------------------------------------------------------------------------
def _tnet_kernel(x_ref, w1_ref, c1_ref, w2_ref, c2_ref, w3_ref, c3_ref,
                 w4_ref, c4_ref, w5_ref, c5_ref, fcw_ref, fcb_ref,
                 t_ref, acc_ref):
    n = pl.program_id(1)
    x = x_ref[0]                                   # (C, TN)  f32
    cin, tn = x.shape

    # --- layer 1: C -> 64 --------------------------------------------------
    if cin <= 8:
        # Tiny contraction dim: a few VPU broadcast FMAs beat a >90%-idle
        # MXU pass, and they fold the "transpose" for free.
        w1 = w1_ref[...]                           # (64, C)
        h = w1[:, 0:1] * x[0:1, :]
        for j in range(1, cin):
            h = h + w1[:, j:j + 1] * x[j:j + 1, :]
    else:
        h = jnp.dot(w1_ref[...], x, preferred_element_type=jnp.float32)
    h = jnp.maximum(h + c1_ref[...], 0.0)          # (64, TN)

    # --- layer 2: 64 -> 128 (bf16 MXU, f32 accumulate) ----------------------
    h = jnp.maximum(
        jnp.dot(w2_ref[...], h.astype(jnp.bfloat16),
                preferred_element_type=jnp.float32) + c2_ref[...], 0.0)  # (128, TN)

    # --- layer 3: 128 -> 1024; bias + ReLU hoisted past the max-pool --------
    h3 = jnp.dot(w3_ref[...], h.astype(jnp.bfloat16),
                 preferred_element_type=jnp.float32)                    # (1024, TN)

    # --- AdaptiveMaxPool1d(1): running max folded per 128-lane group --------
    @pl.when(n == 0)
    def _():
        acc_ref[...] = jnp.full(acc_ref.shape, -jnp.inf, acc_ref.dtype)

    if tn % 128 == 0:
        m = h3[:, 0:128]
        for i in range(1, tn // 128):
            m = jnp.maximum(m, h3[:, i * 128:(i + 1) * 128])
        acc_ref[...] = jnp.maximum(acc_ref[...], m)
    else:
        acc_ref[:, 0:1] = jnp.maximum(acc_ref[:, 0:1],
                                      jnp.max(h3, axis=1, keepdims=True))

    # --- last point tile: finish the pool and run the fused head ------------
    @pl.when(n == pl.num_programs(1) - 1)
    def _():
        pooled = jnp.max(acc_ref[...], axis=1, keepdims=True)        # (1024, 1)
        p = jnp.maximum(pooled + c3_ref[...], 0.0)                   # hoisted bias+ReLU
        # Lane-broadcast so every head matmul sees a full 128-lane RHS tile
        # (same MXU cost as a padded N=1 matmul, simpler lowering).
        pb = jnp.broadcast_to(p, (p.shape[0], 128)).astype(jnp.bfloat16)
        h4 = jnp.maximum(
            jnp.dot(w4_ref[...], pb,
                    preferred_element_type=jnp.float32) + c4_ref[...], 0.0)   # (512, 128)
        h5 = jnp.maximum(
            jnp.dot(w5_ref[...], h4.astype(jnp.bfloat16),
                    preferred_element_type=jnp.float32) + c5_ref[...], 0.0)   # (256, 128)
        t_full = jnp.dot(fcw_ref[...], h5.astype(jnp.bfloat16),
                         preferred_element_type=jnp.float32)                  # (C*C, 128)
        t_ref[0] = t_full[:, 0:1] + fcb_ref[...]


# ---------------------------------------------------------------------------
# Kernel 2: y[b] = t[b] @ x[b], tiled over (B, N); small C goes on the VPU.
# ---------------------------------------------------------------------------
def _bmm_kernel(t_ref, x_ref, y_ref):
    t = t_ref[0]                                   # (C, C)
    x = x_ref[0]                                   # (C, TN)
    c = t.shape[0]
    if c <= 8:
        acc = t[:, 0:1] * x[0:1, :]
        for j in range(1, c):
            acc = acc + t[:, j:j + 1] * x[j:j + 1, :]
    else:
        acc = jnp.dot(t, x, preferred_element_type=jnp.float32)
    y_ref[0] = acc.astype(y_ref.dtype)


# ---------------------------------------------------------------------------
# Wrapper
# ---------------------------------------------------------------------------
@functools.partial(jax.jit, static_argnames=("output_affine",))
def transform_module_forward(x, params, output_affine=False):
    B, C, N = x.shape
    f32 = jnp.float32

    tn = _pick_tile(N, cap=1024)
    n_tiles = N // tn

    weight_args = [params[k] for k in
                   ("w1", "c1", "w2", "c2", "w3", "c3",
                    "w4", "c4", "w5", "c5", "fc_w", "fc_b")]
    weight_specs = [pl.BlockSpec(w.shape, lambda b, n: (0, 0))
                    for w in weight_args]

    t_col = pl.pallas_call(
        _tnet_kernel,
        out_shape=jax.ShapeDtypeStruct((B, C * C, 1), f32),
        grid=(B, n_tiles),
        in_specs=[pl.BlockSpec((1, C, tn), lambda b, n: (b, 0, n))]
                 + weight_specs,
        out_specs=pl.BlockSpec((1, C * C, 1), lambda b, n: (b, 0, 0)),
        scratch_shapes=[pltpu.VMEM((1024, 128), f32)],
        compiler_params=pltpu.CompilerParams(
            dimension_semantics=("parallel", "arbitrary")),
    )(x, *weight_args)
    t = t_col[:, :, 0].reshape(B, C, C)

    tn_b = _pick_tile(N, cap=4096)
    y = pl.pallas_call(
        _bmm_kernel,
        out_shape=jax.ShapeDtypeStruct((B, C, N), x.dtype),
        grid=(B, N // tn_b),
        in_specs=[pl.BlockSpec((1, C, C), lambda b, n: (b, 0, 0)),
                  pl.BlockSpec((1, C, tn_b), lambda b, n: (b, 0, n))],
        out_specs=pl.BlockSpec((1, C, tn_b), lambda b, n: (b, 0, n)),
        compiler_params=pltpu.CompilerParams(
            dimension_semantics=("parallel", "parallel")),
    )(t, x)

    if output_affine:
        return y, t
    return y


# ---------------------------------------------------------------------------
# Deterministic parameter init.  ConvBnRelu (eval-mode BN, running_mean=0,
# running_var=1, eps=1e-5) is folded:  w' = diag(scale) @ W,
# shift = beta + (conv_bias - mean) * scale.  Weights stored (cout, cin),
# biases as (cout, 1) columns; MXU layers stored in bf16.
# ---------------------------------------------------------------------------
def init_params(key, base_channel):
    eps = 1e-5
    layer_dims = [(base_channel, 64), (64, 128), (128, 1024),
                  (1024, 512), (512, 256)]
    w_dtypes = [jnp.float32, jnp.bfloat16, jnp.bfloat16,
                jnp.bfloat16, jnp.bfloat16]
    params = {}
    keys = jax.random.split(key, 4 * len(layer_dims))
    for i, (cin, cout) in enumerate(layer_dims):
        kw, kb, kg, kbe = keys[4 * i: 4 * i + 4]
        w = 0.1 * jax.random.normal(kw, (cout, cin), jnp.float32)
        conv_bias = 0.1 * jax.random.normal(kb, (cout,), jnp.float32)
        gamma = 1.0 + 0.05 * jax.random.normal(kg, (cout,), jnp.float32)
        beta = 0.05 * jax.random.normal(kbe, (cout,), jnp.float32)
        running_mean = jnp.zeros((cout,), jnp.float32)
        running_var = jnp.ones((cout,), jnp.float32)
        scale = gamma / jnp.sqrt(running_var + eps)
        shift = beta + (conv_bias - running_mean) * scale
        params[f"w{i + 1}"] = (scale[:, None] * w).astype(w_dtypes[i])
        params[f"c{i + 1}"] = shift[:, None].astype(jnp.float32)   # (cout, 1)
    C = base_channel
    # Final Linear(256, C*C): weight zeroed, bias = eye(C).flatten()  (TNet.__init__)
    params["fc_w"] = jnp.zeros((C * C, 256), jnp.bfloat16)
    params["fc_b"] = jnp.eye(C, dtype=jnp.float32).reshape(C * C, 1)
    return params


# ---------------------------------------------------------------------------
# Plain-JAX reference (mirrors the kernel's bf16-input / f32-accumulate math
# and the exact "ReLU + bias after max-pool" hoist for layer 3).
# ---------------------------------------------------------------------------
def reference_forward(x, params, output_affine=False):
    B, C, N = x.shape
    xf = x.astype(jnp.float32)

    def conv(w, c, a):
        o = jnp.einsum("ok,bkn->bon", w, a.astype(w.dtype),
                       preferred_element_type=jnp.float32) + c[None]
        return jnp.maximum(o, 0.0)

    def fc(w, c, a, relu=True):
        o = jnp.einsum("ok,bk->bo", w, a.astype(w.dtype),
                       preferred_element_type=jnp.float32) + c[:, 0][None]
        return jnp.maximum(o, 0.0) if relu else o

    h = conv(params["w1"], params["c1"], xf)
    h = conv(params["w2"], params["c2"], h)
    h3 = jnp.einsum("ok,bkn->bon", params["w3"], h.astype(jnp.bfloat16),
                    preferred_element_type=jnp.float32)
    pooled = jnp.max(h3, axis=2)                                   # (B, 1024)
    p = jnp.maximum(pooled + params["c3"][:, 0][None], 0.0)
    h = fc(params["w4"], params["c4"], p)
    h = fc(params["w5"], params["c5"], h)
    t = fc(params["fc_w"], params["fc_b"], h, relu=False).reshape(B, C, C)
    y = jnp.einsum("bij,bjn->bin", t, xf)
    if output_affine:
        return y, t
    return y


if __name__ == "__main__":
    base_channel = 4
    B, N = 2, 512

    key = jax.random.PRNGKey(0)
    k_x, k_p, k_fc = jax.random.split(key, 3)
    x = jax.random.normal(k_x, (B, base_channel, N), jnp.float32)
    params = init_params(k_p, base_channel)

    # 1) Faithful TNet init (zeroed Linear weight, identity bias).
    y, t = transform_module_forward(x, params, output_affine=True)
    y = jax.block_until_ready(y)
    t = jax.block_until_ready(t)
    y_ref, t_ref = reference_forward(x, params, output_affine=True)
    assert y.shape == (B, base_channel, N)
    assert t.shape == (B, base_channel, base_channel)
    assert jnp.allclose(t, t_ref, atol=1e-2, rtol=1e-2)
    assert jnp.allclose(y, y_ref, atol=1e-2, rtol=1e-2)

    # 2) Perturbed Linear weight so the full encoder + fused head path is
    #    actually exercised (with the stock init, t == eye regardless).
    params2 = dict(params)
    params2["fc_w"] = (0.05 * jax.random.normal(
        k_fc, params["fc_w"].shape, jnp.float32)).astype(jnp.bfloat16)
    y2, t2 = transform_module_forward(x, params2, output_affine=True)
    y2 = jax.block_until_ready(y2)
    t2 = jax.block_until_ready(t2)
    y2_ref, t2_ref = reference_forward(x, params2, output_affine=True)
    assert jnp.allclose(t2, t2_ref, atol=2e-2, rtol=2e-2)
    assert jnp.allclose(y2, y2_ref, atol=2e-2, rtol=2e-2)

    print("KERNEL_OK")
</pallas_src>

<mosaic_0001>
module attributes {stable_mosaic.version = 11 : i64} {
  func.func @_bmm_kernel(%arg0: i32, %arg1: i32, %arg2: memref<1x4x4xf32, #tpu.memory_space<vmem>>, %arg3: memref<1x4x512xf32, #tpu.memory_space<vmem>>, %arg4: memref<1x4x512xf32, #tpu.memory_space<vmem>>) attributes {dimension_semantics = [#tpu.dimension_semantics<parallel>, #tpu.dimension_semantics<parallel>], iteration_bounds = array<i64: 2, 1>, scalar_prefetch = 0 : i64, scratch_operands = 0 : i64, tpu.core_type = #tpu.core_type<tc>, window_params = [{transform_indices = @transform_0, window_bounds = array<i64: 1, 4, 4>}, {transform_indices = @transform_1, window_bounds = array<i64: 1, 4, 512>}, {transform_indices = @transform_2, window_bounds = array<i64: 1, 4, 512>}]} {
    %c0 = arith.constant 0 : index
    %c0_0 = arith.constant 0 : index
    %c0_1 = arith.constant 0 : index
    %0 = vector.load %arg2[%c0, %c0_0, %c0_1] : memref<1x4x4xf32, #tpu.memory_space<vmem>>, vector<1x4x4xf32>
    %1 = vector.shape_cast %0 : vector<1x4x4xf32> to vector<4x4xf32>
    %c0_2 = arith.constant 0 : index
    %c0_3 = arith.constant 0 : index
    %c0_4 = arith.constant 0 : index
    %2 = vector.load %arg3[%c0_2, %c0_3, %c0_4] : memref<1x4x512xf32, #tpu.memory_space<vmem>>, vector<1x4x512xf32>
    %3 = vector.shape_cast %2 : vector<1x4x512xf32> to vector<4x512xf32>
    %4 = vector.extract_strided_slice %1 {offsets = [0, 0], sizes = [4, 1], strides = [1, 1]} : vector<4x4xf32> to vector<4x1xf32>
    %5 = vector.extract_strided_slice %3 {offsets = [0, 0], sizes = [1, 512], strides = [1, 1]} : vector<4x512xf32> to vector<1x512xf32>
    %6 = vector.broadcast %4 : vector<4x1xf32> to vector<4x512xf32>
    %7 = vector.broadcast %5 : vector<1x512xf32> to vector<4x512xf32>
    %8 = arith.mulf %6, %7 : vector<4x512xf32>
    %9 = vector.extract_strided_slice %1 {offsets = [0, 1], sizes = [4, 1], strides = [1, 1]} : vector<4x4xf32> to vector<4x1xf32>
    %10 = vector.extract_strided_slice %3 {offsets = [1, 0], sizes = [1, 512], strides = [1, 1]} : vector<4x512xf32> to vector<1x512xf32>
    %11 = vector.broadcast %9 : vector<4x1xf32> to vector<4x512xf32>
    %12 = vector.broadcast %10 : vector<1x512xf32> to vector<4x512xf32>
    %13 = arith.mulf %11, %12 : vector<4x512xf32>
    %14 = arith.addf %8, %13 : vector<4x512xf32>
    %15 = vector.extract_strided_slice %1 {offsets = [0, 2], sizes = [4, 1], strides = [1, 1]} : vector<4x4xf32> to vector<4x1xf32>
    %16 = vector.extract_strided_slice %3 {offsets = [2, 0], sizes = [1, 512], strides = [1, 1]} : vector<4x512xf32> to vector<1x512xf32>
    %17 = vector.broadcast %15 : vector<4x1xf32> to vector<4x512xf32>
    %18 = vector.broadcast %16 : vector<1x512xf32> to vector<4x512xf32>
    %19 = arith.mulf %17, %18 : vector<4x512xf32>
    %20 = arith.addf %14, %19 : vector<4x512xf32>
    %21 = vector.extract_strided_slice %1 {offsets = [0, 3], sizes = [4, 1], strides = [1, 1]} : vector<4x4xf32> to vector<4x1xf32>
    %22 = vector.extract_strided_slice %3 {offsets = [3, 0], sizes = [1, 512], strides = [1, 1]} : vector<4x512xf32> to vector<1x512xf32>
    %23 = vector.broadcast %21 : vector<4x1xf32> to vector<4x512xf32>
    %24 = vector.broadcast %22 : vector<1x512xf32> to vector<4x512xf32>
    %25 = arith.mulf %23, %24 : vector<4x512xf32>
    %26 = arith.addf %20, %25 : vector<4x512xf32>
    %c0_5 = arith.constant 0 : index
    %c0_6 = arith.constant 0 : index
    %c0_7 = arith.constant 0 : index
    %27 = vector.load %arg4[%c0_5, %c0_6, %c0_7] : memref<1x4x512xf32, #tpu.memory_space<vmem>>, vector<1x4x512xf32>
    %28 = vector.shape_cast %27 : vector<1x4x512xf32> to vector<4x512xf32>
    %29 = vector.shape_cast %26 : vector<4x512xf32> to vector<1x4x512xf32>
    tpu.vector_store %arg4[%c0_5, %c0_6, %c0_7], %29 {strides = array<i32>} : memref<1x4x512xf32, #tpu.memory_space<vmem>>, vector<1x4x512xf32>,
    return
  }
  func.func @transform_0(%arg0: i32, %arg1: i32) -> (i32, i32, i32) {
    %c0_i32 = arith.constant 0 : i32
    %c0_i32_0 = arith.constant 0 : i32
    %c0_i32_1 = arith.constant 0 : i32
    return %arg0, %c0_i32, %c0_i32_0 : i32, i32, i32
  }
  func.func @transform_1(%arg0: i32, %arg1: i32) -> (i32, i32, i32) {
    %c0_i32 = arith.constant 0 : i32
    %c0_i32_0 = arith.constant 0 : i32
    return %arg0, %c0_i32, %arg1 : i32, i32, i32
  }
  func.func @transform_2(%arg0: i32, %arg1: i32) -> (i32, i32, i32) {
    %c0_i32 = arith.constant 0 : i32
    %c0_i32_0 = arith.constant 0 : i32
    return %arg0, %c0_i32, %arg1 : i32, i32, i32
  }
}

module attributes {stable_mosaic.version = 11 : i64} {
  func.func @_tnet_kernel(%arg0: i32, %arg1: i32, %arg2: memref<1x4x512xf32, #tpu.memory_space<vmem>>, %arg3: memref<64x4xf32, #tpu.memory_space<vmem>>, %arg4: memref<64x1xf32, #tpu.memory_space<vmem>>, %arg5: memref<128x64xbf16, #tpu.memory_space<vmem>>, %arg6: memref<128x1xf32, #tpu.memory_space<vmem>>, %arg7: memref<1024x128xbf16, #tpu.memory_space<vmem>>, %arg8: memref<1024x1xf32, #tpu.memory_space<vmem>>, %arg9: memref<512x1024xbf16, #tpu.memory_space<vmem>>, %arg10: memref<512x1xf32, #tpu.memory_space<vmem>>, %arg11: memref<256x512xbf16, #tpu.memory_space<vmem>>, %arg12: memref<256x1xf32, #tpu.memory_space<vmem>>, %arg13: memref<16x256xbf16, #tpu.memory_space<vmem>>, %arg14: memref<16x1xf32, #tpu.memory_space<vmem>>, %arg15: memref<1x16x1xf32, #tpu.memory_space<vmem>>, %arg16: memref<1024x128xf32, #tpu.memory_space<vmem>>) attributes {dimension_semantics = [#tpu.dimension_semantics<parallel>, #tpu.dimension_semantics<arbitrary>], iteration_bounds = array<i64: 2, 1>, scalar_prefetch = 0 : i64, scratch_operands = 1 : i64, tpu.core_type = #tpu.core_type<tc>, window_params = [{transform_indices = @transform_0, window_bounds = array<i64: 1, 4, 512>}, {pipeline_mode = #tpu.pipeline_mode<synchronous>, transform_indices = @transform_1, window_bounds = array<i64: 64, 4>}, {pipeline_mode = #tpu.pipeline_mode<synchronous>, transform_indices = @transform_2, window_bounds = array<i64: 64, 1>}, {pipeline_mode = #tpu.pipeline_mode<synchronous>, transform_indices = @transform_3, window_bounds = array<i64: 128, 64>}, {pipeline_mode = #tpu.pipeline_mode<synchronous>, transform_indices = @transform_4, window_bounds = array<i64: 128, 1>}, {pipeline_mode = #tpu.pipeline_mode<synchronous>, transform_indices = @transform_5, window_bounds = array<i64: 1024, 128>}, {pipeline_mode = #tpu.pipeline_mode<synchronous>, transform_indices = @transform_6, window_bounds = array<i64: 1024, 1>}, {pipeline_mode = #tpu.pipeline_mode<synchronous>, transform_indices = @transform_7, window_bounds = array<i64: 512, 1024>}, {pipeline_mode = #tpu.pipeline_mode<synchronous>, transform_indices = @transform_8, window_bounds = array<i64: 512, 1>}, {pipeline_mode = #tpu.pipeline_mode<synchronous>, transform_indices = @transform_9, window_bounds = array<i64: 256, 512>}, {pipeline_mode = #tpu.pipeline_mode<synchronous>, transform_indices = @transform_10, window_bounds = array<i64: 256, 1>}, {pipeline_mode = #tpu.pipeline_mode<synchronous>, transform_indices = @transform_11, window_bounds = array<i64: 16, 256>}, {pipeline_mode = #tpu.pipeline_mode<synchronous>, transform_indices = @transform_12, window_bounds = array<i64: 16, 1>}, {transform_indices = @transform_13, window_bounds = array<i64: 1, 16, 1>}]} {
    %c0 = arith.constant 0 : index
    %c0_0 = arith.constant 0 : index
    %c0_1 = arith.constant 0 : index
    %0 = vector.load %arg2[%c0, %c0_0, %c0_1] : memref<1x4x512xf32, #tpu.memory_space<vmem>>, vector<1x4x512xf32>
    %1 = vector.shape_cast %0 : vector<1x4x512xf32> to vector<4x512xf32>
    %c0_2 = arith.constant 0 : index
    %c0_3 = arith.constant 0 : index
    %2 = vector.load %arg3[%c0_2, %c0_3] : memref<64x4xf32, #tpu.memory_space<vmem>>, vector<64x4xf32>
    %3 = vector.extract_strided_slice %2 {offsets = [0, 0], sizes = [64, 1], strides = [1, 1]} : vector<64x4xf32> to vector<64x1xf32>
    %4 = vector.extract_strided_slice %1 {offsets = [0, 0], sizes = [1, 512], strides = [1, 1]} : vector<4x512xf32> to vector<1x512xf32>
    %5 = vector.broadcast %3 : vector<64x1xf32> to vector<64x512xf32>
    %6 = vector.broadcast %4 : vector<1x512xf32> to vector<64x512xf32>
    %7 = arith.mulf %5, %6 : vector<64x512xf32>
    %8 = vector.extract_strided_slice %2 {offsets = [0, 1], sizes = [64, 1], strides = [1, 1]} : vector<64x4xf32> to vector<64x1xf32>
    %9 = vector.extract_strided_slice %1 {offsets = [1, 0], sizes = [1, 512], strides = [1, 1]} : vector<4x512xf32> to vector<1x512xf32>
    %10 = vector.broadcast %8 : vector<64x1xf32> to vector<64x512xf32>
    %11 = vector.broadcast %9 : vector<1x512xf32> to vector<64x512xf32>
    %12 = arith.mulf %10, %11 : vector<64x512xf32>
    %13 = arith.addf %7, %12 : vector<64x512xf32>
    %14 = vector.extract_strided_slice %2 {offsets = [0, 2], sizes = [64, 1], strides = [1, 1]} : vector<64x4xf32> to vector<64x1xf32>
    %15 = vector.extract_strided_slice %1 {offsets = [2, 0], sizes = [1, 512], strides = [1, 1]} : vector<4x512xf32> to vector<1x512xf32>
    %16 = vector.broadcast %14 : vector<64x1xf32> to vector<64x512xf32>
    %17 = vector.broadcast %15 : vector<1x512xf32> to vector<64x512xf32>
    %18 = arith.mulf %16, %17 : vector<64x512xf32>
    %19 = arith.addf %13, %18 : vector<64x512xf32>
    %20 = vector.extract_strided_slice %2 {offsets = [0, 3], sizes = [64, 1], strides = [1, 1]} : vector<64x4xf32> to vector<64x1xf32>
    %21 = vector.extract_strided_slice %1 {offsets = [3, 0], sizes = [1, 512], strides = [1, 1]} : vector<4x512xf32> to vector<1x512xf32>
    %22 = vector.broadcast %20 : vector<64x1xf32> to vector<64x512xf32>
    %23 = vector.broadcast %21 : vector<1x512xf32> to vector<64x512xf32>
    %24 = arith.mulf %22, %23 : vector<64x512xf32>
    %25 = arith.addf %19, %24 : vector<64x512xf32>
    %c0_4 = arith.constant 0 : index
    %c0_5 = arith.constant 0 : index
    %26 = vector.load %arg4[%c0_4, %c0_5] : memref<64x1xf32, #tpu.memory_space<vmem>>, vector<64x1xf32>
    %27 = vector.broadcast %26 : vector<64x1xf32> to vector<64x512xf32>
    %28 = arith.addf %25, %27 : vector<64x512xf32>
    %cst = arith.constant 0.000000e+00 : f32
    %29 = vector.broadcast %cst : f32 to vector<64x512xf32>
    %30 = arith.maximumf %28, %29 : vector<64x512xf32>
    %c0_6 = arith.constant 0 : index
    %c0_7 = arith.constant 0 : index
    %31 = vector.load %arg5[%c0_6, %c0_7] : memref<128x64xbf16, #tpu.memory_space<vmem>>, vector<128x64xbf16>
    %32 = arith.truncf %30 : vector<64x512xf32> to vector<64x512xbf16>
    %cst_8 = arith.constant dense<0.000000e+00> : vector<128x512xf32>
    %33 = tpu.matmul %31, %32, %cst_8 {dimension_numbers = #tpu.dot_dimension_numbers<[1], [0], [0], [1], [0, 0, 1, 1], [], []>} : vector<128x64xbf16>, vector<64x512xbf16>, vector<128x512xf32> -> vector<128x512xf32>
    %c0_9 = arith.constant 0 : index
    %c0_10 = arith.constant 0 : index
    %34 = vector.load %arg6[%c0_9, %c0_10] : memref<128x1xf32, #tpu.memory_space<vmem>>, vector<128x1xf32>
    %35 = vector.broadcast %34 : vector<128x1xf32> to vector<128x512xf32>
    %36 = arith.addf %33, %35 : vector<128x512xf32>
    %cst_11 = arith.constant 0.000000e+00 : f32
    %37 = vector.broadcast %cst_11 : f32 to vector<128x512xf32>
    %38 = arith.maximumf %36, %37 : vector<128x512xf32>
    %c0_12 = arith.constant 0 : index
    %c0_13 = arith.constant 0 : index
    %39 = vector.load %arg7[%c0_12, %c0_13] : memref<1024x128xbf16, #tpu.memory_space<vmem>>, vector<1024x128xbf16>
    %40 = arith.truncf %38 : vector<128x512xf32> to vector<128x512xbf16>
    %cst_14 = arith.constant dense<0.000000e+00> : vector<1024x512xf32>
    %41 = tpu.matmul %39, %40, %cst_14 {dimension_numbers = #tpu.dot_dimension_numbers<[1], [0], [0], [1], [0, 0, 1, 1], [], []>} : vector<1024x128xbf16>, vector<128x512xbf16>, vector<1024x512xf32> -> vector<1024x512xf32>
    %c0_i32 = arith.constant 0 : i32
    %42 = arith.cmpi eq, %arg1, %c0_i32 : i32
    %43 = arith.extui %42 : i1 to i32
    %c0_i32_15 = arith.constant 0 : i32
    %44 = arith.cmpi ne, %43, %c0_i32_15 : i32
    scf.if %44 {
      %cst_22 = arith.constant 0xFF800000 : f32
      %58 = vector.broadcast %cst_22 : f32 to vector<1024x128xf32>
      %c0_23 = arith.constant 0 : index
      %c0_24 = arith.constant 0 : index
      %59 = vector.load %arg16[%c0_23, %c0_24] : memref<1024x128xf32, #tpu.memory_space<vmem>>, vector<1024x128xf32>
      tpu.vector_store %arg16[%c0_23, %c0_24], %58 {strides = array<i32>} : memref<1024x128xf32, #tpu.memory_space<vmem>>, vector<1024x128xf32>,
    } else {
    }
    %45 = vector.extract_strided_slice %41 {offsets = [0, 0], sizes = [1024, 128], strides = [1, 1]} : vector<1024x512xf32> to vector<1024x128xf32>
    %46 = vector.extract_strided_slice %41 {offsets = [0, 128], sizes = [1024, 128], strides = [1, 1]} : vector<1024x512xf32> to vector<1024x128xf32>
    %47 = arith.maximumf %45, %46 : vector<1024x128xf32>
    %48 = vector.extract_strided_slice %41 {offsets = [0, 256], sizes = [1024, 128], strides = [1, 1]} : vector<1024x512xf32> to vector<1024x128xf32>
    %49 = arith.maximumf %47, %48 : vector<1024x128xf32>
    %50 = vector.extract_strided_slice %41 {offsets = [0, 384], sizes = [1024, 128], strides = [1, 1]} : vector<1024x512xf32> to vector<1024x128xf32>
    %51 = arith.maximumf %49, %50 : vector<1024x128xf32>
    %c0_16 = arith.constant 0 : index
    %c0_17 = arith.constant 0 : index
    %52 = vector.load %arg16[%c0_16, %c0_17] : memref<1024x128xf32, #tpu.memory_space<vmem>>, vector<1024x128xf32>
    %53 = arith.maximumf %52, %51 : vector<1024x128xf32>
    %c0_18 = arith.constant 0 : index
    %c0_19 = arith.constant 0 : index
    %54 = vector.load %arg16[%c0_18, %c0_19] : memref<1024x128xf32, #tpu.memory_space<vmem>>, vector<1024x128xf32>
    tpu.vector_store %arg16[%c0_18, %c0_19], %53 {strides = array<i32>} : memref<1024x128xf32, #tpu.memory_space<vmem>>, vector<1024x128xf32>,
    %c0_i32_20 = arith.constant 0 : i32
    %55 = arith.cmpi eq, %arg1, %c0_i32_20 : i32
    %56 = arith.extui %55 : i1 to i32
    %c0_i32_21 = arith.constant 0 : i32
    %57 = arith.cmpi ne, %56, %c0_i32_21 : i32
    scf.if %57 {
      %c0_22 = arith.constant 0 : index
      %c0_23 = arith.constant 0 : index
      %58 = vector.load %arg16[%c0_22, %c0_23] : memref<1024x128xf32, #tpu.memory_space<vmem>>, vector<1024x128xf32>
      %cst_24 = arith.constant dense<0xFF800000> : vector<1024xf32>
      %59 = vector.multi_reduction <maximumf>, %58, %cst_24 [1] : vector<1024x128xf32> to vector<1024xf32>
      %60 = vector.shape_cast %59 : vector<1024xf32> to vector<1024x1xf32>
      %c0_25 = arith.constant 0 : index
      %c0_26 = arith.constant 0 : index
      %61 = vector.load %arg8[%c0_25, %c0_26] : memref<1024x1xf32, #tpu.memory_space<vmem>>, vector<1024x1xf32>
      %62 = arith.addf %60, %61 : vector<1024x1xf32>
      %cst_27 = arith.constant 0.000000e+00 : f32
      %63 = vector.broadcast %cst_27 : f32 to vector<1024x1xf32>
      %64 = arith.maximumf %62, %63 : vector<1024x1xf32>
      %65 = vector.shape_cast %64 : vector<1024x1xf32> to vector<1024x1xf32>
      %66 = vector.broadcast %65 : vector<1024x1xf32> to vector<1024x128xf32>
      %67 = arith.truncf %66 : vector<1024x128xf32> to vector<1024x128xbf16>
      %c0_28 = arith.constant 0 : index
      %c0_29 = arith.constant 0 : index
      %68 = vector.load %arg9[%c0_28, %c0_29] : memref<512x1024xbf16, #tpu.memory_space<vmem>>, vector<512x1024xbf16>
      %cst_30 = arith.constant dense<0.000000e+00> : vector<512x128xf32>
      %69 = tpu.matmul %68, %67, %cst_30 {dimension_numbers = #tpu.dot_dimension_numbers<[1], [0], [0], [1], [0, 0, 1, 1], [], []>} : vector<512x1024xbf16>, vector<1024x128xbf16>, vector<512x128xf32> -> vector<512x128xf32>
      %c0_31 = arith.constant 0 : index
      %c0_32 = arith.constant 0 : index
      %70 = vector.load %arg10[%c0_31, %c0_32] : memref<512x1xf32, #tpu.memory_space<vmem>>, vector<512x1xf32>
      %71 = vector.broadcast %70 : vector<512x1xf32> to vector<512x128xf32>
      %72 = arith.addf %69, %71 : vector<512x128xf32>
      %cst_33 = arith.constant 0.000000e+00 : f32
      %73 = vector.broadcast %cst_33 : f32 to vector<512x128xf32>
      %74 = arith.maximumf %72, %73 : vector<512x128xf32>
      %c0_34 = arith.constant 0 : index
      %c0_35 = arith.constant 0 : index
      %75 = vector.load %arg11[%c0_34, %c0_35] : memref<256x512xbf16, #tpu.memory_space<vmem>>, vector<256x512xbf16>
      %76 = arith.truncf %74 : vector<512x128xf32> to vector<512x128xbf16>
      %cst_36 = arith.constant dense<0.000000e+00> : vector<256x128xf32>
      %77 = tpu.matmul %75, %76, %cst_36 {dimension_numbers = #tpu.dot_dimension_numbers<[1], [0], [0], [1], [0, 0, 1, 1], [], []>} : vector<256x512xbf16>, vector<512x128xbf16>, vector<256x128xf32> -> vector<256x128xf32>
      %c0_37 = arith.constant 0 : index
      %c0_38 = arith.constant 0 : index
      %78 = vector.load %arg12[%c0_37, %c0_38] : memref<256x1xf32, #tpu.memory_space<vmem>>, vector<256x1xf32>
      %79 = vector.broadcast %78 : vector<256x1xf32> to vector<256x128xf32>
      %80 = arith.addf %77, %79 : vector<256x128xf32>
      %cst_39 = arith.constant 0.000000e+00 : f32
      %81 = vector.broadcast %cst_39 : f32 to vector<256x128xf32>
      %82 = arith.maximumf %80, %81 : vector<256x128xf32>
      %c0_40 = arith.constant 0 : index
      %c0_41 = arith.constant 0 : index
      %83 = vector.load %arg13[%c0_40, %c0_41] : memref<16x256xbf16, #tpu.memory_space<vmem>>, vector<16x256xbf16>
      %84 = arith.truncf %82 : vector<256x128xf32> to vector<256x128xbf16>
      %cst_42 = arith.constant dense<0.000000e+00> : vector<16x128xf32>
      %85 = tpu.matmul %83, %84, %cst_42 {dimension_numbers = #tpu.dot_dimension_numbers<[1], [0], [0], [1], [0, 0, 1, 1], [], []>} : vector<16x256xbf16>, vector<256x128xbf16>, vector<16x128xf32> -> vector<16x128xf32>
      %86 = vector.extract_strided_slice %85 {offsets = [0, 0], sizes = [16, 1], strides = [1, 1]} : vector<16x128xf32> to vector<16x1xf32>
      %c0_43 = arith.constant 0 : index
      %c0_44 = arith.constant 0 : index
      %87 = vector.load %arg14[%c0_43, %c0_44] : memref<16x1xf32, #tpu.memory_space<vmem>>, vector<16x1xf32>
      %88 = arith.addf %86, %87 : vector<16x1xf32>
      %c0_45 = arith.constant 0 : index
      %c0_46 = arith.constant 0 : index
      %c0_47 = arith.constant 0 : index
      %89 = vector.load %arg15[%c0_45, %c0_46, %c0_47] : memref<1x16x1xf32, #tpu.memory_space<vmem>>, vector<1x16x1xf32>
      %90 = vector.shape_cast %89 : vector<1x16x1xf32> to vector<16x1xf32>
      %91 = vector.shape_cast %88 : vector<16x1xf32> to vector<1x16x1xf32>
      tpu.vector_store %arg15[%c0_45, %c0_46, %c0_47], %91 {strides = array<i32>} : memref<1x16x1xf32, #tpu.memory_space<vmem>>, vector<1x16x1xf32>,
    } else {
    }
    return
  }
  func.func @transform_0(%arg0: i32, %arg1: i32) -> (i32, i32, i32) {
    %c0_i32 = arith.constant 0 : i32
    %c0_i32_0 = arith.constant 0 : i32
    return %arg0, %c0_i32, %arg1 : i32, i32, i32
  }
  func.func @transform_1(%arg0: i32, %arg1: i32) -> (i32, i32) {
    %c0_i32 = arith.constant 0 : i32
    %c0_i32_0 = arith.constant 0 : i32
    %c0_i32_1 = arith.constant 0 : i32
    return %c0_i32, %c0_i32_0 : i32, i32
  }
  func.func @transform_2(%arg0: i32, %arg1: i32) -> (i32, i32) {
    %c0_i32 = arith.constant 0 : i32
    %c0_i32_0 = arith.constant 0 : i32
    %c0_i32_1 = arith.constant 0 : i32
    return %c0_i32, %c0_i32_0 : i32, i32
  }
  func.func @transform_3(%arg0: i32, %arg1: i32) -> (i32, i32) {
    %c0_i32 = arith.constant 0 : i32
    %c0_i32_0 = arith.constant 0 : i32
    %c0_i32_1 = arith.constant 0 : i32
    return %c0_i32, %c0_i32_0 : i32, i32
  }
  func.func @transform_4(%arg0: i32, %arg1: i32) -> (i32, i32) {
    %c0_i32 = arith.constant 0 : i32
    %c0_i32_0 = arith.constant 0 : i32
    %c0_i32_1 = arith.constant 0 : i32
    return %c0_i32, %c0_i32_0 : i32, i32
  }
  func.func @transform_5(%arg0: i32, %arg1: i32) -> (i32, i32) {
    %c0_i32 = arith.constant 0 : i32
    %c0_i32_0 = arith.constant 0 : i32
    %c0_i32_1 = arith.constant 0 : i32
    return %c0_i32, %c0_i32_0 : i32, i32
  }
  func.func @transform_6(%arg0: i32, %arg1: i32) -> (i32, i32) {
    %c0_i32 = arith.constant 0 : i32
    %c0_i32_0 = arith.constant 0 : i32
    %c0_i32_1 = arith.constant 0 : i32
    return %c0_i32, %c0_i32_0 : i32, i32
  }
  func.func @transform_7(%arg0: i32, %arg1: i32) -> (i32, i32) {
    %c0_i32 = arith.constant 0 : i32
    %c0_i32_0 = arith.constant 0 : i32
    %c0_i32_1 = arith.constant 0 : i32
    return %c0_i32, %c0_i32_0 : i32, i32
  }
  func.func @transform_8(%arg0: i32, %arg1: i32) -> (i32, i32) {
    %c0_i32 = arith.constant 0 : i32
    %c0_i32_0 = arith.constant 0 : i32
    %c0_i32_1 = arith.constant 0 : i32
    return %c0_i32, %c0_i32_0 : i32, i32
  }
  func.func @transform_9(%arg0: i32, %arg1: i32) -> (i32, i32) {
    %c0_i32 = arith.constant 0 : i32
    %c0_i32_0 = arith.constant 0 : i32
    %c0_i32_1 = arith.constant 0 : i32
    return %c0_i32, %c0_i32_0 : i32, i32
  }
  func.func @transform_10(%arg0: i32, %arg1: i32) -> (i32, i32) {
    %c0_i32 = arith.constant 0 : i32
    %c0_i32_0 = arith.constant 0 : i32
    %c0_i32_1 = arith.constant 0 : i32
    return %c0_i32, %c0_i32_0 : i32, i32
  }
  func.func @transform_11(%arg0: i32, %arg1: i32) -> (i32, i32) {
    %c0_i32 = arith.constant 0 : i32
    %c0_i32_0 = arith.constant 0 : i32
    %c0_i32_1 = arith.constant 0 : i32
    return %c0_i32, %c0_i32_0 : i32, i32
  }
  func.func @transform_12(%arg0: i32, %arg1: i32) -> (i32, i32) {
    %c0_i32 = arith.constant 0 : i32
    %c0_i32_0 = arith.constant 0 : i32
    %c0_i32_1 = arith.constant 0 : i32
    return %c0_i32, %c0_i32_0 : i32, i32
  }
  func.func @transform_13(%arg0: i32, %arg1: i32) -> (i32, i32, i32) {
    %c0_i32 = arith.constant 0 : i32
    %c0_i32_0 = arith.constant 0 : i32
    %c0_i32_1 = arith.constant 0 : i32
    return %arg0, %c0_i32, %c0_i32_0 : i32, i32, i32
  }
}

</mosaic_0001>

<llo_original>
// kernel: squeeze.1
$region0: #{squeeze.1}
  %s0 = inlined_call_operand.vmem [shape: f32[2,16], index: 0, kind: input, shape index: {}]
  %s1 = inlined_call_operand.vmem [shape: f32[2,4,4], index: 1, kind: output, shape index: {}]
  $region1: #{squeeze.1} parent=0
    #allocation0 [shape = 'u8[8192]{0}', space=vmem, size = 0x2000, scoped, tag = 'scoped mem for output reshape']
    #allocation1 [shape = 'u8[4096]{0}', space=vmem, size = 0x1000, scoped, tag = 'scoped mem for input reshape']
    %s3 = sshll.u32 1, 2
    %s4 = ssub.s32 %s3, 1
    %v5 = vld [vmem:[%s0] sm:%s4]
    %6 = vst [vmem:[#allocation1] sm:%s4] %v5
    %v7 = vld [vmem:[#allocation1] sm:$0x3]
    %vm8 = vcmask 31744
    %9 = vst.msk [vmem:[#allocation0] ss:$8 sm:$0x3] %vm8, %v7
    %v10 = vld [vmem:[#allocation1] sm:$0x3]
    %11 = vrot.lane.b32.xlu0 %v10, 124
    %v12 = vpop.permute.xlu0 %11
    %vm13 = vcmask 31744
    %s14 = scalar_lea.vmem [#allocation0], 1
    %15 = vst.msk [vmem:[%s14] ss:$8 sm:$0x3] %vm13, %v12
    %v16 = vld [vmem:[#allocation1] sm:$0x3]
    %17 = vrot.lane.b32.xlu0 %v16, 120
    %v18 = vpop.permute.xlu0 %17
    %vm19 = vcmask 31744
    %s20 = scalar_lea.vmem [#allocation0], 2
    %21 = vst.msk [vmem:[%s20] ss:$8 sm:$0x3] %vm19, %v18
    %v22 = vld [vmem:[#allocation1] sm:$0x3]
    %23 = vrot.lane.b32.xlu0 %v22, 116
    %v24 = vpop.permute.xlu0 %23
    %vm25 = vcmask 31744
    %s26 = scalar_lea.vmem [#allocation0], 3
    %27 = vst.msk [vmem:[%s26] ss:$8 sm:$0x3] %vm25, %v24
    %s29 = sshll.u32 1, 4
    %s30 = ssub.s32 %s29, 1
    %v32 = vld [vmem:[#allocation0] sm:%s30]
    %s33 = sshll.u32 1, 4
    %s34 = ssub.s32 %s33, 1
    %35 = vst [vmem:[%s1] sm:%s34] %v32
    %s36 = scalar_lea.vmem [#allocation0], 8
    %v37 = vld [vmem:[%s36] sm:%s30]
    %s38 = sshll.u32 1, 4
    %s39 = ssub.s32 %s38, 1
    %s40 = scalar_lea.vmem %s1, 4
    %41 = vst [vmem:[%s40] sm:%s39] %v37

// kernel: transform_module_forward.3
$region0: #{transform_module_forward.3}
  #allocation0 [shape = 'u32[]', space=smem, size = 0x4, offset = 0x4, fixed_abs, tag = 'smem constant byte address 0x4 - core index']
  #allocation1 [shape = 'u32[144,128]{1,0:T(1,128)}', space=vmem, size = 0x12000, scoped, tag = 'internal scratch']
  %s0 = inlined_call_operand.vmem [shape: f32[2,4,4], index: 0, kind: input, shape index: {}]
  %s1 = inlined_call_operand.vmem [shape: f32[2,4,512], index: 1, kind: input, shape index: {}]
  %s2 = inlined_call_operand.hbm [shape: f32[2,4,512], index: 2, kind: output, shape index: {}]
  %s3 = sld [smem:[#allocation0]]
  $region41: #{transform_module_forward.3} parent=0
    _
  %s5 = ssub.s32 1, %s3
  %s6 = scalar_select 0, %s5, %s3
  $region1: #{transform_module_forward.3} parent=0
    #allocation2 [shape = 'u8[16384]{0}', space=vmem, size = 0x4000, scoped, tag = 'output window, operand 0']
    #allocation3 [shape = 's32[2]{0}', space=sflag, size = 0x8, scoped, tag = 'scoped memory for transform_module_forward.3']
    %7 = vsyncpa [#allocation3], 0
    %s8 = scalar_lea.sflag [#allocation3], 1
    %9 = vsyncpa %s8, 0
    loop: start=0, step=1, limit=4
    $region2: #{transform_module_forward.3} parent=1 // loop_pre_header
      _
    $region3: #{transform_module_forward.3} parent=1 // loop_header
      %s11 = sphi 0, %s15
      %p12 = scmp.ge.s32.totalorder %s11, 4
      %s18 = sphi 0, %s30
      %s19 = sphi 0, %s26
      %s20 = sphi 0, %s18
      %s21 = sphi 0, %s19
      %s22 = sphi 0, %s20
      %s23 = sphi 0, %s21
      %s33 = sphi 0, %s35
      %s36 = sphi 0, %s33
      %s37 = sphi 0, %s36
      %s53 = sphi 0, %s37
      %s61 = sphi 0, %s63
      %s64 = sphi 0, %s61
      %s65 = sphi 0, %s64
      %s81 = sphi 0, %s65
      %s89 = sphi 0, %s91
      %s92 = sphi 0, %s89
      %s93 = sphi 0, %s92
      %s109 = sphi 0, %s93
    $region4: #{transform_module_forward.3} parent=1 // loop_header_branch
      %14 = sbr.rel (%p12) target = $region8
    $region5: #{transform_module_forward.3} parent=1 // loop_body
      %s16 = ssub.s32 %s11, 1
      %s17 = ssub.s32 %s11, 2
      %s24 = sadd.s32 1, %s19
      %p25 = scmp.ge.s32.totalorder %s24, 1
      %s26 = scalar_select %p25, 0, %s24
      %s27 = sadd.s32 1, %s18
      %s28 = scalar_select %p25, %s27, %s18
      %p29 = scmp.ge.s32.totalorder %s28, 2
      %s30 = scalar_select %p29, 0, %s28
      %s31 = ssub.s32 %s18, %s30
      %p32 = scmp.eq.s32.totalorder %s31, 0
      %s34 = sadd.s32 %s33, 1
      %s35 = scalar_select %p32, %s33, %s34
      %p38 = pneg %p32
      %p39 = scmp.eq.s32.totalorder %s11, 1
      %p40 = por %p38, %p39
      %p41 = scmp.ne.s32.totalorder %s33, %s36
      %p42 = scmp.eq.s32.totalorder %s11, 0
      %p43 = por %p41, %p42
      %p44 = scmp.ne.s32.totalorder %s33, %s36
      %p45 = scmp.eq.s32.totalorder %s16, 1
      %p46 = por %p44, %p45
      %p47 = scmp.ne.s32.totalorder %s36, %s37
      %p48 = scmp.eq.s32.totalorder %s16, 0
      %p49 = por %p47, %p48
      %p50 = scmp.ne.s32.totalorder %s36, %s37
      %p51 = scmp.eq.s32.totalorder %s17, 1
      %p52 = por %p50, %p51
      %p54 = scmp.ne.s32.totalorder %s37, %s53
      %p55 = scmp.eq.s32.totalorder %s17, 0
      %p56 = por %p54, %p55
      %s57 = ssub.s32 %s18, %s30
      %s58 = ssub.s32 %s19, %s26
      %s59 = sor.u32 %s57, %s58
      %p60 = scmp.eq.s32.totalorder %s59, 0
      %s62 = sadd.s32 %s61, 1
      %s63 = scalar_select %p60, %s61, %s62
      %p66 = pneg %p60
      %p67 = scmp.eq.s32.totalorder %s11, 1
      %p68 = por %p66, %p67
      %p69 = scmp.ne.s32.totalorder %s61, %s64
      %p70 = scmp.eq.s32.totalorder %s11, 0
      %p71 = por %p69, %p70
      %p72 = scmp.ne.s32.totalorder %s61, %s64
      %p73 = scmp.eq.s32.totalorder %s16, 1
      %p74 = por %p72, %p73
      %p75 = scmp.ne.s32.totalorder %s64, %s65
      %p76 = scmp.eq.s32.totalorder %s16, 0
      %p77 = por %p75, %p76
      %p78 = scmp.ne.s32.totalorder %s64, %s65
      %p79 = scmp.eq.s32.totalorder %s17, 1
      %p80 = por %p78, %p79
      %p82 = scmp.ne.s32.totalorder %s65, %s81
      %p83 = scmp.eq.s32.totalorder %s17, 0
      %p84 = por %p82, %p83
      %s85 = ssub.s32 %s18, %s30
      %s86 = ssub.s32 %s19, %s26
      %s87 = sor.u32 %s85, %s86
      %p88 = scmp.eq.s32.totalorder %s87, 0
      %s90 = sadd.s32 %s89, 1
      %s91 = scalar_select %p88, %s89, %s90
      %p94 = pneg %p88
      %p95 = scmp.eq.s32.totalorder %s11, 1
      %p96 = por %p94, %p95
      %p97 = scmp.ne.s32.totalorder %s89, %s92
      %p98 = scmp.eq.s32.totalorder %s11, 0
      %p99 = por %p97, %p98
      %p100 = scmp.ne.s32.totalorder %s89, %s92
      %p101 = scmp.eq.s32.totalorder %s16, 1
      %p102 = por %p100, %p101
      %p103 = scmp.ne.s32.totalorder %s92, %s93
      %p104 = scmp.eq.s32.totalorder %s16, 0
      %p105 = por %p103, %p104
      %p106 = scmp.ne.s32.totalorder %s92, %s93
      %p107 = scmp.eq.s32.totalorder %s17, 1
      %p108 = por %p106, %p107
      %p110 = scmp.ne.s32.totalorder %s93, %s109
      %p111 = scmp.eq.s32.totalorder %s17, 0
      %p112 = por %p110, %p111
      %p113 = scmp.le.s32.totalorder 1, %s11
      %p114 = scmp.lt.s32.totalorder %s11, 3
      %p115 = pnand %p113, %p114
      %p116 = pneg %p115
      // Predicated region
      $region9: #{transform_module_forward.3} parent=5 // pred_check
        _
      $region10: #{transform_module_forward.3} parent=5 // pred_check_branch
        %118 = sbr.rel (%p115) target = $region12
      $region11: #{transform_module_forward.3} parent=5 // pred_region
        %s119 = ssub.s32 %s11, 1
      $region12: #{transform_module_forward.3} parent=5 // pred_fallthru
        _
      %p120 = scmp.lt.s32.totalorder %s11, 2
      // Predicated region
      $region13: #{transform_module_forward.3} parent=5 // pred_check
        %p121 = pneg %p120
      $region14: #{transform_module_forward.3} parent=5 // pred_check_branch
        %123 = sbr.rel (%p121) target = $region16
      $region15: #{transform_module_forward.3} parent=5 // pred_region
        // Predicated region
        $region17: #{transform_module_forward.3} parent=15 // pred_check
          %p124 = pneg %p43
        $region18: #{transform_module_forward.3} parent=15 // pred_check_branch
          %126 = sbr.rel (%p124) target = $region20
        $region19: #{transform_module_forward.3} parent=15 // pred_region
          %p127 = scmp.lt.s32.totalorder %s18, 1
          %s128 = scalar_select %p127, %s18, 1
          %s129 = smul.addr %s128, 4
          %s130 = scalar_lea.vmem %s0, %s129
        $region20: #{transform_module_forward.3} parent=15 // pred_fallthru
          _
        // Predicated region
        $region21: #{transform_module_forward.3} parent=15 // pred_check
          %p131 = pneg %p71
        $region22: #{transform_module_forward.3} parent=15 // pred_check_branch
          %133 = sbr.rel (%p131) target = $region24
        $region23: #{transform_module_forward.3} parent=15 // pred_region
          %s134 = smul.u32 4, %s19
          %p135 = scmp.lt.s32.totalorder %s18, 1
          %s136 = scalar_select %p135, %s18, 1
          %p137 = scmp.lt.s32.totalorder %s134, 3
          %s138 = scalar_select %p137, %s134, 3
          %s139 = smul.addr %s136, 4
          %s140 = sadd.s32 %s138, %s139
          %s141 = smul.addr %s140, 4
          %s142 = scalar_lea.vmem %s1, %s141
          %s143 = smul.u32 4, %s19
        $region24: #{transform_module_forward.3} parent=15 // pred_fallthru
          _
      $region16: #{transform_module_forward.3} parent=5 // pred_fallthru
        _
      %p144 = scmp.le.s32.totalorder 1, %s11
      %p145 = scmp.lt.s32.totalorder %s11, 3
      %p146 = pnand %p144, %p145
      %p147 = pneg %p146
      // Predicated region
      $region25: #{transform_module_forward.3} parent=5 // pred_check
        _
      $region26: #{transform_module_forward.3} parent=5 // pred_check_branch
        %149 = sbr.rel (%p146) target = $region28
      $region27: #{transform_module_forward.3} parent=5 // pred_region
        %s150 = ssub.s32 %s11, 1
        %p151 = scmp.lt.s32.totalorder %s20, 1
        %s152 = scalar_select %p151, %s20, 1
        %s153 = smul.addr %s152, 4
        %s154 = scalar_lea.vmem %s0, %s153
        %p155 = pneg %p49
        %p156 = pneg %p46
        %s157 = smul.u32 4, %s21
        %p158 = scmp.lt.s32.totalorder %s20, 1
        %s159 = scalar_select %p158, %s20, 1
        %p160 = scmp.lt.s32.totalorder %s157, 3
        %s161 = scalar_select %p160, %s157, 3
        %s162 = smul.addr %s159, 4
        %s163 = sadd.s32 %s161, %s162
        %s164 = smul.addr %s163, 4
        %s165 = scalar_lea.vmem %s1, %s164
        %p166 = pneg %p77
        %p167 = pneg %p74
        %p168 = pneg %p105
        %p169 = pneg %p102
        %s170 = sand.u32 %s92, 1
        %s171 = scalar_lea.sflag [#allocation3], %s170
        %s172 = sand.u32 %s92, 1
        %s173 = smul.addr %s172, 16
        %s174 = scalar_lea.vmem [#allocation2], %s173
        %p175 = scmp.lt.s32.totalorder %s20, 1
        %s176 = scalar_select %p175, %s20, 1
        %s177 = smul.addr %s176, 4
        %s178 = scalar_lea.vmem %s0, %s177
        %s179 = smul.u32 4, %s21
        %p180 = scmp.lt.s32.totalorder %s20, 1
        %s181 = scalar_select %p180, %s20, 1
        %p182 = scmp.lt.s32.totalorder %s179, 3
        %s183 = scalar_select %p182, %s179, 3
        %s184 = smul.addr %s181, 4
        %s185 = sadd.s32 %s183, %s184
        %s186 = smul.addr %s185, 4
        %s187 = scalar_lea.vmem %s1, %s186
        %s188 = smul.u32 4, %s21
        %s189 = smul.u32 4, %s21
        %v190 = vld [vmem:[%s178] sm:$0xf]
        %v191 = vld [vmem:[%s187] sm:$0xff]
        %v192 = vld [vmem:[%s187 + $0x8] sm:$0xff]
        %194 = vset.pattern.permute.xlu0 0
        %195 = vperm.xlu0 %194, %v190
        %v196 = vpop.permute.xlu0 %195
        %v200 = vlaneseq
        %v201 = vshrl.u32 %v200, 7
        %v202 = vsub.s32 0, %v201
        %v203 = vrot.slane %v191, %v202
        %v204 = vlaneseq
        %v205 = vshrl.u32 %v204, 7
        %v206 = vsub.s32 4, %v205
        %v207 = vrot.slane %v191, %v206
        %v208 = vlaneseq
        %v209 = vshrl.u32 %v208, 7
        %v210 = vsub.s32 0, %v209
        %v211 = vrot.slane %v192, %v210
        %v212 = vlaneseq
        %v213 = vshrl.u32 %v212, 7
        %v214 = vsub.s32 4, %v213
        %v215 = vrot.slane %v192, %v214
        %v220 = vlaneseq
        %v221 = vshrl.u32 %v220, 7
        %v222 = vsub.s32 0, %v221
        %v223 = vrot.slane %v203, %v222
        %v224 = vlaneseq
        %v225 = vshrl.u32 %v224, 7
        %v226 = vsub.s32 0, %v225
        %v227 = vrot.slane %v207, %v226
        %v228 = vlaneseq
        %v229 = vshrl.u32 %v228, 7
        %v230 = vsub.s32 0, %v229
        %v231 = vrot.slane %v211, %v230
        %v232 = vlaneseq
        %v233 = vshrl.u32 %v232, 7
        %v234 = vsub.s32 0, %v233
        %v235 = vrot.slane %v215, %v234
        %v236 = vmul.f32 %v196, %v223
        %v237 = vmul.f32 %v196, %v227
        %v238 = vmul.f32 %v196, %v231
        %v239 = vmul.f32 %v196, %v235
        %240 = vset.pattern.permute.xlu0 1
        %241 = vperm.xlu0 %240, %v190
        %v242 = vpop.permute.xlu0 %241
        %v244 = vlaneseq
        %v245 = vshrl.u32 %v244, 7
        %v246 = vsub.s32 1, %v245
        %v247 = vrot.slane %v191, %v246
        %v248 = vlaneseq
        %v249 = vshrl.u32 %v248, 7
        %v250 = vsub.s32 5, %v249
        %v251 = vrot.slane %v191, %v250
        %v252 = vlaneseq
        %v253 = vshrl.u32 %v252, 7
        %v254 = vsub.s32 1, %v253
        %v255 = vrot.slane %v192, %v254
        %v256 = vlaneseq
        %v257 = vshrl.u32 %v256, 7
        %v258 = vsub.s32 5, %v257
        %v259 = vrot.slane %v192, %v258
        %v264 = vlaneseq
        %v265 = vshrl.u32 %v264, 7
        %v266 = vsub.s32 1, %v265
        %v267 = vrot.slane %v247, %v266
        %v268 = vlaneseq
        %v269 = vshrl.u32 %v268, 7
        %v270 = vsub.s32 1, %v269
        %v271 = vrot.slane %v251, %v270
        %v272 = vlaneseq
        %v273 = vshrl.u32 %v272, 7
        %v274 = vsub.s32 1, %v273
        %v275 = vrot.slane %v255, %v274
        %v276 = vlaneseq
        %v277 = vshrl.u32 %v276, 7
        %v278 = vsub.s32 1, %v277
        %v279 = vrot.slane %v259, %v278
        %v280 = vmul.f32 %v242, %v267
        %v281 = vmul.f32 %v242, %v271
        %v282 = vmul.f32 %v242, %v275
        %v283 = vmul.f32 %v242, %v279
        %v284 = vadd.f32 %v236, %v280
        %v285 = vadd.f32 %v237, %v281
        %v286 = vadd.f32 %v238, %v282
        %v287 = vadd.f32 %v239, %v283
        %288 = vset.pattern.permute.xlu0 2
        %289 = vperm.xlu0 %288, %v190
        %v290 = vpop.permute.xlu0 %289
        %v292 = vlaneseq
        %v293 = vshrl.u32 %v292, 7
        %v294 = vsub.s32 2, %v293
        %v295 = vrot.slane %v191, %v294
        %v296 = vlaneseq
        %v297 = vshrl.u32 %v296, 7
        %v298 = vsub.s32 6, %v297
        %v299 = vrot.slane %v191, %v298
        %v300 = vlaneseq
        %v301 = vshrl.u32 %v300, 7
        %v302 = vsub.s32 2, %v301
        %v303 = vrot.slane %v192, %v302
        %v304 = vlaneseq
        %v305 = vshrl.u32 %v304, 7
        %v306 = vsub.s32 6, %v305
        %v307 = vrot.slane %v192, %v306
        %v312 = vlaneseq
        %v313 = vshrl.u32 %v312, 7
        %v314 = vsub.s32 2, %v313
        %v315 = vrot.slane %v295, %v314
        %v316 = vlaneseq
        %v317 = vshrl.u32 %v316, 7
        %v318 = vsub.s32 2, %v317
        %v319 = vrot.slane %v299, %v318
        %v320 = vlaneseq
        %v321 = vshrl.u32 %v320, 7
        %v322 = vsub.s32 2, %v321
        %v323 = vrot.slane %v303, %v322
        %v324 = vlaneseq
        %v325 = vshrl.u32 %v324, 7
        %v326 = vsub.s32 2, %v325
        %v327 = vrot.slane %v307, %v326
        %v328 = vmul.f32 %v290, %v315
        %v329 = vmul.f32 %v290, %v319
        %v330 = vmul.f32 %v290, %v323
        %v331 = vmul.f32 %v290, %v327
        %v332 = vadd.f32 %v284, %v328
        %v333 = vadd.f32 %v285, %v329
        %v334 = vadd.f32 %v286, %v330
        %v335 = vadd.f32 %v287, %v331
        %336 = vset.pattern.permute.xlu0 3
        %337 = vperm.xlu0 %336, %v190
        %v338 = vpop.permute.xlu0 %337
        %v340 = vlaneseq
        %v341 = vshrl.u32 %v340, 7
        %v342 = vsub.s32 3, %v341
        %v343 = vrot.slane %v191, %v342
        %v344 = vlaneseq
        %v345 = vshrl.u32 %v344, 7
        %v346 = vsub.s32 7, %v345
        %v347 = vrot.slane %v191, %v346
        %v348 = vlaneseq
        %v349 = vshrl.u32 %v348, 7
        %v350 = vsub.s32 3, %v349
        %v351 = vrot.slane %v192, %v350
        %v352 = vlaneseq
        %v353 = vshrl.u32 %v352, 7
        %v354 = vsub.s32 7, %v353
        %v355 = vrot.slane %v192, %v354
        %v360 = vlaneseq
        %v361 = vshrl.u32 %v360, 7
        %v362 = vsub.s32 3, %v361
        %v363 = vrot.slane %v343, %v362
        %v364 = vlaneseq
        %v365 = vshrl.u32 %v364, 7
        %v366 = vsub.s32 3, %v365
        %v367 = vrot.slane %v347, %v366
        %v368 = vlaneseq
        %v369 = vshrl.u32 %v368, 7
        %v370 = vsub.s32 3, %v369
        %v371 = vrot.slane %v351, %v370
        %v372 = vlaneseq
        %v373 = vshrl.u32 %v372, 7
        %v374 = vsub.s32 3, %v373
        %v375 = vrot.slane %v355, %v374
        %v376 = vmul.f32 %v338, %v363
        %v377 = vmul.f32 %v338, %v367
        %v378 = vmul.f32 %v338, %v371
        %v379 = vmul.f32 %v338, %v375
        %v380 = vadd.f32 %v332, %v376
        %v381 = vadd.f32 %v333, %v377
        %v382 = vadd.f32 %v334, %v378
        %v383 = vadd.f32 %v335, %v379
        %v388 = vcombine.low %v380, %v381
        %v389 = vcombine.low %v382, %v383
        %392 = vst [vmem:[%s174] sm:$0xff] %v388
        %393 = vst [vmem:[%s174 + $0x8] sm:$0xff] %v389
        %s394 = sand.u32 %s92, 1
        %s395 = scalar_lea.sflag [#allocation3], %s394
        %s396 = sand.u32 %s92, 1
        %s397 = smul.addr %s396, 16
        %s398 = scalar_lea.vmem [#allocation2], %s397
        // Predicated region
        $region29: #{transform_module_forward.3} parent=27 // pred_check
          %p399 = pneg %p102
        $region30: #{transform_module_forward.3} parent=27 // pred_check_branch
          %401 = sbr.rel (%p399) target = $region32
        $region31: #{transform_module_forward.3} parent=27 // pred_region
          %s402 = smul.u32 4, %s21
          %s404 = ssub.s32 256, 256
          %405 = vsyncadd %s395, %s404
          %s406 = smul.addr %s20, 4
          %s407 = sadd.s32 %s402, %s406
          %s408 = smul.addr %s407, 64
          %s409 = scalar_lea.hbm %s2, %s408
          %s411 = sshll.u32 %s398, 4
          %s412 = int_to_ptr.vmem [resolvable:$true] %s411
          %414 = dma.vmem_to_hbm [thread:$0]  %s412, 256, %s409, %s395
        $region32: #{transform_module_forward.3} parent=27 // pred_fallthru
          _
      $region28: #{transform_module_forward.3} parent=5 // pred_fallthru
        _
      %p415 = scmp.le.s32.totalorder 2, %s11
      // Predicated region
      $region33: #{transform_module_forward.3} parent=5 // pred_check
        %p416 = pneg %p415
      $region34: #{transform_module_forward.3} parent=5 // pred_check_branch
        %418 = sbr.rel (%p416) target = $region36
      $region35: #{transform_module_forward.3} parent=5 // pred_region
        %s419 = ssub.s32 %s11, 2
        // Predicated region
        $region37: #{transform_module_forward.3} parent=35 // pred_check
          %p420 = pneg %p108
        $region38: #{transform_module_forward.3} parent=35 // pred_check_branch
          %422 = sbr.rel (%p420) target = $region40
        $region39: #{transform_module_forward.3} parent=35 // pred_region
          %s423 = sand.u32 %s93, 1
          %s424 = scalar_lea.sflag [#allocation3], %s423
          %s425 = sand.u32 %s93, 1
          %s426 = smul.addr %s425, 16
          %s427 = scalar_lea.vmem [#allocation2], %s426
          %428 = dma.done %s424, 256
        $region40: #{transform_module_forward.3} parent=35 // pred_fallthru
          _
      $region36: #{transform_module_forward.3} parent=5 // pred_fallthru
        _
    $region6: #{transform_module_forward.3} parent=1 // loop_footer
      %s15 = sadd.s32 1, %s11
    $region7: #{transform_module_forward.3} parent=1 // loop_footer_branch
      %10 = sbr.rel target = $region3
    $region8: #{transform_module_forward.3} parent=1 // loop_exit
      _
    %429 = vsyncpa [#allocation3], 1
    %s430 = scalar_lea.sflag [#allocation3], 1
    %431 = vsyncpa %s430, 1

// kernel: transform_module_forward.2
$region0: #{transform_module_forward.2}
  #allocation0 [shape = 'u32[]', space=smem, size = 0x4, offset = 0x4, fixed_abs, tag = 'smem constant byte address 0x4 - core index']
  #allocation1 [shape = 'u32[144,128]{1,0:T(1,128)}', space=vmem, size = 0x12000, scoped, tag = 'internal scratch']
  #allocation2 [shape = 'f32[1024,128]{1,0:T(8,128)}', space=vmem, size = 0x80000, scoped, tag = 'scratch operand']
  %s0 = inlined_call_operand.vmem [shape: f32[2,4,512], index: 0, kind: input, shape index: {}]
  %s1 = inlined_call_operand.vmem [shape: f32[64,4], index: 1, kind: input, shape index: {}]
  %s2 = inlined_call_operand.vmem [shape: f32[64,1], index: 2, kind: input, shape index: {}]
  %s3 = inlined_call_operand.vmem [shape: bf16[128,64], index: 3, kind: input, shape index: {}]
  %s4 = inlined_call_operand.vmem [shape: f32[128,1], index: 4, kind: input, shape index: {}]
  %s5 = inlined_call_operand.hbm [shape: bf16[1024,128], index: 5, kind: input, shape index: {}]
  %s6 = inlined_call_operand.vmem [shape: f32[1024,1], index: 6, kind: input, shape index: {}]
  %s7 = inlined_call_operand.vmem [shape: bf16[512,1024], index: 7, kind: input, shape index: {}]
  %s8 = inlined_call_operand.vmem [shape: f32[512,1], index: 8, kind: input, shape index: {}]
  %s9 = inlined_call_operand.hbm [shape: bf16[256,512], index: 9, kind: input, shape index: {}]
  %s10 = inlined_call_operand.vmem [shape: f32[256,1], index: 10, kind: input, shape index: {}]
  %s11 = inlined_call_operand.vmem [shape: bf16[16,256], index: 11, kind: input, shape index: {}]
  %s12 = inlined_call_operand.vmem [shape: f32[16,1], index: 12, kind: input, shape index: {}]
  %s13 = inlined_call_operand.vmem [shape: f32[2,16,1], index: 13, kind: output, shape index: {}]
  %s14 = sld [smem:[#allocation0]]
  $region101: #{transform_module_forward.2} parent=0
    _
  %s16 = ssub.s32 1, %s14
  %s17 = scalar_select 0, %s16, %s14
  $region1: #{transform_module_forward.2} parent=0
    #allocation3 [shape = 'u8[262144]{0}', space=vmem, size = 0x40000, scoped, tag = 'input window, operand 5, single buffered']
    #allocation4 [shape = 's32[2]{0}', space=sflag, size = 0x8, scoped, tag = 'scoped memory for transform_module_forward.2']
    #allocation5 [shape = 'u8[262144]{0}', space=vmem, size = 0x40000, scoped, tag = 'input window, operand 9, single buffered']
    #allocation6 [shape = 's32[1]{0}', space=sflag, size = 0x4, scoped, tag = 'scoped memory for transform_module_forward.2']
    %18 = vsyncpa [#allocation4], 0
    %19 = vsyncpa [#allocation6], 0
    loop: start=0, step=1, limit=4
    $region2: #{transform_module_forward.2} parent=1 // loop_pre_header
      _
    $region3: #{transform_module_forward.2} parent=1 // loop_header
      %s21 = sphi 0, %s25
      %p22 = scmp.ge.s32.totalorder %s21, 4
      %s28 = sphi 0, %s40
      %s29 = sphi 0, %s36
      %s30 = sphi 0, %s28
      %s31 = sphi 0, %s29
      %s32 = sphi 0, %s30
      %s33 = sphi 0, %s31
      %s45 = sphi 0, %s47
      %s48 = sphi 0, %s45
      %s49 = sphi 0, %s48
      %s65 = sphi 0, %s49
      %s69 = sphi 0, %s69
      %s71 = sphi 0, %s69
      %s72 = sphi 0, %s71
      %s86 = sphi 0, %s72
      %s90 = sphi 0, %s90
      %s92 = sphi 0, %s90
      %s93 = sphi 0, %s92
      %s107 = sphi 0, %s93
      %s111 = sphi 0, %s111
      %s113 = sphi 0, %s111
      %s114 = sphi 0, %s113
      %s128 = sphi 0, %s114
      %s132 = sphi 0, %s132
      %s134 = sphi 0, %s132
      %s135 = sphi 0, %s134
      %s149 = sphi 0, %s135
      %s153 = sphi 0, %s153
      %s155 = sphi 0, %s153
      %s156 = sphi 0, %s155
      %s170 = sphi 0, %s156
      %s174 = sphi 0, %s174
      %s176 = sphi 0, %s174
      %s177 = sphi 0, %s176
      %s191 = sphi 0, %s177
      %s195 = sphi 0, %s195
      %s197 = sphi 0, %s195
      %s198 = sphi 0, %s197
      %s212 = sphi 0, %s198
      %s216 = sphi 0, %s216
      %s218 = sphi 0, %s216
      %s219 = sphi 0, %s218
      %s233 = sphi 0, %s219
      %s237 = sphi 0, %s237
      %s239 = sphi 0, %s237
      %s240 = sphi 0, %s239
      %s254 = sphi 0, %s240
      %s258 = sphi 0, %s258
      %s260 = sphi 0, %s258
      %s261 = sphi 0, %s260
      %s275 = sphi 0, %s261
      %s279 = sphi 0, %s279
      %s281 = sphi 0, %s279
      %s282 = sphi 0, %s281
      %s296 = sphi 0, %s282
      %s300 = sphi 0, %s300
      %s302 = sphi 0, %s300
      %s303 = sphi 0, %s302
      %s317 = sphi 0, %s303
      %s323 = sphi 0, %s325
      %s326 = sphi 0, %s323
      %s327 = sphi 0, %s326
      %s343 = sphi 0, %s327
    $region4: #{transform_module_forward.2} parent=1 // loop_header_branch
      %24 = sbr.rel (%p22) target = $region8
    $region5: #{transform_module_forward.2} parent=1 // loop_body
      %s26 = ssub.s32 %s21, 1
      %s27 = ssub.s32 %s21, 2
      %s34 = sadd.s32 1, %s29
      %p35 = scmp.ge.s32.totalorder %s34, 1
      %s36 = scalar_select %p35, 0, %s34
      %s37 = sadd.s32 1, %s28
      %s38 = scalar_select %p35, %s37, %s28
      %p39 = scmp.ge.s32.totalorder %s38, 2
      %s40 = scalar_select %p39, 0, %s38
      %s41 = ssub.s32 %s28, %s40
      %s42 = ssub.s32 %s29, %s36
      %s43 = sor.u32 %s41, %s42
      %p44 = scmp.eq.s32.totalorder %s43, 0
      %s46 = sadd.s32 %s45, 1
      %s47 = scalar_select %p44, %s45, %s46
      %p50 = pneg %p44
      %p51 = scmp.eq.s32.totalorder %s21, 1
      %p52 = por %p50, %p51
      %p53 = scmp.ne.s32.totalorder %s45, %s48
      %p54 = scmp.eq.s32.totalorder %s21, 0
      %p55 = por %p53, %p54
      %p56 = scmp.ne.s32.totalorder %s45, %s48
      %p57 = scmp.eq.s32.totalorder %s26, 1
      %p58 = por %p56, %p57
      %p59 = scmp.ne.s32.totalorder %s48, %s49
      %p60 = scmp.eq.s32.totalorder %s26, 0
      %p61 = por %p59, %p60
      %p62 = scmp.ne.s32.totalorder %s48, %s49
      %p63 = scmp.eq.s32.totalorder %s27, 1
      %p64 = por %p62, %p63
      %p66 = scmp.ne.s32.totalorder %s49, %s65
      %p67 = scmp.eq.s32.totalorder %s27, 0
      %p68 = por %p66, %p67
      %s70 = sadd.s32 %s69, 1
      %p73 = scmp.eq.s32.totalorder %s21, 1
      %p74 = scmp.ne.s32.totalorder %s69, %s71
      %p75 = scmp.eq.s32.totalorder %s21, 0
      %p76 = por %p74, %p75
      %p77 = scmp.ne.s32.totalorder %s69, %s71
      %p78 = scmp.eq.s32.totalorder %s26, 1
      %p79 = por %p77, %p78
      %p80 = scmp.ne.s32.totalorder %s71, %s72
      %p81 = scmp.eq.s32.totalorder %s26, 0
      %p82 = por %p80, %p81
      %p83 = scmp.ne.s32.totalorder %s71, %s72
      %p84 = scmp.eq.s32.totalorder %s27, 1
      %p85 = por %p83, %p84
      %p87 = scmp.ne.s32.totalorder %s72, %s86
      %p88 = scmp.eq.s32.totalorder %s27, 0
      %p89 = por %p87, %p88
      %s91 = sadd.s32 %s90, 1
      %p94 = scmp.eq.s32.totalorder %s21, 1
      %p95 = scmp.ne.s32.totalorder %s90, %s92
      %p96 = scmp.eq.s32.totalorder %s21, 0
      %p97 = por %p95, %p96
      %p98 = scmp.ne.s32.totalorder %s90, %s92
      %p99 = scmp.eq.s32.totalorder %s26, 1
      %p100 = por %p98, %p99
      %p101 = scmp.ne.s32.totalorder %s92, %s93
      %p102 = scmp.eq.s32.totalorder %s26, 0
      %p103 = por %p101, %p102
      %p104 = scmp.ne.s32.totalorder %s92, %s93
      %p105 = scmp.eq.s32.totalorder %s27, 1
      %p106 = por %p104, %p105
      %p108 = scmp.ne.s32.totalorder %s93, %s107
      %p109 = scmp.eq.s32.totalorder %s27, 0
      %p110 = por %p108, %p109
      %s112 = sadd.s32 %s111, 1
      %p115 = scmp.eq.s32.totalorder %s21, 1
      %p116 = scmp.ne.s32.totalorder %s111, %s113
      %p117 = scmp.eq.s32.totalorder %s21, 0
      %p118 = por %p116, %p117
      %p119 = scmp.ne.s32.totalorder %s111, %s113
      %p120 = scmp.eq.s32.totalorder %s26, 1
      %p121 = por %p119, %p120
      %p122 = scmp.ne.s32.totalorder %s113, %s114
      %p123 = scmp.eq.s32.totalorder %s26, 0
      %p124 = por %p122, %p123
      %p125 = scmp.ne.s32.totalorder %s113, %s114
      %p126 = scmp.eq.s32.totalorder %s27, 1
      %p127 = por %p125, %p126
      %p129 = scmp.ne.s32.totalorder %s114, %s128
      %p130 = scmp.eq.s32.totalorder %s27, 0
      %p131 = por %p129, %p130
      %s133 = sadd.s32 %s132, 1
      %p136 = scmp.eq.s32.totalorder %s21, 1
      %p137 = scmp.ne.s32.totalorder %s132, %s134
      %p138 = scmp.eq.s32.totalorder %s21, 0
      %p139 = por %p137, %p138
      %p140 = scmp.ne.s32.totalorder %s132, %s134
      %p141 = scmp.eq.s32.totalorder %s26, 1
      %p142 = por %p140, %p141
      %p143 = scmp.ne.s32.totalorder %s134, %s135
      %p144 = scmp.eq.s32.totalorder %s26, 0
      %p145 = por %p143, %p144
      %p146 = scmp.ne.s32.totalorder %s134, %s135
      %p147 = scmp.eq.s32.totalorder %s27, 1
      %p148 = por %p146, %p147
      %p150 = scmp.ne.s32.totalorder %s135, %s149
      %p151 = scmp.eq.s32.totalorder %s27, 0
      %p152 = por %p150, %p151
      %s154 = sadd.s32 %s153, 1
      %p157 = scmp.eq.s32.totalorder %s21, 1
      %p158 = scmp.ne.s32.totalorder %s153, %s155
      %p159 = scmp.eq.s32.totalorder %s21, 0
      %p160 = por %p158, %p159
      %p161 = scmp.ne.s32.totalorder %s153, %s155
      %p162 = scmp.eq.s32.totalorder %s26, 1
      %p163 = por %p161, %p162
      %p164 = scmp.ne.s32.totalorder %s155, %s156
      %p165 = scmp.eq.s32.totalorder %s26, 0
      %p166 = por %p164, %p165
      %p167 = scmp.ne.s32.totalorder %s155, %s156
      %p168 = scmp.eq.s32.totalorder %s27, 1
      %p169 = por %p167, %p168
      %p171 = scmp.ne.s32.totalorder %s156, %s170
      %p172 = scmp.eq.s32.totalorder %s27, 0
      %p173 = por %p171, %p172
      %s175 = sadd.s32 %s174, 1
      %p178 = scmp.eq.s32.totalorder %s21, 1
      %p179 = scmp.ne.s32.totalorder %s174, %s176
      %p180 = scmp.eq.s32.totalorder %s21, 0
      %p181 = por %p179, %p180
      %p182 = scmp.ne.s32.totalorder %s174, %s176
      %p183 = scmp.eq.s32.totalorder %s26, 1
      %p184 = por %p182, %p183
      %p185 = scmp.ne.s32.totalorder %s176, %s177
      %p186 = scmp.eq.s32.totalorder %s26, 0
      %p187 = por %p185, %p186
      %p188 = scmp.ne.s32.totalorder %s176, %s177
      %p189 = scmp.eq.s32.totalorder %s27, 1
      %p190 = por %p188, %p189
      %p192 = scmp.ne.s32.totalorder %s177, %s191
      %p193 = scmp.eq.s32.totalorder %s27, 0
      %p194 = por %p192, %p193
      %s196 = sadd.s32 %s195, 1
      %p199 = scmp.eq.s32.totalorder %s21, 1
      %p200 = scmp.ne.s32.totalorder %s195, %s197
      %p201 = scmp.eq.s32.totalorder %s21, 0
      %p202 = por %p200, %p201
      %p203 = scmp.ne.s32.totalorder %s195, %s197
      %p204 = scmp.eq.s32.totalorder %s26, 1
      %p205 = por %p203, %p204
      %p206 = scmp.ne.s32.totalorder %s197, %s198
      %p207 = scmp.eq.s32.totalorder %s26, 0
      %p208 = por %p206, %p207
      %p209 = scmp.ne.s32.totalorder %s197, %s198
      %p210 = scmp.eq.s32.totalorder %s27, 1
      %p211 = por %p209, %p210
      %p213 = scmp.ne.s32.totalorder %s198, %s212
      %p214 = scmp.eq.s32.totalorder %s27, 0
      %p215 = por %p213, %p214
      %s217 = sadd.s32 %s216, 1
      %p220 = scmp.eq.s32.totalorder %s21, 1
      %p221 = scmp.ne.s32.totalorder %s216, %s218
      %p222 = scmp.eq.s32.totalorder %s21, 0
      %p223 = por %p221, %p222
      %p224 = scmp.ne.s32.totalorder %s216, %s218
      %p225 = scmp.eq.s32.totalorder %s26, 1
      %p226 = por %p224, %p225
      %p227 = scmp.ne.s32.totalorder %s218, %s219
      %p228 = scmp.eq.s32.totalorder %s26, 0
      %p229 = por %p227, %p228
      %p230 = scmp.ne.s32.totalorder %s218, %s219
      %p231 = scmp.eq.s32.totalorder %s27, 1
      %p232 = por %p230, %p231
      %p234 = scmp.ne.s32.totalorder %s219, %s233
      %p235 = scmp.eq.s32.totalorder %s27, 0
      %p236 = por %p234, %p235
      %s238 = sadd.s32 %s237, 1
      %p241 = scmp.eq.s32.totalorder %s21, 1
      %p242 = scmp.ne.s32.totalorder %s237, %s239
      %p243 = scmp.eq.s32.totalorder %s21, 0
      %p244 = por %p242, %p243
      %p245 = scmp.ne.s32.totalorder %s237, %s239
      %p246 = scmp.eq.s32.totalorder %s26, 1
      %p247 = por %p245, %p246
      %p248 = scmp.ne.s32.totalorder %s239, %s240
      %p249 = scmp.eq.s32.totalorder %s26, 0
      %p250 = por %p248, %p249
      %p251 = scmp.ne.s32.totalorder %s239, %s240
      %p252 = scmp.eq.s32.totalorder %s27, 1
      %p253 = por %p251, %p252
      %p255 = scmp.ne.s32.totalorder %s240, %s254
      %p256 = scmp.eq.s32.totalorder %s27, 0
      %p257 = por %p255, %p256
      %s259 = sadd.s32 %s258, 1
      %p262 = scmp.eq.s32.totalorder %s21, 1
      %p263 = scmp.ne.s32.totalorder %s258, %s260
      %p264 = scmp.eq.s32.totalorder %s21, 0
      %p265 = por %p263, %p264
      %p266 = scmp.ne.s32.totalorder %s258, %s260
      %p267 = scmp.eq.s32.totalorder %s26, 1
      %p268 = por %p266, %p267
      %p269 = scmp.ne.s32.totalorder %s260, %s261
      %p270 = scmp.eq.s32.totalorder %s26, 0
      %p271 = por %p269, %p270
      %p272 = scmp.ne.s32.totalorder %s260, %s261
      %p273 = scmp.eq.s32.totalorder %s27, 1
      %p274 = por %p272, %p273
      %p276 = scmp.ne.s32.totalorder %s261, %s275
      %p277 = scmp.eq.s32.totalorder %s27, 0
      %p278 = por %p276, %p277
      %s280 = sadd.s32 %s279, 1
      %p283 = scmp.eq.s32.totalorder %s21, 1
      %p284 = scmp.ne.s32.totalorder %s279, %s281
      %p285 = scmp.eq.s32.totalorder %s21, 0
      %p286 = por %p284, %p285
      %p287 = scmp.ne.s32.totalorder %s279, %s281
      %p288 = scmp.eq.s32.totalorder %s26, 1
      %p289 = por %p287, %p288
      %p290 = scmp.ne.s32.totalorder %s281, %s282
      %p291 = scmp.eq.s32.totalorder %s26, 0
      %p292 = por %p290, %p291
      %p293 = scmp.ne.s32.totalorder %s281, %s282
      %p294 = scmp.eq.s32.totalorder %s27, 1
      %p295 = por %p293, %p294
      %p297 = scmp.ne.s32.totalorder %s282, %s296
      %p298 = scmp.eq.s32.totalorder %s27, 0
      %p299 = por %p297, %p298
      %s301 = sadd.s32 %s300, 1
      %p304 = scmp.eq.s32.totalorder %s21, 1
      %p305 = scmp.ne.s32.totalorder %s300, %s302
      %p306 = scmp.eq.s32.totalorder %s21, 0
      %p307 = por %p305, %p306
      %p308 = scmp.ne.s32.totalorder %s300, %s302
      %p309 = scmp.eq.s32.totalorder %s26, 1
      %p310 = por %p308, %p309
      %p311 = scmp.ne.s32.totalorder %s302, %s303
      %p312 = scmp.eq.s32.totalorder %s26, 0
      %p313 = por %p311, %p312
      %p314 = scmp.ne.s32.totalorder %s302, %s303
      %p315 = scmp.eq.s32.totalorder %s27, 1
      %p316 = por %p314, %p315
      %p318 = scmp.ne.s32.totalorder %s303, %s317
      %p319 = scmp.eq.s32.totalorder %s27, 0
      %p320 = por %p318, %p319
      %s321 = ssub.s32 %s28, %s40
      %p322 = scmp.eq.s32.totalorder %s321, 0
      %s324 = sadd.s32 %s323, 1
      %s325 = scalar_select %p322, %s323, %s324
      %p328 = pneg %p322
      %p329 = scmp.eq.s32.totalorder %s21, 1
      %p330 = por %p328, %p329
      %p331 = scmp.ne.s32.totalorder %s323, %s326
      %p332 = scmp.eq.s32.totalorder %s21, 0
      %p333 = por %p331, %p332
      %p334 = scmp.ne.s32.totalorder %s323, %s326
      %p335 = scmp.eq.s32.totalorder %s26, 1
      %p336 = por %p334, %p335
      %p337 = scmp.ne.s32.totalorder %s326, %s327
      %p338 = scmp.eq.s32.totalorder %s26, 0
      %p339 = por %p337, %p338
      %p340 = scmp.ne.s32.totalorder %s326, %s327
      %p341 = scmp.eq.s32.totalorder %s27, 1
      %p342 = por %p340, %p341
      %p344 = scmp.ne.s32.totalorder %s327, %s343
      %p345 = scmp.eq.s32.totalorder %s27, 0
      %p346 = por %p344, %p345
      %p347 = scmp.le.s32.totalorder 1, %s21
      %p348 = scmp.lt.s32.totalorder %s21, 3
      %p349 = pnand %p347, %p348
      %p350 = pneg %p349
      // Predicated region
      $region9: #{transform_module_forward.2} parent=5 // pred_check
        _
      $region10: #{transform_module_forward.2} parent=5 // pred_check_branch
        %352 = sbr.rel (%p349) target = $region12
      $region11: #{transform_module_forward.2} parent=5 // pred_region
        %s353 = ssub.s32 %s21, 1
        // Predicated region
        $region13: #{transform_module_forward.2} parent=11 // pred_check
          %p354 = pneg %p82
        $region14: #{transform_module_forward.2} parent=11 // pred_check_branch
          %356 = sbr.rel (%p354) target = $region16
        $region15: #{transform_module_forward.2} parent=11 // pred_region
          _
        $region16: #{transform_module_forward.2} parent=11 // pred_fallthru
          _
        // Predicated region
        $region17: #{transform_module_forward.2} parent=11 // pred_check
          %p357 = pneg %p103
        $region18: #{transform_module_forward.2} parent=11 // pred_check_branch
          %359 = sbr.rel (%p357) target = $region20
        $region19: #{transform_module_forward.2} parent=11 // pred_region
          _
        $region20: #{transform_module_forward.2} parent=11 // pred_fallthru
          _
        // Predicated region
        $region21: #{transform_module_forward.2} parent=11 // pred_check
          %p360 = pneg %p124
        $region22: #{transform_module_forward.2} parent=11 // pred_check_branch
          %362 = sbr.rel (%p360) target = $region24
        $region23: #{transform_module_forward.2} parent=11 // pred_region
          _
        $region24: #{transform_module_forward.2} parent=11 // pred_fallthru
          _
        // Predicated region
        $region25: #{transform_module_forward.2} parent=11 // pred_check
          %p363 = pneg %p145
        $region26: #{transform_module_forward.2} parent=11 // pred_check_branch
          %365 = sbr.rel (%p363) target = $region28
        $region27: #{transform_module_forward.2} parent=11 // pred_region
          _
        $region28: #{transform_module_forward.2} parent=11 // pred_fallthru
          _
        // Predicated region
        $region29: #{transform_module_forward.2} parent=11 // pred_check
          %p366 = pneg %p166
        $region30: #{transform_module_forward.2} parent=11 // pred_check_branch
          %368 = sbr.rel (%p366) target = $region32
        $region31: #{transform_module_forward.2} parent=11 // pred_region
          %s370 = ssub.s32 8192, 8192
          %371 = vsyncadd [#allocation4], %s370
          %s372 = sshll.u32 [#allocation3], 4
          %s373 = int_to_ptr.vmem [resolvable:$true] %s372
          %378 = dma.hbm_to_vmem [thread:$0]  %s5, 8192, %s373, [#allocation4], 64, 64, 4
        $region32: #{transform_module_forward.2} parent=11 // pred_fallthru
          _
        // Predicated region
        $region33: #{transform_module_forward.2} parent=11 // pred_check
          %p379 = pneg %p187
        $region34: #{transform_module_forward.2} parent=11 // pred_check_branch
          %381 = sbr.rel (%p379) target = $region36
        $region35: #{transform_module_forward.2} parent=11 // pred_region
          _
        $region36: #{transform_module_forward.2} parent=11 // pred_fallthru
          _
        // Predicated region
        $region37: #{transform_module_forward.2} parent=11 // pred_check
          %p382 = pneg %p208
        $region38: #{transform_module_forward.2} parent=11 // pred_check_branch
          %384 = sbr.rel (%p382) target = $region40
        $region39: #{transform_module_forward.2} parent=11 // pred_region
          _
        $region40: #{transform_module_forward.2} parent=11 // pred_fallthru
          _
        // Predicated region
        $region41: #{transform_module_forward.2} parent=11 // pred_check
          %p385 = pneg %p229
        $region42: #{transform_module_forward.2} parent=11 // pred_check_branch
          %387 = sbr.rel (%p385) target = $region44
        $region43: #{transform_module_forward.2} parent=11 // pred_region
          _
        $region44: #{transform_module_forward.2} parent=11 // pred_fallthru
          _
        // Predicated region
        $region45: #{transform_module_forward.2} parent=11 // pred_check
          %p388 = pneg %p250
        $region46: #{transform_module_forward.2} parent=11 // pred_check_branch
          %390 = sbr.rel (%p388) target = $region48
        $region47: #{transform_module_forward.2} parent=11 // pred_region
          %s392 = ssub.s32 8192, 8192
          %393 = vsyncadd [#allocation6], %s392
          %s394 = sshll.u32 [#allocation5], 4
          %s395 = int_to_ptr.vmem [resolvable:$true] %s394
          %400 = dma.hbm_to_vmem [thread:$0]  %s9, 8192, %s395, [#allocation6], 256, 256, 16
        $region48: #{transform_module_forward.2} parent=11 // pred_fallthru
          _
        // Predicated region
        $region49: #{transform_module_forward.2} parent=11 // pred_check
          %p401 = pneg %p271
        $region50: #{transform_module_forward.2} parent=11 // pred_check_branch
          %403 = sbr.rel (%p401) target = $region52
        $region51: #{transform_module_forward.2} parent=11 // pred_region
          _
        $region52: #{transform_module_forward.2} parent=11 // pred_fallthru
          _
        // Predicated region
        $region53: #{transform_module_forward.2} parent=11 // pred_check
          %p404 = pneg %p292
        $region54: #{transform_module_forward.2} parent=11 // pred_check_branch
          %406 = sbr.rel (%p404) target = $region56
        $region55: #{transform_module_forward.2} parent=11 // pred_region
          _
        $region56: #{transform_module_forward.2} parent=11 // pred_fallthru
          _
        // Predicated region
        $region57: #{transform_module_forward.2} parent=11 // pred_check
          %p407 = pneg %p313
        $region58: #{transform_module_forward.2} parent=11 // pred_check_branch
          %409 = sbr.rel (%p407) target = $region60
        $region59: #{transform_module_forward.2} parent=11 // pred_region
          _
        $region60: #{transform_module_forward.2} parent=11 // pred_fallthru
          _
      $region12: #{transform_module_forward.2} parent=5 // pred_fallthru
        _
      %p410 = scmp.lt.s32.totalorder %s21, 2
      // Predicated region
      $region61: #{transform_module_forward.2} parent=5 // pred_check
        %p411 = pneg %p410
      $region62: #{transform_module_forward.2} parent=5 // pred_check_branch
        %413 = sbr.rel (%p411) target = $region64
      $region63: #{transform_module_forward.2} parent=5 // pred_region
        // Predicated region
        $region65: #{transform_module_forward.2} parent=63 // pred_check
          %p414 = pneg %p55
        $region66: #{transform_module_forward.2} parent=63 // pred_check_branch
          %416 = sbr.rel (%p414) target = $region68
        $region67: #{transform_module_forward.2} parent=63 // pred_region
          %s417 = smul.u32 4, %s29
          %p418 = scmp.lt.s32.totalorder %s28, 1
          %s419 = scalar_select %p418, %s28, 1
          %p420 = scmp.lt.s32.totalorder %s417, 3
          %s421 = scalar_select %p420, %s417, 3
          %s422 = smul.addr %s419, 4
          %s423 = sadd.s32 %s421, %s422
          %s424 = smul.addr %s423, 4
          %s425 = scalar_lea.vmem %s0, %s424
          %s426 = smul.u32 4, %s29
        $region68: #{transform_module_forward.2} parent=63 // pred_fallthru
          _
      $region64: #{transform_module_forward.2} parent=5 // pred_fallthru
        _
      %p427 = scmp.le.s32.totalorder 1, %s21
      %p428 = scmp.lt.s32.totalorder %s21, 3
      %p429 = pnand %p427, %p428
      %p430 = pneg %p429
      // Predicated region
      $region69: #{transform_module_forward.2} parent=5 // pred_check
        _
      $region70: #{transform_module_forward.2} parent=5 // pred_check_branch
        %432 = sbr.rel (%p429) target = $region72
      $region71: #{transform_module_forward.2} parent=5 // pred_region
        %s433 = ssub.s32 %s21, 1
        // Predicated region
        $region73: #{transform_module_forward.2} parent=71 // pred_check
          %p434 = pneg %p166
        $region74: #{transform_module_forward.2} parent=71 // pred_check_branch
          %436 = sbr.rel (%p434) target = $region76
        $region75: #{transform_module_forward.2} parent=71 // pred_region
          %437 = dma.done [#allocation4], 8192
        $region76: #{transform_module_forward.2} parent=71 // pred_fallthru
          _
        // Predicated region
        $region77: #{transform_module_forward.2} parent=71 // pred_check
          %p438 = pneg %p250
        $region78: #{transform_module_forward.2} parent=71 // pred_check_branch
          %440 = sbr.rel (%p438) target = $region80
        $region79: #{transform_module_forward.2} parent=71 // pred_region
          %441 = dma.done [#allocation6], 8192
        $region80: #{transform_module_forward.2} parent=71 // pred_fallthru
          _
        %s442 = smul.u32 4, %s31
        %p443 = scmp.lt.s32.totalorder %s30, 1
        %s444 = scalar_select %p443, %s30, 1
        %p445 = scmp.lt.s32.totalorder %s442, 3
        %s446 = scalar_select %p445, %s442, 3
        %s447 = smul.addr %s444, 4
        %s448 = sadd.s32 %s446, %s447
        %s449 = smul.addr %s448, 4
        %s450 = scalar_lea.vmem %s0, %s449
        %p451 = pneg %p61
        %p452 = pneg %p58
        %p453 = pneg %p82
        %p454 = pneg %p79
        %p455 = pneg %p103
        %p456 = pneg %p100
        %p457 = pneg %p124
        %p458 = pneg %p121
        %p459 = pneg %p145
        %p460 = pneg %p142
        %p461 = pneg %p166
        %p462 = pneg %p163
        %p463 = pneg %p187
        %p464 = pneg %p184
        %p465 = pneg %p208
        %p466 = pneg %p205
        %p467 = pneg %p229
        %p468 = pneg %p226
        %p469 = pneg %p250
        %p470 = pneg %p247
        %p471 = pneg %p271
        %p472 = pneg %p268
        %p473 = pneg %p292
        %p474 = pneg %p289
        %p475 = pneg %p313
        %p476 = pneg %p310
        %p477 = pneg %p339
        %p478 = pneg %p336
        %p479 = scmp.lt.s32.totalorder %s30, 1
        %s480 = scalar_select %p479, %s30, 1
        %s481 = smul.addr %s480, 2
        %s482 = smul.addr %s481, 8
        %s483 = scalar_lea.vmem %s13, %s482
        %s484 = smul.u32 4, %s31
        %p485 = scmp.lt.s32.totalorder %s30, 1
        %s486 = scalar_select %p485, %s30, 1
        %p487 = scmp.lt.s32.totalorder %s484, 3
        %s488 = scalar_select %p487, %s484, 3
        %s489 = smul.addr %s486, 4
        %s490 = sadd.s32 %s488, %s489
        %s491 = smul.addr %s490, 4
        %s492 = scalar_lea.vmem %s0, %s491
        %s493 = smul.u32 4, %s31
        %p494 = scmp.lt.s32.totalorder %s30, 1
        %s495 = scalar_select %p494, %s30, 1
        %s496 = smul.addr %s495, 2
        %s497 = smul.addr %s496, 8
        %s498 = scalar_lea.vmem %s13, %s497
        %v500 = vld [vmem:[%s492] sm:$0xff]
        %v501 = vld [vmem:[%s492 + $0x8] sm:$0xff]
        %v502 = vld [vmem:[%s1] sm:$0xff]
        %v503 = vld [vmem:[%s1 + $0x8] sm:$0xff]
        %v504 = vld [vmem:[%s1 + $0x10] sm:$0xff]
        %v505 = vld [vmem:[%s1 + $0x18] sm:$0xff]
        %v506 = vld [vmem:[%s1 + $0x20] sm:$0xff]
        %v507 = vld [vmem:[%s1 + $0x28] sm:$0xff]
        %v508 = vld [vmem:[%s1 + $0x30] sm:$0xff]
        %v509 = vld [vmem:[%s1 + $0x38] sm:$0xff]
        %511 = vset.pattern.permute.xlu0 0
        %512 = vperm.xlu0 %511, %v502
        %v513 = vpop.permute.xlu0 %512
        %516 = vset.pattern.permute.xlu0 0
        %517 = vperm.xlu0 %516, %v503
        %v518 = vpop.permute.xlu0 %517
        %521 = vset.pattern.permute.xlu0 0
        %522 = vperm.xlu0 %521, %v504
        %v523 = vpop.permute.xlu0 %522
        %526 = vset.pattern.permute.xlu0 0
        %527 = vperm.xlu0 %526, %v505
        %v528 = vpop.permute.xlu0 %527
        %531 = vset.pattern.permute.xlu0 0
        %532 = vperm.xlu0 %531, %v506
        %v533 = vpop.permute.xlu0 %532
        %536 = vset.pattern.permute.xlu0 0
        %537 = vperm.xlu0 %536, %v507
        %v538 = vpop.permute.xlu0 %537
        %541 = vset.pattern.permute.xlu0 0
        %542 = vperm.xlu0 %541, %v508
        %v543 = vpop.permute.xlu0 %542
        %546 = vset.pattern.permute.xlu0 0
        %547 = vperm.xlu0 %546, %v509
        %v548 = vpop.permute.xlu0 %547
        %v552 = vlaneseq
        %v553 = vshrl.u32 %v552, 7
        %v554 = vsub.s32 0, %v553
        %v555 = vrot.slane %v500, %v554
        %v556 = vlaneseq
        %v557 = vshrl.u32 %v556, 7
        %v558 = vsub.s32 4, %v557
        %v559 = vrot.slane %v500, %v558
        %v560 = vlaneseq
        %v561 = vshrl.u32 %v560, 7
        %v562 = vsub.s32 0, %v561
        %v563 = vrot.slane %v501, %v562
        %v564 = vlaneseq
        %v565 = vshrl.u32 %v564, 7
        %v566 = vsub.s32 4, %v565
        %v567 = vrot.slane %v501, %v566
        %v572 = vlaneseq
        %v573 = vshrl.u32 %v572, 7
        %v574 = vsub.s32 0, %v573
        %v575 = vrot.slane %v555, %v574
        %v576 = vlaneseq
        %v577 = vshrl.u32 %v576, 7
        %v578 = vsub.s32 0, %v577
        %v579 = vrot.slane %v559, %v578
        %v580 = vlaneseq
        %v581 = vshrl.u32 %v580, 7
        %v582 = vsub.s32 0, %v581
        %v583 = vrot.slane %v563, %v582
        %v584 = vlaneseq
        %v585 = vshrl.u32 %v584, 7
        %v586 = vsub.s32 0, %v585
        %v587 = vrot.slane %v567, %v586
        %v588 = vmul.f32 %v513, %v575
        %v589 = vmul.f32 %v513, %v579
        %v590 = vmul.f32 %v513, %v583
        %v591 = vmul.f32 %v513, %v587
        %v592 = vmul.f32 %v518, %v575
        %v593 = vmul.f32 %v518, %v579
        %v594 = vmul.f32 %v518, %v583
        %v595 = vmul.f32 %v518, %v587
        %v596 = vmul.f32 %v523, %v575
        %v597 = vmul.f32 %v523, %v579
        %v598 = vmul.f32 %v523, %v583
        %v599 = vmul.f32 %v523, %v587
        %v600 = vmul.f32 %v528, %v575
        %v601 = vmul.f32 %v528, %v579
        %v602 = vmul.f32 %v528, %v583
        %v603 = vmul.f32 %v528, %v587
        %v604 = vmul.f32 %v533, %v575
        %v605 = vmul.f32 %v533, %v579
        %v606 = vmul.f32 %v533, %v583
        %v607 = vmul.f32 %v533, %v587
        %v608 = vmul.f32 %v538, %v575
        %v609 = vmul.f32 %v538, %v579
        %v610 = vmul.f32 %v538, %v583
        %v611 = vmul.f32 %v538, %v587
        %v612 = vmul.f32 %v543, %v575
        %v613 = vmul.f32 %v543, %v579
        %v614 = vmul.f32 %v543, %v583
        %v615 = vmul.f32 %v543, %v587
        %v616 = vmul.f32 %v548, %v575
        %v617 = vmul.f32 %v548, %v579
        %v618 = vmul.f32 %v548, %v583
        %v619 = vmul.f32 %v548, %v587
        %620 = vset.pattern.permute.xlu0 1
        %621 = vperm.xlu0 %620, %v502
        %v622 = vpop.permute.xlu0 %621
        %624 = vset.pattern.permute.xlu0 1
        %625 = vperm.xlu0 %624, %v503
        %v626 = vpop.permute.xlu0 %625
        %628 = vset.pattern.permute.xlu0 1
        %629 = vperm.xlu0 %628, %v504
        %v630 = vpop.permute.xlu0 %629
        %632 = vset.pattern.permute.xlu0 1
        %633 = vperm.xlu0 %632, %v505
        %v634 = vpop.permute.xlu0 %633
        %636 = vset.pattern.permute.xlu0 1
        %637 = vperm.xlu0 %636, %v506
        %v638 = vpop.permute.xlu0 %637
        %640 = vset.pattern.permute.xlu0 1
        %641 = vperm.xlu0 %640, %v507
        %v642 = vpop.permute.xlu0 %641
        %644 = vset.pattern.permute.xlu0 1
        %645 = vperm.xlu0 %644, %v508
        %v646 = vpop.permute.xlu0 %645
        %648 = vset.pattern.permute.xlu0 1
        %649 = vperm.xlu0 %648, %v509
        %v650 = vpop.permute.xlu0 %649
        %v652 = vlaneseq
        %v653 = vshrl.u32 %v652, 7
        %v654 = vsub.s32 1, %v653
        %v655 = vrot.slane %v500, %v654
        %v656 = vlaneseq
        %v657 = vshrl.u32 %v656, 7
        %v658 = vsub.s32 5, %v657
        %v659 = vrot.slane %v500, %v658
        %v660 = vlaneseq
        %v661 = vshrl.u32 %v660, 7
        %v662 = vsub.s32 1, %v661
        %v663 = vrot.slane %v501, %v662
        %v664 = vlaneseq
        %v665 = vshrl.u32 %v664, 7
        %v666 = vsub.s32 5, %v665
        %v667 = vrot.slane %v501, %v666
        %v672 = vlaneseq
        %v673 = vshrl.u32 %v672, 7
        %v674 = vsub.s32 1, %v673
        %v675 = vrot.slane %v655, %v674
        %v676 = vlaneseq
        %v677 = vshrl.u32 %v676, 7
        %v678 = vsub.s32 1, %v677
        %v679 = vrot.slane %v659, %v678
        %v680 = vlaneseq
        %v681 = vshrl.u32 %v680, 7
        %v682 = vsub.s32 1, %v681
        %v683 = vrot.slane %v663, %v682
        %v684 = vlaneseq
        %v685 = vshrl.u32 %v684, 7
        %v686 = vsub.s32 1, %v685
        %v687 = vrot.slane %v667, %v686
        %v688 = vmul.f32 %v622, %v675
        %v689 = vmul.f32 %v622, %v679
        %v690 = vmul.f32 %v622, %v683
        %v691 = vmul.f32 %v622, %v687
        %v692 = vmul.f32 %v626, %v675
        %v693 = vmul.f32 %v626, %v679
        %v694 = vmul.f32 %v626, %v683
        %v695 = vmul.f32 %v626, %v687
        %v696 = vmul.f32 %v630, %v675
        %v697 = vmul.f32 %v630, %v679
        %v698 = vmul.f32 %v630, %v683
        %v699 = vmul.f32 %v630, %v687
        %v700 = vmul.f32 %v634, %v675
        %v701 = vmul.f32 %v634, %v679
        %v702 = vmul.f32 %v634, %v683
        %v703 = vmul.f32 %v634, %v687
        %v704 = vmul.f32 %v638, %v675
        %v705 = vmul.f32 %v638, %v679
        %v706 = vmul.f32 %v638, %v683
        %v707 = vmul.f32 %v638, %v687
        %v708 = vmul.f32 %v642, %v675
        %v709 = vmul.f32 %v642, %v679
        %v710 = vmul.f32 %v642, %v683
        %v711 = vmul.f32 %v642, %v687
        %v712 = vmul.f32 %v646, %v675
        %v713 = vmul.f32 %v646, %v679
        %v714 = vmul.f32 %v646, %v683
        %v715 = vmul.f32 %v646, %v687
        %v716 = vmul.f32 %v650, %v675
        %v717 = vmul.f32 %v650, %v679
        %v718 = vmul.f32 %v650, %v683
        %v719 = vmul.f32 %v650, %v687
        %v720 = vadd.f32 %v588, %v688
        %v721 = vadd.f32 %v589, %v689
        %v722 = vadd.f32 %v590, %v690
        %v723 = vadd.f32 %v591, %v691
        %v724 = vadd.f32 %v592, %v692
        %v725 = vadd.f32 %v593, %v693
        %v726 = vadd.f32 %v594, %v694
        %v727 = vadd.f32 %v595, %v695
        %v728 = vadd.f32 %v596, %v696
        %v729 = vadd.f32 %v597, %v697
        %v730 = vadd.f32 %v598, %v698
        %v731 = vadd.f32 %v599, %v699
        %v732 = vadd.f32 %v600, %v700
        %v733 = vadd.f32 %v601, %v701
        %v734 = vadd.f32 %v602, %v702
        %v735 = vadd.f32 %v603, %v703
        %v736 = vadd.f32 %v604, %v704
        %v737 = vadd.f32 %v605, %v705
        %v738 = vadd.f32 %v606, %v706
        %v739 = vadd.f32 %v607, %v707
        %v740 = vadd.f32 %v608, %v708
        %v741 = vadd.f32 %v609, %v709
        %v742 = vadd.f32 %v610, %v710
        %v743 = vadd.f32 %v611, %v711
        %v744 = vadd.f32 %v612, %v712
        %v745 = vadd.f32 %v613, %v713
        %v746 = vadd.f32 %v614, %v714
        %v747 = vadd.f32 %v615, %v715
        %v748 = vadd.f32 %v616, %v716
        %v749 = vadd.f32 %v617, %v717
        %v750 = vadd.f32 %v618, %v718
        %v751 = vadd.f32 %v619, %v719
        %752 = vset.pattern.permute.xlu0 2
        %753 = vperm.xlu0 %752, %v502
        %v754 = vpop.permute.xlu0 %753
        %756 = vset.pattern.permute.xlu0 2
        %757 = vperm.xlu0 %756, %v503
        %v758 = vpop.permute.xlu0 %757
        %760 = vset.pattern.permute.xlu0 2
        %761 = vperm.xlu0 %760, %v504
        %v762 = vpop.permute.xlu0 %761
        %764 = vset.pattern.permute.xlu0 2
        %765 = vperm.xlu0 %764, %v505
        %v766 = vpop.permute.xlu0 %765
        %768 = vset.pattern.permute.xlu0 2
        %769 = vperm.xlu0 %768, %v506
        %v770 = vpop.permute.xlu0 %769
        %772 = vset.pattern.permute.xlu0 2
        %773 = vperm.xlu0 %772, %v507
        %v774 = vpop.permute.xlu0 %773
        %776 = vset.pattern.permute.xlu0 2
        %777 = vperm.xlu0 %776, %v508
        %v778 = vpop.permute.xlu0 %777
        %780 = vset.pattern.permute.xlu0 2
        %781 = vperm.xlu0 %780, %v509
        %v782 = vpop.permute.xlu0 %781
        %v784 = vlaneseq
        %v785 = vshrl.u32 %v784, 7
        %v786 = vsub.s32 2, %v785
        %v787 = vrot.slane %v500, %v786
        %v788 = vlaneseq
        %v789 = vshrl.u32 %v788, 7
        %v790 = vsub.s32 6, %v789
        %v791 = vrot.slane %v500, %v790
        %v792 = vlaneseq
        %v793 = vshrl.u32 %v792, 7
        %v794 = vsub.s32 2, %v793
        %v795 = vrot.slane %v501, %v794
        %v796 = vlaneseq
        %v797 = vshrl.u32 %v796, 7
        %v798 = vsub.s32 6, %v797
        %v799 = vrot.slane %v501, %v798
        %v804 = vlaneseq
        %v805 = vshrl.u32 %v804, 7
        %v806 = vsub.s32 2, %v805
        %v807 = vrot.slane %v787, %v806
        %v808 = vlaneseq
        %v809 = vshrl.u32 %v808, 7
        %v810 = vsub.s32 2, %v809
        %v811 = vrot.slane %v791, %v810
        %v812 = vlaneseq
        %v813 = vshrl.u32 %v812, 7
        %v814 = vsub.s32 2, %v813
        %v815 = vrot.slane %v795, %v814
        %v816 = vlaneseq
        %v817 = vshrl.u32 %v816, 7
        %v818 = vsub.s32 2, %v817
        %v819 = vrot.slane %v799, %v818
        %v820 = vmul.f32 %v754, %v807
        %v821 = vmul.f32 %v754, %v811
        %v822 = vmul.f32 %v754, %v815
        %v823 = vmul.f32 %v754, %v819
        %v824 = vmul.f32 %v758, %v807
        %v825 = vmul.f32 %v758, %v811
        %v826 = vmul.f32 %v758, %v815
        %v827 = vmul.f32 %v758, %v819
        %v828 = vmul.f32 %v762, %v807
        %v829 = vmul.f32 %v762, %v811
        %v830 = vmul.f32 %v762, %v815
        %v831 = vmul.f32 %v762, %v819
        %v832 = vmul.f32 %v766, %v807
        %v833 = vmul.f32 %v766, %v811
        %v834 = vmul.f32 %v766, %v815
        %v835 = vmul.f32 %v766, %v819
        %v836 = vmul.f32 %v770, %v807
        %v837 = vmul.f32 %v770, %v811
        %v838 = vmul.f32 %v770, %v815
        %v839 = vmul.f32 %v770, %v819
        %v840 = vmul.f32 %v774, %v807
        %v841 = vmul.f32 %v774, %v811
        %v842 = vmul.f32 %v774, %v815
        %v843 = vmul.f32 %v774, %v819
        %v844 = vmul.f32 %v778, %v807
        %v845 = vmul.f32 %v778, %v811
        %v846 = vmul.f32 %v778, %v815
        %v847 = vmul.f32 %v778, %v819
        %v848 = vmul.f32 %v782, %v807
        %v849 = vmul.f32 %v782, %v811
        %v850 = vmul.f32 %v782, %v815
        %v851 = vmul.f32 %v782, %v819
        %v852 = vadd.f32 %v720, %v820
        %v853 = vadd.f32 %v721, %v821
        %v854 = vadd.f32 %v722, %v822
        %v855 = vadd.f32 %v723, %v823
        %v856 = vadd.f32 %v724, %v824
        %v857 = vadd.f32 %v725, %v825
        %v858 = vadd.f32 %v726, %v826
        %v859 = vadd.f32 %v727, %v827
        %v860 = vadd.f32 %v728, %v828
        %v861 = vadd.f32 %v729, %v829
        %v862 = vadd.f32 %v730, %v830
        %v863 = vadd.f32 %v731, %v831
        %v864 = vadd.f32 %v732, %v832
        %v865 = vadd.f32 %v733, %v833
        %v866 = vadd.f32 %v734, %v834
        %v867 = vadd.f32 %v735, %v835
        %v868 = vadd.f32 %v736, %v836
        %v869 = vadd.f32 %v737, %v837
        %v870 = vadd.f32 %v738, %v838
        %v871 = vadd.f32 %v739, %v839
        %v872 = vadd.f32 %v740, %v840
        %v873 = vadd.f32 %v741, %v841
        %v874 = vadd.f32 %v742, %v842
        %v875 = vadd.f32 %v743, %v843
        %v876 = vadd.f32 %v744, %v844
        %v877 = vadd.f32 %v745, %v845
        %v878 = vadd.f32 %v746, %v846
        %v879 = vadd.f32 %v747, %v847
        %v880 = vadd.f32 %v748, %v848
        %v881 = vadd.f32 %v749, %v849
        %v882 = vadd.f32 %v750, %v850
        %v883 = vadd.f32 %v751, %v851
        %884 = vset.pattern.permute.xlu0 3
        %885 = vperm.xlu0 %884, %v502
        %v886 = vpop.permute.xlu0 %885
        %888 = vset.pattern.permute.xlu0 3
        %889 = vperm.xlu0 %888, %v503
        %v890 = vpop.permute.xlu0 %889
        %892 = vset.pattern.permute.xlu0 3
        %893 = vperm.xlu0 %892, %v504
        %v894 = vpop.permute.xlu0 %893
        %896 = vset.pattern.permute.xlu0 3
        %897 = vperm.xlu0 %896, %v505
        %v898 = vpop.permute.xlu0 %897
        %900 = vset.pattern.permute.xlu0 3
        %901 = vperm.xlu0 %900, %v506
        %v902 = vpop.permute.xlu0 %901
        %904 = vset.pattern.permute.xlu0 3
        %905 = vperm.xlu0 %904, %v507
        %v906 = vpop.permute.xlu0 %905
        %908 = vset.pattern.permute.xlu0 3
        %909 = vperm.xlu0 %908, %v508
        %v910 = vpop.permute.xlu0 %909
        %912 = vset.pattern.permute.xlu0 3
        %913 = vperm.xlu0 %912, %v509
        %v914 = vpop.permute.xlu0 %913
        %v916 = vlaneseq
        %v917 = vshrl.u32 %v916, 7
        %v918 = vsub.s32 3, %v917
        %v919 = vrot.slane %v500, %v918
        %v920 = vlaneseq
        %v921 = vshrl.u32 %v920, 7
        %v922 = vsub.s32 7, %v921
        %v923 = vrot.slane %v500, %v922
        %v924 = vlaneseq
        %v925 = vshrl.u32 %v924, 7
        %v926 = vsub.s32 3, %v925
        %v927 = vrot.slane %v501, %v926
        %v928 = vlaneseq
        %v929 = vshrl.u32 %v928, 7
        %v930 = vsub.s32 7, %v929
        %v931 = vrot.slane %v501, %v930
        %v936 = vlaneseq
        %v937 = vshrl.u32 %v936, 7
        %v938 = vsub.s32 3, %v937
        %v939 = vrot.slane %v919, %v938
        %v940 = vlaneseq
        %v941 = vshrl.u32 %v940, 7
        %v942 = vsub.s32 3, %v941
        %v943 = vrot.slane %v923, %v942
        %v944 = vlaneseq
        %v945 = vshrl.u32 %v944, 7
        %v946 = vsub.s32 3, %v945
        %v947 = vrot.slane %v927, %v946
        %v948 = vlaneseq
        %v949 = vshrl.u32 %v948, 7
        %v950 = vsub.s32 3, %v949
        %v951 = vrot.slane %v931, %v950
        %v952 = vmul.f32 %v886, %v939
        %v953 = vmul.f32 %v886, %v943
        %v954 = vmul.f32 %v886, %v947
        %v955 = vmul.f32 %v886, %v951
        %v956 = vmul.f32 %v890, %v939
        %v957 = vmul.f32 %v890, %v943
        %v958 = vmul.f32 %v890, %v947
        %v959 = vmul.f32 %v890, %v951
        %v960 = vmul.f32 %v894, %v939
        %v961 = vmul.f32 %v894, %v943
        %v962 = vmul.f32 %v894, %v947
        %v963 = vmul.f32 %v894, %v951
        %v964 = vmul.f32 %v898, %v939
        %v965 = vmul.f32 %v898, %v943
        %v966 = vmul.f32 %v898, %v947
        %v967 = vmul.f32 %v898, %v951
        %v968 = vmul.f32 %v902, %v939
        %v969 = vmul.f32 %v902, %v943
        %v970 = vmul.f32 %v902, %v947
        %v971 = vmul.f32 %v902, %v951
        %v972 = vmul.f32 %v906, %v939
        %v973 = vmul.f32 %v906, %v943
        %v974 = vmul.f32 %v906, %v947
        %v975 = vmul.f32 %v906, %v951
        %v976 = vmul.f32 %v910, %v939
        %v977 = vmul.f32 %v910, %v943
        %v978 = vmul.f32 %v910, %v947
        %v979 = vmul.f32 %v910, %v951
        %v980 = vmul.f32 %v914, %v939
        %v981 = vmul.f32 %v914, %v943
        %v982 = vmul.f32 %v914, %v947
        %v983 = vmul.f32 %v914, %v951
        %v984 = vadd.f32 %v852, %v952
        %v985 = vadd.f32 %v853, %v953
        %v986 = vadd.f32 %v854, %v954
        %v987 = vadd.f32 %v855, %v955
        %v988 = vadd.f32 %v856, %v956
        %v989 = vadd.f32 %v857, %v957
        %v990 = vadd.f32 %v858, %v958
        %v991 = vadd.f32 %v859, %v959
        %v992 = vadd.f32 %v860, %v960
        %v993 = vadd.f32 %v861, %v961
        %v994 = vadd.f32 %v862, %v962
        %v995 = vadd.f32 %v863, %v963
        %v996 = vadd.f32 %v864, %v964
        %v997 = vadd.f32 %v865, %v965
        %v998 = vadd.f32 %v866, %v966
        %v999 = vadd.f32 %v867, %v967
        %v1000 = vadd.f32 %v868, %v968
        %v1001 = vadd.f32 %v869, %v969
        %v1002 = vadd.f32 %v870, %v970
        %v1003 = vadd.f32 %v871, %v971
        %v1004 = vadd.f32 %v872, %v972
        %v1005 = vadd.f32 %v873, %v973
        %v1006 = vadd.f32 %v874, %v974
        %v1007 = vadd.f32 %v875, %v975
        %v1008 = vadd.f32 %v876, %v976
        %v1009 = vadd.f32 %v877, %v977
        %v1010 = vadd.f32 %v878, %v978
        %v1011 = vadd.f32 %v879, %v979
        %v1012 = vadd.f32 %v880, %v980
        %v1013 = vadd.f32 %v881, %v981
        %v1014 = vadd.f32 %v882, %v982
        %v1015 = vadd.f32 %v883, %v983
        %v1016 = vld [vmem:[%s2] sm:$0xff]
        %v1017 = vld [vmem:[%s2 + $0x8] sm:$0xff]
        %v1018 = vld [vmem:[%s2 + $0x10] sm:$0xff]
        %v1019 = vld [vmem:[%s2 + $0x18] sm:$0xff]
        %v1020 = vld [vmem:[%s2 + $0x20] sm:$0xff]
        %v1021 = vld [vmem:[%s2 + $0x28] sm:$0xff]
        %v1022 = vld [vmem:[%s2 + $0x30] sm:$0xff]
        %v1023 = vld [vmem:[%s2 + $0x38] sm:$0xff]
        %1025 = vset.pattern.permute.xlu0 0
        %1026 = vperm.xlu0 %1025, %v1016
        %v1027 = vpop.permute.xlu0 %1026
        %1030 = vset.pattern.permute.xlu0 0
        %1031 = vperm.xlu0 %1030, %v1017
        %v1032 = vpop.permute.xlu0 %1031
        %1035 = vset.pattern.permute.xlu0 0
        %1036 = vperm.xlu0 %1035, %v1018
        %v1037 = vpop.permute.xlu0 %1036
        %1040 = vset.pattern.permute.xlu0 0
        %1041 = vperm.xlu0 %1040, %v1019
        %v1042 = vpop.permute.xlu0 %1041
        %1045 = vset.pattern.permute.xlu0 0
        %1046 = vperm.xlu0 %1045, %v1020
        %v1047 = vpop.permute.xlu0 %1046
        %1050 = vset.pattern.permute.xlu0 0
        %1051 = vperm.xlu0 %1050, %v1021
        %v1052 = vpop.permute.xlu0 %1051
        %1055 = vset.pattern.permute.xlu0 0
        %1056 = vperm.xlu0 %1055, %v1022
        %v1057 = vpop.permute.xlu0 %1056
        %1060 = vset.pattern.permute.xlu0 0
        %1061 = vperm.xlu0 %1060, %v1023
        %v1062 = vpop.permute.xlu0 %1061
        %v1064 = vadd.f32 %v984, %v1027
        %v1065 = vadd.f32 %v985, %v1027
        %v1066 = vadd.f32 %v986, %v1027
        %v1067 = vadd.f32 %v987, %v1027
        %v1068 = vadd.f32 %v988, %v1032
        %v1069 = vadd.f32 %v989, %v1032
        %v1070 = vadd.f32 %v990, %v1032
        %v1071 = vadd.f32 %v991, %v1032
        %v1072 = vadd.f32 %v992, %v1037
        %v1073 = vadd.f32 %v993, %v1037
        %v1074 = vadd.f32 %v994, %v1037
        %v1075 = vadd.f32 %v995, %v1037
        %v1076 = vadd.f32 %v996, %v1042
        %v1077 = vadd.f32 %v997, %v1042
        %v1078 = vadd.f32 %v998, %v1042
        %v1079 = vadd.f32 %v999, %v1042
        %v1080 = vadd.f32 %v1000, %v1047
        %v1081 = vadd.f32 %v1001, %v1047
        %v1082 = vadd.f32 %v1002, %v1047
        %v1083 = vadd.f32 %v1003, %v1047
        %v1084 = vadd.f32 %v1004, %v1052
        %v1085 = vadd.f32 %v1005, %v1052
        %v1086 = vadd.f32 %v1006, %v1052
        %v1087 = vadd.f32 %v1007, %v1052
        %v1088 = vadd.f32 %v1008, %v1057
        %v1089 = vadd.f32 %v1009, %v1057
        %v1090 = vadd.f32 %v1010, %v1057
        %v1091 = vadd.f32 %v1011, %v1057
        %v1092 = vadd.f32 %v1012, %v1062
        %v1093 = vadd.f32 %v1013, %v1062
        %v1094 = vadd.f32 %v1014, %v1062
        %v1095 = vadd.f32 %v1015, %v1062
        %v1096 = vmax.f32 %v1064, 0.0
        %v1097 = vmax.f32 %v1065, 0.0
        %v1098 = vmax.f32 %v1066, 0.0
        %v1099 = vmax.f32 %v1067, 0.0
        %v1100 = vmax.f32 %v1068, 0.0
        %v1101 = vmax.f32 %v1069, 0.0
        %v1102 = vmax.f32 %v1070, 0.0
        %v1103 = vmax.f32 %v1071, 0.0
        %v1104 = vmax.f32 %v1072, 0.0
        %v1105 = vmax.f32 %v1073, 0.0
        %v1106 = vmax.f32 %v1074, 0.0
        %v1107 = vmax.f32 %v1075, 0.0
        %v1108 = vmax.f32 %v1076, 0.0
        %v1109 = vmax.f32 %v1077, 0.0
        %v1110 = vmax.f32 %v1078, 0.0
        %v1111 = vmax.f32 %v1079, 0.0
        %v1112 = vmax.f32 %v1080, 0.0
        %v1113 = vmax.f32 %v1081, 0.0
        %v1114 = vmax.f32 %v1082, 0.0
        %v1115 = vmax.f32 %v1083, 0.0
        %v1116 = vmax.f32 %v1084, 0.0
        %v1117 = vmax.f32 %v1085, 0.0
        %v1118 = vmax.f32 %v1086, 0.0
        %v1119 = vmax.f32 %v1087, 0.0
        %v1120 = vmax.f32 %v1088, 0.0
        %v1121 = vmax.f32 %v1089, 0.0
        %v1122 = vmax.f32 %v1090, 0.0
        %v1123 = vmax.f32 %v1091, 0.0
        %v1124 = vmax.f32 %v1092, 0.0
        %v1125 = vmax.f32 %v1093, 0.0
        %v1126 = vmax.f32 %v1094, 0.0
        %v1127 = vmax.f32 %v1095, 0.0
        %v1128 = vld [vmem:[%s3] sm:$0xf]
        %v1129 = vld [vmem:[%s3 + $0x4] sm:$0xf]
        %v1130 = vld [vmem:[%s3 + $0x8] sm:$0xf]
        %v1131 = vld [vmem:[%s3 + $0xc] sm:$0xf]
        %v1132 = vld [vmem:[%s3 + $0x10] sm:$0xf]
        %v1133 = vld [vmem:[%s3 + $0x14] sm:$0xf]
        %v1134 = vld [vmem:[%s3 + $0x18] sm:$0xf]
        %v1135 = vld [vmem:[%s3 + $0x1c] sm:$0xf]
        %v1136 = vld [vmem:[%s3 + $0x20] sm:$0xf]
        %v1137 = vld [vmem:[%s3 + $0x24] sm:$0xf]
        %v1138 = vld [vmem:[%s3 + $0x28] sm:$0xf]
        %v1139 = vld [vmem:[%s3 + $0x2c] sm:$0xf]
        %v1140 = vld [vmem:[%s3 + $0x30] sm:$0xf]
        %v1141 = vld [vmem:[%s3 + $0x34] sm:$0xf]
        %v1142 = vld [vmem:[%s3 + $0x38] sm:$0xf]
        %v1143 = vld [vmem:[%s3 + $0x3c] sm:$0xf]
        %v1144 = vpack.c.bf16 %v1100, %v1096
        %v1145 = vpack.c.bf16 %v1101, %v1097
        %v1146 = vpack.c.bf16 %v1102, %v1098
        %v1147 = vpack.c.bf16 %v1103, %v1099
        %v1148 = vpack.c.bf16 %v1108, %v1104
        %v1149 = vpack.c.bf16 %v1109, %v1105
        %v1150 = vpack.c.bf16 %v1110, %v1106
        %v1151 = vpack.c.bf16 %v1111, %v1107
        %v1152 = vpack.c.bf16 %v1116, %v1112
        %v1153 = vpack.c.bf16 %v1117, %v1113
        %v1154 = vpack.c.bf16 %v1118, %v1114
        %v1155 = vpack.c.bf16 %v1119, %v1115
        %v1156 = vpack.c.bf16 %v1124, %v1120
        %v1157 = vpack.c.bf16 %v1125, %v1121
        %v1158 = vpack.c.bf16 %v1126, %v1122
        %v1159 = vpack.c.bf16 %v1127, %v1123
        %v1160 = vld [vmem:[%s4] sm:$0xff]
        %v1161 = vld [vmem:[%s4 + $0x8] sm:$0xff]
        %v1162 = vld [vmem:[%s4 + $0x10] sm:$0xff]
        %v1163 = vld [vmem:[%s4 + $0x18] sm:$0xff]
        %v1164 = vld [vmem:[%s4 + $0x20] sm:$0xff]
        %v1165 = vld [vmem:[%s4 + $0x28] sm:$0xff]
        %v1166 = vld [vmem:[%s4 + $0x30] sm:$0xff]
        %v1167 = vld [vmem:[%s4 + $0x38] sm:$0xff]
        %v1168 = vld [vmem:[%s4 + $0x40] sm:$0xff]
        %v1169 = vld [vmem:[%s4 + $0x48] sm:$0xff]
        %v1170 = vld [vmem:[%s4 + $0x50] sm:$0xff]
        %v1171 = vld [vmem:[%s4 + $0x58] sm:$0xff]
        %v1172 = vld [vmem:[%s4 + $0x60] sm:$0xff]
        %v1173 = vld [vmem:[%s4 + $0x68] sm:$0xff]
        %v1174 = vld [vmem:[%s4 + $0x70] sm:$0xff]
        %v1175 = vld [vmem:[%s4 + $0x78] sm:$0xff]
        %1177 = vset.pattern.permute.xlu0 0
        %1178 = vperm.xlu0 %1177, %v1160
        %v1179 = vpop.permute.xlu0 %1178
        %1182 = vset.pattern.permute.xlu0 0
        %1183 = vperm.xlu0 %1182, %v1161
        %v1184 = vpop.permute.xlu0 %1183
        %1187 = vset.pattern.permute.xlu0 0
        %1188 = vperm.xlu0 %1187, %v1162
        %v1189 = vpop.permute.xlu0 %1188
        %1192 = vset.pattern.permute.xlu0 0
        %1193 = vperm.xlu0 %1192, %v1163
        %v1194 = vpop.permute.xlu0 %1193
        %1197 = vset.pattern.permute.xlu0 0
        %1198 = vperm.xlu0 %1197, %v1164
        %v1199 = vpop.permute.xlu0 %1198
        %1202 = vset.pattern.permute.xlu0 0
        %1203 = vperm.xlu0 %1202, %v1165
        %v1204 = vpop.permute.xlu0 %1203
        %1207 = vset.pattern.permute.xlu0 0
        %1208 = vperm.xlu0 %1207, %v1166
        %v1209 = vpop.permute.xlu0 %1208
        %1212 = vset.pattern.permute.xlu0 0
        %1213 = vperm.xlu0 %1212, %v1167
        %v1214 = vpop.permute.xlu0 %1213
        %1217 = vset.pattern.permute.xlu0 0
        %1218 = vperm.xlu0 %1217, %v1168
        %v1219 = vpop.permute.xlu0 %1218
        %1222 = vset.pattern.permute.xlu0 0
        %1223 = vperm.xlu0 %1222, %v1169
        %v1224 = vpop.permute.xlu0 %1223
        %1227 = vset.pattern.permute.xlu0 0
        %1228 = vperm.xlu0 %1227, %v1170
        %v1229 = vpop.permute.xlu0 %1228
        %1232 = vset.pattern.permute.xlu0 0
        %1233 = vperm.xlu0 %1232, %v1171
        %v1234 = vpop.permute.xlu0 %1233
        %1237 = vset.pattern.permute.xlu0 0
        %1238 = vperm.xlu0 %1237, %v1172
        %v1239 = vpop.permute.xlu0 %1238
        %1242 = vset.pattern.permute.xlu0 0
        %1243 = vperm.xlu0 %1242, %v1173
        %v1244 = vpop.permute.xlu0 %1243
        %1247 = vset.pattern.permute.xlu0 0
        %1248 = vperm.xlu0 %1247, %v1174
        %v1249 = vpop.permute.xlu0 %1248
        %1252 = vset.pattern.permute.xlu0 0
        %1253 = vperm.xlu0 %1252, %v1175
        %v1254 = vpop.permute.xlu0 %1253
        %v1272 = vunpack.c.l.b16 %v1128
        %v1273 = vunpack.c.l.b16 %v1129
        %v1274 = vunpack.c.l.b16 %v1130
        %v1275 = vunpack.c.l.b16 %v1131
        %v1276 = vunpack.c.l.b16 %v1132
        %v1277 = vunpack.c.l.b16 %v1133
        %v1278 = vunpack.c.l.b16 %v1134
        %v1279 = vunpack.c.l.b16 %v1135
        %v1280 = vunpack.c.l.b16 %v1136
        %v1281 = vunpack.c.l.b16 %v1137
        %v1282 = vunpack.c.l.b16 %v1138
        %v1283 = vunpack.c.l.b16 %v1139
        %v1284 = vunpack.c.l.b16 %v1140
        %v1285 = vunpack.c.l.b16 %v1141
        %v1286 = vunpack.c.l.b16 %v1142
        %v1287 = vunpack.c.l.b16 %v1143
        %v1288 = vpack.c.b16 %v1273, %v1272
        %v1289 = vpack.c.b16 %v1275, %v1274
        %v1290 = vpack.c.b16 %v1277, %v1276
        %v1291 = vpack.c.b16 %v1279, %v1278
        %v1292 = vpack.c.b16 %v1281, %v1280
        %v1293 = vpack.c.b16 %v1283, %v1282
        %v1294 = vpack.c.b16 %v1285, %v1284
        %v1295 = vpack.c.b16 %v1287, %v1286
        %vm1296 = vcmask 523264
        %v1298 = vsel %vm1296, %v1288, 0
        %v1301 = vsel %vm1296, %v1289, 0
        %v1304 = vsel %vm1296, %v1290, 0
        %v1307 = vsel %vm1296, %v1291, 0
        %v1310 = vsel %vm1296, %v1292, 0
        %v1313 = vsel %vm1296, %v1293, 0
        %v1316 = vsel %vm1296, %v1294, 0
        %v1319 = vsel %vm1296, %v1295, 0
        %1321 = vmatprep.subr.bf16.mxu0 0
        %1322 = vmatpush1.bf16.msra.mxu0 0
        %1323 = vmatprep.subr.bf16.mxu0 0
        %1324 = vmatpush1.bf16.msra.mxu0 0
        %1325 = vmatprep.subr.bf16.mxu0 0
        %1326 = vmatpush1.bf16.msra.mxu0 0
        %1327 = vmatprep.subr.bf16.mxu0 0
        %1328 = vmatpush1.bf16.msra.mxu0 0
        %1329 = vmatprep.subr.bf16.mxu0 %v1157
        %1330 = vmatpush1.bf16.msra.mxu0 %v1156
        %1331 = vmatprep.subr.bf16.mxu0 %v1153
        %1332 = vmatpush1.bf16.msra.mxu0 %v1152
        %1333 = vmatprep.subr.bf16.mxu0 %v1149
        %1334 = vmatpush1.bf16.msra.mxu0 %v1148
        %1335 = vmatprep.subr.bf16.mxu0 %v1145
        %1336 = vmatpush1.bf16.msra.mxu0 %v1144
        %1337 = vmatprep.subr.bf16.mxu0 0
        %1338 = vmatpush2.bf16.msra.mxu0 0
        %1339 = vmatprep.subr.bf16.mxu0 0
        %1340 = vmatpush2.bf16.msra.mxu0 0
        %1341 = vmatprep.subr.bf16.mxu0 0
        %1342 = vmatpush2.bf16.msra.mxu0 0
        %1343 = vmatprep.subr.bf16.mxu0 0
        %1344 = vmatpush2.bf16.msra.mxu0 0
        %1345 = vmatprep.subr.bf16.mxu0 0
        %1346 = vmatpush2.bf16.msra.mxu0 0
        %1347 = vmatprep.subr.bf16.mxu0 0
        %1348 = vmatpush2.bf16.msra.mxu0 0
        %1349 = vmatprep.subr.bf16.mxu0 0
        %1350 = vmatpush2.bf16.msra.mxu0 0
        %1351 = vmatprep.subr.bf16.mxu0 0
        %1352 = vmatpush2.bf16.msra.mxu0 0
        %1353 = vmatprep.mubr.bf16.mxu0 0
        %1354 = vmatmul.mubr.bf16.gmra.mxu0 %v1298
        %v1355 = vpop.f32.mrf.mxu0
        %v1356 = vadd.f32 %v1179, %v1355
        %v1357 = vpop.f32.mrf.mxu0
        %v1358 = vadd.f32 %v1179, %v1357
        %v1359 = vpop.f32.mrf.mxu0
        %v1360 = vadd.f32 %v1184, %v1359
        %v1361 = vpop.f32.mrf.mxu0
        %v1362 = vadd.f32 %v1184, %v1361
        %1363 = vmatprep.mubr.bf16.mxu0 0
        %1364 = vmatmul.mubr.bf16.gmra.mxu0 %v1301
        %v1365 = vpop.f32.mrf.mxu0
        %v1366 = vadd.f32 %v1189, %v1365
        %v1367 = vpop.f32.mrf.mxu0
        %v1368 = vadd.f32 %v1189, %v1367
        %v1369 = vpop.f32.mrf.mxu0
        %v1370 = vadd.f32 %v1194, %v1369
        %v1371 = vpop.f32.mrf.mxu0
        %v1372 = vadd.f32 %v1194, %v1371
        %1373 = vmatprep.mubr.bf16.mxu0 0
        %1374 = vmatmul.mubr.bf16.gmra.mxu0 %v1304
        %v1375 = vpop.f32.mrf.mxu0
        %v1376 = vadd.f32 %v1199, %v1375
        %v1377 = vpop.f32.mrf.mxu0
        %v1378 = vadd.f32 %v1199, %v1377
        %v1379 = vpop.f32.mrf.mxu0
        %v1380 = vadd.f32 %v1204, %v1379
        %v1381 = vpop.f32.mrf.mxu0
        %v1382 = vadd.f32 %v1204, %v1381
        %1383 = vmatprep.mubr.bf16.mxu0 0
        %1384 = vmatmul.mubr.bf16.gmra.mxu0 %v1307
        %v1385 = vpop.f32.mrf.mxu0
        %v1386 = vadd.f32 %v1209, %v1385
        %v1387 = vpop.f32.mrf.mxu0
        %v1388 = vadd.f32 %v1209, %v1387
        %v1389 = vpop.f32.mrf.mxu0
        %v1390 = vadd.f32 %v1214, %v1389
        %v1391 = vpop.f32.mrf.mxu0
        %v1392 = vadd.f32 %v1214, %v1391
        %1393 = vmatprep.mubr.bf16.mxu0 0
        %1394 = vmatmul.mubr.bf16.gmra.mxu0 %v1310
        %v1395 = vpop.f32.mrf.mxu0
        %v1396 = vadd.f32 %v1219, %v1395
        %v1397 = vpop.f32.mrf.mxu0
        %v1398 = vadd.f32 %v1219, %v1397
        %v1399 = vpop.f32.mrf.mxu0
        %v1400 = vadd.f32 %v1224, %v1399
        %v1401 = vpop.f32.mrf.mxu0
        %v1402 = vadd.f32 %v1224, %v1401
        %1403 = vmatprep.mubr.bf16.mxu0 0
        %1404 = vmatmul.mubr.bf16.gmra.mxu0 %v1313
        %v1405 = vpop.f32.mrf.mxu0
        %v1406 = vadd.f32 %v1229, %v1405
        %v1407 = vpop.f32.mrf.mxu0
        %v1408 = vadd.f32 %v1229, %v1407
        %v1409 = vpop.f32.mrf.mxu0
        %v1410 = vadd.f32 %v1234, %v1409
        %v1411 = vpop.f32.mrf.mxu0
        %v1412 = vadd.f32 %v1234, %v1411
        %1413 = vmatprep.mubr.bf16.mxu0 0
        %1414 = vmatmul.mubr.bf16.gmra.mxu0 %v1316
        %v1415 = vpop.f32.mrf.mxu0
        %v1416 = vadd.f32 %v1239, %v1415
        %v1417 = vpop.f32.mrf.mxu0
        %v1418 = vadd.f32 %v1239, %v1417
        %v1419 = vpop.f32.mrf.mxu0
        %v1420 = vadd.f32 %v1244, %v1419
        %v1421 = vpop.f32.mrf.mxu0
        %v1422 = vadd.f32 %v1244, %v1421
        %1423 = vmatprep.mubr.bf16.mxu0 0
        %1424 = vmatmul.mubr.bf16.gmra.mxu0 %v1319
        %v1425 = vpop.f32.mrf.mxu0
        %v1426 = vadd.f32 %v1249, %v1425
        %v1427 = vpop.f32.mrf.mxu0
        %v1428 = vadd.f32 %v1249, %v1427
        %v1429 = vpop.f32.mrf.mxu0
        %v1430 = vadd.f32 %v1254, %v1429
        %v1431 = vpop.f32.mrf.mxu0
        %v1432 = vadd.f32 %v1254, %v1431
        %1433 = vdwg.mxu0
        %1434 = vmatprep.subr.bf16.mxu0 0
        %1435 = vmatpush1.bf16.msra.mxu0 0
        %1436 = vmatprep.subr.bf16.mxu0 0
        %1437 = vmatpush1.bf16.msra.mxu0 0
        %1438 = vmatprep.subr.bf16.mxu0 0
        %1439 = vmatpush1.bf16.msra.mxu0 0
        %1440 = vmatprep.subr.bf16.mxu0 0
        %1441 = vmatpush1.bf16.msra.mxu0 0
        %1442 = vmatprep.subr.bf16.mxu0 %v1159
        %1443 = vmatpush1.bf16.msra.mxu0 %v1158
        %1444 = vmatprep.subr.bf16.mxu0 %v1155
        %1445 = vmatpush1.bf16.msra.mxu0 %v1154
        %1446 = vmatprep.subr.bf16.mxu0 %v1151
        %1447 = vmatpush1.bf16.msra.mxu0 %v1150
        %1448 = vmatprep.subr.bf16.mxu0 %v1147
        %1449 = vmatpush1.bf16.msra.mxu0 %v1146
        %1450 = vmatprep.subr.bf16.mxu0 0
        %1451 = vmatpush2.bf16.msra.mxu0 0
        %1452 = vmatprep.subr.bf16.mxu0 0
        %1453 = vmatpush2.bf16.msra.mxu0 0
        %1454 = vmatprep.subr.bf16.mxu0 0
        %1455 = vmatpush2.bf16.msra.mxu0 0
        %1456 = vmatprep.subr.bf16.mxu0 0
        %1457 = vmatpush2.bf16.msra.mxu0 0
        %1458 = vmatprep.subr.bf16.mxu0 0
        %1459 = vmatpush2.bf16.msra.mxu0 0
        %1460 = vmatprep.subr.bf16.mxu0 0
        %1461 = vmatpush2.bf16.msra.mxu0 0
        %1462 = vmatprep.subr.bf16.mxu0 0
        %1463 = vmatpush2.bf16.msra.mxu0 0
        %1464 = vmatprep.subr.bf16.mxu0 0
        %1465 = vmatpush2.bf16.msra.mxu0 0
        %1466 = vmatprep.mubr.bf16.mxu0 0
        %1467 = vmatmul.mubr.bf16.gmra.mxu0 %v1298
        %v1468 = vpop.f32.mrf.mxu0
        %v1469 = vadd.f32 %v1179, %v1468
        %v1470 = vpop.f32.mrf.mxu0
        %v1471 = vadd.f32 %v1179, %v1470
        %v1472 = vpop.f32.mrf.mxu0
        %v1473 = vadd.f32 %v1184, %v1472
        %v1474 = vpop.f32.mrf.mxu0
        %v1475 = vadd.f32 %v1184, %v1474
        %1476 = vmatprep.mubr.bf16.mxu0 0
        %1477 = vmatmul.mubr.bf16.gmra.mxu0 %v1301
        %v1478 = vpop.f32.mrf.mxu0
        %v1479 = vadd.f32 %v1189, %v1478
        %v1480 = vpop.f32.mrf.mxu0
        %v1481 = vadd.f32 %v1189, %v1480
        %v1482 = vpop.f32.mrf.mxu0
        %v1483 = vadd.f32 %v1194, %v1482
        %v1484 = vpop.f32.mrf.mxu0
        %v1485 = vadd.f32 %v1194, %v1484
        %1486 = vmatprep.mubr.bf16.mxu0 0
        %1487 = vmatmul.mubr.bf16.gmra.mxu0 %v1304
        %v1488 = vpop.f32.mrf.mxu0
        %v1489 = vadd.f32 %v1199, %v1488
        %v1490 = vpop.f32.mrf.mxu0
        %v1491 = vadd.f32 %v1199, %v1490
        %v1492 = vpop.f32.mrf.mxu0
        %v1493 = vadd.f32 %v1204, %v1492
        %v1494 = vpop.f32.mrf.mxu0
        %v1495 = vadd.f32 %v1204, %v1494
        %1496 = vmatprep.mubr.bf16.mxu0 0
        %1497 = vmatmul.mubr.bf16.gmra.mxu0 %v1307
        %v1498 = vpop.f32.mrf.mxu0
        %v1499 = vadd.f32 %v1209, %v1498
        %v1500 = vpop.f32.mrf.mxu0
        %v1501 = vadd.f32 %v1209, %v1500
        %v1502 = vpop.f32.mrf.mxu0
        %v1503 = vadd.f32 %v1214, %v1502
        %v1504 = vpop.f32.mrf.mxu0
        %v1505 = vadd.f32 %v1214, %v1504
        %1506 = vmatprep.mubr.bf16.mxu0 0
        %1507 = vmatmul.mubr.bf16.gmra.mxu0 %v1310
        %v1508 = vpop.f32.mrf.mxu0
        %v1509 = vadd.f32 %v1219, %v1508
        %v1510 = vpop.f32.mrf.mxu0
        %v1511 = vadd.f32 %v1219, %v1510
        %v1512 = vpop.f32.mrf.mxu0
        %v1513 = vadd.f32 %v1224, %v1512
        %v1514 = vpop.f32.mrf.mxu0
        %v1515 = vadd.f32 %v1224, %v1514
        %1516 = vmatprep.mubr.bf16.mxu0 0
        %1517 = vmatmul.mubr.bf16.gmra.mxu0 %v1313
        %v1518 = vpop.f32.mrf.mxu0
        %v1519 = vadd.f32 %v1229, %v1518
        %v1520 = vpop.f32.mrf.mxu0
        %v1521 = vadd.f32 %v1229, %v1520
        %v1522 = vpop.f32.mrf.mxu0
        %v1523 = vadd.f32 %v1234, %v1522
        %v1524 = vpop.f32.mrf.mxu0
        %v1525 = vadd.f32 %v1234, %v1524
        %1526 = vmatprep.mubr.bf16.mxu0 0
        %1527 = vmatmul.mubr.bf16.gmra.mxu0 %v1316
        %v1528 = vpop.f32.mrf.mxu0
        %v1529 = vadd.f32 %v1239, %v1528
        %v1530 = vpop.f32.mrf.mxu0
        %v1531 = vadd.f32 %v1239, %v1530
        %v1532 = vpop.f32.mrf.mxu0
        %v1533 = vadd.f32 %v1244, %v1532
        %v1534 = vpop.f32.mrf.mxu0
        %v1535 = vadd.f32 %v1244, %v1534
        %1536 = vmatprep.mubr.bf16.mxu0 0
        %1537 = vmatmul.mubr.bf16.gmra.mxu0 %v1319
        %v1538 = vpop.f32.mrf.mxu0
        %v1539 = vadd.f32 %v1249, %v1538
        %v1540 = vpop.f32.mrf.mxu0
        %v1541 = vadd.f32 %v1249, %v1540
        %v1542 = vpop.f32.mrf.mxu0
        %v1543 = vadd.f32 %v1254, %v1542
        %v1544 = vpop.f32.mrf.mxu0
        %v1545 = vadd.f32 %v1254, %v1544
        %1546 = vdwg.mxu0
        %v1547 = vmax.f32 %v1356, 0.0
        %v1548 = vmax.f32 %v1358, 0.0
        %v1549 = vmax.f32 %v1469, 0.0
        %v1550 = vmax.f32 %v1471, 0.0
        %v1551 = vmax.f32 %v1360, 0.0
        %v1552 = vmax.f32 %v1362, 0.0
        %v1553 = vmax.f32 %v1473, 0.0
        %v1554 = vmax.f32 %v1475, 0.0
        %v1555 = vmax.f32 %v1366, 0.0
        %v1556 = vmax.f32 %v1368, 0.0
        %v1557 = vmax.f32 %v1479, 0.0
        %v1558 = vmax.f32 %v1481, 0.0
        %v1559 = vmax.f32 %v1370, 0.0
        %v1560 = vmax.f32 %v1372, 0.0
        %v1561 = vmax.f32 %v1483, 0.0
        %v1562 = vmax.f32 %v1485, 0.0
        %v1563 = vmax.f32 %v1376, 0.0
        %v1564 = vmax.f32 %v1378, 0.0
        %v1565 = vmax.f32 %v1489, 0.0
        %v1566 = vmax.f32 %v1491, 0.0
        %v1567 = vmax.f32 %v1380, 0.0
        %v1568 = vmax.f32 %v1382, 0.0
        %v1569 = vmax.f32 %v1493, 0.0
        %v1570 = vmax.f32 %v1495, 0.0
        %v1571 = vmax.f32 %v1386, 0.0
        %v1572 = vmax.f32 %v1388, 0.0
        %v1573 = vmax.f32 %v1499, 0.0
        %v1574 = vmax.f32 %v1501, 0.0
        %v1575 = vmax.f32 %v1390, 0.0
        %v1576 = vmax.f32 %v1392, 0.0
        %v1577 = vmax.f32 %v1503, 0.0
        %v1578 = vmax.f32 %v1505, 0.0
        %v1579 = vmax.f32 %v1396, 0.0
        %v1580 = vmax.f32 %v1398, 0.0
        %v1581 = vmax.f32 %v1509, 0.0
        %v1582 = vmax.f32 %v1511, 0.0
        %v1583 = vmax.f32 %v1400, 0.0
        %v1584 = vmax.f32 %v1402, 0.0
        %v1585 = vmax.f32 %v1513, 0.0
        %v1586 = vmax.f32 %v1515, 0.0
        %v1587 = vmax.f32 %v1406, 0.0
        %v1588 = vmax.f32 %v1408, 0.0
        %v1589 = vmax.f32 %v1519, 0.0
        %v1590 = vmax.f32 %v1521, 0.0
        %v1591 = vmax.f32 %v1410, 0.0
        %v1592 = vmax.f32 %v1412, 0.0
        %v1593 = vmax.f32 %v1523, 0.0
        %v1594 = vmax.f32 %v1525, 0.0
        %v1595 = vmax.f32 %v1416, 0.0
        %v1596 = vmax.f32 %v1418, 0.0
        %v1597 = vmax.f32 %v1529, 0.0
        %v1598 = vmax.f32 %v1531, 0.0
        %v1599 = vmax.f32 %v1420, 0.0
        %v1600 = vmax.f32 %v1422, 0.0
        %v1601 = vmax.f32 %v1533, 0.0
        %v1602 = vmax.f32 %v1535, 0.0
        %v1603 = vmax.f32 %v1426, 0.0
        %v1604 = vmax.f32 %v1428, 0.0
        %v1605 = vmax.f32 %v1539, 0.0
        %v1606 = vmax.f32 %v1541, 0.0
        %v1607 = vmax.f32 %v1430, 0.0
        %v1608 = vmax.f32 %v1432, 0.0
        %v1609 = vmax.f32 %v1543, 0.0
        %v1610 = vmax.f32 %v1545, 0.0
        %v1611 = vld [vmem:[#allocation3] sm:$0xf]
        %v1612 = vld [vmem:[#allocation3 + $0x4] sm:$0xf]
        %v1613 = vld [vmem:[#allocation3 + $0x8] sm:$0xf]
        %v1614 = vld [vmem:[#allocation3 + $0xc] sm:$0xf]
        %v1615 = vld [vmem:[#allocation3 + $0x10] sm:$0xf]
        %v1616 = vld [vmem:[#allocation3 + $0x14] sm:$0xf]
        %v1617 = vld [vmem:[#allocation3 + $0x18] sm:$0xf]
        %v1618 = vld [vmem:[#allocation3 + $0x1c] sm:$0xf]
        %v1619 = vld [vmem:[#allocation3 + $0x20] sm:$0xf]
        %v1620 = vld [vmem:[#allocation3 + $0x24] sm:$0xf]
        %v1621 = vld [vmem:[#allocation3 + $0x28] sm:$0xf]
        %v1622 = vld [vmem:[#allocation3 + $0x2c] sm:$0xf]
        %v1623 = vld [vmem:[#allocation3 + $0x30] sm:$0xf]
        %v1624 = vld [vmem:[#allocation3 + $0x34] sm:$0xf]
        %v1625 = vld [vmem:[#allocation3 + $0x38] sm:$0xf]
        %v1626 = vld [vmem:[#allocation3 + $0x3c] sm:$0xf]
        %v1627 = vld [vmem:[#allocation3 + $0x40] sm:$0xf]
        %v1628 = vld [vmem:[#allocation3 + $0x44] sm:$0xf]
        %v1629 = vld [vmem:[#allocation3 + $0x48] sm:$0xf]
        %v1630 = vld [vmem:[#allocation3 + $0x4c] sm:$0xf]
        %v1631 = vld [vmem:[#allocation3 + $0x50] sm:$0xf]
        %v1632 = vld [vmem:[#allocation3 + $0x54] sm:$0xf]
        %v1633 = vld [vmem:[#allocation3 + $0x58] sm:$0xf]
        %v1634 = vld [vmem:[#allocation3 + $0x5c] sm:$0xf]
        %v1635 = vld [vmem:[#allocation3 + $0x60] sm:$0xf]
        %v1636 = vld [vmem:[#allocation3 + $0x64] sm:$0xf]
        %v1637 = vld [vmem:[#allocation3 + $0x68] sm:$0xf]
        %v1638 = vld [vmem:[#allocation3 + $0x6c] sm:$0xf]
        %v1639 = vld [vmem:[#allocation3 + $0x70] sm:$0xf]
        %v1640 = vld [vmem:[#allocation3 + $0x74] sm:$0xf]
        %v1641 = vld [vmem:[#allocation3 + $0x78] sm:$0xf]
        %v1642 = vld [vmem:[#allocation3 + $0x7c] sm:$0xf]
        %v1643 = vld [vmem:[#allocation3 + $0x80] sm:$0xf]
        %v1644 = vld [vmem:[#allocation3 + $0x84] sm:$0xf]
        %v1645 = vld [vmem:[#allocation3 + $0x88] sm:$0xf]
        %v1646 = vld [vmem:[#allocation3 + $0x8c] sm:$0xf]
        %v1647 = vld [vmem:[#allocation3 + $0x90] sm:$0xf]
        %v1648 = vld [vmem:[#allocation3 + $0x94] sm:$0xf]
        %v1649 = vld [vmem:[#allocation3 + $0x98] sm:$0xf]
        %v1650 = vld [vmem:[#allocation3 + $0x9c] sm:$0xf]
        %v1651 = vld [vmem:[#allocation3 + $0xa0] sm:$0xf]
        %v1652 = vld [vmem:[#allocation3 + $0xa4] sm:$0xf]
        %v1653 = vld [vmem:[#allocation3 + $0xa8] sm:$0xf]
        %v1654 = vld [vmem:[#allocation3 + $0xac] sm:$0xf]
        %v1655 = vld [vmem:[#allocation3 + $0xb0] sm:$0xf]
        %v1656 = vld [vmem:[#allocation3 + $0xb4] sm:$0xf]
        %v1657 = vld [vmem:[#allocation3 + $0xb8] sm:$0xf]
        %v1658 = vld [vmem:[#allocation3 + $0xbc] sm:$0xf]
        %v1659 = vld [vmem:[#allocation3 + $0xc0] sm:$0xf]
        %v1660 = vld [vmem:[#allocation3 + $0xc4] sm:$0xf]
        %v1661 = vld [vmem:[#allocation3 + $0xc8] sm:$0xf]
        %v1662 = vld [vmem:[#allocation3 + $0xcc] sm:$0xf]
        %v1663 = vld [vmem:[#allocation3 + $0xd0] sm:$0xf]
        %v1664 = vld [vmem:[#allocation3 + $0xd4] sm:$0xf]
        %v1665 = vld [vmem:[#allocation3 + $0xd8] sm:$0xf]
        %v1666 = vld [vmem:[#allocation3 + $0xdc] sm:$0xf]
        %v1667 = vld [vmem:[#allocation3 + $0xe0] sm:$0xf]
        %v1668 = vld [vmem:[#allocation3 + $0xe4] sm:$0xf]
        %v1669 = vld [vmem:[#allocation3 + $0xe8] sm:$0xf]
        %v1670 = vld [vmem:[#allocation3 + $0xec] sm:$0xf]
        %v1671 = vld [vmem:[#allocation3 + $0xf0] sm:$0xf]
        %v1672 = vld [vmem:[#allocation3 + $0xf4] sm:$0xf]
        %v1673 = vld [vmem:[#allocation3 + $0xf8] sm:$0xf]
        %v1674 = vld [vmem:[#allocation3 + $0xfc] sm:$0xf]
        %v1675 = vld [vmem:[#allocation3 + $0x100] sm:$0xf]
        %v1676 = vld [vmem:[#allocation3 + $0x104] sm:$0xf]
        %v1677 = vld [vmem:[#allocation3 + $0x108] sm:$0xf]
        %v1678 = vld [vmem:[#allocation3 + $0x10c] sm:$0xf]
        %v1679 = vld [vmem:[#allocation3 + $0x110] sm:$0xf]
        %v1680 = vld [vmem:[#allocation3 + $0x114] sm:$0xf]
        %v1681 = vld [vmem:[#allocation3 + $0x118] sm:$0xf]
        %v1682 = vld [vmem:[#allocation3 + $0x11c] sm:$0xf]
        %v1683 = vld [vmem:[#allocation3 + $0x120] sm:$0xf]
        %v1684 = vld [vmem:[#allocation3 + $0x124] sm:$0xf]
        %v1685 = vld [vmem:[#allocation3 + $0x128] sm:$0xf]
        %v1686 = vld [vmem:[#allocation3 + $0x12c] sm:$0xf]
        %v1687 = vld [vmem:[#allocation3 + $0x130] sm:$0xf]
        %v1688 = vld [vmem:[#allocation3 + $0x134] sm:$0xf]
        %v1689 = vld [vmem:[#allocation3 + $0x138] sm:$0xf]
        %v1690 = vld [vmem:[#allocation3 + $0x13c] sm:$0xf]
        %v1691 = vld [vmem:[#allocation3 + $0x140] sm:$0xf]
        %v1692 = vld [vmem:[#allocation3 + $0x144] sm:$0xf]
        %v1693 = vld [vmem:[#allocation3 + $0x148] sm:$0xf]
        %v1694 = vld [vmem:[#allocation3 + $0x14c] sm:$0xf]
        %v1695 = vld [vmem:[#allocation3 + $0x150] sm:$0xf]
        %v1696 = vld [vmem:[#allocation3 + $0x154] sm:$0xf]
        %v1697 = vld [vmem:[#allocation3 + $0x158] sm:$0xf]
        %v1698 = vld [vmem:[#allocation3 + $0x15c] sm:$0xf]
        %v1699 = vld [vmem:[#allocation3 + $0x160] sm:$0xf]
        %v1700 = vld [vmem:[#allocation3 + $0x164] sm:$0xf]
        %v1701 = vld [vmem:[#allocation3 + $0x168] sm:$0xf]
        %v1702 = vld [vmem:[#allocation3 + $0x16c] sm:$0xf]
        %v1703 = vld [vmem:[#allocation3 + $0x170] sm:$0xf]
        %v1704 = vld [vmem:[#allocation3 + $0x174] sm:$0xf]
        %v1705 = vld [vmem:[#allocation3 + $0x178] sm:$0xf]
        %v1706 = vld [vmem:[#allocation3 + $0x17c] sm:$0xf]
        %v1707 = vld [vmem:[#allocation3 + $0x180] sm:$0xf]
        %v1708 = vld [vmem:[#allocation3 + $0x184] sm:$0xf]
        %v1709 = vld [vmem:[#allocation3 + $0x188] sm:$0xf]
        %v1710 = vld [vmem:[#allocation3 + $0x18c] sm:$0xf]
        %v1711 = vld [vmem:[#allocation3 + $0x190] sm:$0xf]
        %v1712 = vld [vmem:[#allocation3 + $0x194] sm:$0xf]
        %v1713 = vld [vmem:[#allocation3 + $0x198] sm:$0xf]
        %v1714 = vld [vmem:[#allocation3 + $0x19c] sm:$0xf]
        %v1715 = vld [vmem:[#allocation3 + $0x1a0] sm:$0xf]
        %v1716 = vld [vmem:[#allocation3 + $0x1a4] sm:$0xf]
        %v1717 = vld [vmem:[#allocation3 + $0x1a8] sm:$0xf]
        %v1718 = vld [vmem:[#allocation3 + $0x1ac] sm:$0xf]
        %v1719 = vld [vmem:[#allocation3 + $0x1b0] sm:$0xf]
        %v1720 = vld [vmem:[#allocation3 + $0x1b4] sm:$0xf]
        %v1721 = vld [vmem:[#allocation3 + $0x1b8] sm:$0xf]
        %v1722 = vld [vmem:[#allocation3 + $0x1bc] sm:$0xf]
        %v1723 = vld [vmem:[#allocation3 + $0x1c0] sm:$0xf]
        %v1724 = vld [vmem:[#allocation3 + $0x1c4] sm:$0xf]
        %v1725 = vld [vmem:[#allocation3 + $0x1c8] sm:$0xf]
        %v1726 = vld [vmem:[#allocation3 + $0x1cc] sm:$0xf]
        %v1727 = vld [vmem:[#allocation3 + $0x1d0] sm:$0xf]
        %v1728 = vld [vmem:[#allocation3 + $0x1d4] sm:$0xf]
        %v1729 = vld [vmem:[#allocation3 + $0x1d8] sm:$0xf]
        %v1730 = vld [vmem:[#allocation3 + $0x1dc] sm:$0xf]
        %v1731 = vld [vmem:[#allocation3 + $0x1e0] sm:$0xf]
        %v1732 = vld [vmem:[#allocation3 + $0x1e4] sm:$0xf]
        %v1733 = vld [vmem:[#allocation3 + $0x1e8] sm:$0xf]
        %v1734 = vld [vmem:[#allocation3 + $0x1ec] sm:$0xf]
        %v1735 = vld [vmem:[#allocation3 + $0x1f0] sm:$0xf]
        %v1736 = vld [vmem:[#allocation3 + $0x1f4] sm:$0xf]
        %v1737 = vld [vmem:[#allocation3 + $0x1f8] sm:$0xf]
        %v1738 = vld [vmem:[#allocation3 + $0x1fc] sm:$0xf]
        %v1739 = vpack.c.bf16 %v1551, %v1547
        %v1740 = vpack.c.bf16 %v1552, %v1548
        %v1741 = vpack.c.bf16 %v1553, %v1549
        %v1742 = vpack.c.bf16 %v1554, %v1550
        %v1743 = vpack.c.bf16 %v1559, %v1555
        %v1744 = vpack.c.bf16 %v1560, %v1556
        %v1745 = vpack.c.bf16 %v1561, %v1557
        %v1746 = vpack.c.bf16 %v1562, %v1558
        %v1747 = vpack.c.bf16 %v1567, %v1563
        %v1748 = vpack.c.bf16 %v1568, %v1564
        %v1749 = vpack.c.bf16 %v1569, %v1565
        %v1750 = vpack.c.bf16 %v1570, %v1566
        %v1751 = vpack.c.bf16 %v1575, %v1571
        %v1752 = vpack.c.bf16 %v1576, %v1572
        %v1753 = vpack.c.bf16 %v1577, %v1573
        %v1754 = vpack.c.bf16 %v1578, %v1574
        %v1755 = vpack.c.bf16 %v1583, %v1579
        %v1756 = vpack.c.bf16 %v1584, %v1580
        %v1757 = vpack.c.bf16 %v1585, %v1581
        %v1758 = vpack.c.bf16 %v1586, %v1582
        %v1759 = vpack.c.bf16 %v1591, %v1587
        %v1760 = vpack.c.bf16 %v1592, %v1588
        %v1761 = vpack.c.bf16 %v1593, %v1589
        %v1762 = vpack.c.bf16 %v1594, %v1590
        %v1763 = vpack.c.bf16 %v1599, %v1595
        %v1764 = vpack.c.bf16 %v1600, %v1596
        %v1765 = vpack.c.bf16 %v1601, %v1597
        %v1766 = vpack.c.bf16 %v1602, %v1598
        %v1767 = vpack.c.bf16 %v1607, %v1603
        %v1768 = vpack.c.bf16 %v1608, %v1604
        %v1769 = vpack.c.bf16 %v1609, %v1605
        %v1770 = vpack.c.bf16 %v1610, %v1606
        %v1899 = vunpack.c.l.b16 %v1611
        %v1900 = vunpack.c.l.b16 %v1612
        %v1901 = vunpack.c.l.b16 %v1613
        %v1902 = vunpack.c.l.b16 %v1614
        %v1903 = vunpack.c.l.b16 %v1615
        %v1904 = vunpack.c.l.b16 %v1616
        %v1905 = vunpack.c.l.b16 %v1617
        %v1906 = vunpack.c.l.b16 %v1618
        %v1907 = vunpack.c.l.b16 %v1619
        %v1908 = vunpack.c.l.b16 %v1620
        %v1909 = vunpack.c.l.b16 %v1621
        %v1910 = vunpack.c.l.b16 %v1622
        %v1911 = vunpack.c.l.b16 %v1623
        %v1912 = vunpack.c.l.b16 %v1624
        %v1913 = vunpack.c.l.b16 %v1625
        %v1914 = vunpack.c.l.b16 %v1626
        %v1915 = vunpack.c.l.b16 %v1627
        %v1916 = vunpack.c.l.b16 %v1628
        %v1917 = vunpack.c.l.b16 %v1629
        %v1918 = vunpack.c.l.b16 %v1630
        %v1919 = vunpack.c.l.b16 %v1631
        %v1920 = vunpack.c.l.b16 %v1632
        %v1921 = vunpack.c.l.b16 %v1633
        %v1922 = vunpack.c.l.b16 %v1634
        %v1923 = vunpack.c.l.b16 %v1635
        %v1924 = vunpack.c.l.b16 %v1636
        %v1925 = vunpack.c.l.b16 %v1637
        %v1926 = vunpack.c.l.b16 %v1638
        %v1927 = vunpack.c.l.b16 %v1639
        %v1928 = vunpack.c.l.b16 %v1640
        %v1929 = vunpack.c.l.b16 %v1641
        %v1930 = vunpack.c.l.b16 %v1642
        %v1931 = vunpack.c.l.b16 %v1643
        %v1932 = vunpack.c.l.b16 %v1644
        %v1933 = vunpack.c.l.b16 %v1645
        %v1934 = vunpack.c.l.b16 %v1646
        %v1935 = vunpack.c.l.b16 %v1647
        %v1936 = vunpack.c.l.b16 %v1648
        %v1937 = vunpack.c.l.b16 %v1649
        %v1938 = vunpack.c.l.b16 %v1650
        %v1939 = vunpack.c.l.b16 %v1651
        %v1940 = vunpack.c.l.b16 %v1652
        %v1941 = vunpack.c.l.b16 %v1653
        %v1942 = vunpack.c.l.b16 %v1654
        %v1943 = vunpack.c.l.b16 %v1655
        %v1944 = vunpack.c.l.b16 %v1656
        %v1945 = vunpack.c.l.b16 %v1657
        %v1946 = vunpack.c.l.b16 %v1658
        %v1947 = vunpack.c.l.b16 %v1659
        %v1948 = vunpack.c.l.b16 %v1660
        %v1949 = vunpack.c.l.b16 %v1661
        %v1950 = vunpack.c.l.b16 %v1662
        %v1951 = vunpack.c.l.b16 %v1663
        %v1952 = vunpack.c.l.b16 %v1664
        %v1953 = vunpack.c.l.b16 %v1665
        %v1954 = vunpack.c.l.b16 %v1666
        %v1955 = vunpack.c.l.b16 %v1667
        %v1956 = vunpack.c.l.b16 %v1668
        %v1957 = vunpack.c.l.b16 %v1669
        %v1958 = vunpack.c.l.b16 %v1670
        %v1959 = vunpack.c.l.b16 %v1671
        %v1960 = vunpack.c.l.b16 %v1672
        %v1961 = vunpack.c.l.b16 %v1673
        %v1962 = vunpack.c.l.b16 %v1674
        %v1963 = vunpack.c.l.b16 %v1675
        %v1964 = vunpack.c.l.b16 %v1676
        %v1965 = vunpack.c.l.b16 %v1677
        %v1966 = vunpack.c.l.b16 %v1678
        %v1967 = vunpack.c.l.b16 %v1679
        %v1968 = vunpack.c.l.b16 %v1680
        %v1969 = vunpack.c.l.b16 %v1681
        %v1970 = vunpack.c.l.b16 %v1682
        %v1971 = vunpack.c.l.b16 %v1683
        %v1972 = vunpack.c.l.b16 %v1684
        %v1973 = vunpack.c.l.b16 %v1685
        %v1974 = vunpack.c.l.b16 %v1686
        %v1975 = vunpack.c.l.b16 %v1687
        %v1976 = vunpack.c.l.b16 %v1688
        %v1977 = vunpack.c.l.b16 %v1689
        %v1978 = vunpack.c.l.b16 %v1690
        %v1979 = vunpack.c.l.b16 %v1691
        %v1980 = vunpack.c.l.b16 %v1692
        %v1981 = vunpack.c.l.b16 %v1693
        %v1982 = vunpack.c.l.b16 %v1694
        %v1983 = vunpack.c.l.b16 %v1695
        %v1984 = vunpack.c.l.b16 %v1696
        %v1985 = vunpack.c.l.b16 %v1697
        %v1986 = vunpack.c.l.b16 %v1698
        %v1987 = vunpack.c.l.b16 %v1699
        %v1988 = vunpack.c.l.b16 %v1700
        %v1989 = vunpack.c.l.b16 %v1701
        %v1990 = vunpack.c.l.b16 %v1702
        %v1991 = vunpack.c.l.b16 %v1703
        %v1992 = vunpack.c.l.b16 %v1704
        %v1993 = vunpack.c.l.b16 %v1705
        %v1994 = vunpack.c.l.b16 %v1706
        %v1995 = vunpack.c.l.b16 %v1707
        %v1996 = vunpack.c.l.b16 %v1708
        %v1997 = vunpack.c.l.b16 %v1709
        %v1998 = vunpack.c.l.b16 %v1710
        %v1999 = vunpack.c.l.b16 %v1711
        %v2000 = vunpack.c.l.b16 %v1712
        %v2001 = vunpack.c.l.b16 %v1713
        %v2002 = vunpack.c.l.b16 %v1714
        %v2003 = vunpack.c.l.b16 %v1715
        %v2004 = vunpack.c.l.b16 %v1716
        %v2005 = vunpack.c.l.b16 %v1717
        %v2006 = vunpack.c.l.b16 %v1718
        %v2007 = vunpack.c.l.b16 %v1719
        %v2008 = vunpack.c.l.b16 %v1720
        %v2009 = vunpack.c.l.b16 %v1721
        %v2010 = vunpack.c.l.b16 %v1722
        %v2011 = vunpack.c.l.b16 %v1723
        %v2012 = vunpack.c.l.b16 %v1724
        %v2013 = vunpack.c.l.b16 %v1725
        %v2014 = vunpack.c.l.b16 %v1726
        %v2015 = vunpack.c.l.b16 %v1727
        %v2016 = vunpack.c.l.b16 %v1728
        %v2017 = vunpack.c.l.b16 %v1729
        %v2018 = vunpack.c.l.b16 %v1730
        %v2019 = vunpack.c.l.b16 %v1731
        %v2020 = vunpack.c.l.b16 %v1732
        %v2021 = vunpack.c.l.b16 %v1733
        %v2022 = vunpack.c.l.b16 %v1734
        %v2023 = vunpack.c.l.b16 %v1735
        %v2024 = vunpack.c.l.b16 %v1736
        %v2025 = vunpack.c.l.b16 %v1737
        %v2026 = vunpack.c.l.b16 %v1738
        %v2027 = vpack.c.b16 %v1900, %v1899
        %v2028 = vpack.c.b16 %v1902, %v1901
        %v2029 = vpack.c.b16 %v1904, %v1903
        %v2030 = vpack.c.b16 %v1906, %v1905
        %v2031 = vpack.c.b16 %v1908, %v1907
        %v2032 = vpack.c.b16 %v1910, %v1909
        %v2033 = vpack.c.b16 %v1912, %v1911
        %v2034 = vpack.c.b16 %v1914, %v1913
        %v2035 = vpack.c.b16 %v1916, %v1915
        %v2036 = vpack.c.b16 %v1918, %v1917
        %v2037 = vpack.c.b16 %v1920, %v1919
        %v2038 = vpack.c.b16 %v1922, %v1921
        %v2039 = vpack.c.b16 %v1924, %v1923
        %v2040 = vpack.c.b16 %v1926, %v1925
        %v2041 = vpack.c.b16 %v1928, %v1927
        %v2042 = vpack.c.b16 %v1930, %v1929
        %v2043 = vpack.c.b16 %v1932, %v1931
        %v2044 = vpack.c.b16 %v1934, %v1933
        %v2045 = vpack.c.b16 %v1936, %v1935
        %v2046 = vpack.c.b16 %v1938, %v1937
        %v2047 = vpack.c.b16 %v1940, %v1939
        %v2048 = vpack.c.b16 %v1942, %v1941
        %v2049 = vpack.c.b16 %v1944, %v1943
        %v2050 = vpack.c.b16 %v1946, %v1945
        %v2051 = vpack.c.b16 %v1948, %v1947
        %v2052 = vpack.c.b16 %v1950, %v1949
        %v2053 = vpack.c.b16 %v1952, %v1951
        %v2054 = vpack.c.b16 %v1954, %v1953
        %v2055 = vpack.c.b16 %v1956, %v1955
        %v2056 = vpack.c.b16 %v1958, %v1957
        %v2057 = vpack.c.b16 %v1960, %v1959
        %v2058 = vpack.c.b16 %v1962, %v1961
        %v2059 = vpack.c.b16 %v1964, %v1963
        %v2060 = vpack.c.b16 %v1966, %v1965
        %v2061 = vpack.c.b16 %v1968, %v1967
        %v2062 = vpack.c.b16 %v1970, %v1969
        %v2063 = vpack.c.b16 %v1972, %v1971
        %v2064 = vpack.c.b16 %v1974, %v1973
        %v2065 = vpack.c.b16 %v1976, %v1975
        %v2066 = vpack.c.b16 %v1978, %v1977
        %v2067 = vpack.c.b16 %v1980, %v1979
        %v2068 = vpack.c.b16 %v1982, %v1981
        %v2069 = vpack.c.b16 %v1984, %v1983
        %v2070 = vpack.c.b16 %v1986, %v1985
        %v2071 = vpack.c.b16 %v1988, %v1987
        %v2072 = vpack.c.b16 %v1990, %v1989
        %v2073 = vpack.c.b16 %v1992, %v1991
        %v2074 = vpack.c.b16 %v1994, %v1993
        %v2075 = vpack.c.b16 %v1996, %v1995
        %v2076 = vpack.c.b16 %v1998, %v1997
        %v2077 = vpack.c.b16 %v2000, %v1999
        %v2078 = vpack.c.b16 %v2002, %v2001
        %v2079 = vpack.c.b16 %v2004, %v2003
        %v2080 = vpack.c.b16 %v2006, %v2005
        %v2081 = vpack.c.b16 %v2008, %v2007
        %v2082 = vpack.c.b16 %v2010, %v2009
        %v2083 = vpack.c.b16 %v2012, %v2011
        %v2084 = vpack.c.b16 %v2014, %v2013
        %v2085 = vpack.c.b16 %v2016, %v2015
        %v2086 = vpack.c.b16 %v2018, %v2017
        %v2087 = vpack.c.b16 %v2020, %v2019
        %v2088 = vpack.c.b16 %v2022, %v2021
        %v2089 = vpack.c.b16 %v2024, %v2023
        %v2090 = vpack.c.b16 %v2026, %v2025
        %2155 = vmatprep.subr.bf16.mxu0 %v1768
        %2156 = vmatpush1.bf16.msra.mxu0 %v1767
        %2157 = vmatprep.subr.bf16.mxu0 %v1764
        %2158 = vmatpush1.bf16.msra.mxu0 %v1763
        %2159 = vmatprep.subr.bf16.mxu0 %v1760
        %2160 = vmatpush1.bf16.msra.mxu0 %v1759
        %2161 = vmatprep.subr.bf16.mxu0 %v1756
        %2162 = vmatpush1.bf16.msra.mxu0 %v1755
        %2163 = vmatprep.subr.bf16.mxu0 %v1752
        %2164 = vmatpush1.bf16.msra.mxu0 %v1751
        %2165 = vmatprep.subr.bf16.mxu0 %v1748
        %2166 = vmatpush1.bf16.msra.mxu0 %v1747
        %2167 = vmatprep.subr.bf16.mxu0 %v1744
        %2168 = vmatpush1.bf16.msra.mxu0 %v1743
        %2169 = vmatprep.subr.bf16.mxu0 %v1740
        %2170 = vmatpush1.bf16.msra.mxu0 %v1739
        %2171 = vmatprep.subr.bf16.mxu0 0
        %2172 = vmatpush2.bf16.msra.mxu0 0
        %2173 = vmatprep.subr.bf16.mxu0 0
        %2174 = vmatpush2.bf16.msra.mxu0 0
        %2175 = vmatprep.subr.bf16.mxu0 0
        %2176 = vmatpush2.bf16.msra.mxu0 0
        %2177 = vmatprep.subr.bf16.mxu0 0
        %2178 = vmatpush2.bf16.msra.mxu0 0
        %2179 = vmatprep.subr.bf16.mxu0 0
        %2180 = vmatpush2.bf16.msra.mxu0 0
        %2181 = vmatprep.subr.bf16.mxu0 0
        %2182 = vmatpush2.bf16.msra.mxu0 0
        %2183 = vmatprep.subr.bf16.mxu0 0
        %2184 = vmatpush2.bf16.msra.mxu0 0
        %2185 = vmatprep.subr.bf16.mxu0 0
        %2186 = vmatpush2.bf16.msra.mxu0 0
        %2187 = vmatprep.mubr.bf16.mxu0 0
        %2188 = vmatmul.mubr.bf16.gmra.mxu0 %v2027
        %v2189 = vpop.f32.mrf.mxu0
        %v2190 = vadd.f32 0.0, %v2189
        %v2191 = vpop.f32.mrf.mxu0
        %v2192 = vadd.f32 0.0, %v2191
        %v2193 = vpop.f32.mrf.mxu0
        %v2194 = vadd.f32 0.0, %v2193
        %v2195 = vpop.f32.mrf.mxu0
        %v2196 = vadd.f32 0.0, %v2195
        %2197 = vmatprep.mubr.bf16.mxu0 0
        %2198 = vmatmul.mubr.bf16.gmra.mxu0 %v2028
        %v2199 = vpop.f32.mrf.mxu0
        %v2200 = vadd.f32 0.0, %v2199
        %v2201 = vpop.f32.mrf.mxu0
        %v2202 = vadd.f32 0.0, %v2201
        %v2203 = vpop.f32.mrf.mxu0
        %v2204 = vadd.f32 0.0, %v2203
        %v2205 = vpop.f32.mrf.mxu0
        %v2206 = vadd.f32 0.0, %v2205
        %2207 = vmatprep.mubr.bf16.mxu0 0
        %2208 = vmatmul.mubr.bf16.gmra.mxu0 %v2029
        %v2209 = vpop.f32.mrf.mxu0
        %v2210 = vadd.f32 0.0, %v2209
        %v2211 = vpop.f32.mrf.mxu0
        %v2212 = vadd.f32 0.0, %v2211
        %v2213 = vpop.f32.mrf.mxu0
        %v2214 = vadd.f32 0.0, %v2213
        %v2215 = vpop.f32.mrf.mxu0
        %v2216 = vadd.f32 0.0, %v2215
        %2217 = vmatprep.mubr.bf16.mxu0 0
        %2218 = vmatmul.mubr.bf16.gmra.mxu0 %v2030
        %v2219 = vpop.f32.mrf.mxu0
        %v2220 = vadd.f32 0.0, %v2219
        %v2221 = vpop.f32.mrf.mxu0
        %v2222 = vadd.f32 0.0, %v2221
        %v2223 = vpop.f32.mrf.mxu0
        %v2224 = vadd.f32 0.0, %v2223
        %v2225 = vpop.f32.mrf.mxu0
        %v2226 = vadd.f32 0.0, %v2225
        %2227 = vmatprep.mubr.bf16.mxu0 0
        %2228 = vmatmul.mubr.bf16.gmra.mxu0 %v2031
        %v2229 = vpop.f32.mrf.mxu0
        %v2230 = vadd.f32 0.0, %v2229
        %v2231 = vpop.f32.mrf.mxu0
        %v2232 = vadd.f32 0.0, %v2231
        %v2233 = vpop.f32.mrf.mxu0
        %v2234 = vadd.f32 0.0, %v2233
        %v2235 = vpop.f32.mrf.mxu0
        %v2236 = vadd.f32 0.0, %v2235
        %2237 = vmatprep.mubr.bf16.mxu0 0
        %2238 = vmatmul.mubr.bf16.gmra.mxu0 %v2032
        %v2239 = vpop.f32.mrf.mxu0
        %v2240 = vadd.f32 0.0, %v2239
        %v2241 = vpop.f32.mrf.mxu0
        %v2242 = vadd.f32 0.0, %v2241
        %v2243 = vpop.f32.mrf.mxu0
        %v2244 = vadd.f32 0.0, %v2243
        %v2245 = vpop.f32.mrf.mxu0
        %v2246 = vadd.f32 0.0, %v2245
        %2247 = vmatprep.mubr.bf16.mxu0 0
        %2248 = vmatmul.mubr.bf16.gmra.mxu0 %v2033
        %v2249 = vpop.f32.mrf.mxu0
        %v2250 = vadd.f32 0.0, %v2249
        %v2251 = vpop.f32.mrf.mxu0
        %v2252 = vadd.f32 0.0, %v2251
        %v2253 = vpop.f32.mrf.mxu0
        %v2254 = vadd.f32 0.0, %v2253
        %v2255 = vpop.f32.mrf.mxu0
        %v2256 = vadd.f32 0.0, %v2255
        %2257 = vmatprep.mubr.bf16.mxu0 0
        %2258 = vmatmul.mubr.bf16.gmra.mxu0 %v2034
        %v2259 = vpop.f32.mrf.mxu0
        %v2260 = vadd.f32 0.0, %v2259
        %v2261 = vpop.f32.mrf.mxu0
        %v2262 = vadd.f32 0.0, %v2261
        %v2263 = vpop.f32.mrf.mxu0
        %v2264 = vadd.f32 0.0, %v2263
        %v2265 = vpop.f32.mrf.mxu0
        %v2266 = vadd.f32 0.0, %v2265
        %2267 = vmatprep.mubr.bf16.mxu0 0
        %2268 = vmatmul.mubr.bf16.gmra.mxu0 %v2035
        %v2269 = vpop.f32.mrf.mxu0
        %v2270 = vadd.f32 0.0, %v2269
        %v2271 = vpop.f32.mrf.mxu0
        %v2272 = vadd.f32 0.0, %v2271
        %v2273 = vpop.f32.mrf.mxu0
        %v2274 = vadd.f32 0.0, %v2273
        %v2275 = vpop.f32.mrf.mxu0
        %v2276 = vadd.f32 0.0, %v2275
        %2277 = vmatprep.mubr.bf16.mxu0 0
        %2278 = vmatmul.mubr.bf16.gmra.mxu0 %v2036
        %v2279 = vpop.f32.mrf.mxu0
        %v2280 = vadd.f32 0.0, %v2279
        %v2281 = vpop.f32.mrf.mxu0
        %v2282 = vadd.f32 0.0, %v2281
        %v2283 = vpop.f32.mrf.mxu0
        %v2284 = vadd.f32 0.0, %v2283
        %v2285 = vpop.f32.mrf.mxu0
        %v2286 = vadd.f32 0.0, %v2285
        %2287 = vmatprep.mubr.bf16.mxu0 0
        %2288 = vmatmul.mubr.bf16.gmra.mxu0 %v2037
        %v2289 = vpop.f32.mrf.mxu0
        %v2290 = vadd.f32 0.0, %v2289
        %v2291 = vpop.f32.mrf.mxu0
        %v2292 = vadd.f32 0.0, %v2291
        %v2293 = vpop.f32.mrf.mxu0
        %v2294 = vadd.f32 0.0, %v2293
        %v2295 = vpop.f32.mrf.mxu0
        %v2296 = vadd.f32 0.0, %v2295
        %2297 = vmatprep.mubr.bf16.mxu0 0
        %2298 = vmatmul.mubr.bf16.gmra.mxu0 %v2038
        %v2299 = vpop.f32.mrf.mxu0
        %v2300 = vadd.f32 0.0, %v2299
        %v2301 = vpop.f32.mrf.mxu0
        %v2302 = vadd.f32 0.0, %v2301
        %v2303 = vpop.f32.mrf.mxu0
        %v2304 = vadd.f32 0.0, %v2303
        %v2305 = vpop.f32.mrf.mxu0
        %v2306 = vadd.f32 0.0, %v2305
        %2307 = vmatprep.mubr.bf16.mxu0 0
        %2308 = vmatmul.mubr.bf16.gmra.mxu0 %v2039
        %v2309 = vpop.f32.mrf.mxu0
        %v2310 = vadd.f32 0.0, %v2309
        %v2311 = vpop.f32.mrf.mxu0
        %v2312 = vadd.f32 0.0, %v2311
        %v2313 = vpop.f32.mrf.mxu0
        %v2314 = vadd.f32 0.0, %v2313
        %v2315 = vpop.f32.mrf.mxu0
        %v2316 = vadd.f32 0.0, %v2315
        %2317 = vmatprep.mubr.bf16.mxu0 0
        %2318 = vmatmul.mubr.bf16.gmra.mxu0 %v2040
        %v2319 = vpop.f32.mrf.mxu0
        %v2320 = vadd.f32 0.0, %v2319
        %v2321 = vpop.f32.mrf.mxu0
        %v2322 = vadd.f32 0.0, %v2321
        %v2323 = vpop.f32.mrf.mxu0
        %v2324 = vadd.f32 0.0, %v2323
        %v2325 = vpop.f32.mrf.mxu0
        %v2326 = vadd.f32 0.0, %v2325
        %2327 = vmatprep.mubr.bf16.mxu0 0
        %2328 = vmatmul.mubr.bf16.gmra.mxu0 %v2041
        %v2329 = vpop.f32.mrf.mxu0
        %v2330 = vadd.f32 0.0, %v2329
        %v2331 = vpop.f32.mrf.mxu0
        %v2332 = vadd.f32 0.0, %v2331
        %v2333 = vpop.f32.mrf.mxu0
        %v2334 = vadd.f32 0.0, %v2333
        %v2335 = vpop.f32.mrf.mxu0
        %v2336 = vadd.f32 0.0, %v2335
        %2337 = vmatprep.mubr.bf16.mxu0 0
        %2338 = vmatmul.mubr.bf16.gmra.mxu0 %v2042
        %v2339 = vpop.f32.mrf.mxu0
        %v2340 = vadd.f32 0.0, %v2339
        %v2341 = vpop.f32.mrf.mxu0
        %v2342 = vadd.f32 0.0, %v2341
        %v2343 = vpop.f32.mrf.mxu0
        %v2344 = vadd.f32 0.0, %v2343
        %v2345 = vpop.f32.mrf.mxu0
        %v2346 = vadd.f32 0.0, %v2345
        %2347 = vmatprep.mubr.bf16.mxu0 0
        %2348 = vmatmul.mubr.bf16.gmra.mxu0 %v2043
        %v2349 = vpop.f32.mrf.mxu0
        %v2350 = vadd.f32 0.0, %v2349
        %v2351 = vpop.f32.mrf.mxu0
        %v2352 = vadd.f32 0.0, %v2351
        %v2353 = vpop.f32.mrf.mxu0
        %v2354 = vadd.f32 0.0, %v2353
        %v2355 = vpop.f32.mrf.mxu0
        %v2356 = vadd.f32 0.0, %v2355
        %2357 = vmatprep.mubr.bf16.mxu0 0
        %2358 = vmatmul.mubr.bf16.gmra.mxu0 %v2044
        %v2359 = vpop.f32.mrf.mxu0
        %v2360 = vadd.f32 0.0, %v2359
        %v2361 = vpop.f32.mrf.mxu0
        %v2362 = vadd.f32 0.0, %v2361
        %v2363 = vpop.f32.mrf.mxu0
        %v2364 = vadd.f32 0.0, %v2363
        %v2365 = vpop.f32.mrf.mxu0
        %v2366 = vadd.f32 0.0, %v2365
        %2367 = vmatprep.mubr.bf16.mxu0 0
        %2368 = vmatmul.mubr.bf16.gmra.mxu0 %v2045
        %v2369 = vpop.f32.mrf.mxu0
        %v2370 = vadd.f32 0.0, %v2369
        %v2371 = vpop.f32.mrf.mxu0
        %v2372 = vadd.f32 0.0, %v2371
        %v2373 = vpop.f32.mrf.mxu0
        %v2374 = vadd.f32 0.0, %v2373
        %v2375 = vpop.f32.mrf.mxu0
        %v2376 = vadd.f32 0.0, %v2375
        %2377 = vmatprep.mubr.bf16.mxu0 0
        %2378 = vmatmul.mubr.bf16.gmra.mxu0 %v2046
        %v2379 = vpop.f32.mrf.mxu0
        %v2380 = vadd.f32 0.0, %v2379
        %v2381 = vpop.f32.mrf.mxu0
        %v2382 = vadd.f32 0.0, %v2381
        %v2383 = vpop.f32.mrf.mxu0
        %v2384 = vadd.f32 0.0, %v2383
        %v2385 = vpop.f32.mrf.mxu0
        %v2386 = vadd.f32 0.0, %v2385
        %2387 = vmatprep.mubr.bf16.mxu0 0
        %2388 = vmatmul.mubr.bf16.gmra.mxu0 %v2047
        %v2389 = vpop.f32.mrf.mxu0
        %v2390 = vadd.f32 0.0, %v2389
        %v2391 = vpop.f32.mrf.mxu0
        %v2392 = vadd.f32 0.0, %v2391
        %v2393 = vpop.f32.mrf.mxu0
        %v2394 = vadd.f32 0.0, %v2393
        %v2395 = vpop.f32.mrf.mxu0
        %v2396 = vadd.f32 0.0, %v2395
        %2397 = vmatprep.mubr.bf16.mxu0 0
        %2398 = vmatmul.mubr.bf16.gmra.mxu0 %v2048
        %v2399 = vpop.f32.mrf.mxu0
        %v2400 = vadd.f32 0.0, %v2399
        %v2401 = vpop.f32.mrf.mxu0
        %v2402 = vadd.f32 0.0, %v2401
        %v2403 = vpop.f32.mrf.mxu0
        %v2404 = vadd.f32 0.0, %v2403
        %v2405 = vpop.f32.mrf.mxu0
        %v2406 = vadd.f32 0.0, %v2405
        %2407 = vmatprep.mubr.bf16.mxu0 0
        %2408 = vmatmul.mubr.bf16.gmra.mxu0 %v2049
        %v2409 = vpop.f32.mrf.mxu0
        %v2410 = vadd.f32 0.0, %v2409
        %v2411 = vpop.f32.mrf.mxu0
        %v2412 = vadd.f32 0.0, %v2411
        %v2413 = vpop.f32.mrf.mxu0
        %v2414 = vadd.f32 0.0, %v2413
        %v2415 = vpop.f32.mrf.mxu0
        %v2416 = vadd.f32 0.0, %v2415
        %2417 = vmatprep.mubr.bf16.mxu0 0
        %2418 = vmatmul.mubr.bf16.gmra.mxu0 %v2050
        %v2419 = vpop.f32.mrf.mxu0
        %v2420 = vadd.f32 0.0, %v2419
        %v2421 = vpop.f32.mrf.mxu0
        %v2422 = vadd.f32 0.0, %v2421
        %v2423 = vpop.f32.mrf.mxu0
        %v2424 = vadd.f32 0.0, %v2423
        %v2425 = vpop.f32.mrf.mxu0
        %v2426 = vadd.f32 0.0, %v2425
        %2427 = vmatprep.mubr.bf16.mxu0 0
        %2428 = vmatmul.mubr.bf16.gmra.mxu0 %v2051
        %v2429 = vpop.f32.mrf.mxu0
        %v2430 = vadd.f32 0.0, %v2429
        %v2431 = vpop.f32.mrf.mxu0
        %v2432 = vadd.f32 0.0, %v2431
        %v2433 = vpop.f32.mrf.mxu0
        %v2434 = vadd.f32 0.0, %v2433
        %v2435 = vpop.f32.mrf.mxu0
        %v2436 = vadd.f32 0.0, %v2435
        %2437 = vmatprep.mubr.bf16.mxu0 0
        %2438 = vmatmul.mubr.bf16.gmra.mxu0 %v2052
        %v2439 = vpop.f32.mrf.mxu0
        %v2440 = vadd.f32 0.0, %v2439
        %v2441 = vpop.f32.mrf.mxu0
        %v2442 = vadd.f32 0.0, %v2441
        %v2443 = vpop.f32.mrf.mxu0
        %v2444 = vadd.f32 0.0, %v2443
        %v2445 = vpop.f32.mrf.mxu0
        %v2446 = vadd.f32 0.0, %v2445
        %2447 = vmatprep.mubr.bf16.mxu0 0
        %2448 = vmatmul.mubr.bf16.gmra.mxu0 %v2053
        %v2449 = vpop.f32.mrf.mxu0
        %v2450 = vadd.f32 0.0, %v2449
        %v2451 = vpop.f32.mrf.mxu0
        %v2452 = vadd.f32 0.0, %v2451
        %v2453 = vpop.f32.mrf.mxu0
        %v2454 = vadd.f32 0.0, %v2453
        %v2455 = vpop.f32.mrf.mxu0
        %v2456 = vadd.f32 0.0, %v2455
        %2457 = vmatprep.mubr.bf16.mxu0 0
        %2458 = vmatmul.mubr.bf16.gmra.mxu0 %v2054
        %v2459 = vpop.f32.mrf.mxu0
        %v2460 = vadd.f32 0.0, %v2459
        %v2461 = vpop.f32.mrf.mxu0
        %v2462 = vadd.f32 0.0, %v2461
        %v2463 = vpop.f32.mrf.mxu0
        %v2464 = vadd.f32 0.0, %v2463
        %v2465 = vpop.f32.mrf.mxu0
        %v2466 = vadd.f32 0.0, %v2465
        %2467 = vmatprep.mubr.bf16.mxu0 0
        %2468 = vmatmul.mubr.bf16.gmra.mxu0 %v2055
        %v2469 = vpop.f32.mrf.mxu0
        %v2470 = vadd.f32 0.0, %v2469
        %v2471 = vpop.f32.mrf.mxu0
        %v2472 = vadd.f32 0.0, %v2471
        %v2473 = vpop.f32.mrf.mxu0
        %v2474 = vadd.f32 0.0, %v2473
        %v2475 = vpop.f32.mrf.mxu0
        %v2476 = vadd.f32 0.0, %v2475
        %2477 = vmatprep.mubr.bf16.mxu0 0
        %2478 = vmatmul.mubr.bf16.gmra.mxu0 %v2056
        %v2479 = vpop.f32.mrf.mxu0
        %v2480 = vadd.f32 0.0, %v2479
        %v2481 = vpop.f32.mrf.mxu0
        %v2482 = vadd.f32 0.0, %v2481
        %v2483 = vpop.f32.mrf.mxu0
        %v2484 = vadd.f32 0.0, %v2483
        %v2485 = vpop.f32.mrf.mxu0
        %v2486 = vadd.f32 0.0, %v2485
        %2487 = vmatprep.mubr.bf16.mxu0 0
        %2488 = vmatmul.mubr.bf16.gmra.mxu0 %v2057
        %v2489 = vpop.f32.mrf.mxu0
        %v2490 = vadd.f32 0.0, %v2489
        %v2491 = vpop.f32.mrf.mxu0
        %v2492 = vadd.f32 0.0, %v2491
        %v2493 = vpop.f32.mrf.mxu0
        %v2494 = vadd.f32 0.0, %v2493
        %v2495 = vpop.f32.mrf.mxu0
        %v2496 = vadd.f32 0.0, %v2495
        %2497 = vmatprep.mubr.bf16.mxu0 0
        %2498 = vmatmul.mubr.bf16.gmra.mxu0 %v2058
        %v2499 = vpop.f32.mrf.mxu0
        %v2500 = vadd.f32 0.0, %v2499
        %v2501 = vpop.f32.mrf.mxu0
        %v2502 = vadd.f32 0.0, %v2501
        %v2503 = vpop.f32.mrf.mxu0
        %v2504 = vadd.f32 0.0, %v2503
        %v2505 = vpop.f32.mrf.mxu0
        %v2506 = vadd.f32 0.0, %v2505
        %2507 = vmatprep.mubr.bf16.mxu0 0
        %2508 = vmatmul.mubr.bf16.gmra.mxu0 %v2059
        %v2509 = vpop.f32.mrf.mxu0
        %v2510 = vadd.f32 0.0, %v2509
        %v2511 = vpop.f32.mrf.mxu0
        %v2512 = vadd.f32 0.0, %v2511
        %v2513 = vpop.f32.mrf.mxu0
        %v2514 = vadd.f32 0.0, %v2513
        %v2515 = vpop.f32.mrf.mxu0
        %v2516 = vadd.f32 0.0, %v2515
        %2517 = vmatprep.mubr.bf16.mxu0 0
        %2518 = vmatmul.mubr.bf16.gmra.mxu0 %v2060
        %v2519 = vpop.f32.mrf.mxu0
        %v2520 = vadd.f32 0.0, %v2519
        %v2521 = vpop.f32.mrf.mxu0
        %v2522 = vadd.f32 0.0, %v2521
        %v2523 = vpop.f32.mrf.mxu0
        %v2524 = vadd.f32 0.0, %v2523
        %v2525 = vpop.f32.mrf.mxu0
        %v2526 = vadd.f32 0.0, %v2525
        %2527 = vmatprep.mubr.bf16.mxu0 0
        %2528 = vmatmul.mubr.bf16.gmra.mxu0 %v2061
        %v2529 = vpop.f32.mrf.mxu0
        %v2530 = vadd.f32 0.0, %v2529
        %v2531 = vpop.f32.mrf.mxu0
        %v2532 = vadd.f32 0.0, %v2531
        %v2533 = vpop.f32.mrf.mxu0
        %v2534 = vadd.f32 0.0, %v2533
        %v2535 = vpop.f32.mrf.mxu0
        %v2536 = vadd.f32 0.0, %v2535
        %2537 = vmatprep.mubr.bf16.mxu0 0
        %2538 = vmatmul.mubr.bf16.gmra.mxu0 %v2062
        %v2539 = vpop.f32.mrf.mxu0
        %v2540 = vadd.f32 0.0, %v2539
        %v2541 = vpop.f32.mrf.mxu0
        %v2542 = vadd.f32 0.0, %v2541
        %v2543 = vpop.f32.mrf.mxu0
        %v2544 = vadd.f32 0.0, %v2543
        %v2545 = vpop.f32.mrf.mxu0
        %v2546 = vadd.f32 0.0, %v2545
        %2547 = vmatprep.mubr.bf16.mxu0 0
        %2548 = vmatmul.mubr.bf16.gmra.mxu0 %v2063
        %v2549 = vpop.f32.mrf.mxu0
        %v2550 = vadd.f32 0.0, %v2549
        %v2551 = vpop.f32.mrf.mxu0
        %v2552 = vadd.f32 0.0, %v2551
        %v2553 = vpop.f32.mrf.mxu0
        %v2554 = vadd.f32 0.0, %v2553
        %v2555 = vpop.f32.mrf.mxu0
        %v2556 = vadd.f32 0.0, %v2555
        %2557 = vmatprep.mubr.bf16.mxu0 0
        %2558 = vmatmul.mubr.bf16.gmra.mxu0 %v2064
        %v2559 = vpop.f32.mrf.mxu0
        %v2560 = vadd.f32 0.0, %v2559
        %v2561 = vpop.f32.mrf.mxu0
        %v2562 = vadd.f32 0.0, %v2561
        %v2563 = vpop.f32.mrf.mxu0
        %v2564 = vadd.f32 0.0, %v2563
        %v2565 = vpop.f32.mrf.mxu0
        %v2566 = vadd.f32 0.0, %v2565
        %2567 = vmatprep.mubr.bf16.mxu0 0
        %2568 = vmatmul.mubr.bf16.gmra.mxu0 %v2065
        %v2569 = vpop.f32.mrf.mxu0
        %v2570 = vadd.f32 0.0, %v2569
        %v2571 = vpop.f32.mrf.mxu0
        %v2572 = vadd.f32 0.0, %v2571
        %v2573 = vpop.f32.mrf.mxu0
        %v2574 = vadd.f32 0.0, %v2573
        %v2575 = vpop.f32.mrf.mxu0
        %v2576 = vadd.f32 0.0, %v2575
        %2577 = vmatprep.mubr.bf16.mxu0 0
        %2578 = vmatmul.mubr.bf16.gmra.mxu0 %v2066
        %v2579 = vpop.f32.mrf.mxu0
        %v2580 = vadd.f32 0.0, %v2579
        %v2581 = vpop.f32.mrf.mxu0
        %v2582 = vadd.f32 0.0, %v2581
        %v2583 = vpop.f32.mrf.mxu0
        %v2584 = vadd.f32 0.0, %v2583
        %v2585 = vpop.f32.mrf.mxu0
        %v2586 = vadd.f32 0.0, %v2585
        %2587 = vmatprep.mubr.bf16.mxu0 0
        %2588 = vmatmul.mubr.bf16.gmra.mxu0 %v2067
        %v2589 = vpop.f32.mrf.mxu0
        %v2590 = vadd.f32 0.0, %v2589
        %v2591 = vpop.f32.mrf.mxu0
        %v2592 = vadd.f32 0.0, %v2591
        %v2593 = vpop.f32.mrf.mxu0
        %v2594 = vadd.f32 0.0, %v2593
        %v2595 = vpop.f32.mrf.mxu0
        %v2596 = vadd.f32 0.0, %v2595
        %2597 = vmatprep.mubr.bf16.mxu0 0
        %2598 = vmatmul.mubr.bf16.gmra.mxu0 %v2068
        %v2599 = vpop.f32.mrf.mxu0
        %v2600 = vadd.f32 0.0, %v2599
        %v2601 = vpop.f32.mrf.mxu0
        %v2602 = vadd.f32 0.0, %v2601
        %v2603 = vpop.f32.mrf.mxu0
        %v2604 = vadd.f32 0.0, %v2603
        %v2605 = vpop.f32.mrf.mxu0
        %v2606 = vadd.f32 0.0, %v2605
        %2607 = vmatprep.mubr.bf16.mxu0 0
        %2608 = vmatmul.mubr.bf16.gmra.mxu0 %v2069
        %v2609 = vpop.f32.mrf.mxu0
        %v2610 = vadd.f32 0.0, %v2609
        %v2611 = vpop.f32.mrf.mxu0
        %v2612 = vadd.f32 0.0, %v2611
        %v2613 = vpop.f32.mrf.mxu0
        %v2614 = vadd.f32 0.0, %v2613
        %v2615 = vpop.f32.mrf.mxu0
        %v2616 = vadd.f32 0.0, %v2615
        %2617 = vmatprep.mubr.bf16.mxu0 0
        %2618 = vmatmul.mubr.bf16.gmra.mxu0 %v2070
        %v2619 = vpop.f32.mrf.mxu0
        %v2620 = vadd.f32 0.0, %v2619
        %v2621 = vpop.f32.mrf.mxu0
        %v2622 = vadd.f32 0.0, %v2621
        %v2623 = vpop.f32.mrf.mxu0
        %v2624 = vadd.f32 0.0, %v2623
        %v2625 = vpop.f32.mrf.mxu0
        %v2626 = vadd.f32 0.0, %v2625
        %2627 = vmatprep.mubr.bf16.mxu0 0
        %2628 = vmatmul.mubr.bf16.gmra.mxu0 %v2071
        %v2629 = vpop.f32.mrf.mxu0
        %v2630 = vadd.f32 0.0, %v2629
        %v2631 = vpop.f32.mrf.mxu0
        %v2632 = vadd.f32 0.0, %v2631
        %v2633 = vpop.f32.mrf.mxu0
        %v2634 = vadd.f32 0.0, %v2633
        %v2635 = vpop.f32.mrf.mxu0
        %v2636 = vadd.f32 0.0, %v2635
        %2637 = vmatprep.mubr.bf16.mxu0 0
        %2638 = vmatmul.mubr.bf16.gmra.mxu0 %v2072
        %v2639 = vpop.f32.mrf.mxu0
        %v2640 = vadd.f32 0.0, %v2639
        %v2641 = vpop.f32.mrf.mxu0
        %v2642 = vadd.f32 0.0, %v2641
        %v2643 = vpop.f32.mrf.mxu0
        %v2644 = vadd.f32 0.0, %v2643
        %v2645 = vpop.f32.mrf.mxu0
        %v2646 = vadd.f32 0.0, %v2645
        %2647 = vmatprep.mubr.bf16.mxu0 0
        %2648 = vmatmul.mubr.bf16.gmra.mxu0 %v2073
        %v2649 = vpop.f32.mrf.mxu0
        %v2650 = vadd.f32 0.0, %v2649
        %v2651 = vpop.f32.mrf.mxu0
        %v2652 = vadd.f32 0.0, %v2651
        %v2653 = vpop.f32.mrf.mxu0
        %v2654 = vadd.f32 0.0, %v2653
        %v2655 = vpop.f32.mrf.mxu0
        %v2656 = vadd.f32 0.0, %v2655
        %2657 = vmatprep.mubr.bf16.mxu0 0
        %2658 = vmatmul.mubr.bf16.gmra.mxu0 %v2074
        %v2659 = vpop.f32.mrf.mxu0
        %v2660 = vadd.f32 0.0, %v2659
        %v2661 = vpop.f32.mrf.mxu0
        %v2662 = vadd.f32 0.0, %v2661
        %v2663 = vpop.f32.mrf.mxu0
        %v2664 = vadd.f32 0.0, %v2663
        %v2665 = vpop.f32.mrf.mxu0
        %v2666 = vadd.f32 0.0, %v2665
        %2667 = vmatprep.mubr.bf16.mxu0 0
        %2668 = vmatmul.mubr.bf16.gmra.mxu0 %v2075
        %v2669 = vpop.f32.mrf.mxu0
        %v2670 = vadd.f32 0.0, %v2669
        %v2671 = vpop.f32.mrf.mxu0
        %v2672 = vadd.f32 0.0, %v2671
        %v2673 = vpop.f32.mrf.mxu0
        %v2674 = vadd.f32 0.0, %v2673
        %v2675 = vpop.f32.mrf.mxu0
        %v2676 = vadd.f32 0.0, %v2675
        %2677 = vmatprep.mubr.bf16.mxu0 0
        %2678 = vmatmul.mubr.bf16.gmra.mxu0 %v2076
        %v2679 = vpop.f32.mrf.mxu0
        %v2680 = vadd.f32 0.0, %v2679
        %v2681 = vpop.f32.mrf.mxu0
        %v2682 = vadd.f32 0.0, %v2681
        %v2683 = vpop.f32.mrf.mxu0
        %v2684 = vadd.f32 0.0, %v2683
        %v2685 = vpop.f32.mrf.mxu0
        %v2686 = vadd.f32 0.0, %v2685
        %2687 = vmatprep.mubr.bf16.mxu0 0
        %2688 = vmatmul.mubr.bf16.gmra.mxu0 %v2077
        %v2689 = vpop.f32.mrf.mxu0
        %v2690 = vadd.f32 0.0, %v2689
        %v2691 = vpop.f32.mrf.mxu0
        %v2692 = vadd.f32 0.0, %v2691
        %v2693 = vpop.f32.mrf.mxu0
        %v2694 = vadd.f32 0.0, %v2693
        %v2695 = vpop.f32.mrf.mxu0
        %v2696 = vadd.f32 0.0, %v2695
        %2697 = vmatprep.mubr.bf16.mxu0 0
        %2698 = vmatmul.mubr.bf16.gmra.mxu0 %v2078
        %v2699 = vpop.f32.mrf.mxu0
        %v2700 = vadd.f32 0.0, %v2699
        %v2701 = vpop.f32.mrf.mxu0
        %v2702 = vadd.f32 0.0, %v2701
        %v2703 = vpop.f32.mrf.mxu0
        %v2704 = vadd.f32 0.0, %v2703
        %v2705 = vpop.f32.mrf.mxu0
        %v2706 = vadd.f32 0.0, %v2705
        %2707 = vmatprep.mubr.bf16.mxu0 0
        %2708 = vmatmul.mubr.bf16.gmra.mxu0 %v2079
        %v2709 = vpop.f32.mrf.mxu0
        %v2710 = vadd.f32 0.0, %v2709
        %v2711 = vpop.f32.mrf.mxu0
        %v2712 = vadd.f32 0.0, %v2711
        %v2713 = vpop.f32.mrf.mxu0
        %v2714 = vadd.f32 0.0, %v2713
        %v2715 = vpop.f32.mrf.mxu0
        %v2716 = vadd.f32 0.0, %v2715
        %2717 = vmatprep.mubr.bf16.mxu0 0
        %2718 = vmatmul.mubr.bf16.gmra.mxu0 %v2080
        %v2719 = vpop.f32.mrf.mxu0
        %v2720 = vadd.f32 0.0, %v2719
        %v2721 = vpop.f32.mrf.mxu0
        %v2722 = vadd.f32 0.0, %v2721
        %v2723 = vpop.f32.mrf.mxu0
        %v2724 = vadd.f32 0.0, %v2723
        %v2725 = vpop.f32.mrf.mxu0
        %v2726 = vadd.f32 0.0, %v2725
        %2727 = vmatprep.mubr.bf16.mxu0 0
        %2728 = vmatmul.mubr.bf16.gmra.mxu0 %v2081
        %v2729 = vpop.f32.mrf.mxu0
        %v2730 = vadd.f32 0.0, %v2729
        %v2731 = vpop.f32.mrf.mxu0
        %v2732 = vadd.f32 0.0, %v2731
        %v2733 = vpop.f32.mrf.mxu0
        %v2734 = vadd.f32 0.0, %v2733
        %v2735 = vpop.f32.mrf.mxu0
        %v2736 = vadd.f32 0.0, %v2735
        %2737 = vmatprep.mubr.bf16.mxu0 0
        %2738 = vmatmul.mubr.bf16.gmra.mxu0 %v2082
        %v2739 = vpop.f32.mrf.mxu0
        %v2740 = vadd.f32 0.0, %v2739
        %v2741 = vpop.f32.mrf.mxu0
        %v2742 = vadd.f32 0.0, %v2741
        %v2743 = vpop.f32.mrf.mxu0
        %v2744 = vadd.f32 0.0, %v2743
        %v2745 = vpop.f32.mrf.mxu0
        %v2746 = vadd.f32 0.0, %v2745
        %2747 = vmatprep.mubr.bf16.mxu0 0
        %2748 = vmatmul.mubr.bf16.gmra.mxu0 %v2083
        %v2749 = vpop.f32.mrf.mxu0
        %v2750 = vadd.f32 0.0, %v2749
        %v2751 = vpop.f32.mrf.mxu0
        %v2752 = vadd.f32 0.0, %v2751
        %v2753 = vpop.f32.mrf.mxu0
        %v2754 = vadd.f32 0.0, %v2753
        %v2755 = vpop.f32.mrf.mxu0
        %v2756 = vadd.f32 0.0, %v2755
        %2757 = vmatprep.mubr.bf16.mxu0 0
        %2758 = vmatmul.mubr.bf16.gmra.mxu0 %v2084
        %v2759 = vpop.f32.mrf.mxu0
        %v2760 = vadd.f32 0.0, %v2759
        %v2761 = vpop.f32.mrf.mxu0
        %v2762 = vadd.f32 0.0, %v2761
        %v2763 = vpop.f32.mrf.mxu0
        %v2764 = vadd.f32 0.0, %v2763
        %v2765 = vpop.f32.mrf.mxu0
        %v2766 = vadd.f32 0.0, %v2765
        %2767 = vmatprep.mubr.bf16.mxu0 0
        %2768 = vmatmul.mubr.bf16.gmra.mxu0 %v2085
        %v2769 = vpop.f32.mrf.mxu0
        %v2770 = vadd.f32 0.0, %v2769
        %v2771 = vpop.f32.mrf.mxu0
        %v2772 = vadd.f32 0.0, %v2771
        %v2773 = vpop.f32.mrf.mxu0
        %v2774 = vadd.f32 0.0, %v2773
        %v2775 = vpop.f32.mrf.mxu0
        %v2776 = vadd.f32 0.0, %v2775
        %2777 = vmatprep.mubr.bf16.mxu0 0
        %2778 = vmatmul.mubr.bf16.gmra.mxu0 %v2086
        %v2779 = vpop.f32.mrf.mxu0
        %v2780 = vadd.f32 0.0, %v2779
        %v2781 = vpop.f32.mrf.mxu0
        %v2782 = vadd.f32 0.0, %v2781
        %v2783 = vpop.f32.mrf.mxu0
        %v2784 = vadd.f32 0.0, %v2783
        %v2785 = vpop.f32.mrf.mxu0
        %v2786 = vadd.f32 0.0, %v2785
        %2787 = vmatprep.mubr.bf16.mxu0 0
        %2788 = vmatmul.mubr.bf16.gmra.mxu0 %v2087
        %v2789 = vpop.f32.mrf.mxu0
        %v2790 = vadd.f32 0.0, %v2789
        %v2791 = vpop.f32.mrf.mxu0
        %v2792 = vadd.f32 0.0, %v2791
        %v2793 = vpop.f32.mrf.mxu0
        %v2794 = vadd.f32 0.0, %v2793
        %v2795 = vpop.f32.mrf.mxu0
        %v2796 = vadd.f32 0.0, %v2795
        %2797 = vmatprep.mubr.bf16.mxu0 0
        %2798 = vmatmul.mubr.bf16.gmra.mxu0 %v2088
        %v2799 = vpop.f32.mrf.mxu0
        %v2800 = vadd.f32 0.0, %v2799
        %v2801 = vpop.f32.mrf.mxu0
        %v2802 = vadd.f32 0.0, %v2801
        %v2803 = vpop.f32.mrf.mxu0
        %v2804 = vadd.f32 0.0, %v2803
        %v2805 = vpop.f32.mrf.mxu0
        %v2806 = vadd.f32 0.0, %v2805
        %2807 = vmatprep.mubr.bf16.mxu0 0
        %2808 = vmatmul.mubr.bf16.gmra.mxu0 %v2089
        %v2809 = vpop.f32.mrf.mxu0
        %v2810 = vadd.f32 0.0, %v2809
        %v2811 = vpop.f32.mrf.mxu0
        %v2812 = vadd.f32 0.0, %v2811
        %v2813 = vpop.f32.mrf.mxu0
        %v2814 = vadd.f32 0.0, %v2813
        %v2815 = vpop.f32.mrf.mxu0
        %v2816 = vadd.f32 0.0, %v2815
        %2817 = vmatprep.mubr.bf16.mxu0 0
        %2818 = vmatmul.mubr.bf16.gmra.mxu0 %v2090
        %v2819 = vpop.f32.mrf.mxu0
        %v2820 = vadd.f32 0.0, %v2819
        %v2821 = vpop.f32.mrf.mxu0
        %v2822 = vadd.f32 0.0, %v2821
        %v2823 = vpop.f32.mrf.mxu0
        %v2824 = vadd.f32 0.0, %v2823
        %v2825 = vpop.f32.mrf.mxu0
        %v2826 = vadd.f32 0.0, %v2825
        %2827 = vdwg.mxu0
        %2828 = vmatprep.subr.bf16.mxu0 %v1770
        %2829 = vmatpush1.bf16.msra.mxu0 %v1769
        %2830 = vmatprep.subr.bf16.mxu0 %v1766
        %2831 = vmatpush1.bf16.msra.mxu0 %v1765
        %2832 = vmatprep.subr.bf16.mxu0 %v1762
        %2833 = vmatpush1.bf16.msra.mxu0 %v1761
        %2834 = vmatprep.subr.bf16.mxu0 %v1758
        %2835 = vmatpush1.bf16.msra.mxu0 %v1757
        %2836 = vmatprep.subr.bf16.mxu0 %v1754
        %2837 = vmatpush1.bf16.msra.mxu0 %v1753
        %2838 = vmatprep.subr.bf16.mxu0 %v1750
        %2839 = vmatpush1.bf16.msra.mxu0 %v1749
        %2840 = vmatprep.subr.bf16.mxu0 %v1746
        %2841 = vmatpush1.bf16.msra.mxu0 %v1745
        %2842 = vmatprep.subr.bf16.mxu0 %v1742
        %2843 = vmatpush1.bf16.msra.mxu0 %v1741
        %2844 = vmatprep.subr.bf16.mxu0 0
        %2845 = vmatpush2.bf16.msra.mxu0 0
        %2846 = vmatprep.subr.bf16.mxu0 0
        %2847 = vmatpush2.bf16.msra.mxu0 0
        %2848 = vmatprep.subr.bf16.mxu0 0
        %2849 = vmatpush2.bf16.msra.mxu0 0
        %2850 = vmatprep.subr.bf16.mxu0 0
        %2851 = vmatpush2.bf16.msra.mxu0 0
        %2852 = vmatprep.subr.bf16.mxu0 0
        %2853 = vmatpush2.bf16.msra.mxu0 0
        %2854 = vmatprep.subr.bf16.mxu0 0
        %2855 = vmatpush2.bf16.msra.mxu0 0
        %2856 = vmatprep.subr.bf16.mxu0 0
        %2857 = vmatpush2.bf16.msra.mxu0 0
        %2858 = vmatprep.subr.bf16.mxu0 0
        %2859 = vmatpush2.bf16.msra.mxu0 0
        %2860 = vmatprep.mubr.bf16.mxu0 0
        %2861 = vmatmul.mubr.bf16.gmra.mxu0 %v2027
        %v2862 = vpop.f32.mrf.mxu0
        %v2863 = vadd.f32 0.0, %v2862
        %v2864 = vpop.f32.mrf.mxu0
        %v2865 = vadd.f32 0.0, %v2864
        %v2866 = vpop.f32.mrf.mxu0
        %v2867 = vadd.f32 0.0, %v2866
        %v2868 = vpop.f32.mrf.mxu0
        %v2869 = vadd.f32 0.0, %v2868
        %2870 = vmatprep.mubr.bf16.mxu0 0
        %2871 = vmatmul.mubr.bf16.gmra.mxu0 %v2028
        %v2872 = vpop.f32.mrf.mxu0
        %v2873 = vadd.f32 0.0, %v2872
        %v2874 = vpop.f32.mrf.mxu0
        %v2875 = vadd.f32 0.0, %v2874
        %v2876 = vpop.f32.mrf.mxu0
        %v2877 = vadd.f32 0.0, %v2876
        %v2878 = vpop.f32.mrf.mxu0
        %v2879 = vadd.f32 0.0, %v2878
        %2880 = vmatprep.mubr.bf16.mxu0 0
        %2881 = vmatmul.mubr.bf16.gmra.mxu0 %v2029
        %v2882 = vpop.f32.mrf.mxu0
        %v2883 = vadd.f32 0.0, %v2882
        %v2884 = vpop.f32.mrf.mxu0
        %v2885 = vadd.f32 0.0, %v2884
        %v2886 = vpop.f32.mrf.mxu0
        %v2887 = vadd.f32 0.0, %v2886
        %v2888 = vpop.f32.mrf.mxu0
        %v2889 = vadd.f32 0.0, %v2888
        %2890 = vmatprep.mubr.bf16.mxu0 0
        %2891 = vmatmul.mubr.bf16.gmra.mxu0 %v2030
        %v2892 = vpop.f32.mrf.mxu0
        %v2893 = vadd.f32 0.0, %v2892
        %v2894 = vpop.f32.mrf.mxu0
        %v2895 = vadd.f32 0.0, %v2894
        %v2896 = vpop.f32.mrf.mxu0
        %v2897 = vadd.f32 0.0, %v2896
        %v2898 = vpop.f32.mrf.mxu0
        %v2899 = vadd.f32 0.0, %v2898
        %2900 = vmatprep.mubr.bf16.mxu0 0
        %2901 = vmatmul.mubr.bf16.gmra.mxu0 %v2031
        %v2902 = vpop.f32.mrf.mxu0
        %v2903 = vadd.f32 0.0, %v2902
        %v2904 = vpop.f32.mrf.mxu0
        %v2905 = vadd.f32 0.0, %v2904
        %v2906 = vpop.f32.mrf.mxu0
        %v2907 = vadd.f32 0.0, %v2906
        %v2908 = vpop.f32.mrf.mxu0
        %v2909 = vadd.f32 0.0, %v2908
        %2910 = vmatprep.mubr.bf16.mxu0 0
        %2911 = vmatmul.mubr.bf16.gmra.mxu0 %v2032
        %v2912 = vpop.f32.mrf.mxu0
        %v2913 = vadd.f32 0.0, %v2912
        %v2914 = vpop.f32.mrf.mxu0
        %v2915 = vadd.f32 0.0, %v2914
        %v2916 = vpop.f32.mrf.mxu0
        %v2917 = vadd.f32 0.0, %v2916
        %v2918 = vpop.f32.mrf.mxu0
        %v2919 = vadd.f32 0.0, %v2918
        %2920 = vmatprep.mubr.bf16.mxu0 0
        %2921 = vmatmul.mubr.bf16.gmra.mxu0 %v2033
        %v2922 = vpop.f32.mrf.mxu0
        %v2923 = vadd.f32 0.0, %v2922
        %v2924 = vpop.f32.mrf.mxu0
        %v2925 = vadd.f32 0.0, %v2924
        %v2926 = vpop.f32.mrf.mxu0
        %v2927 = vadd.f32 0.0, %v2926
        %v2928 = vpop.f32.mrf.mxu0
        %v2929 = vadd.f32 0.0, %v2928
        %2930 = vmatprep.mubr.bf16.mxu0 0
        %2931 = vmatmul.mubr.bf16.gmra.mxu0 %v2034
        %v2932 = vpop.f32.mrf.mxu0
        %v2933 = vadd.f32 0.0, %v2932
        %v2934 = vpop.f32.mrf.mxu0
        %v2935 = vadd.f32 0.0, %v2934
        %v2936 = vpop.f32.mrf.mxu0
        %v2937 = vadd.f32 0.0, %v2936
        %v2938 = vpop.f32.mrf.mxu0
        %v2939 = vadd.f32 0.0, %v2938
        %2940 = vmatprep.mubr.bf16.mxu0 0
        %2941 = vmatmul.mubr.bf16.gmra.mxu0 %v2035
        %v2942 = vpop.f32.mrf.mxu0
        %v2943 = vadd.f32 0.0, %v2942
        %v2944 = vpop.f32.mrf.mxu0
        %v2945 = vadd.f32 0.0, %v2944
        %v2946 = vpop.f32.mrf.mxu0
        %v2947 = vadd.f32 0.0, %v2946
        %v2948 = vpop.f32.mrf.mxu0
        %v2949 = vadd.f32 0.0, %v2948
        %2950 = vmatprep.mubr.bf16.mxu0 0
        %2951 = vmatmul.mubr.bf16.gmra.mxu0 %v2036
        %v2952 = vpop.f32.mrf.mxu0
        %v2953 = vadd.f32 0.0, %v2952
        %v2954 = vpop.f32.mrf.mxu0
        %v2955 = vadd.f32 0.0, %v2954
        %v2956 = vpop.f32.mrf.mxu0
        %v2957 = vadd.f32 0.0, %v2956
        %v2958 = vpop.f32.mrf.mxu0
        %v2959 = vadd.f32 0.0, %v2958
        %2960 = vmatprep.mubr.bf16.mxu0 0
        %2961 = vmatmul.mubr.bf16.gmra.mxu0 %v2037
        %v2962 = vpop.f32.mrf.mxu0
        %v2963 = vadd.f32 0.0, %v2962
        %v2964 = vpop.f32.mrf.mxu0
        %v2965 = vadd.f32 0.0, %v2964
        %v2966 = vpop.f32.mrf.mxu0
        %v2967 = vadd.f32 0.0, %v2966
        %v2968 = vpop.f32.mrf.mxu0
        %v2969 = vadd.f32 0.0, %v2968
        %2970 = vmatprep.mubr.bf16.mxu0 0
        %2971 = vmatmul.mubr.bf16.gmra.mxu0 %v2038
        %v2972 = vpop.f32.mrf.mxu0
        %v2973 = vadd.f32 0.0, %v2972
        %v2974 = vpop.f32.mrf.mxu0
        %v2975 = vadd.f32 0.0, %v2974
        %v2976 = vpop.f32.mrf.mxu0
        %v2977 = vadd.f32 0.0, %v2976
        %v2978 = vpop.f32.mrf.mxu0
        %v2979 = vadd.f32 0.0, %v2978
        %2980 = vmatprep.mubr.bf16.mxu0 0
        %2981 = vmatmul.mubr.bf16.gmra.mxu0 %v2039
        %v2982 = vpop.f32.mrf.mxu0
        %v2983 = vadd.f32 0.0, %v2982
        %v2984 = vpop.f32.mrf.mxu0
        %v2985 = vadd.f32 0.0, %v2984
        %v2986 = vpop.f32.mrf.mxu0
        %v2987 = vadd.f32 0.0, %v2986
        %v2988 = vpop.f32.mrf.mxu0
        %v2989 = vadd.f32 0.0, %v2988
        %2990 = vmatprep.mubr.bf16.mxu0 0
        %2991 = vmatmul.mubr.bf16.gmra.mxu0 %v2040
        %v2992 = vpop.f32.mrf.mxu0
        %v2993 = vadd.f32 0.0, %v2992
        %v2994 = vpop.f32.mrf.mxu0
        %v2995 = vadd.f32 0.0, %v2994
        %v2996 = vpop.f32.mrf.mxu0
        %v2997 = vadd.f32 0.0, %v2996
        %v2998 = vpop.f32.mrf.mxu0
        %v2999 = vadd.f32 0.0, %v2998
        %3000 = vmatprep.mubr.bf16.mxu0 0
        %3001 = vmatmul.mubr.bf16.gmra.mxu0 %v2041
        %v3002 = vpop.f32.mrf.mxu0
        %v3003 = vadd.f32 0.0, %v3002
        %v3004 = vpop.f32.mrf.mxu0
        %v3005 = vadd.f32 0.0, %v3004
        %v3006 = vpop.f32.mrf.mxu0
        %v3007 = vadd.f32 0.0, %v3006
        %v3008 = vpop.f32.mrf.mxu0
        %v3009 = vadd.f32 0.0, %v3008
        %3010 = vmatprep.mubr.bf16.mxu0 0
        %3011 = vmatmul.mubr.bf16.gmra.mxu0 %v2042
        %v3012 = vpop.f32.mrf.mxu0
        %v3013 = vadd.f32 0.0, %v3012
        %v3014 = vpop.f32.mrf.mxu0
        %v3015 = vadd.f32 0.0, %v3014
        %v3016 = vpop.f32.mrf.mxu0
        %v3017 = vadd.f32 0.0, %v3016
        %v3018 = vpop.f32.mrf.mxu0
        %v3019 = vadd.f32 0.0, %v3018
        %3020 = vmatprep.mubr.bf16.mxu0 0
        %3021 = vmatmul.mubr.bf16.gmra.mxu0 %v2043
        %v3022 = vpop.f32.mrf.mxu0
        %v3023 = vadd.f32 0.0, %v3022
        %v3024 = vpop.f32.mrf.mxu0
        %v3025 = vadd.f32 0.0, %v3024
        %v3026 = vpop.f32.mrf.mxu0
        %v3027 = vadd.f32 0.0, %v3026
        %v3028 = vpop.f32.mrf.mxu0
        %v3029 = vadd.f32 0.0, %v3028
        %3030 = vmatprep.mubr.bf16.mxu0 0
        %3031 = vmatmul.mubr.bf16.gmra.mxu0 %v2044
        %v3032 = vpop.f32.mrf.mxu0
        %v3033 = vadd.f32 0.0, %v3032
        %v3034 = vpop.f32.mrf.mxu0
        %v3035 = vadd.f32 0.0, %v3034
        %v3036 = vpop.f32.mrf.mxu0
        %v3037 = vadd.f32 0.0, %v3036
        %v3038 = vpop.f32.mrf.mxu0
        %v3039 = vadd.f32 0.0, %v3038
        %3040 = vmatprep.mubr.bf16.mxu0 0
        %3041 = vmatmul.mubr.bf16.gmra.mxu0 %v2045
        %v3042 = vpop.f32.mrf.mxu0
        %v3043 = vadd.f32 0.0, %v3042
        %v3044 = vpop.f32.mrf.mxu0
        %v3045 = vadd.f32 0.0, %v3044
        %v3046 = vpop.f32.mrf.mxu0
        %v3047 = vadd.f32 0.0, %v3046
        %v3048 = vpop.f32.mrf.mxu0
        %v3049 = vadd.f32 0.0, %v3048
        %3050 = vmatprep.mubr.bf16.mxu0 0
        %3051 = vmatmul.mubr.bf16.gmra.mxu0 %v2046
        %v3052 = vpop.f32.mrf.mxu0
        %v3053 = vadd.f32 0.0, %v3052
        %v3054 = vpop.f32.mrf.mxu0
        %v3055 = vadd.f32 0.0, %v3054
        %v3056 = vpop.f32.mrf.mxu0
        %v3057 = vadd.f32 0.0, %v3056
        %v3058 = vpop.f32.mrf.mxu0
        %v3059 = vadd.f32 0.0, %v3058
        %3060 = vmatprep.mubr.bf16.mxu0 0
        %3061 = vmatmul.mubr.bf16.gmra.mxu0 %v2047
        %v3062 = vpop.f32.mrf.mxu0
        %v3063 = vadd.f32 0.0, %v3062
        %v3064 = vpop.f32.mrf.mxu0
        %v3065 = vadd.f32 0.0, %v3064
        %v3066 = vpop.f32.mrf.mxu0
        %v3067 = vadd.f32 0.0, %v3066
        %v3068 = vpop.f32.mrf.mxu0
        %v3069 = vadd.f32 0.0, %v3068
        %3070 = vmatprep.mubr.bf16.mxu0 0
        %3071 = vmatmul.mubr.bf16.gmra.mxu0 %v2048
        %v3072 = vpop.f32.mrf.mxu0
        %v3073 = vadd.f32 0.0, %v3072
        %v3074 = vpop.f32.mrf.mxu0
        %v3075 = vadd.f32 0.0, %v3074
        %v3076 = vpop.f32.mrf.mxu0
        %v3077 = vadd.f32 0.0, %v3076
        %v3078 = vpop.f32.mrf.mxu0
        %v3079 = vadd.f32 0.0, %v3078
        %3080 = vmatprep.mubr.bf16.mxu0 0
        %3081 = vmatmul.mubr.bf16.gmra.mxu0 %v2049
        %v3082 = vpop.f32.mrf.mxu0
        %v3083 = vadd.f32 0.0, %v3082
        %v3084 = vpop.f32.mrf.mxu0
        %v3085 = vadd.f32 0.0, %v3084
        %v3086 = vpop.f32.mrf.mxu0
        %v3087 = vadd.f32 0.0, %v3086
        %v3088 = vpop.f32.mrf.mxu0
        %v3089 = vadd.f32 0.0, %v3088
        %3090 = vmatprep.mubr.bf16.mxu0 0
        %3091 = vmatmul.mubr.bf16.gmra.mxu0 %v2050
        %v3092 = vpop.f32.mrf.mxu0
        %v3093 = vadd.f32 0.0, %v3092
        %v3094 = vpop.f32.mrf.mxu0
        %v3095 = vadd.f32 0.0, %v3094
        %v3096 = vpop.f32.mrf.mxu0
        %v3097 = vadd.f32 0.0, %v3096
        %v3098 = vpop.f32.mrf.mxu0
        %v3099 = vadd.f32 0.0, %v3098
        %3100 = vmatprep.mubr.bf16.mxu0 0
        %3101 = vmatmul.mubr.bf16.gmra.mxu0 %v2051
        %v3102 = vpop.f32.mrf.mxu0
        %v3103 = vadd.f32 0.0, %v3102
        %v3104 = vpop.f32.mrf.mxu0
        %v3105 = vadd.f32 0.0, %v3104
        %v3106 = vpop.f32.mrf.mxu0
        %v3107 = vadd.f32 0.0, %v3106
        %v3108 = vpop.f32.mrf.mxu0
        %v3109 = vadd.f32 0.0, %v3108
        %3110 = vmatprep.mubr.bf16.mxu0 0
        %3111 = vmatmul.mubr.bf16.gmra.mxu0 %v2052
        %v3112 = vpop.f32.mrf.mxu0
        %v3113 = vadd.f32 0.0, %v3112
        %v3114 = vpop.f32.mrf.mxu0
        %v3115 = vadd.f32 0.0, %v3114
        %v3116 = vpop.f32.mrf.mxu0
        %v3117 = vadd.f32 0.0, %v3116
        %v3118 = vpop.f32.mrf.mxu0
        %v3119 = vadd.f32 0.0, %v3118
        %3120 = vmatprep.mubr.bf16.mxu0 0
        %3121 = vmatmul.mubr.bf16.gmra.mxu0 %v2053
        %v3122 = vpop.f32.mrf.mxu0
        %v3123 = vadd.f32 0.0, %v3122
        %v3124 = vpop.f32.mrf.mxu0
        %v3125 = vadd.f32 0.0, %v3124
        %v3126 = vpop.f32.mrf.mxu0
        %v3127 = vadd.f32 0.0, %v3126
        %v3128 = vpop.f32.mrf.mxu0
        %v3129 = vadd.f32 0.0, %v3128
        %3130 = vmatprep.mubr.bf16.mxu0 0
        %3131 = vmatmul.mubr.bf16.gmra.mxu0 %v2054
        %v3132 = vpop.f32.mrf.mxu0
        %v3133 = vadd.f32 0.0, %v3132
        %v3134 = vpop.f32.mrf.mxu0
        %v3135 = vadd.f32 0.0, %v3134
        %v3136 = vpop.f32.mrf.mxu0
        %v3137 = vadd.f32 0.0, %v3136
        %v3138 = vpop.f32.mrf.mxu0
        %v3139 = vadd.f32 0.0, %v3138
        %3140 = vmatprep.mubr.bf16.mxu0 0
        %3141 = vmatmul.mubr.bf16.gmra.mxu0 %v2055
        %v3142 = vpop.f32.mrf.mxu0
        %v3143 = vadd.f32 0.0, %v3142
        %v3144 = vpop.f32.mrf.mxu0
        %v3145 = vadd.f32 0.0, %v3144
        %v3146 = vpop.f32.mrf.mxu0
        %v3147 = vadd.f32 0.0, %v3146
        %v3148 = vpop.f32.mrf.mxu0
        %v3149 = vadd.f32 0.0, %v3148
        %3150 = vmatprep.mubr.bf16.mxu0 0
        %3151 = vmatmul.mubr.bf16.gmra.mxu0 %v2056
        %v3152 = vpop.f32.mrf.mxu0
        %v3153 = vadd.f32 0.0, %v3152
        %v3154 = vpop.f32.mrf.mxu0
        %v3155 = vadd.f32 0.0, %v3154
        %v3156 = vpop.f32.mrf.mxu0
        %v3157 = vadd.f32 0.0, %v3156
        %v3158 = vpop.f32.mrf.mxu0
        %v3159 = vadd.f32 0.0, %v3158
        %3160 = vmatprep.mubr.bf16.mxu0 0
        %3161 = vmatmul.mubr.bf16.gmra.mxu0 %v2057
        %v3162 = vpop.f32.mrf.mxu0
        %v3163 = vadd.f32 0.0, %v3162
        %v3164 = vpop.f32.mrf.mxu0
        %v3165 = vadd.f32 0.0, %v3164
        %v3166 = vpop.f32.mrf.mxu0
        %v3167 = vadd.f32 0.0, %v3166
        %v3168 = vpop.f32.mrf.mxu0
        %v3169 = vadd.f32 0.0, %v3168
        %3170 = vmatprep.mubr.bf16.mxu0 0
        %3171 = vmatmul.mubr.bf16.gmra.mxu0 %v2058
        %v3172 = vpop.f32.mrf.mxu0
        %v3173 = vadd.f32 0.0, %v3172
        %v3174 = vpop.f32.mrf.mxu0
        %v3175 = vadd.f32 0.0, %v3174
        %v3176 = vpop.f32.mrf.mxu0
        %v3177 = vadd.f32 0.0, %v3176
        %v3178 = vpop.f32.mrf.mxu0
        %v3179 = vadd.f32 0.0, %v3178
        %3180 = vmatprep.mubr.bf16.mxu0 0
        %3181 = vmatmul.mubr.bf16.gmra.mxu0 %v2059
        %v3182 = vpop.f32.mrf.mxu0
        %v3183 = vadd.f32 0.0, %v3182
        %v3184 = vpop.f32.mrf.mxu0
        %v3185 = vadd.f32 0.0, %v3184
        %v3186 = vpop.f32.mrf.mxu0
        %v3187 = vadd.f32 0.0, %v3186
        %v3188 = vpop.f32.mrf.mxu0
        %v3189 = vadd.f32 0.0, %v3188
        %3190 = vmatprep.mubr.bf16.mxu0 0
        %3191 = vmatmul.mubr.bf16.gmra.mxu0 %v2060
        %v3192 = vpop.f32.mrf.mxu0
        %v3193 = vadd.f32 0.0, %v3192
        %v3194 = vpop.f32.mrf.mxu0
        %v3195 = vadd.f32 0.0, %v3194
        %v3196 = vpop.f32.mrf.mxu0
        %v3197 = vadd.f32 0.0, %v3196
        %v3198 = vpop.f32.mrf.mxu0
        %v3199 = vadd.f32 0.0, %v3198
        %3200 = vmatprep.mubr.bf16.mxu0 0
        %3201 = vmatmul.mubr.bf16.gmra.mxu0 %v2061
        %v3202 = vpop.f32.mrf.mxu0
        %v3203 = vadd.f32 0.0, %v3202
        %v3204 = vpop.f32.mrf.mxu0
        %v3205 = vadd.f32 0.0, %v3204
        %v3206 = vpop.f32.mrf.mxu0
        %v3207 = vadd.f32 0.0, %v3206
        %v3208 = vpop.f32.mrf.mxu0
        %v3209 = vadd.f32 0.0, %v3208
        %3210 = vmatprep.mubr.bf16.mxu0 0
        %3211 = vmatmul.mubr.bf16.gmra.mxu0 %v2062
        %v3212 = vpop.f32.mrf.mxu0
        %v3213 = vadd.f32 0.0, %v3212
        %v3214 = vpop.f32.mrf.mxu0
        %v3215 = vadd.f32 0.0, %v3214
        %v3216 = vpop.f32.mrf.mxu0
        %v3217 = vadd.f32 0.0, %v3216
        %v3218 = vpop.f32.mrf.mxu0
        %v3219 = vadd.f32 0.0, %v3218
        %3220 = vmatprep.mubr.bf16.mxu0 0
        %3221 = vmatmul.mubr.bf16.gmra.mxu0 %v2063
        %v3222 = vpop.f32.mrf.mxu0
        %v3223 = vadd.f32 0.0, %v3222
        %v3224 = vpop.f32.mrf.mxu0
        %v3225 = vadd.f32 0.0, %v3224
        %v3226 = vpop.f32.mrf.mxu0
        %v3227 = vadd.f32 0.0, %v3226
        %v3228 = vpop.f32.mrf.mxu0
        %v3229 = vadd.f32 0.0, %v3228
        %3230 = vmatprep.mubr.bf16.mxu0 0
        %3231 = vmatmul.mubr.bf16.gmra.mxu0 %v2064
        %v3232 = vpop.f32.mrf.mxu0
        %v3233 = vadd.f32 0.0, %v3232
        %v3234 = vpop.f32.mrf.mxu0
        %v3235 = vadd.f32 0.0, %v3234
        %v3236 = vpop.f32.mrf.mxu0
        %v3237 = vadd.f32 0.0, %v3236
        %v3238 = vpop.f32.mrf.mxu0
        %v3239 = vadd.f32 0.0, %v3238
        %3240 = vmatprep.mubr.bf16.mxu0 0
        %3241 = vmatmul.mubr.bf16.gmra.mxu0 %v2065
        %v3242 = vpop.f32.mrf.mxu0
        %v3243 = vadd.f32 0.0, %v3242
        %v3244 = vpop.f32.mrf.mxu0
        %v3245 = vadd.f32 0.0, %v3244
        %v3246 = vpop.f32.mrf.mxu0
        %v3247 = vadd.f32 0.0, %v3246
        %v3248 = vpop.f32.mrf.mxu0
        %v3249 = vadd.f32 0.0, %v3248
        %3250 = vmatprep.mubr.bf16.mxu0 0
        %3251 = vmatmul.mubr.bf16.gmra.mxu0 %v2066
        %v3252 = vpop.f32.mrf.mxu0
        %v3253 = vadd.f32 0.0, %v3252
        %v3254 = vpop.f32.mrf.mxu0
        %v3255 = vadd.f32 0.0, %v3254
        %v3256 = vpop.f32.mrf.mxu0
        %v3257 = vadd.f32 0.0, %v3256
        %v3258 = vpop.f32.mrf.mxu0
        %v3259 = vadd.f32 0.0, %v3258
        %3260 = vmatprep.mubr.bf16.mxu0 0
        %3261 = vmatmul.mubr.bf16.gmra.mxu0 %v2067
        %v3262 = vpop.f32.mrf.mxu0
        %v3263 = vadd.f32 0.0, %v3262
        %v3264 = vpop.f32.mrf.mxu0
        %v3265 = vadd.f32 0.0, %v3264
        %v3266 = vpop.f32.mrf.mxu0
        %v3267 = vadd.f32 0.0, %v3266
        %v3268 = vpop.f32.mrf.mxu0
        %v3269 = vadd.f32 0.0, %v3268
        %3270 = vmatprep.mubr.bf16.mxu0 0
        %3271 = vmatmul.mubr.bf16.gmra.mxu0 %v2068
        %v3272 = vpop.f32.mrf.mxu0
        %v3273 = vadd.f32 0.0, %v3272
        %v3274 = vpop.f32.mrf.mxu0
        %v3275 = vadd.f32 0.0, %v3274
        %v3276 = vpop.f32.mrf.mxu0
        %v3277 = vadd.f32 0.0, %v3276
        %v3278 = vpop.f32.mrf.mxu0
        %v3279 = vadd.f32 0.0, %v3278
        %3280 = vmatprep.mubr.bf16.mxu0 0
        %3281 = vmatmul.mubr.bf16.gmra.mxu0 %v2069
        %v3282 = vpop.f32.mrf.mxu0
        %v3283 = vadd.f32 0.0, %v3282
        %v3284 = vpop.f32.mrf.mxu0
        %v3285 = vadd.f32 0.0, %v3284
        %v3286 = vpop.f32.mrf.mxu0
        %v3287 = vadd.f32 0.0, %v3286
        %v3288 = vpop.f32.mrf.mxu0
        %v3289 = vadd.f32 0.0, %v3288
        %3290 = vmatprep.mubr.bf16.mxu0 0
        %3291 = vmatmul.mubr.bf16.gmra.mxu0 %v2070
        %v3292 = vpop.f32.mrf.mxu0
        %v3293 = vadd.f32 0.0, %v3292
        %v3294 = vpop.f32.mrf.mxu0
        %v3295 = vadd.f32 0.0, %v3294
        %v3296 = vpop.f32.mrf.mxu0
        %v3297 = vadd.f32 0.0, %v3296
        %v3298 = vpop.f32.mrf.mxu0
        %v3299 = vadd.f32 0.0, %v3298
        %3300 = vmatprep.mubr.bf16.mxu0 0
        %3301 = vmatmul.mubr.bf16.gmra.mxu0 %v2071
        %v3302 = vpop.f32.mrf.mxu0
        %v3303 = vadd.f32 0.0, %v3302
        %v3304 = vpop.f32.mrf.mxu0
        %v3305 = vadd.f32 0.0, %v3304
        %v3306 = vpop.f32.mrf.mxu0
        %v3307 = vadd.f32 0.0, %v3306
        %v3308 = vpop.f32.mrf.mxu0
        %v3309 = vadd.f32 0.0, %v3308
        %3310 = vmatprep.mubr.bf16.mxu0 0
        %3311 = vmatmul.mubr.bf16.gmra.mxu0 %v2072
        %v3312 = vpop.f32.mrf.mxu0
        %v3313 = vadd.f32 0.0, %v3312
        %v3314 = vpop.f32.mrf.mxu0
        %v3315 = vadd.f32 0.0, %v3314
        %v3316 = vpop.f32.mrf.mxu0
        %v3317 = vadd.f32 0.0, %v3316
        %v3318 = vpop.f32.mrf.mxu0
        %v3319 = vadd.f32 0.0, %v3318
        %3320 = vmatprep.mubr.bf16.mxu0 0
        %3321 = vmatmul.mubr.bf16.gmra.mxu0 %v2073
        %v3322 = vpop.f32.mrf.mxu0
        %v3323 = vadd.f32 0.0, %v3322
        %v3324 = vpop.f32.mrf.mxu0
        %v3325 = vadd.f32 0.0, %v3324
        %v3326 = vpop.f32.mrf.mxu0
        %v3327 = vadd.f32 0.0, %v3326
        %v3328 = vpop.f32.mrf.mxu0
        %v3329 = vadd.f32 0.0, %v3328
        %3330 = vmatprep.mubr.bf16.mxu0 0
        %3331 = vmatmul.mubr.bf16.gmra.mxu0 %v2074
        %v3332 = vpop.f32.mrf.mxu0
        %v3333 = vadd.f32 0.0, %v3332
        %v3334 = vpop.f32.mrf.mxu0
        %v3335 = vadd.f32 0.0, %v3334
        %v3336 = vpop.f32.mrf.mxu0
        %v3337 = vadd.f32 0.0, %v3336
        %v3338 = vpop.f32.mrf.mxu0
        %v3339 = vadd.f32 0.0, %v3338
        %3340 = vmatprep.mubr.bf16.mxu0 0
        %3341 = vmatmul.mubr.bf16.gmra.mxu0 %v2075
        %v3342 = vpop.f32.mrf.mxu0
        %v3343 = vadd.f32 0.0, %v3342
        %v3344 = vpop.f32.mrf.mxu0
        %v3345 = vadd.f32 0.0, %v3344
        %v3346 = vpop.f32.mrf.mxu0
        %v3347 = vadd.f32 0.0, %v3346
        %v3348 = vpop.f32.mrf.mxu0
        %v3349 = vadd.f32 0.0, %v3348
        %3350 = vmatprep.mubr.bf16.mxu0 0
        %3351 = vmatmul.mubr.bf16.gmra.mxu0 %v2076
        %v3352 = vpop.f32.mrf.mxu0
        %v3353 = vadd.f32 0.0, %v3352
        %v3354 = vpop.f32.mrf.mxu0
        %v3355 = vadd.f32 0.0, %v3354
        %v3356 = vpop.f32.mrf.mxu0
        %v3357 = vadd.f32 0.0, %v3356
        %v3358 = vpop.f32.mrf.mxu0
        %v3359 = vadd.f32 0.0, %v3358
        %3360 = vmatprep.mubr.bf16.mxu0 0
        %3361 = vmatmul.mubr.bf16.gmra.mxu0 %v2077
        %v3362 = vpop.f32.mrf.mxu0
        %v3363 = vadd.f32 0.0, %v3362
        %v3364 = vpop.f32.mrf.mxu0
        %v3365 = vadd.f32 0.0, %v3364
        %v3366 = vpop.f32.mrf.mxu0
        %v3367 = vadd.f32 0.0, %v3366
        %v3368 = vpop.f32.mrf.mxu0
        %v3369 = vadd.f32 0.0, %v3368
        %3370 = vmatprep.mubr.bf16.mxu0 0
        %3371 = vmatmul.mubr.bf16.gmra.mxu0 %v2078
        %v3372 = vpop.f32.mrf.mxu0
        %v3373 = vadd.f32 0.0, %v3372
        %v3374 = vpop.f32.mrf.mxu0
        %v3375 = vadd.f32 0.0, %v3374
        %v3376 = vpop.f32.mrf.mxu0
        %v3377 = vadd.f32 0.0, %v3376
        %v3378 = vpop.f32.mrf.mxu0
        %v3379 = vadd.f32 0.0, %v3378
        %3380 = vmatprep.mubr.bf16.mxu0 0
        %3381 = vmatmul.mubr.bf16.gmra.mxu0 %v2079
        %v3382 = vpop.f32.mrf.mxu0
        %v3383 = vadd.f32 0.0, %v3382
        %v3384 = vpop.f32.mrf.mxu0
        %v3385 = vadd.f32 0.0, %v3384
        %v3386 = vpop.f32.mrf.mxu0
        %v3387 = vadd.f32 0.0, %v3386
        %v3388 = vpop.f32.mrf.mxu0
        %v3389 = vadd.f32 0.0, %v3388
        %3390 = vmatprep.mubr.bf16.mxu0 0
        %3391 = vmatmul.mubr.bf16.gmra.mxu0 %v2080
        %v3392 = vpop.f32.mrf.mxu0
        %v3393 = vadd.f32 0.0, %v3392
        %v3394 = vpop.f32.mrf.mxu0
        %v3395 = vadd.f32 0.0, %v3394
        %v3396 = vpop.f32.mrf.mxu0
        %v3397 = vadd.f32 0.0, %v3396
        %v3398 = vpop.f32.mrf.mxu0
        %v3399 = vadd.f32 0.0, %v3398
        %3400 = vmatprep.mubr.bf16.mxu0 0
        %3401 = vmatmul.mubr.bf16.gmra.mxu0 %v2081
        %v3402 = vpop.f32.mrf.mxu0
        %v3403 = vadd.f32 0.0, %v3402
        %v3404 = vpop.f32.mrf.mxu0
        %v3405 = vadd.f32 0.0, %v3404
        %v3406 = vpop.f32.mrf.mxu0
        %v3407 = vadd.f32 0.0, %v3406
        %v3408 = vpop.f32.mrf.mxu0
        %v3409 = vadd.f32 0.0, %v3408
        %3410 = vmatprep.mubr.bf16.mxu0 0
        %3411 = vmatmul.mubr.bf16.gmra.mxu0 %v2082
        %v3412 = vpop.f32.mrf.mxu0
        %v3413 = vadd.f32 0.0, %v3412
        %v3414 = vpop.f32.mrf.mxu0
        %v3415 = vadd.f32 0.0, %v3414
        %v3416 = vpop.f32.mrf.mxu0
        %v3417 = vadd.f32 0.0, %v3416
        %v3418 = vpop.f32.mrf.mxu0
        %v3419 = vadd.f32 0.0, %v3418
        %3420 = vmatprep.mubr.bf16.mxu0 0
        %3421 = vmatmul.mubr.bf16.gmra.mxu0 %v2083
        %v3422 = vpop.f32.mrf.mxu0
        %v3423 = vadd.f32 0.0, %v3422
        %v3424 = vpop.f32.mrf.mxu0
        %v3425 = vadd.f32 0.0, %v3424
        %v3426 = vpop.f32.mrf.mxu0
        %v3427 = vadd.f32 0.0, %v3426
        %v3428 = vpop.f32.mrf.mxu0
        %v3429 = vadd.f32 0.0, %v3428
        %3430 = vmatprep.mubr.bf16.mxu0 0
        %3431 = vmatmul.mubr.bf16.gmra.mxu0 %v2084
        %v3432 = vpop.f32.mrf.mxu0
        %v3433 = vadd.f32 0.0, %v3432
        %v3434 = vpop.f32.mrf.mxu0
        %v3435 = vadd.f32 0.0, %v3434
        %v3436 = vpop.f32.mrf.mxu0
        %v3437 = vadd.f32 0.0, %v3436
        %v3438 = vpop.f32.mrf.mxu0
        %v3439 = vadd.f32 0.0, %v3438
        %3440 = vmatprep.mubr.bf16.mxu0 0
        %3441 = vmatmul.mubr.bf16.gmra.mxu0 %v2085
        %v3442 = vpop.f32.mrf.mxu0
        %v3443 = vadd.f32 0.0, %v3442
        %v3444 = vpop.f32.mrf.mxu0
        %v3445 = vadd.f32 0.0, %v3444
        %v3446 = vpop.f32.mrf.mxu0
        %v3447 = vadd.f32 0.0, %v3446
        %v3448 = vpop.f32.mrf.mxu0
        %v3449 = vadd.f32 0.0, %v3448
        %3450 = vmatprep.mubr.bf16.mxu0 0
        %3451 = vmatmul.mubr.bf16.gmra.mxu0 %v2086
        %v3452 = vpop.f32.mrf.mxu0
        %v3453 = vadd.f32 0.0, %v3452
        %v3454 = vpop.f32.mrf.mxu0
        %v3455 = vadd.f32 0.0, %v3454
        %v3456 = vpop.f32.mrf.mxu0
        %v3457 = vadd.f32 0.0, %v3456
        %v3458 = vpop.f32.mrf.mxu0
        %v3459 = vadd.f32 0.0, %v3458
        %3460 = vmatprep.mubr.bf16.mxu0 0
        %3461 = vmatmul.mubr.bf16.gmra.mxu0 %v2087
        %v3462 = vpop.f32.mrf.mxu0
        %v3463 = vadd.f32 0.0, %v3462
        %v3464 = vpop.f32.mrf.mxu0
        %v3465 = vadd.f32 0.0, %v3464
        %v3466 = vpop.f32.mrf.mxu0
        %v3467 = vadd.f32 0.0, %v3466
        %v3468 = vpop.f32.mrf.mxu0
        %v3469 = vadd.f32 0.0, %v3468
        %3470 = vmatprep.mubr.bf16.mxu0 0
        %3471 = vmatmul.mubr.bf16.gmra.mxu0 %v2088
        %v3472 = vpop.f32.mrf.mxu0
        %v3473 = vadd.f32 0.0, %v3472
        %v3474 = vpop.f32.mrf.mxu0
        %v3475 = vadd.f32 0.0, %v3474
        %v3476 = vpop.f32.mrf.mxu0
        %v3477 = vadd.f32 0.0, %v3476
        %v3478 = vpop.f32.mrf.mxu0
        %v3479 = vadd.f32 0.0, %v3478
        %3480 = vmatprep.mubr.bf16.mxu0 0
        %3481 = vmatmul.mubr.bf16.gmra.mxu0 %v2089
        %v3482 = vpop.f32.mrf.mxu0
        %v3483 = vadd.f32 0.0, %v3482
        %v3484 = vpop.f32.mrf.mxu0
        %v3485 = vadd.f32 0.0, %v3484
        %v3486 = vpop.f32.mrf.mxu0
        %v3487 = vadd.f32 0.0, %v3486
        %v3488 = vpop.f32.mrf.mxu0
        %v3489 = vadd.f32 0.0, %v3488
        %3490 = vmatprep.mubr.bf16.mxu0 0
        %3491 = vmatmul.mubr.bf16.gmra.mxu0 %v2090
        %v3492 = vpop.f32.mrf.mxu0
        %v3493 = vadd.f32 0.0, %v3492
        %v3494 = vpop.f32.mrf.mxu0
        %v3495 = vadd.f32 0.0, %v3494
        %v3496 = vpop.f32.mrf.mxu0
        %v3497 = vadd.f32 0.0, %v3496
        %v3498 = vpop.f32.mrf.mxu0
        %v3499 = vadd.f32 0.0, %v3498
        %3500 = vdwg.mxu0
        %p3501 = scmp.eq.s32.totalorder %s31, 0
        // Predicated region
        $region81: #{transform_module_forward.2} parent=71 // pred_check
          %p3502 = pneg %p3501
        $region82: #{transform_module_forward.2} parent=71 // pred_check_branch
          %3504 = sbr.rel (%p3502) target = $region84
        $region83: #{transform_module_forward.2} parent=71 // pred_region
          %3505 = vst [vmem:[#allocation2] sm:$0xff] -inf
          %3506 = vst [vmem:[#allocation2 + $0x8] sm:$0xff] -inf
          %3507 = vst [vmem:[#allocation2 + $0x10] sm:$0xff] -inf
          %3508 = vst [vmem:[#allocation2 + $0x18] sm:$0xff] -inf
          %3509 = vst [vmem:[#allocation2 + $0x20] sm:$0xff] -inf
          %3510 = vst [vmem:[#allocation2 + $0x28] sm:$0xff] -inf
          %3511 = vst [vmem:[#allocation2 + $0x30] sm:$0xff] -inf
          %3512 = vst [vmem:[#allocation2 + $0x38] sm:$0xff] -inf
          %3513 = vst [vmem:[#allocation2 + $0x40] sm:$0xff] -inf
          %3514 = vst [vmem:[#allocation2 + $0x48] sm:$0xff] -inf
          %3515 = vst [vmem:[#allocation2 + $0x50] sm:$0xff] -inf
          %3516 = vst [vmem:[#allocation2 + $0x58] sm:$0xff] -inf
          %3517 = vst [vmem:[#allocation2 + $0x60] sm:$0xff] -inf
          %3518 = vst [vmem:[#allocation2 + $0x68] sm:$0xff] -inf
          %3519 = vst [vmem:[#allocation2 + $0x70] sm:$0xff] -inf
          %3520 = vst [vmem:[#allocation2 + $0x78] sm:$0xff] -inf
          %3521 = vst [vmem:[#allocation2 + $0x80] sm:$0xff] -inf
          %3522 = vst [vmem:[#allocation2 + $0x88] sm:$0xff] -inf
          %3523 = vst [vmem:[#allocation2 + $0x90] sm:$0xff] -inf
          %3524 = vst [vmem:[#allocation2 + $0x98] sm:$0xff] -inf
          %3525 = vst [vmem:[#allocation2 + $0xa0] sm:$0xff] -inf
          %3526 = vst [vmem:[#allocation2 + $0xa8] sm:$0xff] -inf
          %3527 = vst [vmem:[#allocation2 + $0xb0] sm:$0xff] -inf
          %3528 = vst [vmem:[#allocation2 + $0xb8] sm:$0xff] -inf
          %3529 = vst [vmem:[#allocation2 + $0xc0] sm:$0xff] -inf
          %3530 = vst [vmem:[#allocation2 + $0xc8] sm:$0xff] -inf
          %3531 = vst [vmem:[#allocation2 + $0xd0] sm:$0xff] -inf
          %3532 = vst [vmem:[#allocation2 + $0xd8] sm:$0xff] -inf
          %3533 = vst [vmem:[#allocation2 + $0xe0] sm:$0xff] -inf
          %3534 = vst [vmem:[#allocation2 + $0xe8] sm:$0xff] -inf
          %3535 = vst [vmem:[#allocation2 + $0xf0] sm:$0xff] -inf
          %3536 = vst [vmem:[#allocation2 + $0xf8] sm:$0xff] -inf
          %3537 = vst [vmem:[#allocation2 + $0x100] sm:$0xff] -inf
          %3538 = vst [vmem:[#allocation2 + $0x108] sm:$0xff] -inf
          %3539 = vst [vmem:[#allocation2 + $0x110] sm:$0xff] -inf
          %3540 = vst [vmem:[#allocation2 + $0x118] sm:$0xff] -inf
          %3541 = vst [vmem:[#allocation2 + $0x120] sm:$0xff] -inf
          %3542 = vst [vmem:[#allocation2 + $0x128] sm:$0xff] -inf
          %3543 = vst [vmem:[#allocation2 + $0x130] sm:$0xff] -inf
          %3544 = vst [vmem:[#allocation2 + $0x138] sm:$0xff] -inf
          %3545 = vst [vmem:[#allocation2 + $0x140] sm:$0xff] -inf
          %3546 = vst [vmem:[#allocation2 + $0x148] sm:$0xff] -inf
          %3547 = vst [vmem:[#allocation2 + $0x150] sm:$0xff] -inf
          %3548 = vst [vmem:[#allocation2 + $0x158] sm:$0xff] -inf
          %3549 = vst [vmem:[#allocation2 + $0x160] sm:$0xff] -inf
          %3550 = vst [vmem:[#allocation2 + $0x168] sm:$0xff] -inf
          %3551 = vst [vmem:[#allocation2 + $0x170] sm:$0xff] -inf
          %3552 = vst [vmem:[#allocation2 + $0x178] sm:$0xff] -inf
          %3553 = vst [vmem:[#allocation2 + $0x180] sm:$0xff] -inf
          %3554 = vst [vmem:[#allocation2 + $0x188] sm:$0xff] -inf
          %3555 = vst [vmem:[#allocation2 + $0x190] sm:$0xff] -inf
          %3556 = vst [vmem:[#allocation2 + $0x198] sm:$0xff] -inf
          %3557 = vst [vmem:[#allocation2 + $0x1a0] sm:$0xff] -inf
          %3558 = vst [vmem:[#allocation2 + $0x1a8] sm:$0xff] -inf
          %3559 = vst [vmem:[#allocation2 + $0x1b0] sm:$0xff] -inf
          %3560 = vst [vmem:[#allocation2 + $0x1b8] sm:$0xff] -inf
          %3561 = vst [vmem:[#allocation2 + $0x1c0] sm:$0xff] -inf
          %3562 = vst [vmem:[#allocation2 + $0x1c8] sm:$0xff] -inf
          %3563 = vst [vmem:[#allocation2 + $0x1d0] sm:$0xff] -inf
          %3564 = vst [vmem:[#allocation2 + $0x1d8] sm:$0xff] -inf
          %3565 = vst [vmem:[#allocation2 + $0x1e0] sm:$0xff] -inf
          %3566 = vst [vmem:[#allocation2 + $0x1e8] sm:$0xff] -inf
          %3567 = vst [vmem:[#allocation2 + $0x1f0] sm:$0xff] -inf
          %3568 = vst [vmem:[#allocation2 + $0x1f8] sm:$0xff] -inf
          %3569 = vst [vmem:[#allocation2 + $0x200] sm:$0xff] -inf
          %3570 = vst [vmem:[#allocation2 + $0x208] sm:$0xff] -inf
          %3571 = vst [vmem:[#allocation2 + $0x210] sm:$0xff] -inf
          %3572 = vst [vmem:[#allocation2 + $0x218] sm:$0xff] -inf
          %3573 = vst [vmem:[#allocation2 + $0x220] sm:$0xff] -inf
          %3574 = vst [vmem:[#allocation2 + $0x228] sm:$0xff] -inf
          %3575 = vst [vmem:[#allocation2 + $0x230] sm:$0xff] -inf
          %3576 = vst [vmem:[#allocation2 + $0x238] sm:$0xff] -inf
          %3577 = vst [vmem:[#allocation2 + $0x240] sm:$0xff] -inf
          %3578 = vst [vmem:[#allocation2 + $0x248] sm:$0xff] -inf
          %3579 = vst [vmem:[#allocation2 + $0x250] sm:$0xff] -inf
          %3580 = vst [vmem:[#allocation2 + $0x258] sm:$0xff] -inf
          %3581 = vst [vmem:[#allocation2 + $0x260] sm:$0xff] -inf
          %3582 = vst [vmem:[#allocation2 + $0x268] sm:$0xff] -inf
          %3583 = vst [vmem:[#allocation2 + $0x270] sm:$0xff] -inf
          %3584 = vst [vmem:[#allocation2 + $0x278] sm:$0xff] -inf
          %3585 = vst [vmem:[#allocation2 + $0x280] sm:$0xff] -inf
          %3586 = vst [vmem:[#allocation2 + $0x288] sm:$0xff] -inf
          %3587 = vst [vmem:[#allocation2 + $0x290] sm:$0xff] -inf
          %3588 = vst [vmem:[#allocation2 + $0x298] sm:$0xff] -inf
          %3589 = vst [vmem:[#allocation2 + $0x2a0] sm:$0xff] -inf
          %3590 = vst [vmem:[#allocation2 + $0x2a8] sm:$0xff] -inf
          %3591 = vst [vmem:[#allocation2 + $0x2b0] sm:$0xff] -inf
          %3592 = vst [vmem:[#allocation2 + $0x2b8] sm:$0xff] -inf
          %3593 = vst [vmem:[#allocation2 + $0x2c0] sm:$0xff] -inf
          %3594 = vst [vmem:[#allocation2 + $0x2c8] sm:$0xff] -inf
          %3595 = vst [vmem:[#allocation2 + $0x2d0] sm:$0xff] -inf
          %3596 = vst [vmem:[#allocation2 + $0x2d8] sm:$0xff] -inf
          %3597 = vst [vmem:[#allocation2 + $0x2e0] sm:$0xff] -inf
          %3598 = vst [vmem:[#allocation2 + $0x2e8] sm:$0xff] -inf
          %3599 = vst [vmem:[#allocation2 + $0x2f0] sm:$0xff] -inf
          %3600 = vst [vmem:[#allocation2 + $0x2f8] sm:$0xff] -inf
          %3601 = vst [vmem:[#allocation2 + $0x300] sm:$0xff] -inf
          %3602 = vst [vmem:[#allocation2 + $0x308] sm:$0xff] -inf
          %3603 = vst [vmem:[#allocation2 + $0x310] sm:$0xff] -inf
          %3604 = vst [vmem:[#allocation2 + $0x318] sm:$0xff] -inf
          %3605 = vst [vmem:[#allocation2 + $0x320] sm:$0xff] -inf
          %3606 = vst [vmem:[#allocation2 + $0x328] sm:$0xff] -inf
          %3607 = vst [vmem:[#allocation2 + $0x330] sm:$0xff] -inf
          %3608 = vst [vmem:[#allocation2 + $0x338] sm:$0xff] -inf
          %3609 = vst [vmem:[#allocation2 + $0x340] sm:$0xff] -inf
          %3610 = vst [vmem:[#allocation2 + $0x348] sm:$0xff] -inf
          %3611 = vst [vmem:[#allocation2 + $0x350] sm:$0xff] -inf
          %3612 = vst [vmem:[#allocation2 + $0x358] sm:$0xff] -inf
          %3613 = vst [vmem:[#allocation2 + $0x360] sm:$0xff] -inf
          %3614 = vst [vmem:[#allocation2 + $0x368] sm:$0xff] -inf
          %3615 = vst [vmem:[#allocation2 + $0x370] sm:$0xff] -inf
          %3616 = vst [vmem:[#allocation2 + $0x378] sm:$0xff] -inf
          %3617 = vst [vmem:[#allocation2 + $0x380] sm:$0xff] -inf
          %3618 = vst [vmem:[#allocation2 + $0x388] sm:$0xff] -inf
          %3619 = vst [vmem:[#allocation2 + $0x390] sm:$0xff] -inf
          %3620 = vst [vmem:[#allocation2 + $0x398] sm:$0xff] -inf
          %3621 = vst [vmem:[#allocation2 + $0x3a0] sm:$0xff] -inf
          %3622 = vst [vmem:[#allocation2 + $0x3a8] sm:$0xff] -inf
          %3623 = vst [vmem:[#allocation2 + $0x3b0] sm:$0xff] -inf
          %3624 = vst [vmem:[#allocation2 + $0x3b8] sm:$0xff] -inf
          %3625 = vst [vmem:[#allocation2 + $0x3c0] sm:$0xff] -inf
          %3626 = vst [vmem:[#allocation2 + $0x3c8] sm:$0xff] -inf
          %3627 = vst [vmem:[#allocation2 + $0x3d0] sm:$0xff] -inf
          %3628 = vst [vmem:[#allocation2 + $0x3d8] sm:$0xff] -inf
          %3629 = vst [vmem:[#allocation2 + $0x3e0] sm:$0xff] -inf
          %3630 = vst [vmem:[#allocation2 + $0x3e8] sm:$0xff] -inf
          %3631 = vst [vmem:[#allocation2 + $0x3f0] sm:$0xff] -inf
          %3632 = vst [vmem:[#allocation2 + $0x3f8] sm:$0xff] -inf
        $region84: #{transform_module_forward.2} parent=71 // pred_fallthru
          _
        %v3633 = vmax.f32 %v2190, %v2192
        %v3634 = vmax.f32 %v2194, %v2196
        %v3635 = vmax.f32 %v2200, %v2202
        %v3636 = vmax.f32 %v2204, %v2206
        %v3637 = vmax.f32 %v2210, %v2212
        %v3638 = vmax.f32 %v2214, %v2216
        %v3639 = vmax.f32 %v2220, %v2222
        %v3640 = vmax.f32 %v2224, %v2226
        %v3641 = vmax.f32 %v2230, %v2232
        %v3642 = vmax.f32 %v2234, %v2236
        %v3643 = vmax.f32 %v2240, %v2242
        %v3644 = vmax.f32 %v2244, %v2246
        %v3645 = vmax.f32 %v2250, %v2252
        %v3646 = vmax.f32 %v2254, %v2256
        %v3647 = vmax.f32 %v2260, %v2262
        %v3648 = vmax.f32 %v2264, %v2266
        %v3649 = vmax.f32 %v2270, %v2272
        %v3650 = vmax.f32 %v2274, %v2276
        %v3651 = vmax.f32 %v2280, %v2282
        %v3652 = vmax.f32 %v2284, %v2286
        %v3653 = vmax.f32 %v2290, %v2292
        %v3654 = vmax.f32 %v2294, %v2296
        %v3655 = vmax.f32 %v2300, %v2302
        %v3656 = vmax.f32 %v2304, %v2306
        %v3657 = vmax.f32 %v2310, %v2312
        %v3658 = vmax.f32 %v2314, %v2316
        %v3659 = vmax.f32 %v2320, %v2322
        %v3660 = vmax.f32 %v2324, %v2326
        %v3661 = vmax.f32 %v2330, %v2332
        %v3662 = vmax.f32 %v2334, %v2336
        %v3663 = vmax.f32 %v2340, %v2342
        %v3664 = vmax.f32 %v2344, %v2346
        %v3665 = vmax.f32 %v2350, %v2352
        %v3666 = vmax.f32 %v2354, %v2356
        %v3667 = vmax.f32 %v2360, %v2362
        %v3668 = vmax.f32 %v2364, %v2366
        %v3669 = vmax.f32 %v2370, %v2372
        %v3670 = vmax.f32 %v2374, %v2376
        %v3671 = vmax.f32 %v2380, %v2382
        %v3672 = vmax.f32 %v2384, %v2386
        %v3673 = vmax.f32 %v2390, %v2392
        %v3674 = vmax.f32 %v2394, %v2396
        %v3675 = vmax.f32 %v2400, %v2402
        %v3676 = vmax.f32 %v2404, %v2406
        %v3677 = vmax.f32 %v2410, %v2412
        %v3678 = vmax.f32 %v2414, %v2416
        %v3679 = vmax.f32 %v2420, %v2422
        %v3680 = vmax.f32 %v2424, %v2426
        %v3681 = vmax.f32 %v2430, %v2432
        %v3682 = vmax.f32 %v2434, %v2436
        %v3683 = vmax.f32 %v2440, %v2442
        %v3684 = vmax.f32 %v2444, %v2446
        %v3685 = vmax.f32 %v2450, %v2452
        %v3686 = vmax.f32 %v2454, %v2456
        %v3687 = vmax.f32 %v2460, %v2462
        %v3688 = vmax.f32 %v2464, %v2466
        %v3689 = vmax.f32 %v2470, %v2472
        %v3690 = vmax.f32 %v2474, %v2476
        %v3691 = vmax.f32 %v2480, %v2482
        %v3692 = vmax.f32 %v2484, %v2486
        %v3693 = vmax.f32 %v2490, %v2492
        %v3694 = vmax.f32 %v2494, %v2496
        %v3695 = vmax.f32 %v2500, %v2502
        %v3696 = vmax.f32 %v2504, %v2506
        %v3697 = vmax.f32 %v2510, %v2512
        %v3698 = vmax.f32 %v2514, %v2516
        %v3699 = vmax.f32 %v2520, %v2522
        %v3700 = vmax.f32 %v2524, %v2526
        %v3701 = vmax.f32 %v2530, %v2532
        %v3702 = vmax.f32 %v2534, %v2536
        %v3703 = vmax.f32 %v2540, %v2542
        %v3704 = vmax.f32 %v2544, %v2546
        %v3705 = vmax.f32 %v2550, %v2552
        %v3706 = vmax.f32 %v2554, %v2556
        %v3707 = vmax.f32 %v2560, %v2562
        %v3708 = vmax.f32 %v2564, %v2566
        %v3709 = vmax.f32 %v2570, %v2572
        %v3710 = vmax.f32 %v2574, %v2576
        %v3711 = vmax.f32 %v2580, %v2582
        %v3712 = vmax.f32 %v2584, %v2586
        %v3713 = vmax.f32 %v2590, %v2592
        %v3714 = vmax.f32 %v2594, %v2596
        %v3715 = vmax.f32 %v2600, %v2602
        %v3716 = vmax.f32 %v2604, %v2606
        %v3717 = vmax.f32 %v2610, %v2612
        %v3718 = vmax.f32 %v2614, %v2616
        %v3719 = vmax.f32 %v2620, %v2622
        %v3720 = vmax.f32 %v2624, %v2626
        %v3721 = vmax.f32 %v2630, %v2632
        %v3722 = vmax.f32 %v2634, %v2636
        %v3723 = vmax.f32 %v2640, %v2642
        %v3724 = vmax.f32 %v2644, %v2646
        %v3725 = vmax.f32 %v2650, %v2652
        %v3726 = vmax.f32 %v2654, %v2656
        %v3727 = vmax.f32 %v2660, %v2662
        %v3728 = vmax.f32 %v2664, %v2666
        %v3729 = vmax.f32 %v2670, %v2672
        %v3730 = vmax.f32 %v2674, %v2676
        %v3731 = vmax.f32 %v2680, %v2682
        %v3732 = vmax.f32 %v2684, %v2686
        %v3733 = vmax.f32 %v2690, %v2692
        %v3734 = vmax.f32 %v2694, %v2696
        %v3735 = vmax.f32 %v2700, %v2702
        %v3736 = vmax.f32 %v2704, %v2706
        %v3737 = vmax.f32 %v2710, %v2712
        %v3738 = vmax.f32 %v2714, %v2716
        %v3739 = vmax.f32 %v2720, %v2722
        %v3740 = vmax.f32 %v2724, %v2726
        %v3741 = vmax.f32 %v2730, %v2732
        %v3742 = vmax.f32 %v2734, %v2736
        %v3743 = vmax.f32 %v2740, %v2742
        %v3744 = vmax.f32 %v2744, %v2746
        %v3745 = vmax.f32 %v2750, %v2752
        %v3746 = vmax.f32 %v2754, %v2756
        %v3747 = vmax.f32 %v2760, %v2762
        %v3748 = vmax.f32 %v2764, %v2766
        %v3749 = vmax.f32 %v2770, %v2772
        %v3750 = vmax.f32 %v2774, %v2776
        %v3751 = vmax.f32 %v2780, %v2782
        %v3752 = vmax.f32 %v2784, %v2786
        %v3753 = vmax.f32 %v2790, %v2792
        %v3754 = vmax.f32 %v2794, %v2796
        %v3755 = vmax.f32 %v2800, %v2802
        %v3756 = vmax.f32 %v2804, %v2806
        %v3757 = vmax.f32 %v2810, %v2812
        %v3758 = vmax.f32 %v2814, %v2816
        %v3759 = vmax.f32 %v2820, %v2822
        %v3760 = vmax.f32 %v2824, %v2826
        %v3761 = vmax.f32 %v3633, %v2863
        %v3762 = vmax.f32 %v3634, %v2867
        %v3763 = vmax.f32 %v3635, %v2873
        %v3764 = vmax.f32 %v3636, %v2877
        %v3765 = vmax.f32 %v3637, %v2883
        %v3766 = vmax.f32 %v3638, %v2887
        %v3767 = vmax.f32 %v3639, %v2893
        %v3768 = vmax.f32 %v3640, %v2897
        %v3769 = vmax.f32 %v3641, %v2903
        %v3770 = vmax.f32 %v3642, %v2907
        %v3771 = vmax.f32 %v3643, %v2913
        %v3772 = vmax.f32 %v3644, %v2917
        %v3773 = vmax.f32 %v3645, %v2923
        %v3774 = vmax.f32 %v3646, %v2927
        %v3775 = vmax.f32 %v3647, %v2933
        %v3776 = vmax.f32 %v3648, %v2937
        %v3777 = vmax.f32 %v3649, %v2943
        %v3778 = vmax.f32 %v3650, %v2947
        %v3779 = vmax.f32 %v3651, %v2953
        %v3780 = vmax.f32 %v3652, %v2957
        %v3781 = vmax.f32 %v3653, %v2963
        %v3782 = vmax.f32 %v3654, %v2967
        %v3783 = vmax.f32 %v3655, %v2973
        %v3784 = vmax.f32 %v3656, %v2977
        %v3785 = vmax.f32 %v3657, %v2983
        %v3786 = vmax.f32 %v3658, %v2987
        %v3787 = vmax.f32 %v3659, %v2993
        %v3788 = vmax.f32 %v3660, %v2997
        %v3789 = vmax.f32 %v3661, %v3003
        %v3790 = vmax.f32 %v3662, %v3007
        %v3791 = vmax.f32 %v3663, %v3013
        %v3792 = vmax.f32 %v3664, %v3017
        %v3793 = vmax.f32 %v3665, %v3023
        %v3794 = vmax.f32 %v3666, %v3027
        %v3795 = vmax.f32 %v3667, %v3033
        %v3796 = vmax.f32 %v3668, %v3037
        %v3797 = vmax.f32 %v3669, %v3043
        %v3798 = vmax.f32 %v3670, %v3047
        %v3799 = vmax.f32 %v3671, %v3053
        %v3800 = vmax.f32 %v3672, %v3057
        %v3801 = vmax.f32 %v3673, %v3063
        %v3802 = vmax.f32 %v3674, %v3067
        %v3803 = vmax.f32 %v3675, %v3073
        %v3804 = vmax.f32 %v3676, %v3077
        %v3805 = vmax.f32 %v3677, %v3083
        %v3806 = vmax.f32 %v3678, %v3087
        %v3807 = vmax.f32 %v3679, %v3093
        %v3808 = vmax.f32 %v3680, %v3097
        %v3809 = vmax.f32 %v3681, %v3103
        %v3810 = vmax.f32 %v3682, %v3107
        %v3811 = vmax.f32 %v3683, %v3113
        %v3812 = vmax.f32 %v3684, %v3117
        %v3813 = vmax.f32 %v3685, %v3123
        %v3814 = vmax.f32 %v3686, %v3127
        %v3815 = vmax.f32 %v3687, %v3133
        %v3816 = vmax.f32 %v3688, %v3137
        %v3817 = vmax.f32 %v3689, %v3143
        %v3818 = vmax.f32 %v3690, %v3147
        %v3819 = vmax.f32 %v3691, %v3153
        %v3820 = vmax.f32 %v3692, %v3157
        %v3821 = vmax.f32 %v3693, %v3163
        %v3822 = vmax.f32 %v3694, %v3167
        %v3823 = vmax.f32 %v3695, %v3173
        %v3824 = vmax.f32 %v3696, %v3177
        %v3825 = vmax.f32 %v3697, %v3183
        %v3826 = vmax.f32 %v3698, %v3187
        %v3827 = vmax.f32 %v3699, %v3193
        %v3828 = vmax.f32 %v3700, %v3197
        %v3829 = vmax.f32 %v3701, %v3203
        %v3830 = vmax.f32 %v3702, %v3207
        %v3831 = vmax.f32 %v3703, %v3213
        %v3832 = vmax.f32 %v3704, %v3217
        %v3833 = vmax.f32 %v3705, %v3223
        %v3834 = vmax.f32 %v3706, %v3227
        %v3835 = vmax.f32 %v3707, %v3233
        %v3836 = vmax.f32 %v3708, %v3237
        %v3837 = vmax.f32 %v3709, %v3243
        %v3838 = vmax.f32 %v3710, %v3247
        %v3839 = vmax.f32 %v3711, %v3253
        %v3840 = vmax.f32 %v3712, %v3257
        %v3841 = vmax.f32 %v3713, %v3263
        %v3842 = vmax.f32 %v3714, %v3267
        %v3843 = vmax.f32 %v3715, %v3273
        %v3844 = vmax.f32 %v3716, %v3277
        %v3845 = vmax.f32 %v3717, %v3283
        %v3846 = vmax.f32 %v3718, %v3287
        %v3847 = vmax.f32 %v3719, %v3293
        %v3848 = vmax.f32 %v3720, %v3297
        %v3849 = vmax.f32 %v3721, %v3303
        %v3850 = vmax.f32 %v3722, %v3307
        %v3851 = vmax.f32 %v3723, %v3313
        %v3852 = vmax.f32 %v3724, %v3317
        %v3853 = vmax.f32 %v3725, %v3323
        %v3854 = vmax.f32 %v3726, %v3327
        %v3855 = vmax.f32 %v3727, %v3333
        %v3856 = vmax.f32 %v3728, %v3337
        %v3857 = vmax.f32 %v3729, %v3343
        %v3858 = vmax.f32 %v3730, %v3347
        %v3859 = vmax.f32 %v3731, %v3353
        %v3860 = vmax.f32 %v3732, %v3357
        %v3861 = vmax.f32 %v3733, %v3363
        %v3862 = vmax.f32 %v3734, %v3367
        %v3863 = vmax.f32 %v3735, %v3373
        %v3864 = vmax.f32 %v3736, %v3377
        %v3865 = vmax.f32 %v3737, %v3383
        %v3866 = vmax.f32 %v3738, %v3387
        %v3867 = vmax.f32 %v3739, %v3393
        %v3868 = vmax.f32 %v3740, %v3397
        %v3869 = vmax.f32 %v3741, %v3403
        %v3870 = vmax.f32 %v3742, %v3407
        %v3871 = vmax.f32 %v3743, %v3413
        %v3872 = vmax.f32 %v3744, %v3417
        %v3873 = vmax.f32 %v3745, %v3423
        %v3874 = vmax.f32 %v3746, %v3427
        %v3875 = vmax.f32 %v3747, %v3433
        %v3876 = vmax.f32 %v3748, %v3437
        %v3877 = vmax.f32 %v3749, %v3443
        %v3878 = vmax.f32 %v3750, %v3447
        %v3879 = vmax.f32 %v3751, %v3453
        %v3880 = vmax.f32 %v3752, %v3457
        %v3881 = vmax.f32 %v3753, %v3463
        %v3882 = vmax.f32 %v3754, %v3467
        %v3883 = vmax.f32 %v3755, %v3473
        %v3884 = vmax.f32 %v3756, %v3477
        %v3885 = vmax.f32 %v3757, %v3483
        %v3886 = vmax.f32 %v3758, %v3487
        %v3887 = vmax.f32 %v3759, %v3493
        %v3888 = vmax.f32 %v3760, %v3497
        %v3889 = vmax.f32 %v3761, %v2865
        %v3890 = vmax.f32 %v3762, %v2869
        %v3891 = vmax.f32 %v3763, %v2875
        %v3892 = vmax.f32 %v3764, %v2879
        %v3893 = vmax.f32 %v3765, %v2885
        %v3894 = vmax.f32 %v3766, %v2889
        %v3895 = vmax.f32 %v3767, %v2895
        %v3896 = vmax.f32 %v3768, %v2899
        %v3897 = vmax.f32 %v3769, %v2905
        %v3898 = vmax.f32 %v3770, %v2909
        %v3899 = vmax.f32 %v3771, %v2915
        %v3900 = vmax.f32 %v3772, %v2919
        %v3901 = vmax.f32 %v3773, %v2925
        %v3902 = vmax.f32 %v3774, %v2929
        %v3903 = vmax.f32 %v3775, %v2935
        %v3904 = vmax.f32 %v3776, %v2939
        %v3905 = vmax.f32 %v3777, %v2945
        %v3906 = vmax.f32 %v3778, %v2949
        %v3907 = vmax.f32 %v3779, %v2955
        %v3908 = vmax.f32 %v3780, %v2959
        %v3909 = vmax.f32 %v3781, %v2965
        %v3910 = vmax.f32 %v3782, %v2969
        %v3911 = vmax.f32 %v3783, %v2975
        %v3912 = vmax.f32 %v3784, %v2979
        %v3913 = vmax.f32 %v3785, %v2985
        %v3914 = vmax.f32 %v3786, %v2989
        %v3915 = vmax.f32 %v3787, %v2995
        %v3916 = vmax.f32 %v3788, %v2999
        %v3917 = vmax.f32 %v3789, %v3005
        %v3918 = vmax.f32 %v3790, %v3009
        %v3919 = vmax.f32 %v3791, %v3015
        %v3920 = vmax.f32 %v3792, %v3019
        %v3921 = vmax.f32 %v3793, %v3025
        %v3922 = vmax.f32 %v3794, %v3029
        %v3923 = vmax.f32 %v3795, %v3035
        %v3924 = vmax.f32 %v3796, %v3039
        %v3925 = vmax.f32 %v3797, %v3045
        %v3926 = vmax.f32 %v3798, %v3049
        %v3927 = vmax.f32 %v3799, %v3055
        %v3928 = vmax.f32 %v3800, %v3059
        %v3929 = vmax.f32 %v3801, %v3065
        %v3930 = vmax.f32 %v3802, %v3069
        %v3931 = vmax.f32 %v3803, %v3075
        %v3932 = vmax.f32 %v3804, %v3079
        %v3933 = vmax.f32 %v3805, %v3085
        %v3934 = vmax.f32 %v3806, %v3089
        %v3935 = vmax.f32 %v3807, %v3095
        %v3936 = vmax.f32 %v3808, %v3099
        %v3937 = vmax.f32 %v3809, %v3105
        %v3938 = vmax.f32 %v3810, %v3109
        %v3939 = vmax.f32 %v3811, %v3115
        %v3940 = vmax.f32 %v3812, %v3119
        %v3941 = vmax.f32 %v3813, %v3125
        %v3942 = vmax.f32 %v3814, %v3129
        %v3943 = vmax.f32 %v3815, %v3135
        %v3944 = vmax.f32 %v3816, %v3139
        %v3945 = vmax.f32 %v3817, %v3145
        %v3946 = vmax.f32 %v3818, %v3149
        %v3947 = vmax.f32 %v3819, %v3155
        %v3948 = vmax.f32 %v3820, %v3159
        %v3949 = vmax.f32 %v3821, %v3165
        %v3950 = vmax.f32 %v3822, %v3169
        %v3951 = vmax.f32 %v3823, %v3175
        %v3952 = vmax.f32 %v3824, %v3179
        %v3953 = vmax.f32 %v3825, %v3185
        %v3954 = vmax.f32 %v3826, %v3189
        %v3955 = vmax.f32 %v3827, %v3195
        %v3956 = vmax.f32 %v3828, %v3199
        %v3957 = vmax.f32 %v3829, %v3205
        %v3958 = vmax.f32 %v3830, %v3209
        %v3959 = vmax.f32 %v3831, %v3215
        %v3960 = vmax.f32 %v3832, %v3219
        %v3961 = vmax.f32 %v3833, %v3225
        %v3962 = vmax.f32 %v3834, %v3229
        %v3963 = vmax.f32 %v3835, %v3235
        %v3964 = vmax.f32 %v3836, %v3239
        %v3965 = vmax.f32 %v3837, %v3245
        %v3966 = vmax.f32 %v3838, %v3249
        %v3967 = vmax.f32 %v3839, %v3255
        %v3968 = vmax.f32 %v3840, %v3259
        %v3969 = vmax.f32 %v3841, %v3265
        %v3970 = vmax.f32 %v3842, %v3269
        %v3971 = vmax.f32 %v3843, %v3275
        %v3972 = vmax.f32 %v3844, %v3279
        %v3973 = vmax.f32 %v3845, %v3285
        %v3974 = vmax.f32 %v3846, %v3289
        %v3975 = vmax.f32 %v3847, %v3295
        %v3976 = vmax.f32 %v3848, %v3299
        %v3977 = vmax.f32 %v3849, %v3305
        %v3978 = vmax.f32 %v3850, %v3309
        %v3979 = vmax.f32 %v3851, %v3315
        %v3980 = vmax.f32 %v3852, %v3319
        %v3981 = vmax.f32 %v3853, %v3325
        %v3982 = vmax.f32 %v3854, %v3329
        %v3983 = vmax.f32 %v3855, %v3335
        %v3984 = vmax.f32 %v3856, %v3339
        %v3985 = vmax.f32 %v3857, %v3345
        %v3986 = vmax.f32 %v3858, %v3349
        %v3987 = vmax.f32 %v3859, %v3355
        %v3988 = vmax.f32 %v3860, %v3359
        %v3989 = vmax.f32 %v3861, %v3365
        %v3990 = vmax.f32 %v3862, %v3369
        %v3991 = vmax.f32 %v3863, %v3375
        %v3992 = vmax.f32 %v3864, %v3379
        %v3993 = vmax.f32 %v3865, %v3385
        %v3994 = vmax.f32 %v3866, %v3389
        %v3995 = vmax.f32 %v3867, %v3395
        %v3996 = vmax.f32 %v3868, %v3399
        %v3997 = vmax.f32 %v3869, %v3405
        %v3998 = vmax.f32 %v3870, %v3409
        %v3999 = vmax.f32 %v3871, %v3415
        %v4000 = vmax.f32 %v3872, %v3419
        %v4001 = vmax.f32 %v3873, %v3425
        %v4002 = vmax.f32 %v3874, %v3429
        %v4003 = vmax.f32 %v3875, %v3435
        %v4004 = vmax.f32 %v3876, %v3439
        %v4005 = vmax.f32 %v3877, %v3445
        %v4006 = vmax.f32 %v3878, %v3449
        %v4007 = vmax.f32 %v3879, %v3455
        %v4008 = vmax.f32 %v3880, %v3459
        %v4009 = vmax.f32 %v3881, %v3465
        %v4010 = vmax.f32 %v3882, %v3469
        %v4011 = vmax.f32 %v3883, %v3475
        %v4012 = vmax.f32 %v3884, %v3479
        %v4013 = vmax.f32 %v3885, %v3485
        %v4014 = vmax.f32 %v3886, %v3489
        %v4015 = vmax.f32 %v3887, %v3495
        %v4016 = vmax.f32 %v3888, %v3499
        %v4017 = vld [vmem:[#allocation2] sm:$0xff]
        %v4018 = vld [vmem:[#allocation2 + $0x8] sm:$0xff]
        %v4019 = vld [vmem:[#allocation2 + $0x10] sm:$0xff]
        %v4020 = vld [vmem:[#allocation2 + $0x18] sm:$0xff]
        %v4021 = vld [vmem:[#allocation2 + $0x20] sm:$0xff]
        %v4022 = vld [vmem:[#allocation2 + $0x28] sm:$0xff]
        %v4023 = vld [vmem:[#allocation2 + $0x30] sm:$0xff]
        %v4024 = vld [vmem:[#allocation2 + $0x38] sm:$0xff]
        %v4025 = vld [vmem:[#allocation2 + $0x40] sm:$0xff]
        %v4026 = vld [vmem:[#allocation2 + $0x48] sm:$0xff]
        %v4027 = vld [vmem:[#allocation2 + $0x50] sm:$0xff]
        %v4028 = vld [vmem:[#allocation2 + $0x58] sm:$0xff]
        %v4029 = vld [vmem:[#allocation2 + $0x60] sm:$0xff]
        %v4030 = vld [vmem:[#allocation2 + $0x68] sm:$0xff]
        %v4031 = vld [vmem:[#allocation2 + $0x70] sm:$0xff]
        %v4032 = vld [vmem:[#allocation2 + $0x78] sm:$0xff]
        %v4033 = vld [vmem:[#allocation2 + $0x80] sm:$0xff]
        %v4034 = vld [vmem:[#allocation2 + $0x88] sm:$0xff]
        %v4035 = vld [vmem:[#allocation2 + $0x90] sm:$0xff]
        %v4036 = vld [vmem:[#allocation2 + $0x98] sm:$0xff]
        %v4037 = vld [vmem:[#allocation2 + $0xa0] sm:$0xff]
        %v4038 = vld [vmem:[#allocation2 + $0xa8] sm:$0xff]
        %v4039 = vld [vmem:[#allocation2 + $0xb0] sm:$0xff]
        %v4040 = vld [vmem:[#allocation2 + $0xb8] sm:$0xff]
        %v4041 = vld [vmem:[#allocation2 + $0xc0] sm:$0xff]
        %v4042 = vld [vmem:[#allocation2 + $0xc8] sm:$0xff]
        %v4043 = vld [vmem:[#allocation2 + $0xd0] sm:$0xff]
        %v4044 = vld [vmem:[#allocation2 + $0xd8] sm:$0xff]
        %v4045 = vld [vmem:[#allocation2 + $0xe0] sm:$0xff]
        %v4046 = vld [vmem:[#allocation2 + $0xe8] sm:$0xff]
        %v4047 = vld [vmem:[#allocation2 + $0xf0] sm:$0xff]
        %v4048 = vld [vmem:[#allocation2 + $0xf8] sm:$0xff]
        %v4049 = vld [vmem:[#allocation2 + $0x100] sm:$0xff]
        %v4050 = vld [vmem:[#allocation2 + $0x108] sm:$0xff]
        %v4051 = vld [vmem:[#allocation2 + $0x110] sm:$0xff]
        %v4052 = vld [vmem:[#allocation2 + $0x118] sm:$0xff]
        %v4053 = vld [vmem:[#allocation2 + $0x120] sm:$0xff]
        %v4054 = vld [vmem:[#allocation2 + $0x128] sm:$0xff]
        %v4055 = vld [vmem:[#allocation2 + $0x130] sm:$0xff]
        %v4056 = vld [vmem:[#allocation2 + $0x138] sm:$0xff]
        %v4057 = vld [vmem:[#allocation2 + $0x140] sm:$0xff]
        %v4058 = vld [vmem:[#allocation2 + $0x148] sm:$0xff]
        %v4059 = vld [vmem:[#allocation2 + $0x150] sm:$0xff]
        %v4060 = vld [vmem:[#allocation2 + $0x158] sm:$0xff]
        %v4061 = vld [vmem:[#allocation2 + $0x160] sm:$0xff]
        %v4062 = vld [vmem:[#allocation2 + $0x168] sm:$0xff]
        %v4063 = vld [vmem:[#allocation2 + $0x170] sm:$0xff]
        %v4064 = vld [vmem:[#allocation2 + $0x178] sm:$0xff]
        %v4065 = vld [vmem:[#allocation2 + $0x180] sm:$0xff]
        %v4066 = vld [vmem:[#allocation2 + $0x188] sm:$0xff]
        %v4067 = vld [vmem:[#allocation2 + $0x190] sm:$0xff]
        %v4068 = vld [vmem:[#allocation2 + $0x198] sm:$0xff]
        %v4069 = vld [vmem:[#allocation2 + $0x1a0] sm:$0xff]
        %v4070 = vld [vmem:[#allocation2 + $0x1a8] sm:$0xff]
        %v4071 = vld [vmem:[#allocation2 + $0x1b0] sm:$0xff]
        %v4072 = vld [vmem:[#allocation2 + $0x1b8] sm:$0xff]
        %v4073 = vld [vmem:[#allocation2 + $0x1c0] sm:$0xff]
        %v4074 = vld [vmem:[#allocation2 + $0x1c8] sm:$0xff]
        %v4075 = vld [vmem:[#allocation2 + $0x1d0] sm:$0xff]
        %v4076 = vld [vmem:[#allocation2 + $0x1d8] sm:$0xff]
        %v4077 = vld [vmem:[#allocation2 + $0x1e0] sm:$0xff]
        %v4078 = vld [vmem:[#allocation2 + $0x1e8] sm:$0xff]
        %v4079 = vld [vmem:[#allocation2 + $0x1f0] sm:$0xff]
        %v4080 = vld [vmem:[#allocation2 + $0x1f8] sm:$0xff]
        %v4081 = vld [vmem:[#allocation2 + $0x200] sm:$0xff]
        %v4082 = vld [vmem:[#allocation2 + $0x208] sm:$0xff]
        %v4083 = vld [vmem:[#allocation2 + $0x210] sm:$0xff]
        %v4084 = vld [vmem:[#allocation2 + $0x218] sm:$0xff]
        %v4085 = vld [vmem:[#allocation2 + $0x220] sm:$0xff]
        %v4086 = vld [vmem:[#allocation2 + $0x228] sm:$0xff]
        %v4087 = vld [vmem:[#allocation2 + $0x230] sm:$0xff]
        %v4088 = vld [vmem:[#allocation2 + $0x238] sm:$0xff]
        %v4089 = vld [vmem:[#allocation2 + $0x240] sm:$0xff]
        %v4090 = vld [vmem:[#allocation2 + $0x248] sm:$0xff]
        %v4091 = vld [vmem:[#allocation2 + $0x250] sm:$0xff]
        %v4092 = vld [vmem:[#allocation2 + $0x258] sm:$0xff]
        %v4093 = vld [vmem:[#allocation2 + $0x260] sm:$0xff]
        %v4094 = vld [vmem:[#allocation2 + $0x268] sm:$0xff]
        %v4095 = vld [vmem:[#allocation2 + $0x270] sm:$0xff]
        %v4096 = vld [vmem:[#allocation2 + $0x278] sm:$0xff]
        %v4097 = vld [vmem:[#allocation2 + $0x280] sm:$0xff]
        %v4098 = vld [vmem:[#allocation2 + $0x288] sm:$0xff]
        %v4099 = vld [vmem:[#allocation2 + $0x290] sm:$0xff]
        %v4100 = vld [vmem:[#allocation2 + $0x298] sm:$0xff]
        %v4101 = vld [vmem:[#allocation2 + $0x2a0] sm:$0xff]
        %v4102 = vld [vmem:[#allocation2 + $0x2a8] sm:$0xff]
        %v4103 = vld [vmem:[#allocation2 + $0x2b0] sm:$0xff]
        %v4104 = vld [vmem:[#allocation2 + $0x2b8] sm:$0xff]
        %v4105 = vld [vmem:[#allocation2 + $0x2c0] sm:$0xff]
        %v4106 = vld [vmem:[#allocation2 + $0x2c8] sm:$0xff]
        %v4107 = vld [vmem:[#allocation2 + $0x2d0] sm:$0xff]
        %v4108 = vld [vmem:[#allocation2 + $0x2d8] sm:$0xff]
        %v4109 = vld [vmem:[#allocation2 + $0x2e0] sm:$0xff]
        %v4110 = vld [vmem:[#allocation2 + $0x2e8] sm:$0xff]
        %v4111 = vld [vmem:[#allocation2 + $0x2f0] sm:$0xff]
        %v4112 = vld [vmem:[#allocation2 + $0x2f8] sm:$0xff]
        %v4113 = vld [vmem:[#allocation2 + $0x300] sm:$0xff]
        %v4114 = vld [vmem:[#allocation2 + $0x308] sm:$0xff]
        %v4115 = vld [vmem:[#allocation2 + $0x310] sm:$0xff]
        %v4116 = vld [vmem:[#allocation2 + $0x318] sm:$0xff]
        %v4117 = vld [vmem:[#allocation2 + $0x320] sm:$0xff]
        %v4118 = vld [vmem:[#allocation2 + $0x328] sm:$0xff]
        %v4119 = vld [vmem:[#allocation2 + $0x330] sm:$0xff]
        %v4120 = vld [vmem:[#allocation2 + $0x338] sm:$0xff]
        %v4121 = vld [vmem:[#allocation2 + $0x340] sm:$0xff]
        %v4122 = vld [vmem:[#allocation2 + $0x348] sm:$0xff]
        %v4123 = vld [vmem:[#allocation2 + $0x350] sm:$0xff]
        %v4124 = vld [vmem:[#allocation2 + $0x358] sm:$0xff]
        %v4125 = vld [vmem:[#allocation2 + $0x360] sm:$0xff]
        %v4126 = vld [vmem:[#allocation2 + $0x368] sm:$0xff]
        %v4127 = vld [vmem:[#allocation2 + $0x370] sm:$0xff]
        %v4128 = vld [vmem:[#allocation2 + $0x378] sm:$0xff]
        %v4129 = vld [vmem:[#allocation2 + $0x380] sm:$0xff]
        %v4130 = vld [vmem:[#allocation2 + $0x388] sm:$0xff]
        %v4131 = vld [vmem:[#allocation2 + $0x390] sm:$0xff]
        %v4132 = vld [vmem:[#allocation2 + $0x398] sm:$0xff]
        %v4133 = vld [vmem:[#allocation2 + $0x3a0] sm:$0xff]
        %v4134 = vld [vmem:[#allocation2 + $0x3a8] sm:$0xff]
        %v4135 = vld [vmem:[#allocation2 + $0x3b0] sm:$0xff]
        %v4136 = vld [vmem:[#allocation2 + $0x3b8] sm:$0xff]
        %v4137 = vld [vmem:[#allocation2 + $0x3c0] sm:$0xff]
        %v4138 = vld [vmem:[#allocation2 + $0x3c8] sm:$0xff]
        %v4139 = vld [vmem:[#allocation2 + $0x3d0] sm:$0xff]
        %v4140 = vld [vmem:[#allocation2 + $0x3d8] sm:$0xff]
        %v4141 = vld [vmem:[#allocation2 + $0x3e0] sm:$0xff]
        %v4142 = vld [vmem:[#allocation2 + $0x3e8] sm:$0xff]
        %v4143 = vld [vmem:[#allocation2 + $0x3f0] sm:$0xff]
        %v4144 = vld [vmem:[#allocation2 + $0x3f8] sm:$0xff]
        %v4145 = vmax.f32 %v4017, %v3889
        %v4146 = vmax.f32 %v4018, %v3890
        %v4147 = vmax.f32 %v4019, %v3891
        %v4148 = vmax.f32 %v4020, %v3892
        %v4149 = vmax.f32 %v4021, %v3893
        %v4150 = vmax.f32 %v4022, %v3894
        %v4151 = vmax.f32 %v4023, %v3895
        %v4152 = vmax.f32 %v4024, %v3896
        %v4153 = vmax.f32 %v4025, %v3897
        %v4154 = vmax.f32 %v4026, %v3898
        %v4155 = vmax.f32 %v4027, %v3899
        %v4156 = vmax.f32 %v4028, %v3900
        %v4157 = vmax.f32 %v4029, %v3901
        %v4158 = vmax.f32 %v4030, %v3902
        %v4159 = vmax.f32 %v4031, %v3903
        %v4160 = vmax.f32 %v4032, %v3904
        %v4161 = vmax.f32 %v4033, %v3905
        %v4162 = vmax.f32 %v4034, %v3906
        %v4163 = vmax.f32 %v4035, %v3907
        %v4164 = vmax.f32 %v4036, %v3908
        %v4165 = vmax.f32 %v4037, %v3909
        %v4166 = vmax.f32 %v4038, %v3910
        %v4167 = vmax.f32 %v4039, %v3911
        %v4168 = vmax.f32 %v4040, %v3912
        %v4169 = vmax.f32 %v4041, %v3913
        %v4170 = vmax.f32 %v4042, %v3914
        %v4171 = vmax.f32 %v4043, %v3915
        %v4172 = vmax.f32 %v4044, %v3916
        %v4173 = vmax.f32 %v4045, %v3917
        %v4174 = vmax.f32 %v4046, %v3918
        %v4175 = vmax.f32 %v4047, %v3919
        %v4176 = vmax.f32 %v4048, %v3920
        %v4177 = vmax.f32 %v4049, %v3921
        %v4178 = vmax.f32 %v4050, %v3922
        %v4179 = vmax.f32 %v4051, %v3923
        %v4180 = vmax.f32 %v4052, %v3924
        %v4181 = vmax.f32 %v4053, %v3925
        %v4182 = vmax.f32 %v4054, %v3926
        %v4183 = vmax.f32 %v4055, %v3927
        %v4184 = vmax.f32 %v4056, %v3928
        %v4185 = vmax.f32 %v4057, %v3929
        %v4186 = vmax.f32 %v4058, %v3930
        %v4187 = vmax.f32 %v4059, %v3931
        %v4188 = vmax.f32 %v4060, %v3932
        %v4189 = vmax.f32 %v4061, %v3933
        %v4190 = vmax.f32 %v4062, %v3934
        %v4191 = vmax.f32 %v4063, %v3935
        %v4192 = vmax.f32 %v4064, %v3936
        %v4193 = vmax.f32 %v4065, %v3937
        %v4194 = vmax.f32 %v4066, %v3938
        %v4195 = vmax.f32 %v4067, %v3939
        %v4196 = vmax.f32 %v4068, %v3940
        %v4197 = vmax.f32 %v4069, %v3941
        %v4198 = vmax.f32 %v4070, %v3942
        %v4199 = vmax.f32 %v4071, %v3943
        %v4200 = vmax.f32 %v4072, %v3944
        %v4201 = vmax.f32 %v4073, %v3945
        %v4202 = vmax.f32 %v4074, %v3946
        %v4203 = vmax.f32 %v4075, %v3947
        %v4204 = vmax.f32 %v4076, %v3948
        %v4205 = vmax.f32 %v4077, %v3949
        %v4206 = vmax.f32 %v4078, %v3950
        %v4207 = vmax.f32 %v4079, %v3951
        %v4208 = vmax.f32 %v4080, %v3952
        %v4209 = vmax.f32 %v4081, %v3953
        %v4210 = vmax.f32 %v4082, %v3954
        %v4211 = vmax.f32 %v4083, %v3955
        %v4212 = vmax.f32 %v4084, %v3956
        %v4213 = vmax.f32 %v4085, %v3957
        %v4214 = vmax.f32 %v4086, %v3958
        %v4215 = vmax.f32 %v4087, %v3959
        %v4216 = vmax.f32 %v4088, %v3960
        %v4217 = vmax.f32 %v4089, %v3961
        %v4218 = vmax.f32 %v4090, %v3962
        %v4219 = vmax.f32 %v4091, %v3963
        %v4220 = vmax.f32 %v4092, %v3964
        %v4221 = vmax.f32 %v4093, %v3965
        %v4222 = vmax.f32 %v4094, %v3966
        %v4223 = vmax.f32 %v4095, %v3967
        %v4224 = vmax.f32 %v4096, %v3968
        %v4225 = vmax.f32 %v4097, %v3969
        %v4226 = vmax.f32 %v4098, %v3970
        %v4227 = vmax.f32 %v4099, %v3971
        %v4228 = vmax.f32 %v4100, %v3972
        %v4229 = vmax.f32 %v4101, %v3973
        %v4230 = vmax.f32 %v4102, %v3974
        %v4231 = vmax.f32 %v4103, %v3975
        %v4232 = vmax.f32 %v4104, %v3976
        %v4233 = vmax.f32 %v4105, %v3977
        %v4234 = vmax.f32 %v4106, %v3978
        %v4235 = vmax.f32 %v4107, %v3979
        %v4236 = vmax.f32 %v4108, %v3980
        %v4237 = vmax.f32 %v4109, %v3981
        %v4238 = vmax.f32 %v4110, %v3982
        %v4239 = vmax.f32 %v4111, %v3983
        %v4240 = vmax.f32 %v4112, %v3984
        %v4241 = vmax.f32 %v4113, %v3985
        %v4242 = vmax.f32 %v4114, %v3986
        %v4243 = vmax.f32 %v4115, %v3987
        %v4244 = vmax.f32 %v4116, %v3988
        %v4245 = vmax.f32 %v4117, %v3989
        %v4246 = vmax.f32 %v4118, %v3990
        %v4247 = vmax.f32 %v4119, %v3991
        %v4248 = vmax.f32 %v4120, %v3992
        %v4249 = vmax.f32 %v4121, %v3993
        %v4250 = vmax.f32 %v4122, %v3994
        %v4251 = vmax.f32 %v4123, %v3995
        %v4252 = vmax.f32 %v4124, %v3996
        %v4253 = vmax.f32 %v4125, %v3997
        %v4254 = vmax.f32 %v4126, %v3998
        %v4255 = vmax.f32 %v4127, %v3999
        %v4256 = vmax.f32 %v4128, %v4000
        %v4257 = vmax.f32 %v4129, %v4001
        %v4258 = vmax.f32 %v4130, %v4002
        %v4259 = vmax.f32 %v4131, %v4003
        %v4260 = vmax.f32 %v4132, %v4004
        %v4261 = vmax.f32 %v4133, %v4005
        %v4262 = vmax.f32 %v4134, %v4006
        %v4263 = vmax.f32 %v4135, %v4007
        %v4264 = vmax.f32 %v4136, %v4008
        %v4265 = vmax.f32 %v4137, %v4009
        %v4266 = vmax.f32 %v4138, %v4010
        %v4267 = vmax.f32 %v4139, %v4011
        %v4268 = vmax.f32 %v4140, %v4012
        %v4269 = vmax.f32 %v4141, %v4013
        %v4270 = vmax.f32 %v4142, %v4014
        %v4271 = vmax.f32 %v4143, %v4015
        %v4272 = vmax.f32 %v4144, %v4016
        %4273 = vst [vmem:[#allocation2] sm:$0xff] %v4145
        %4274 = vst [vmem:[#allocation2 + $0x8] sm:$0xff] %v4146
        %4275 = vst [vmem:[#allocation2 + $0x10] sm:$0xff] %v4147
        %4276 = vst [vmem:[#allocation2 + $0x18] sm:$0xff] %v4148
        %4277 = vst [vmem:[#allocation2 + $0x20] sm:$0xff] %v4149
        %4278 = vst [vmem:[#allocation2 + $0x28] sm:$0xff] %v4150
        %4279 = vst [vmem:[#allocation2 + $0x30] sm:$0xff] %v4151
        %4280 = vst [vmem:[#allocation2 + $0x38] sm:$0xff] %v4152
        %4281 = vst [vmem:[#allocation2 + $0x40] sm:$0xff] %v4153
        %4282 = vst [vmem:[#allocation2 + $0x48] sm:$0xff] %v4154
        %4283 = vst [vmem:[#allocation2 + $0x50] sm:$0xff] %v4155
        %4284 = vst [vmem:[#allocation2 + $0x58] sm:$0xff] %v4156
        %4285 = vst [vmem:[#allocation2 + $0x60] sm:$0xff] %v4157
        %4286 = vst [vmem:[#allocation2 + $0x68] sm:$0xff] %v4158
        %4287 = vst [vmem:[#allocation2 + $0x70] sm:$0xff] %v4159
        %4288 = vst [vmem:[#allocation2 + $0x78] sm:$0xff] %v4160
        %4289 = vst [vmem:[#allocation2 + $0x80] sm:$0xff] %v4161
        %4290 = vst [vmem:[#allocation2 + $0x88] sm:$0xff] %v4162
        %4291 = vst [vmem:[#allocation2 + $0x90] sm:$0xff] %v4163
        %4292 = vst [vmem:[#allocation2 + $0x98] sm:$0xff] %v4164
        %4293 = vst [vmem:[#allocation2 + $0xa0] sm:$0xff] %v4165
        %4294 = vst [vmem:[#allocation2 + $0xa8] sm:$0xff] %v4166
        %4295 = vst [vmem:[#allocation2 + $0xb0] sm:$0xff] %v4167
        %4296 = vst [vmem:[#allocation2 + $0xb8] sm:$0xff] %v4168
        %4297 = vst [vmem:[#allocation2 + $0xc0] sm:$0xff] %v4169
        %4298 = vst [vmem:[#allocation2 + $0xc8] sm:$0xff] %v4170
        %4299 = vst [vmem:[#allocation2 + $0xd0] sm:$0xff] %v4171
        %4300 = vst [vmem:[#allocation2 + $0xd8] sm:$0xff] %v4172
        %4301 = vst [vmem:[#allocation2 + $0xe0] sm:$0xff] %v4173
        %4302 = vst [vmem:[#allocation2 + $0xe8] sm:$0xff] %v4174
        %4303 = vst [vmem:[#allocation2 + $0xf0] sm:$0xff] %v4175
        %4304 = vst [vmem:[#allocation2 + $0xf8] sm:$0xff] %v4176
        %4305 = vst [vmem:[#allocation2 + $0x100] sm:$0xff] %v4177
        %4306 = vst [vmem:[#allocation2 + $0x108] sm:$0xff] %v4178
        %4307 = vst [vmem:[#allocation2 + $0x110] sm:$0xff] %v4179
        %4308 = vst [vmem:[#allocation2 + $0x118] sm:$0xff] %v4180
        %4309 = vst [vmem:[#allocation2 + $0x120] sm:$0xff] %v4181
        %4310 = vst [vmem:[#allocation2 + $0x128] sm:$0xff] %v4182
        %4311 = vst [vmem:[#allocation2 + $0x130] sm:$0xff] %v4183
        %4312 = vst [vmem:[#allocation2 + $0x138] sm:$0xff] %v4184
        %4313 = vst [vmem:[#allocation2 + $0x140] sm:$0xff] %v4185
        %4314 = vst [vmem:[#allocation2 + $0x148] sm:$0xff] %v4186
        %4315 = vst [vmem:[#allocation2 + $0x150] sm:$0xff] %v4187
        %4316 = vst [vmem:[#allocation2 + $0x158] sm:$0xff] %v4188
        %4317 = vst [vmem:[#allocation2 + $0x160] sm:$0xff] %v4189
        %4318 = vst [vmem:[#allocation2 + $0x168] sm:$0xff] %v4190
        %4319 = vst [vmem:[#allocation2 + $0x170] sm:$0xff] %v4191
        %4320 = vst [vmem:[#allocation2 + $0x178] sm:$0xff] %v4192
        %4321 = vst [vmem:[#allocation2 + $0x180] sm:$0xff] %v4193
        %4322 = vst [vmem:[#allocation2 + $0x188] sm:$0xff] %v4194
        %4323 = vst [vmem:[#allocation2 + $0x190] sm:$0xff] %v4195
        %4324 = vst [vmem:[#allocation2 + $0x198] sm:$0xff] %v4196
        %4325 = vst [vmem:[#allocation2 + $0x1a0] sm:$0xff] %v4197
        %4326 = vst [vmem:[#allocation2 + $0x1a8] sm:$0xff] %v4198
        %4327 = vst [vmem:[#allocation2 + $0x1b0] sm:$0xff] %v4199
        %4328 = vst [vmem:[#allocation2 + $0x1b8] sm:$0xff] %v4200
        %4329 = vst [vmem:[#allocation2 + $0x1c0] sm:$0xff] %v4201
        %4330 = vst [vmem:[#allocation2 + $0x1c8] sm:$0xff] %v4202
        %4331 = vst [vmem:[#allocation2 + $0x1d0] sm:$0xff] %v4203
        %4332 = vst [vmem:[#allocation2 + $0x1d8] sm:$0xff] %v4204
        %4333 = vst [vmem:[#allocation2 + $0x1e0] sm:$0xff] %v4205
        %4334 = vst [vmem:[#allocation2 + $0x1e8] sm:$0xff] %v4206
        %4335 = vst [vmem:[#allocation2 + $0x1f0] sm:$0xff] %v4207
        %4336 = vst [vmem:[#allocation2 + $0x1f8] sm:$0xff] %v4208
        %4337 = vst [vmem:[#allocation2 + $0x200] sm:$0xff] %v4209
        %4338 = vst [vmem:[#allocation2 + $0x208] sm:$0xff] %v4210
        %4339 = vst [vmem:[#allocation2 + $0x210] sm:$0xff] %v4211
        %4340 = vst [vmem:[#allocation2 + $0x218] sm:$0xff] %v4212
        %4341 = vst [vmem:[#allocation2 + $0x220] sm:$0xff] %v4213
        %4342 = vst [vmem:[#allocation2 + $0x228] sm:$0xff] %v4214
        %4343 = vst [vmem:[#allocation2 + $0x230] sm:$0xff] %v4215
        %4344 = vst [vmem:[#allocation2 + $0x238] sm:$0xff] %v4216
        %4345 = vst [vmem:[#allocation2 + $0x240] sm:$0xff] %v4217
        %4346 = vst [vmem:[#allocation2 + $0x248] sm:$0xff] %v4218
        %4347 = vst [vmem:[#allocation2 + $0x250] sm:$0xff] %v4219
        %4348 = vst [vmem:[#allocation2 + $0x258] sm:$0xff] %v4220
        %4349 = vst [vmem:[#allocation2 + $0x260] sm:$0xff] %v4221
        %4350 = vst [vmem:[#allocation2 + $0x268] sm:$0xff] %v4222
        %4351 = vst [vmem:[#allocation2 + $0x270] sm:$0xff] %v4223
        %4352 = vst [vmem:[#allocation2 + $0x278] sm:$0xff] %v4224
        %4353 = vst [vmem:[#allocation2 + $0x280] sm:$0xff] %v4225
        %4354 = vst [vmem:[#allocation2 + $0x288] sm:$0xff] %v4226
        %4355 = vst [vmem:[#allocation2 + $0x290] sm:$0xff] %v4227
        %4356 = vst [vmem:[#allocation2 + $0x298] sm:$0xff] %v4228
        %4357 = vst [vmem:[#allocation2 + $0x2a0] sm:$0xff] %v4229
        %4358 = vst [vmem:[#allocation2 + $0x2a8] sm:$0xff] %v4230
        %4359 = vst [vmem:[#allocation2 + $0x2b0] sm:$0xff] %v4231
        %4360 = vst [vmem:[#allocation2 + $0x2b8] sm:$0xff] %v4232
        %4361 = vst [vmem:[#allocation2 + $0x2c0] sm:$0xff] %v4233
        %4362 = vst [vmem:[#allocation2 + $0x2c8] sm:$0xff] %v4234
        %4363 = vst [vmem:[#allocation2 + $0x2d0] sm:$0xff] %v4235
        %4364 = vst [vmem:[#allocation2 + $0x2d8] sm:$0xff] %v4236
        %4365 = vst [vmem:[#allocation2 + $0x2e0] sm:$0xff] %v4237
        %4366 = vst [vmem:[#allocation2 + $0x2e8] sm:$0xff] %v4238
        %4367 = vst [vmem:[#allocation2 + $0x2f0] sm:$0xff] %v4239
        %4368 = vst [vmem:[#allocation2 + $0x2f8] sm:$0xff] %v4240
        %4369 = vst [vmem:[#allocation2 + $0x300] sm:$0xff] %v4241
        %4370 = vst [vmem:[#allocation2 + $0x308] sm:$0xff] %v4242
        %4371 = vst [vmem:[#allocation2 + $0x310] sm:$0xff] %v4243
        %4372 = vst [vmem:[#allocation2 + $0x318] sm:$0xff] %v4244
        %4373 = vst [vmem:[#allocation2 + $0x320] sm:$0xff] %v4245
        %4374 = vst [vmem:[#allocation2 + $0x328] sm:$0xff] %v4246
        %4375 = vst [vmem:[#allocation2 + $0x330] sm:$0xff] %v4247
        %4376 = vst [vmem:[#allocation2 + $0x338] sm:$0xff] %v4248
        %4377 = vst [vmem:[#allocation2 + $0x340] sm:$0xff] %v4249
        %4378 = vst [vmem:[#allocation2 + $0x348] sm:$0xff] %v4250
        %4379 = vst [vmem:[#allocation2 + $0x350] sm:$0xff] %v4251
        %4380 = vst [vmem:[#allocation2 + $0x358] sm:$0xff] %v4252
        %4381 = vst [vmem:[#allocation2 + $0x360] sm:$0xff] %v4253
        %4382 = vst [vmem:[#allocation2 + $0x368] sm:$0xff] %v4254
        %4383 = vst [vmem:[#allocation2 + $0x370] sm:$0xff] %v4255
        %4384 = vst [vmem:[#allocation2 + $0x378] sm:$0xff] %v4256
        %4385 = vst [vmem:[#allocation2 + $0x380] sm:$0xff] %v4257
        %4386 = vst [vmem:[#allocation2 + $0x388] sm:$0xff] %v4258
        %4387 = vst [vmem:[#allocation2 + $0x390] sm:$0xff] %v4259
        %4388 = vst [vmem:[#allocation2 + $0x398] sm:$0xff] %v4260
        %4389 = vst [vmem:[#allocation2 + $0x3a0] sm:$0xff] %v4261
        %4390 = vst [vmem:[#allocation2 + $0x3a8] sm:$0xff] %v4262
        %4391 = vst [vmem:[#allocation2 + $0x3b0] sm:$0xff] %v4263
        %4392 = vst [vmem:[#allocation2 + $0x3b8] sm:$0xff] %v4264
        %4393 = vst [vmem:[#allocation2 + $0x3c0] sm:$0xff] %v4265
        %4394 = vst [vmem:[#allocation2 + $0x3c8] sm:$0xff] %v4266
        %4395 = vst [vmem:[#allocation2 + $0x3d0] sm:$0xff] %v4267
        %4396 = vst [vmem:[#allocation2 + $0x3d8] sm:$0xff] %v4268
        %4397 = vst [vmem:[#allocation2 + $0x3e0] sm:$0xff] %v4269
        %4398 = vst [vmem:[#allocation2 + $0x3e8] sm:$0xff] %v4270
        %4399 = vst [vmem:[#allocation2 + $0x3f0] sm:$0xff] %v4271
        %4400 = vst [vmem:[#allocation2 + $0x3f8] sm:$0xff] %v4272
        // Predicated region
        $region85: #{transform_module_forward.2} parent=71 // pred_check
          %p4401 = pneg %p3501
        $region86: #{transform_module_forward.2} parent=71 // pred_check_branch
          %4403 = sbr.rel (%p4401) target = $region88
        $region87: #{transform_module_forward.2} parent=71 // pred_region
          %v4404 = vld [vmem:[#allocation2] sm:$0xff]
          %v4405 = vld [vmem:[#allocation2 + $0x8] sm:$0xff]
          %v4406 = vld [vmem:[#allocation2 + $0x10] sm:$0xff]
          %v4407 = vld [vmem:[#allocation2 + $0x18] sm:$0xff]
          %v4408 = vld [vmem:[#allocation2 + $0x20] sm:$0xff]
          %v4409 = vld [vmem:[#allocation2 + $0x28] sm:$0xff]
          %v4410 = vld [vmem:[#allocation2 + $0x30] sm:$0xff]
          %v4411 = vld [vmem:[#allocation2 + $0x38] sm:$0xff]
          %v4412 = vld [vmem:[#allocation2 + $0x40] sm:$0xff]
          %v4413 = vld [vmem:[#allocation2 + $0x48] sm:$0xff]
          %v4414 = vld [vmem:[#allocation2 + $0x50] sm:$0xff]
          %v4415 = vld [vmem:[#allocation2 + $0x58] sm:$0xff]
          %v4416 = vld [vmem:[#allocation2 + $0x60] sm:$0xff]
          %v4417 = vld [vmem:[#allocation2 + $0x68] sm:$0xff]
          %v4418 = vld [vmem:[#allocation2 + $0x70] sm:$0xff]
          %v4419 = vld [vmem:[#allocation2 + $0x78] sm:$0xff]
          %v4420 = vld [vmem:[#allocation2 + $0x80] sm:$0xff]
          %v4421 = vld [vmem:[#allocation2 + $0x88] sm:$0xff]
          %v4422 = vld [vmem:[#allocation2 + $0x90] sm:$0xff]
          %v4423 = vld [vmem:[#allocation2 + $0x98] sm:$0xff]
          %v4424 = vld [vmem:[#allocation2 + $0xa0] sm:$0xff]
          %v4425 = vld [vmem:[#allocation2 + $0xa8] sm:$0xff]
          %v4426 = vld [vmem:[#allocation2 + $0xb0] sm:$0xff]
          %v4427 = vld [vmem:[#allocation2 + $0xb8] sm:$0xff]
          %v4428 = vld [vmem:[#allocation2 + $0xc0] sm:$0xff]
          %v4429 = vld [vmem:[#allocation2 + $0xc8] sm:$0xff]
          %v4430 = vld [vmem:[#allocation2 + $0xd0] sm:$0xff]
          %v4431 = vld [vmem:[#allocation2 + $0xd8] sm:$0xff]
          %v4432 = vld [vmem:[#allocation2 + $0xe0] sm:$0xff]
          %v4433 = vld [vmem:[#allocation2 + $0xe8] sm:$0xff]
          %v4434 = vld [vmem:[#allocation2 + $0xf0] sm:$0xff]
          %v4435 = vld [vmem:[#allocation2 + $0xf8] sm:$0xff]
          %v4436 = vld [vmem:[#allocation2 + $0x100] sm:$0xff]
          %v4437 = vld [vmem:[#allocation2 + $0x108] sm:$0xff]
          %v4438 = vld [vmem:[#allocation2 + $0x110] sm:$0xff]
          %v4439 = vld [vmem:[#allocation2 + $0x118] sm:$0xff]
          %v4440 = vld [vmem:[#allocation2 + $0x120] sm:$0xff]
          %v4441 = vld [vmem:[#allocation2 + $0x128] sm:$0xff]
          %v4442 = vld [vmem:[#allocation2 + $0x130] sm:$0xff]
          %v4443 = vld [vmem:[#allocation2 + $0x138] sm:$0xff]
          %v4444 = vld [vmem:[#allocation2 + $0x140] sm:$0xff]
          %v4445 = vld [vmem:[#allocation2 + $0x148] sm:$0xff]
          %v4446 = vld [vmem:[#allocation2 + $0x150] sm:$0xff]
          %v4447 = vld [vmem:[#allocation2 + $0x158] sm:$0xff]
          %v4448 = vld [vmem:[#allocation2 + $0x160] sm:$0xff]
          %v4449 = vld [vmem:[#allocation2 + $0x168] sm:$0xff]
          %v4450 = vld [vmem:[#allocation2 + $0x170] sm:$0xff]
          %v4451 = vld [vmem:[#allocation2 + $0x178] sm:$0xff]
          %v4452 = vld [vmem:[#allocation2 + $0x180] sm:$0xff]
          %v4453 = vld [vmem:[#allocation2 + $0x188] sm:$0xff]
          %v4454 = vld [vmem:[#allocation2 + $0x190] sm:$0xff]
          %v4455 = vld [vmem:[#allocation2 + $0x198] sm:$0xff]
          %v4456 = vld [vmem:[#allocation2 + $0x1a0] sm:$0xff]
          %v4457 = vld [vmem:[#allocation2 + $0x1a8] sm:$0xff]
          %v4458 = vld [vmem:[#allocation2 + $0x1b0] sm:$0xff]
          %v4459 = vld [vmem:[#allocation2 + $0x1b8] sm:$0xff]
          %v4460 = vld [vmem:[#allocation2 + $0x1c0] sm:$0xff]
          %v4461 = vld [vmem:[#allocation2 + $0x1c8] sm:$0xff]
          %v4462 = vld [vmem:[#allocation2 + $0x1d0] sm:$0xff]
          %v4463 = vld [vmem:[#allocation2 + $0x1d8] sm:$0xff]
          %v4464 = vld [vmem:[#allocation2 + $0x1e0] sm:$0xff]
          %v4465 = vld [vmem:[#allocation2 + $0x1e8] sm:$0xff]
          %v4466 = vld [vmem:[#allocation2 + $0x1f0] sm:$0xff]
          %v4467 = vld [vmem:[#allocation2 + $0x1f8] sm:$0xff]
          %v4468 = vld [vmem:[#allocation2 + $0x200] sm:$0xff]
          %v4469 = vld [vmem:[#allocation2 + $0x208] sm:$0xff]
          %v4470 = vld [vmem:[#allocation2 + $0x210] sm:$0xff]
          %v4471 = vld [vmem:[#allocation2 + $0x218] sm:$0xff]
          %v4472 = vld [vmem:[#allocation2 + $0x220] sm:$0xff]
          %v4473 = vld [vmem:[#allocation2 + $0x228] sm:$0xff]
          %v4474 = vld [vmem:[#allocation2 + $0x230] sm:$0xff]
          %v4475 = vld [vmem:[#allocation2 + $0x238] sm:$0xff]
          %v4476 = vld [vmem:[#allocation2 + $0x240] sm:$0xff]
          %v4477 = vld [vmem:[#allocation2 + $0x248] sm:$0xff]
          %v4478 = vld [vmem:[#allocation2 + $0x250] sm:$0xff]
          %v4479 = vld [vmem:[#allocation2 + $0x258] sm:$0xff]
          %v4480 = vld [vmem:[#allocation2 + $0x260] sm:$0xff]
          %v4481 = vld [vmem:[#allocation2 + $0x268] sm:$0xff]
          %v4482 = vld [vmem:[#allocation2 + $0x270] sm:$0xff]
          %v4483 = vld [vmem:[#allocation2 + $0x278] sm:$0xff]
          %v4484 = vld [vmem:[#allocation2 + $0x280] sm:$0xff]
          %v4485 = vld [vmem:[#allocation2 + $0x288] sm:$0xff]
          %v4486 = vld [vmem:[#allocation2 + $0x290] sm:$0xff]
          %v4487 = vld [vmem:[#allocation2 + $0x298] sm:$0xff]
          %v4488 = vld [vmem:[#allocation2 + $0x2a0] sm:$0xff]
          %v4489 = vld [vmem:[#allocation2 + $0x2a8] sm:$0xff]
          %v4490 = vld [vmem:[#allocation2 + $0x2b0] sm:$0xff]
          %v4491 = vld [vmem:[#allocation2 + $0x2b8] sm:$0xff]
          %v4492 = vld [vmem:[#allocation2 + $0x2c0] sm:$0xff]
          %v4493 = vld [vmem:[#allocation2 + $0x2c8] sm:$0xff]
          %v4494 = vld [vmem:[#allocation2 + $0x2d0] sm:$0xff]
          %v4495 = vld [vmem:[#allocation2 + $0x2d8] sm:$0xff]
          %v4496 = vld [vmem:[#allocation2 + $0x2e0] sm:$0xff]
          %v4497 = vld [vmem:[#allocation2 + $0x2e8] sm:$0xff]
          %v4498 = vld [vmem:[#allocation2 + $0x2f0] sm:$0xff]
          %v4499 = vld [vmem:[#allocation2 + $0x2f8] sm:$0xff]
          %v4500 = vld [vmem:[#allocation2 + $0x300] sm:$0xff]
          %v4501 = vld [vmem:[#allocation2 + $0x308] sm:$0xff]
          %v4502 = vld [vmem:[#allocation2 + $0x310] sm:$0xff]
          %v4503 = vld [vmem:[#allocation2 + $0x318] sm:$0xff]
          %v4504 = vld [vmem:[#allocation2 + $0x320] sm:$0xff]
          %v4505 = vld [vmem:[#allocation2 + $0x328] sm:$0xff]
          %v4506 = vld [vmem:[#allocation2 + $0x330] sm:$0xff]
          %v4507 = vld [vmem:[#allocation2 + $0x338] sm:$0xff]
          %v4508 = vld [vmem:[#allocation2 + $0x340] sm:$0xff]
          %v4509 = vld [vmem:[#allocation2 + $0x348] sm:$0xff]
          %v4510 = vld [vmem:[#allocation2 + $0x350] sm:$0xff]
          %v4511 = vld [vmem:[#allocation2 + $0x358] sm:$0xff]
          %v4512 = vld [vmem:[#allocation2 + $0x360] sm:$0xff]
          %v4513 = vld [vmem:[#allocation2 + $0x368] sm:$0xff]
          %v4514 = vld [vmem:[#allocation2 + $0x370] sm:$0xff]
          %v4515 = vld [vmem:[#allocation2 + $0x378] sm:$0xff]
          %v4516 = vld [vmem:[#allocation2 + $0x380] sm:$0xff]
          %v4517 = vld [vmem:[#allocation2 + $0x388] sm:$0xff]
          %v4518 = vld [vmem:[#allocation2 + $0x390] sm:$0xff]
          %v4519 = vld [vmem:[#allocation2 + $0x398] sm:$0xff]
          %v4520 = vld [vmem:[#allocation2 + $0x3a0] sm:$0xff]
          %v4521 = vld [vmem:[#allocation2 + $0x3a8] sm:$0xff]
          %v4522 = vld [vmem:[#allocation2 + $0x3b0] sm:$0xff]
          %v4523 = vld [vmem:[#allocation2 + $0x3b8] sm:$0xff]
          %v4524 = vld [vmem:[#allocation2 + $0x3c0] sm:$0xff]
          %v4525 = vld [vmem:[#allocation2 + $0x3c8] sm:$0xff]
          %v4526 = vld [vmem:[#allocation2 + $0x3d0] sm:$0xff]
          %v4527 = vld [vmem:[#allocation2 + $0x3d8] sm:$0xff]
          %v4528 = vld [vmem:[#allocation2 + $0x3e0] sm:$0xff]
          %v4529 = vld [vmem:[#allocation2 + $0x3e8] sm:$0xff]
          %v4530 = vld [vmem:[#allocation2 + $0x3f0] sm:$0xff]
          %v4531 = vld [vmem:[#allocation2 + $0x3f8] sm:$0xff]
          %4532 = vmax.xlane.f32.xlu0 %v4404
          %v4533 = vpop.xlane.xlu0 %4532
          %4534 = vmax.xlane.f32.xlu0 %v4405
          %v4535 = vpop.xlane.xlu0 %4534
          %4536 = vmax.xlane.f32.xlu0 %v4406
          %v4537 = vpop.xlane.xlu0 %4536
          %4538 = vmax.xlane.f32.xlu0 %v4407
          %v4539 = vpop.xlane.xlu0 %4538
          %4540 = vmax.xlane.f32.xlu0 %v4408
          %v4541 = vpop.xlane.xlu0 %4540
          %4542 = vmax.xlane.f32.xlu0 %v4409
          %v4543 = vpop.xlane.xlu0 %4542
          %4544 = vmax.xlane.f32.xlu0 %v4410
          %v4545 = vpop.xlane.xlu0 %4544
          %4546 = vmax.xlane.f32.xlu0 %v4411
          %v4547 = vpop.xlane.xlu0 %4546
          %4548 = vmax.xlane.f32.xlu0 %v4412
          %v4549 = vpop.xlane.xlu0 %4548
          %4550 = vmax.xlane.f32.xlu0 %v4413
          %v4551 = vpop.xlane.xlu0 %4550
          %4552 = vmax.xlane.f32.xlu0 %v4414
          %v4553 = vpop.xlane.xlu0 %4552
          %4554 = vmax.xlane.f32.xlu0 %v4415
          %v4555 = vpop.xlane.xlu0 %4554
          %4556 = vmax.xlane.f32.xlu0 %v4416
          %v4557 = vpop.xlane.xlu0 %4556
          %4558 = vmax.xlane.f32.xlu0 %v4417
          %v4559 = vpop.xlane.xlu0 %4558
          %4560 = vmax.xlane.f32.xlu0 %v4418
          %v4561 = vpop.xlane.xlu0 %4560
          %4562 = vmax.xlane.f32.xlu0 %v4419
          %v4563 = vpop.xlane.xlu0 %4562
          %4564 = vmax.xlane.f32.xlu0 %v4420
          %v4565 = vpop.xlane.xlu0 %4564
          %4566 = vmax.xlane.f32.xlu0 %v4421
          %v4567 = vpop.xlane.xlu0 %4566
          %4568 = vmax.xlane.f32.xlu0 %v4422
          %v4569 = vpop.xlane.xlu0 %4568
          %4570 = vmax.xlane.f32.xlu0 %v4423
          %v4571 = vpop.xlane.xlu0 %4570
          %4572 = vmax.xlane.f32.xlu0 %v4424
          %v4573 = vpop.xlane.xlu0 %4572
          %4574 = vmax.xlane.f32.xlu0 %v4425
          %v4575 = vpop.xlane.xlu0 %4574
          %4576 = vmax.xlane.f32.xlu0 %v4426
          %v4577 = vpop.xlane.xlu0 %4576
          %4578 = vmax.xlane.f32.xlu0 %v4427
          %v4579 = vpop.xlane.xlu0 %4578
          %4580 = vmax.xlane.f32.xlu0 %v4428
          %v4581 = vpop.xlane.xlu0 %4580
          %4582 = vmax.xlane.f32.xlu0 %v4429
          %v4583 = vpop.xlane.xlu0 %4582
          %4584 = vmax.xlane.f32.xlu0 %v4430
          %v4585 = vpop.xlane.xlu0 %4584
          %4586 = vmax.xlane.f32.xlu0 %v4431
          %v4587 = vpop.xlane.xlu0 %4586
          %4588 = vmax.xlane.f32.xlu0 %v4432
          %v4589 = vpop.xlane.xlu0 %4588
          %4590 = vmax.xlane.f32.xlu0 %v4433
          %v4591 = vpop.xlane.xlu0 %4590
          %4592 = vmax.xlane.f32.xlu0 %v4434
          %v4593 = vpop.xlane.xlu0 %4592
          %4594 = vmax.xlane.f32.xlu0 %v4435
          %v4595 = vpop.xlane.xlu0 %4594
          %4596 = vmax.xlane.f32.xlu0 %v4436
          %v4597 = vpop.xlane.xlu0 %4596
          %4598 = vmax.xlane.f32.xlu0 %v4437
          %v4599 = vpop.xlane.xlu0 %4598
          %4600 = vmax.xlane.f32.xlu0 %v4438
          %v4601 = vpop.xlane.xlu0 %4600
          %4602 = vmax.xlane.f32.xlu0 %v4439
          %v4603 = vpop.xlane.xlu0 %4602
          %4604 = vmax.xlane.f32.xlu0 %v4440
          %v4605 = vpop.xlane.xlu0 %4604
          %4606 = vmax.xlane.f32.xlu0 %v4441
          %v4607 = vpop.xlane.xlu0 %4606
          %4608 = vmax.xlane.f32.xlu0 %v4442
          %v4609 = vpop.xlane.xlu0 %4608
          %4610 = vmax.xlane.f32.xlu0 %v4443
          %v4611 = vpop.xlane.xlu0 %4610
          %4612 = vmax.xlane.f32.xlu0 %v4444
          %v4613 = vpop.xlane.xlu0 %4612
          %4614 = vmax.xlane.f32.xlu0 %v4445
          %v4615 = vpop.xlane.xlu0 %4614
          %4616 = vmax.xlane.f32.xlu0 %v4446
          %v4617 = vpop.xlane.xlu0 %4616
          %4618 = vmax.xlane.f32.xlu0 %v4447
          %v4619 = vpop.xlane.xlu0 %4618
          %4620 = vmax.xlane.f32.xlu0 %v4448
          %v4621 = vpop.xlane.xlu0 %4620
          %4622 = vmax.xlane.f32.xlu0 %v4449
          %v4623 = vpop.xlane.xlu0 %4622
          %4624 = vmax.xlane.f32.xlu0 %v4450
          %v4625 = vpop.xlane.xlu0 %4624
          %4626 = vmax.xlane.f32.xlu0 %v4451
          %v4627 = vpop.xlane.xlu0 %4626
          %4628 = vmax.xlane.f32.xlu0 %v4452
          %v4629 = vpop.xlane.xlu0 %4628
          %4630 = vmax.xlane.f32.xlu0 %v4453
          %v4631 = vpop.xlane.xlu0 %4630
          %4632 = vmax.xlane.f32.xlu0 %v4454
          %v4633 = vpop.xlane.xlu0 %4632
          %4634 = vmax.xlane.f32.xlu0 %v4455
          %v4635 = vpop.xlane.xlu0 %4634
          %4636 = vmax.xlane.f32.xlu0 %v4456
          %v4637 = vpop.xlane.xlu0 %4636
          %4638 = vmax.xlane.f32.xlu0 %v4457
          %v4639 = vpop.xlane.xlu0 %4638
          %4640 = vmax.xlane.f32.xlu0 %v4458
          %v4641 = vpop.xlane.xlu0 %4640
          %4642 = vmax.xlane.f32.xlu0 %v4459
          %v4643 = vpop.xlane.xlu0 %4642
          %4644 = vmax.xlane.f32.xlu0 %v4460
          %v4645 = vpop.xlane.xlu0 %4644
          %4646 = vmax.xlane.f32.xlu0 %v4461
          %v4647 = vpop.xlane.xlu0 %4646
          %4648 = vmax.xlane.f32.xlu0 %v4462
          %v4649 = vpop.xlane.xlu0 %4648
          %4650 = vmax.xlane.f32.xlu0 %v4463
          %v4651 = vpop.xlane.xlu0 %4650
          %4652 = vmax.xlane.f32.xlu0 %v4464
          %v4653 = vpop.xlane.xlu0 %4652
          %4654 = vmax.xlane.f32.xlu0 %v4465
          %v4655 = vpop.xlane.xlu0 %4654
          %4656 = vmax.xlane.f32.xlu0 %v4466
          %v4657 = vpop.xlane.xlu0 %4656
          %4658 = vmax.xlane.f32.xlu0 %v4467
          %v4659 = vpop.xlane.xlu0 %4658
          %4660 = vmax.xlane.f32.xlu0 %v4468
          %v4661 = vpop.xlane.xlu0 %4660
          %4662 = vmax.xlane.f32.xlu0 %v4469
          %v4663 = vpop.xlane.xlu0 %4662
          %4664 = vmax.xlane.f32.xlu0 %v4470
          %v4665 = vpop.xlane.xlu0 %4664
          %4666 = vmax.xlane.f32.xlu0 %v4471
          %v4667 = vpop.xlane.xlu0 %4666
          %4668 = vmax.xlane.f32.xlu0 %v4472
          %v4669 = vpop.xlane.xlu0 %4668
          %4670 = vmax.xlane.f32.xlu0 %v4473
          %v4671 = vpop.xlane.xlu0 %4670
          %4672 = vmax.xlane.f32.xlu0 %v4474
          %v4673 = vpop.xlane.xlu0 %4672
          %4674 = vmax.xlane.f32.xlu0 %v4475
          %v4675 = vpop.xlane.xlu0 %4674
          %4676 = vmax.xlane.f32.xlu0 %v4476
          %v4677 = vpop.xlane.xlu0 %4676
          %4678 = vmax.xlane.f32.xlu0 %v4477
          %v4679 = vpop.xlane.xlu0 %4678
          %4680 = vmax.xlane.f32.xlu0 %v4478
          %v4681 = vpop.xlane.xlu0 %4680
          %4682 = vmax.xlane.f32.xlu0 %v4479
          %v4683 = vpop.xlane.xlu0 %4682
          %4684 = vmax.xlane.f32.xlu0 %v4480
          %v4685 = vpop.xlane.xlu0 %4684
          %4686 = vmax.xlane.f32.xlu0 %v4481
          %v4687 = vpop.xlane.xlu0 %4686
          %4688 = vmax.xlane.f32.xlu0 %v4482
          %v4689 = vpop.xlane.xlu0 %4688
          %4690 = vmax.xlane.f32.xlu0 %v4483
          %v4691 = vpop.xlane.xlu0 %4690
          %4692 = vmax.xlane.f32.xlu0 %v4484
          %v4693 = vpop.xlane.xlu0 %4692
          %4694 = vmax.xlane.f32.xlu0 %v4485
          %v4695 = vpop.xlane.xlu0 %4694
          %4696 = vmax.xlane.f32.xlu0 %v4486
          %v4697 = vpop.xlane.xlu0 %4696
          %4698 = vmax.xlane.f32.xlu0 %v4487
          %v4699 = vpop.xlane.xlu0 %4698
          %4700 = vmax.xlane.f32.xlu0 %v4488
          %v4701 = vpop.xlane.xlu0 %4700
          %4702 = vmax.xlane.f32.xlu0 %v4489
          %v4703 = vpop.xlane.xlu0 %4702
          %4704 = vmax.xlane.f32.xlu0 %v4490
          %v4705 = vpop.xlane.xlu0 %4704
          %4706 = vmax.xlane.f32.xlu0 %v4491
          %v4707 = vpop.xlane.xlu0 %4706
          %4708 = vmax.xlane.f32.xlu0 %v4492
          %v4709 = vpop.xlane.xlu0 %4708
          %4710 = vmax.xlane.f32.xlu0 %v4493
          %v4711 = vpop.xlane.xlu0 %4710
          %4712 = vmax.xlane.f32.xlu0 %v4494
          %v4713 = vpop.xlane.xlu0 %4712
          %4714 = vmax.xlane.f32.xlu0 %v4495
          %v4715 = vpop.xlane.xlu0 %4714
          %4716 = vmax.xlane.f32.xlu0 %v4496
          %v4717 = vpop.xlane.xlu0 %4716
          %4718 = vmax.xlane.f32.xlu0 %v4497
          %v4719 = vpop.xlane.xlu0 %4718
          %4720 = vmax.xlane.f32.xlu0 %v4498
          %v4721 = vpop.xlane.xlu0 %4720
          %4722 = vmax.xlane.f32.xlu0 %v4499
          %v4723 = vpop.xlane.xlu0 %4722
          %4724 = vmax.xlane.f32.xlu0 %v4500
          %v4725 = vpop.xlane.xlu0 %4724
          %4726 = vmax.xlane.f32.xlu0 %v4501
          %v4727 = vpop.xlane.xlu0 %4726
          %4728 = vmax.xlane.f32.xlu0 %v4502
          %v4729 = vpop.xlane.xlu0 %4728
          %4730 = vmax.xlane.f32.xlu0 %v4503
          %v4731 = vpop.xlane.xlu0 %4730
          %4732 = vmax.xlane.f32.xlu0 %v4504
          %v4733 = vpop.xlane.xlu0 %4732
          %4734 = vmax.xlane.f32.xlu0 %v4505
          %v4735 = vpop.xlane.xlu0 %4734
          %4736 = vmax.xlane.f32.xlu0 %v4506
          %v4737 = vpop.xlane.xlu0 %4736
          %4738 = vmax.xlane.f32.xlu0 %v4507
          %v4739 = vpop.xlane.xlu0 %4738
          %4740 = vmax.xlane.f32.xlu0 %v4508
          %v4741 = vpop.xlane.xlu0 %4740
          %4742 = vmax.xlane.f32.xlu0 %v4509
          %v4743 = vpop.xlane.xlu0 %4742
          %4744 = vmax.xlane.f32.xlu0 %v4510
          %v4745 = vpop.xlane.xlu0 %4744
          %4746 = vmax.xlane.f32.xlu0 %v4511
          %v4747 = vpop.xlane.xlu0 %4746
          %4748 = vmax.xlane.f32.xlu0 %v4512
          %v4749 = vpop.xlane.xlu0 %4748
          %4750 = vmax.xlane.f32.xlu0 %v4513
          %v4751 = vpop.xlane.xlu0 %4750
          %4752 = vmax.xlane.f32.xlu0 %v4514
          %v4753 = vpop.xlane.xlu0 %4752
          %4754 = vmax.xlane.f32.xlu0 %v4515
          %v4755 = vpop.xlane.xlu0 %4754
          %4756 = vmax.xlane.f32.xlu0 %v4516
          %v4757 = vpop.xlane.xlu0 %4756
          %4758 = vmax.xlane.f32.xlu0 %v4517
          %v4759 = vpop.xlane.xlu0 %4758
          %4760 = vmax.xlane.f32.xlu0 %v4518
          %v4761 = vpop.xlane.xlu0 %4760
          %4762 = vmax.xlane.f32.xlu0 %v4519
          %v4763 = vpop.xlane.xlu0 %4762
          %4764 = vmax.xlane.f32.xlu0 %v4520
          %v4765 = vpop.xlane.xlu0 %4764
          %4766 = vmax.xlane.f32.xlu0 %v4521
          %v4767 = vpop.xlane.xlu0 %4766
          %4768 = vmax.xlane.f32.xlu0 %v4522
          %v4769 = vpop.xlane.xlu0 %4768
          %4770 = vmax.xlane.f32.xlu0 %v4523
          %v4771 = vpop.xlane.xlu0 %4770
          %4772 = vmax.xlane.f32.xlu0 %v4524
          %v4773 = vpop.xlane.xlu0 %4772
          %4774 = vmax.xlane.f32.xlu0 %v4525
          %v4775 = vpop.xlane.xlu0 %4774
          %4776 = vmax.xlane.f32.xlu0 %v4526
          %v4777 = vpop.xlane.xlu0 %4776
          %4778 = vmax.xlane.f32.xlu0 %v4527
          %v4779 = vpop.xlane.xlu0 %4778
          %4780 = vmax.xlane.f32.xlu0 %v4528
          %v4781 = vpop.xlane.xlu0 %4780
          %4782 = vmax.xlane.f32.xlu0 %v4529
          %v4783 = vpop.xlane.xlu0 %4782
          %4784 = vmax.xlane.f32.xlu0 %v4530
          %v4785 = vpop.xlane.xlu0 %4784
          %4786 = vmax.xlane.f32.xlu0 %v4531
          %v4787 = vpop.xlane.xlu0 %4786
          %v4788 = vld [vmem:[%s6] sm:$0xff]
          %v4789 = vld [vmem:[%s6 + $0x8] sm:$0xff]
          %v4790 = vld [vmem:[%s6 + $0x10] sm:$0xff]
          %v4791 = vld [vmem:[%s6 + $0x18] sm:$0xff]
          %v4792 = vld [vmem:[%s6 + $0x20] sm:$0xff]
          %v4793 = vld [vmem:[%s6 + $0x28] sm:$0xff]
          %v4794 = vld [vmem:[%s6 + $0x30] sm:$0xff]
          %v4795 = vld [vmem:[%s6 + $0x38] sm:$0xff]
          %v4796 = vld [vmem:[%s6 + $0x40] sm:$0xff]
          %v4797 = vld [vmem:[%s6 + $0x48] sm:$0xff]
          %v4798 = vld [vmem:[%s6 + $0x50] sm:$0xff]
          %v4799 = vld [vmem:[%s6 + $0x58] sm:$0xff]
          %v4800 = vld [vmem:[%s6 + $0x60] sm:$0xff]
          %v4801 = vld [vmem:[%s6 + $0x68] sm:$0xff]
          %v4802 = vld [vmem:[%s6 + $0x70] sm:$0xff]
          %v4803 = vld [vmem:[%s6 + $0x78] sm:$0xff]
          %v4804 = vld [vmem:[%s6 + $0x80] sm:$0xff]
          %v4805 = vld [vmem:[%s6 + $0x88] sm:$0xff]
          %v4806 = vld [vmem:[%s6 + $0x90] sm:$0xff]
          %v4807 = vld [vmem:[%s6 + $0x98] sm:$0xff]
          %v4808 = vld [vmem:[%s6 + $0xa0] sm:$0xff]
          %v4809 = vld [vmem:[%s6 + $0xa8] sm:$0xff]
          %v4810 = vld [vmem:[%s6 + $0xb0] sm:$0xff]
          %v4811 = vld [vmem:[%s6 + $0xb8] sm:$0xff]
          %v4812 = vld [vmem:[%s6 + $0xc0] sm:$0xff]
          %v4813 = vld [vmem:[%s6 + $0xc8] sm:$0xff]
          %v4814 = vld [vmem:[%s6 + $0xd0] sm:$0xff]
          %v4815 = vld [vmem:[%s6 + $0xd8] sm:$0xff]
          %v4816 = vld [vmem:[%s6 + $0xe0] sm:$0xff]
          %v4817 = vld [vmem:[%s6 + $0xe8] sm:$0xff]
          %v4818 = vld [vmem:[%s6 + $0xf0] sm:$0xff]
          %v4819 = vld [vmem:[%s6 + $0xf8] sm:$0xff]
          %v4820 = vld [vmem:[%s6 + $0x100] sm:$0xff]
          %v4821 = vld [vmem:[%s6 + $0x108] sm:$0xff]
          %v4822 = vld [vmem:[%s6 + $0x110] sm:$0xff]
          %v4823 = vld [vmem:[%s6 + $0x118] sm:$0xff]
          %v4824 = vld [vmem:[%s6 + $0x120] sm:$0xff]
          %v4825 = vld [vmem:[%s6 + $0x128] sm:$0xff]
          %v4826 = vld [vmem:[%s6 + $0x130] sm:$0xff]
          %v4827 = vld [vmem:[%s6 + $0x138] sm:$0xff]
          %v4828 = vld [vmem:[%s6 + $0x140] sm:$0xff]
          %v4829 = vld [vmem:[%s6 + $0x148] sm:$0xff]
          %v4830 = vld [vmem:[%s6 + $0x150] sm:$0xff]
          %v4831 = vld [vmem:[%s6 + $0x158] sm:$0xff]
          %v4832 = vld [vmem:[%s6 + $0x160] sm:$0xff]
          %v4833 = vld [vmem:[%s6 + $0x168] sm:$0xff]
          %v4834 = vld [vmem:[%s6 + $0x170] sm:$0xff]
          %v4835 = vld [vmem:[%s6 + $0x178] sm:$0xff]
          %v4836 = vld [vmem:[%s6 + $0x180] sm:$0xff]
          %v4837 = vld [vmem:[%s6 + $0x188] sm:$0xff]
          %v4838 = vld [vmem:[%s6 + $0x190] sm:$0xff]
          %v4839 = vld [vmem:[%s6 + $0x198] sm:$0xff]
          %v4840 = vld [vmem:[%s6 + $0x1a0] sm:$0xff]
          %v4841 = vld [vmem:[%s6 + $0x1a8] sm:$0xff]
          %v4842 = vld [vmem:[%s6 + $0x1b0] sm:$0xff]
          %v4843 = vld [vmem:[%s6 + $0x1b8] sm:$0xff]
          %v4844 = vld [vmem:[%s6 + $0x1c0] sm:$0xff]
          %v4845 = vld [vmem:[%s6 + $0x1c8] sm:$0xff]
          %v4846 = vld [vmem:[%s6 + $0x1d0] sm:$0xff]
          %v4847 = vld [vmem:[%s6 + $0x1d8] sm:$0xff]
          %v4848 = vld [vmem:[%s6 + $0x1e0] sm:$0xff]
          %v4849 = vld [vmem:[%s6 + $0x1e8] sm:$0xff]
          %v4850 = vld [vmem:[%s6 + $0x1f0] sm:$0xff]
          %v4851 = vld [vmem:[%s6 + $0x1f8] sm:$0xff]
          %v4852 = vld [vmem:[%s6 + $0x200] sm:$0xff]
          %v4853 = vld [vmem:[%s6 + $0x208] sm:$0xff]
          %v4854 = vld [vmem:[%s6 + $0x210] sm:$0xff]
          %v4855 = vld [vmem:[%s6 + $0x218] sm:$0xff]
          %v4856 = vld [vmem:[%s6 + $0x220] sm:$0xff]
          %v4857 = vld [vmem:[%s6 + $0x228] sm:$0xff]
          %v4858 = vld [vmem:[%s6 + $0x230] sm:$0xff]
          %v4859 = vld [vmem:[%s6 + $0x238] sm:$0xff]
          %v4860 = vld [vmem:[%s6 + $0x240] sm:$0xff]
          %v4861 = vld [vmem:[%s6 + $0x248] sm:$0xff]
          %v4862 = vld [vmem:[%s6 + $0x250] sm:$0xff]
          %v4863 = vld [vmem:[%s6 + $0x258] sm:$0xff]
          %v4864 = vld [vmem:[%s6 + $0x260] sm:$0xff]
          %v4865 = vld [vmem:[%s6 + $0x268] sm:$0xff]
          %v4866 = vld [vmem:[%s6 + $0x270] sm:$0xff]
          %v4867 = vld [vmem:[%s6 + $0x278] sm:$0xff]
          %v4868 = vld [vmem:[%s6 + $0x280] sm:$0xff]
          %v4869 = vld [vmem:[%s6 + $0x288] sm:$0xff]
          %v4870 = vld [vmem:[%s6 + $0x290] sm:$0xff]
          %v4871 = vld [vmem:[%s6 + $0x298] sm:$0xff]
          %v4872 = vld [vmem:[%s6 + $0x2a0] sm:$0xff]
          %v4873 = vld [vmem:[%s6 + $0x2a8] sm:$0xff]
          %v4874 = vld [vmem:[%s6 + $0x2b0] sm:$0xff]
          %v4875 = vld [vmem:[%s6 + $0x2b8] sm:$0xff]
          %v4876 = vld [vmem:[%s6 + $0x2c0] sm:$0xff]
          %v4877 = vld [vmem:[%s6 + $0x2c8] sm:$0xff]
          %v4878 = vld [vmem:[%s6 + $0x2d0] sm:$0xff]
          %v4879 = vld [vmem:[%s6 + $0x2d8] sm:$0xff]
          %v4880 = vld [vmem:[%s6 + $0x2e0] sm:$0xff]
          %v4881 = vld [vmem:[%s6 + $0x2e8] sm:$0xff]
          %v4882 = vld [vmem:[%s6 + $0x2f0] sm:$0xff]
          %v4883 = vld [vmem:[%s6 + $0x2f8] sm:$0xff]
          %v4884 = vld [vmem:[%s6 + $0x300] sm:$0xff]
          %v4885 = vld [vmem:[%s6 + $0x308] sm:$0xff]
          %v4886 = vld [vmem:[%s6 + $0x310] sm:$0xff]
          %v4887 = vld [vmem:[%s6 + $0x318] sm:$0xff]
          %v4888 = vld [vmem:[%s6 + $0x320] sm:$0xff]
          %v4889 = vld [vmem:[%s6 + $0x328] sm:$0xff]
          %v4890 = vld [vmem:[%s6 + $0x330] sm:$0xff]
          %v4891 = vld [vmem:[%s6 + $0x338] sm:$0xff]
          %v4892 = vld [vmem:[%s6 + $0x340] sm:$0xff]
          %v4893 = vld [vmem:[%s6 + $0x348] sm:$0xff]
          %v4894 = vld [vmem:[%s6 + $0x350] sm:$0xff]
          %v4895 = vld [vmem:[%s6 + $0x358] sm:$0xff]
          %v4896 = vld [vmem:[%s6 + $0x360] sm:$0xff]
          %v4897 = vld [vmem:[%s6 + $0x368] sm:$0xff]
          %v4898 = vld [vmem:[%s6 + $0x370] sm:$0xff]
          %v4899 = vld [vmem:[%s6 + $0x378] sm:$0xff]
          %v4900 = vld [vmem:[%s6 + $0x380] sm:$0xff]
          %v4901 = vld [vmem:[%s6 + $0x388] sm:$0xff]
          %v4902 = vld [vmem:[%s6 + $0x390] sm:$0xff]
          %v4903 = vld [vmem:[%s6 + $0x398] sm:$0xff]
          %v4904 = vld [vmem:[%s6 + $0x3a0] sm:$0xff]
          %v4905 = vld [vmem:[%s6 + $0x3a8] sm:$0xff]
          %v4906 = vld [vmem:[%s6 + $0x3b0] sm:$0xff]
          %v4907 = vld [vmem:[%s6 + $0x3b8] sm:$0xff]
          %v4908 = vld [vmem:[%s6 + $0x3c0] sm:$0xff]
          %v4909 = vld [vmem:[%s6 + $0x3c8] sm:$0xff]
          %v4910 = vld [vmem:[%s6 + $0x3d0] sm:$0xff]
          %v4911 = vld [vmem:[%s6 + $0x3d8] sm:$0xff]
          %v4912 = vld [vmem:[%s6 + $0x3e0] sm:$0xff]
          %v4913 = vld [vmem:[%s6 + $0x3e8] sm:$0xff]
          %v4914 = vld [vmem:[%s6 + $0x3f0] sm:$0xff]
          %v4915 = vld [vmem:[%s6 + $0x3f8] sm:$0xff]
          %v4916 = vadd.f32 %v4533, %v4788
          %v4917 = vadd.f32 %v4535, %v4789
          %v4918 = vadd.f32 %v4537, %v4790
          %v4919 = vadd.f32 %v4539, %v4791
          %v4920 = vadd.f32 %v4541, %v4792
          %v4921 = vadd.f32 %v4543, %v4793
          %v4922 = vadd.f32 %v4545, %v4794
          %v4923 = vadd.f32 %v4547, %v4795
          %v4924 = vadd.f32 %v4549, %v4796
          %v4925 = vadd.f32 %v4551, %v4797
          %v4926 = vadd.f32 %v4553, %v4798
          %v4927 = vadd.f32 %v4555, %v4799
          %v4928 = vadd.f32 %v4557, %v4800
          %v4929 = vadd.f32 %v4559, %v4801
          %v4930 = vadd.f32 %v4561, %v4802
          %v4931 = vadd.f32 %v4563, %v4803
          %v4932 = vadd.f32 %v4565, %v4804
          %v4933 = vadd.f32 %v4567, %v4805
          %v4934 = vadd.f32 %v4569, %v4806
          %v4935 = vadd.f32 %v4571, %v4807
          %v4936 = vadd.f32 %v4573, %v4808
          %v4937 = vadd.f32 %v4575, %v4809
          %v4938 = vadd.f32 %v4577, %v4810
          %v4939 = vadd.f32 %v4579, %v4811
          %v4940 = vadd.f32 %v4581, %v4812
          %v4941 = vadd.f32 %v4583, %v4813
          %v4942 = vadd.f32 %v4585, %v4814
          %v4943 = vadd.f32 %v4587, %v4815
          %v4944 = vadd.f32 %v4589, %v4816
          %v4945 = vadd.f32 %v4591, %v4817
          %v4946 = vadd.f32 %v4593, %v4818
          %v4947 = vadd.f32 %v4595, %v4819
          %v4948 = vadd.f32 %v4597, %v4820
          %v4949 = vadd.f32 %v4599, %v4821
          %v4950 = vadd.f32 %v4601, %v4822
          %v4951 = vadd.f32 %v4603, %v4823
          %v4952 = vadd.f32 %v4605, %v4824
          %v4953 = vadd.f32 %v4607, %v4825
          %v4954 = vadd.f32 %v4609, %v4826
          %v4955 = vadd.f32 %v4611, %v4827
          %v4956 = vadd.f32 %v4613, %v4828
          %v4957 = vadd.f32 %v4615, %v4829
          %v4958 = vadd.f32 %v4617, %v4830
          %v4959 = vadd.f32 %v4619, %v4831
          %v4960 = vadd.f32 %v4621, %v4832
          %v4961 = vadd.f32 %v4623, %v4833
          %v4962 = vadd.f32 %v4625, %v4834
          %v4963 = vadd.f32 %v4627, %v4835
          %v4964 = vadd.f32 %v4629, %v4836
          %v4965 = vadd.f32 %v4631, %v4837
          %v4966 = vadd.f32 %v4633, %v4838
          %v4967 = vadd.f32 %v4635, %v4839
          %v4968 = vadd.f32 %v4637, %v4840
          %v4969 = vadd.f32 %v4639, %v4841
          %v4970 = vadd.f32 %v4641, %v4842
          %v4971 = vadd.f32 %v4643, %v4843
          %v4972 = vadd.f32 %v4645, %v4844
          %v4973 = vadd.f32 %v4647, %v4845
          %v4974 = vadd.f32 %v4649, %v4846
          %v4975 = vadd.f32 %v4651, %v4847
          %v4976 = vadd.f32 %v4653, %v4848
          %v4977 = vadd.f32 %v4655, %v4849
          %v4978 = vadd.f32 %v4657, %v4850
          %v4979 = vadd.f32 %v4659, %v4851
          %v4980 = vadd.f32 %v4661, %v4852
          %v4981 = vadd.f32 %v4663, %v4853
          %v4982 = vadd.f32 %v4665, %v4854
          %v4983 = vadd.f32 %v4667, %v4855
          %v4984 = vadd.f32 %v4669, %v4856
          %v4985 = vadd.f32 %v4671, %v4857
          %v4986 = vadd.f32 %v4673, %v4858
          %v4987 = vadd.f32 %v4675, %v4859
          %v4988 = vadd.f32 %v4677, %v4860
          %v4989 = vadd.f32 %v4679, %v4861
          %v4990 = vadd.f32 %v4681, %v4862
          %v4991 = vadd.f32 %v4683, %v4863
          %v4992 = vadd.f32 %v4685, %v4864
          %v4993 = vadd.f32 %v4687, %v4865
          %v4994 = vadd.f32 %v4689, %v4866
          %v4995 = vadd.f32 %v4691, %v4867
          %v4996 = vadd.f32 %v4693, %v4868
          %v4997 = vadd.f32 %v4695, %v4869
          %v4998 = vadd.f32 %v4697, %v4870
          %v4999 = vadd.f32 %v4699, %v4871
          %v5000 = vadd.f32 %v4701, %v4872
          %v5001 = vadd.f32 %v4703, %v4873
          %v5002 = vadd.f32 %v4705, %v4874
          %v5003 = vadd.f32 %v4707, %v4875
          %v5004 = vadd.f32 %v4709, %v4876
          %v5005 = vadd.f32 %v4711, %v4877
          %v5006 = vadd.f32 %v4713, %v4878
          %v5007 = vadd.f32 %v4715, %v4879
          %v5008 = vadd.f32 %v4717, %v4880
          %v5009 = vadd.f32 %v4719, %v4881
          %v5010 = vadd.f32 %v4721, %v4882
          %v5011 = vadd.f32 %v4723, %v4883
          %v5012 = vadd.f32 %v4725, %v4884
          %v5013 = vadd.f32 %v4727, %v4885
          %v5014 = vadd.f32 %v4729, %v4886
          %v5015 = vadd.f32 %v4731, %v4887
          %v5016 = vadd.f32 %v4733, %v4888
          %v5017 = vadd.f32 %v4735, %v4889
          %v5018 = vadd.f32 %v4737, %v4890
          %v5019 = vadd.f32 %v4739, %v4891
          %v5020 = vadd.f32 %v4741, %v4892
          %v5021 = vadd.f32 %v4743, %v4893
          %v5022 = vadd.f32 %v4745, %v4894
          %v5023 = vadd.f32 %v4747, %v4895
          %v5024 = vadd.f32 %v4749, %v4896
          %v5025 = vadd.f32 %v4751, %v4897
          %v5026 = vadd.f32 %v4753, %v4898
          %v5027 = vadd.f32 %v4755, %v4899
          %v5028 = vadd.f32 %v4757, %v4900
          %v5029 = vadd.f32 %v4759, %v4901
          %v5030 = vadd.f32 %v4761, %v4902
          %v5031 = vadd.f32 %v4763, %v4903
          %v5032 = vadd.f32 %v4765, %v4904
          %v5033 = vadd.f32 %v4767, %v4905
          %v5034 = vadd.f32 %v4769, %v4906
          %v5035 = vadd.f32 %v4771, %v4907
          %v5036 = vadd.f32 %v4773, %v4908
          %v5037 = vadd.f32 %v4775, %v4909
          %v5038 = vadd.f32 %v4777, %v4910
          %v5039 = vadd.f32 %v4779, %v4911
          %v5040 = vadd.f32 %v4781, %v4912
          %v5041 = vadd.f32 %v4783, %v4913
          %v5042 = vadd.f32 %v4785, %v4914
          %v5043 = vadd.f32 %v4787, %v4915
          %v5044 = vmax.f32 %v4916, 0.0
          %v5045 = vmax.f32 %v4917, 0.0
          %v5046 = vmax.f32 %v4918, 0.0
          %v5047 = vmax.f32 %v4919, 0.0
          %v5048 = vmax.f32 %v4920, 0.0
          %v5049 = vmax.f32 %v4921, 0.0
          %v5050 = vmax.f32 %v4922, 0.0
          %v5051 = vmax.f32 %v4923, 0.0
          %v5052 = vmax.f32 %v4924, 0.0
          %v5053 = vmax.f32 %v4925, 0.0
          %v5054 = vmax.f32 %v4926, 0.0
          %v5055 = vmax.f32 %v4927, 0.0
          %v5056 = vmax.f32 %v4928, 0.0
          %v5057 = vmax.f32 %v4929, 0.0
          %v5058 = vmax.f32 %v4930, 0.0
          %v5059 = vmax.f32 %v4931, 0.0
          %v5060 = vmax.f32 %v4932, 0.0
          %v5061 = vmax.f32 %v4933, 0.0
          %v5062 = vmax.f32 %v4934, 0.0
          %v5063 = vmax.f32 %v4935, 0.0
          %v5064 = vmax.f32 %v4936, 0.0
          %v5065 = vmax.f32 %v4937, 0.0
          %v5066 = vmax.f32 %v4938, 0.0
          %v5067 = vmax.f32 %v4939, 0.0
          %v5068 = vmax.f32 %v4940, 0.0
          %v5069 = vmax.f32 %v4941, 0.0
          %v5070 = vmax.f32 %v4942, 0.0
          %v5071 = vmax.f32 %v4943, 0.0
          %v5072 = vmax.f32 %v4944, 0.0
          %v5073 = vmax.f32 %v4945, 0.0
          %v5074 = vmax.f32 %v4946, 0.0
          %v5075 = vmax.f32 %v4947, 0.0
          %v5076 = vmax.f32 %v4948, 0.0
          %v5077 = vmax.f32 %v4949, 0.0
          %v5078 = vmax.f32 %v4950, 0.0
          %v5079 = vmax.f32 %v4951, 0.0
          %v5080 = vmax.f32 %v4952, 0.0
          %v5081 = vmax.f32 %v4953, 0.0
          %v5082 = vmax.f32 %v4954, 0.0
          %v5083 = vmax.f32 %v4955, 0.0
          %v5084 = vmax.f32 %v4956, 0.0
          %v5085 = vmax.f32 %v4957, 0.0
          %v5086 = vmax.f32 %v4958, 0.0
          %v5087 = vmax.f32 %v4959, 0.0
          %v5088 = vmax.f32 %v4960, 0.0
          %v5089 = vmax.f32 %v4961, 0.0
          %v5090 = vmax.f32 %v4962, 0.0
          %v5091 = vmax.f32 %v4963, 0.0
          %v5092 = vmax.f32 %v4964, 0.0
          %v5093 = vmax.f32 %v4965, 0.0
          %v5094 = vmax.f32 %v4966, 0.0
          %v5095 = vmax.f32 %v4967, 0.0
          %v5096 = vmax.f32 %v4968, 0.0
          %v5097 = vmax.f32 %v4969, 0.0
          %v5098 = vmax.f32 %v4970, 0.0
          %v5099 = vmax.f32 %v4971, 0.0
          %v5100 = vmax.f32 %v4972, 0.0
          %v5101 = vmax.f32 %v4973, 0.0
          %v5102 = vmax.f32 %v4974, 0.0
          %v5103 = vmax.f32 %v4975, 0.0
          %v5104 = vmax.f32 %v4976, 0.0
          %v5105 = vmax.f32 %v4977, 0.0
          %v5106 = vmax.f32 %v4978, 0.0
          %v5107 = vmax.f32 %v4979, 0.0
          %v5108 = vmax.f32 %v4980, 0.0
          %v5109 = vmax.f32 %v4981, 0.0
          %v5110 = vmax.f32 %v4982, 0.0
          %v5111 = vmax.f32 %v4983, 0.0
          %v5112 = vmax.f32 %v4984, 0.0
          %v5113 = vmax.f32 %v4985, 0.0
          %v5114 = vmax.f32 %v4986, 0.0
          %v5115 = vmax.f32 %v4987, 0.0
          %v5116 = vmax.f32 %v4988, 0.0
          %v5117 = vmax.f32 %v4989, 0.0
          %v5118 = vmax.f32 %v4990, 0.0
          %v5119 = vmax.f32 %v4991, 0.0
          %v5120 = vmax.f32 %v4992, 0.0
          %v5121 = vmax.f32 %v4993, 0.0
          %v5122 = vmax.f32 %v4994, 0.0
          %v5123 = vmax.f32 %v4995, 0.0
          %v5124 = vmax.f32 %v4996, 0.0
          %v5125 = vmax.f32 %v4997, 0.0
          %v5126 = vmax.f32 %v4998, 0.0
          %v5127 = vmax.f32 %v4999, 0.0
          %v5128 = vmax.f32 %v5000, 0.0
          %v5129 = vmax.f32 %v5001, 0.0
          %v5130 = vmax.f32 %v5002, 0.0
          %v5131 = vmax.f32 %v5003, 0.0
          %v5132 = vmax.f32 %v5004, 0.0
          %v5133 = vmax.f32 %v5005, 0.0
          %v5134 = vmax.f32 %v5006, 0.0
          %v5135 = vmax.f32 %v5007, 0.0
          %v5136 = vmax.f32 %v5008, 0.0
          %v5137 = vmax.f32 %v5009, 0.0
          %v5138 = vmax.f32 %v5010, 0.0
          %v5139 = vmax.f32 %v5011, 0.0
          %v5140 = vmax.f32 %v5012, 0.0
          %v5141 = vmax.f32 %v5013, 0.0
          %v5142 = vmax.f32 %v5014, 0.0
          %v5143 = vmax.f32 %v5015, 0.0
          %v5144 = vmax.f32 %v5016, 0.0
          %v5145 = vmax.f32 %v5017, 0.0
          %v5146 = vmax.f32 %v5018, 0.0
          %v5147 = vmax.f32 %v5019, 0.0
          %v5148 = vmax.f32 %v5020, 0.0
          %v5149 = vmax.f32 %v5021, 0.0
          %v5150 = vmax.f32 %v5022, 0.0
          %v5151 = vmax.f32 %v5023, 0.0
          %v5152 = vmax.f32 %v5024, 0.0
          %v5153 = vmax.f32 %v5025, 0.0
          %v5154 = vmax.f32 %v5026, 0.0
          %v5155 = vmax.f32 %v5027, 0.0
          %v5156 = vmax.f32 %v5028, 0.0
          %v5157 = vmax.f32 %v5029, 0.0
          %v5158 = vmax.f32 %v5030, 0.0
          %v5159 = vmax.f32 %v5031, 0.0
          %v5160 = vmax.f32 %v5032, 0.0
          %v5161 = vmax.f32 %v5033, 0.0
          %v5162 = vmax.f32 %v5034, 0.0
          %v5163 = vmax.f32 %v5035, 0.0
          %v5164 = vmax.f32 %v5036, 0.0
          %v5165 = vmax.f32 %v5037, 0.0
          %v5166 = vmax.f32 %v5038, 0.0
          %v5167 = vmax.f32 %v5039, 0.0
          %v5168 = vmax.f32 %v5040, 0.0
          %v5169 = vmax.f32 %v5041, 0.0
          %v5170 = vmax.f32 %v5042, 0.0
          %v5171 = vmax.f32 %v5043, 0.0
          %5173 = vset.pattern.permute.xlu0 0
          %5174 = vperm.xlu0 %5173, %v5044
          %v5175 = vpop.permute.xlu0 %5174
          %5178 = vset.pattern.permute.xlu0 0
          %5179 = vperm.xlu0 %5178, %v5045
          %v5180 = vpop.permute.xlu0 %5179
          %5183 = vset.pattern.permute.xlu0 0
          %5184 = vperm.xlu0 %5183, %v5046
          %v5185 = vpop.permute.xlu0 %5184
          %5188 = vset.pattern.permute.xlu0 0
          %5189 = vperm.xlu0 %5188, %v5047
          %v5190 = vpop.permute.xlu0 %5189
          %5193 = vset.pattern.permute.xlu0 0
          %5194 = vperm.xlu0 %5193, %v5048
          %v5195 = vpop.permute.xlu0 %5194
          %5198 = vset.pattern.permute.xlu0 0
          %5199 = vperm.xlu0 %5198, %v5049
          %v5200 = vpop.permute.xlu0 %5199
          %5203 = vset.pattern.permute.xlu0 0
          %5204 = vperm.xlu0 %5203, %v5050
          %v5205 = vpop.permute.xlu0 %5204
          %5208 = vset.pattern.permute.xlu0 0
          %5209 = vperm.xlu0 %5208, %v5051
          %v5210 = vpop.permute.xlu0 %5209
          %5213 = vset.pattern.permute.xlu0 0
          %5214 = vperm.xlu0 %5213, %v5052
          %v5215 = vpop.permute.xlu0 %5214
          %5218 = vset.pattern.permute.xlu0 0
          %5219 = vperm.xlu0 %5218, %v5053
          %v5220 = vpop.permute.xlu0 %5219
          %5223 = vset.pattern.permute.xlu0 0
          %5224 = vperm.xlu0 %5223, %v5054
          %v5225 = vpop.permute.xlu0 %5224
          %5228 = vset.pattern.permute.xlu0 0
          %5229 = vperm.xlu0 %5228, %v5055
          %v5230 = vpop.permute.xlu0 %5229
          %5233 = vset.pattern.permute.xlu0 0
          %5234 = vperm.xlu0 %5233, %v5056
          %v5235 = vpop.permute.xlu0 %5234
          %5238 = vset.pattern.permute.xlu0 0
          %5239 = vperm.xlu0 %5238, %v5057
          %v5240 = vpop.permute.xlu0 %5239
          %5243 = vset.pattern.permute.xlu0 0
          %5244 = vperm.xlu0 %5243, %v5058
          %v5245 = vpop.permute.xlu0 %5244
          %5248 = vset.pattern.permute.xlu0 0
          %5249 = vperm.xlu0 %5248, %v5059
          %v5250 = vpop.permute.xlu0 %5249
          %5253 = vset.pattern.permute.xlu0 0
          %5254 = vperm.xlu0 %5253, %v5060
          %v5255 = vpop.permute.xlu0 %5254
          %5258 = vset.pattern.permute.xlu0 0
          %5259 = vperm.xlu0 %5258, %v5061
          %v5260 = vpop.permute.xlu0 %5259
          %5263 = vset.pattern.permute.xlu0 0
          %5264 = vperm.xlu0 %5263, %v5062
          %v5265 = vpop.permute.xlu0 %5264
          %5268 = vset.pattern.permute.xlu0 0
          %5269 = vperm.xlu0 %5268, %v5063
          %v5270 = vpop.permute.xlu0 %5269
          %5273 = vset.pattern.permute.xlu0 0
          %5274 = vperm.xlu0 %5273, %v5064
          %v5275 = vpop.permute.xlu0 %5274
          %5278 = vset.pattern.permute.xlu0 0
          %5279 = vperm.xlu0 %5278, %v5065
          %v5280 = vpop.permute.xlu0 %5279
          %5283 = vset.pattern.permute.xlu0 0
          %5284 = vperm.xlu0 %5283, %v5066
          %v5285 = vpop.permute.xlu0 %5284
          %5288 = vset.pattern.permute.xlu0 0
          %5289 = vperm.xlu0 %5288, %v5067
          %v5290 = vpop.permute.xlu0 %5289
          %5293 = vset.pattern.permute.xlu0 0
          %5294 = vperm.xlu0 %5293, %v5068
          %v5295 = vpop.permute.xlu0 %5294
          %5298 = vset.pattern.permute.xlu0 0
          %5299 = vperm.xlu0 %5298, %v5069
          %v5300 = vpop.permute.xlu0 %5299
          %5303 = vset.pattern.permute.xlu0 0
          %5304 = vperm.xlu0 %5303, %v5070
          %v5305 = vpop.permute.xlu0 %5304
          %5308 = vset.pattern.permute.xlu0 0
          %5309 = vperm.xlu0 %5308, %v5071
          %v5310 = vpop.permute.xlu0 %5309
          %5313 = vset.pattern.permute.xlu0 0
          %5314 = vperm.xlu0 %5313, %v5072
          %v5315 = vpop.permute.xlu0 %5314
          %5318 = vset.pattern.permute.xlu0 0
          %5319 = vperm.xlu0 %5318, %v5073
          %v5320 = vpop.permute.xlu0 %5319
          %5323 = vset.pattern.permute.xlu0 0
          %5324 = vperm.xlu0 %5323, %v5074
          %v5325 = vpop.permute.xlu0 %5324
          %5328 = vset.pattern.permute.xlu0 0
          %5329 = vperm.xlu0 %5328, %v5075
          %v5330 = vpop.permute.xlu0 %5329
          %5333 = vset.pattern.permute.xlu0 0
          %5334 = vperm.xlu0 %5333, %v5076
          %v5335 = vpop.permute.xlu0 %5334
          %5338 = vset.pattern.permute.xlu0 0
          %5339 = vperm.xlu0 %5338, %v5077
          %v5340 = vpop.permute.xlu0 %5339
          %5343 = vset.pattern.permute.xlu0 0
          %5344 = vperm.xlu0 %5343, %v5078
          %v5345 = vpop.permute.xlu0 %5344
          %5348 = vset.pattern.permute.xlu0 0
          %5349 = vperm.xlu0 %5348, %v5079
          %v5350 = vpop.permute.xlu0 %5349
          %5353 = vset.pattern.permute.xlu0 0
          %5354 = vperm.xlu0 %5353, %v5080
          %v5355 = vpop.permute.xlu0 %5354
          %5358 = vset.pattern.permute.xlu0 0
          %5359 = vperm.xlu0 %5358, %v5081
          %v5360 = vpop.permute.xlu0 %5359
          %5363 = vset.pattern.permute.xlu0 0
          %5364 = vperm.xlu0 %5363, %v5082
          %v5365 = vpop.permute.xlu0 %5364
          %5368 = vset.pattern.permute.xlu0 0
          %5369 = vperm.xlu0 %5368, %v5083
          %v5370 = vpop.permute.xlu0 %5369
          %5373 = vset.pattern.permute.xlu0 0
          %5374 = vperm.xlu0 %5373, %v5084
          %v5375 = vpop.permute.xlu0 %5374
          %5378 = vset.pattern.permute.xlu0 0
          %5379 = vperm.xlu0 %5378, %v5085
          %v5380 = vpop.permute.xlu0 %5379
          %5383 = vset.pattern.permute.xlu0 0
          %5384 = vperm.xlu0 %5383, %v5086
          %v5385 = vpop.permute.xlu0 %5384
          %5388 = vset.pattern.permute.xlu0 0
          %5389 = vperm.xlu0 %5388, %v5087
          %v5390 = vpop.permute.xlu0 %5389
          %5393 = vset.pattern.permute.xlu0 0
          %5394 = vperm.xlu0 %5393, %v5088
          %v5395 = vpop.permute.xlu0 %5394
          %5398 = vset.pattern.permute.xlu0 0
          %5399 = vperm.xlu0 %5398, %v5089
          %v5400 = vpop.permute.xlu0 %5399
          %5403 = vset.pattern.permute.xlu0 0
          %5404 = vperm.xlu0 %5403, %v5090
          %v5405 = vpop.permute.xlu0 %5404
          %5408 = vset.pattern.permute.xlu0 0
          %5409 = vperm.xlu0 %5408, %v5091
          %v5410 = vpop.permute.xlu0 %5409
          %5413 = vset.pattern.permute.xlu0 0
          %5414 = vperm.xlu0 %5413, %v5092
          %v5415 = vpop.permute.xlu0 %5414
          %5418 = vset.pattern.permute.xlu0 0
          %5419 = vperm.xlu0 %5418, %v5093
          %v5420 = vpop.permute.xlu0 %5419
          %5423 = vset.pattern.permute.xlu0 0
          %5424 = vperm.xlu0 %5423, %v5094
          %v5425 = vpop.permute.xlu0 %5424
          %5428 = vset.pattern.permute.xlu0 0
          %5429 = vperm.xlu0 %5428, %v5095
          %v5430 = vpop.permute.xlu0 %5429
          %5433 = vset.pattern.permute.xlu0 0
          %5434 = vperm.xlu0 %5433, %v5096
          %v5435 = vpop.permute.xlu0 %5434
          %5438 = vset.pattern.permute.xlu0 0
          %5439 = vperm.xlu0 %5438, %v5097
          %v5440 = vpop.permute.xlu0 %5439
          %5443 = vset.pattern.permute.xlu0 0
          %5444 = vperm.xlu0 %5443, %v5098
          %v5445 = vpop.permute.xlu0 %5444
          %5448 = vset.pattern.permute.xlu0 0
          %5449 = vperm.xlu0 %5448, %v5099
          %v5450 = vpop.permute.xlu0 %5449
          %5453 = vset.pattern.permute.xlu0 0
          %5454 = vperm.xlu0 %5453, %v5100
          %v5455 = vpop.permute.xlu0 %5454
          %5458 = vset.pattern.permute.xlu0 0
          %5459 = vperm.xlu0 %5458, %v5101
          %v5460 = vpop.permute.xlu0 %5459
          %5463 = vset.pattern.permute.xlu0 0
          %5464 = vperm.xlu0 %5463, %v5102
          %v5465 = vpop.permute.xlu0 %5464
          %5468 = vset.pattern.permute.xlu0 0
          %5469 = vperm.xlu0 %5468, %v5103
          %v5470 = vpop.permute.xlu0 %5469
          %5473 = vset.pattern.permute.xlu0 0
          %5474 = vperm.xlu0 %5473, %v5104
          %v5475 = vpop.permute.xlu0 %5474
          %5478 = vset.pattern.permute.xlu0 0
          %5479 = vperm.xlu0 %5478, %v5105
          %v5480 = vpop.permute.xlu0 %5479
          %5483 = vset.pattern.permute.xlu0 0
          %5484 = vperm.xlu0 %5483, %v5106
          %v5485 = vpop.permute.xlu0 %5484
          %5488 = vset.pattern.permute.xlu0 0
          %5489 = vperm.xlu0 %5488, %v5107
          %v5490 = vpop.permute.xlu0 %5489
          %5493 = vset.pattern.permute.xlu0 0
          %5494 = vperm.xlu0 %5493, %v5108
          %v5495 = vpop.permute.xlu0 %5494
          %5498 = vset.pattern.permute.xlu0 0
          %5499 = vperm.xlu0 %5498, %v5109
          %v5500 = vpop.permute.xlu0 %5499
          %5503 = vset.pattern.permute.xlu0 0
          %5504 = vperm.xlu0 %5503, %v5110
          %v5505 = vpop.permute.xlu0 %5504
          %5508 = vset.pattern.permute.xlu0 0
          %5509 = vperm.xlu0 %5508, %v5111
          %v5510 = vpop.permute.xlu0 %5509
          %5513 = vset.pattern.permute.xlu0 0
          %5514 = vperm.xlu0 %5513, %v5112
          %v5515 = vpop.permute.xlu0 %5514
          %5518 = vset.pattern.permute.xlu0 0
          %5519 = vperm.xlu0 %5518, %v5113
          %v5520 = vpop.permute.xlu0 %5519
          %5523 = vset.pattern.permute.xlu0 0
          %5524 = vperm.xlu0 %5523, %v5114
          %v5525 = vpop.permute.xlu0 %5524
          %5528 = vset.pattern.permute.xlu0 0
          %5529 = vperm.xlu0 %5528, %v5115
          %v5530 = vpop.permute.xlu0 %5529
          %5533 = vset.pattern.permute.xlu0 0
          %5534 = vperm.xlu0 %5533, %v5116
          %v5535 = vpop.permute.xlu0 %5534
          %5538 = vset.pattern.permute.xlu0 0
          %5539 = vperm.xlu0 %5538, %v5117
          %v5540 = vpop.permute.xlu0 %5539
          %5543 = vset.pattern.permute.xlu0 0
          %5544 = vperm.xlu0 %5543, %v5118
          %v5545 = vpop.permute.xlu0 %5544
          %5548 = vset.pattern.permute.xlu0 0
          %5549 = vperm.xlu0 %5548, %v5119
          %v5550 = vpop.permute.xlu0 %5549
          %5553 = vset.pattern.permute.xlu0 0
          %5554 = vperm.xlu0 %5553, %v5120
          %v5555 = vpop.permute.xlu0 %5554
          %5558 = vset.pattern.permute.xlu0 0
          %5559 = vperm.xlu0 %5558, %v5121
          %v5560 = vpop.permute.xlu0 %5559
          %5563 = vset.pattern.permute.xlu0 0
          %5564 = vperm.xlu0 %5563, %v5122
          %v5565 = vpop.permute.xlu0 %5564
          %5568 = vset.pattern.permute.xlu0 0
          %5569 = vperm.xlu0 %5568, %v5123
          %v5570 = vpop.permute.xlu0 %5569
          %5573 = vset.pattern.permute.xlu0 0
          %5574 = vperm.xlu0 %5573, %v5124
          %v5575 = vpop.permute.xlu0 %5574
          %5578 = vset.pattern.permute.xlu0 0
          %5579 = vperm.xlu0 %5578, %v5125
          %v5580 = vpop.permute.xlu0 %5579
          %5583 = vset.pattern.permute.xlu0 0
          %5584 = vperm.xlu0 %5583, %v5126
          %v5585 = vpop.permute.xlu0 %5584
          %5588 = vset.pattern.permute.xlu0 0
          %5589 = vperm.xlu0 %5588, %v5127
          %v5590 = vpop.permute.xlu0 %5589
          %5593 = vset.pattern.permute.xlu0 0
          %5594 = vperm.xlu0 %5593, %v5128
          %v5595 = vpop.permute.xlu0 %5594
          %5598 = vset.pattern.permute.xlu0 0
          %5599 = vperm.xlu0 %5598, %v5129
          %v5600 = vpop.permute.xlu0 %5599
          %5603 = vset.pattern.permute.xlu0 0
          %5604 = vperm.xlu0 %5603, %v5130
          %v5605 = vpop.permute.xlu0 %5604
          %5608 = vset.pattern.permute.xlu0 0
          %5609 = vperm.xlu0 %5608, %v5131
          %v5610 = vpop.permute.xlu0 %5609
          %5613 = vset.pattern.permute.xlu0 0
          %5614 = vperm.xlu0 %5613, %v5132
          %v5615 = vpop.permute.xlu0 %5614
          %5618 = vset.pattern.permute.xlu0 0
          %5619 = vperm.xlu0 %5618, %v5133
          %v5620 = vpop.permute.xlu0 %5619
          %5623 = vset.pattern.permute.xlu0 0
          %5624 = vperm.xlu0 %5623, %v5134
          %v5625 = vpop.permute.xlu0 %5624
          %5628 = vset.pattern.permute.xlu0 0
          %5629 = vperm.xlu0 %5628, %v5135
          %v5630 = vpop.permute.xlu0 %5629
          %5633 = vset.pattern.permute.xlu0 0
          %5634 = vperm.xlu0 %5633, %v5136
          %v5635 = vpop.permute.xlu0 %5634
          %5638 = vset.pattern.permute.xlu0 0
          %5639 = vperm.xlu0 %5638, %v5137
          %v5640 = vpop.permute.xlu0 %5639
          %5643 = vset.pattern.permute.xlu0 0
          %5644 = vperm.xlu0 %5643, %v5138
          %v5645 = vpop.permute.xlu0 %5644
          %5648 = vset.pattern.permute.xlu0 0
          %5649 = vperm.xlu0 %5648, %v5139
          %v5650 = vpop.permute.xlu0 %5649
          %5653 = vset.pattern.permute.xlu0 0
          %5654 = vperm.xlu0 %5653, %v5140
          %v5655 = vpop.permute.xlu0 %5654
          %5658 = vset.pattern.permute.xlu0 0
          %5659 = vperm.xlu0 %5658, %v5141
          %v5660 = vpop.permute.xlu0 %5659
          %5663 = vset.pattern.permute.xlu0 0
          %5664 = vperm.xlu0 %5663, %v5142
          %v5665 = vpop.permute.xlu0 %5664
          %5668 = vset.pattern.permute.xlu0 0
          %5669 = vperm.xlu0 %5668, %v5143
          %v5670 = vpop.permute.xlu0 %5669
          %5673 = vset.pattern.permute.xlu0 0
          %5674 = vperm.xlu0 %5673, %v5144
          %v5675 = vpop.permute.xlu0 %5674
          %5678 = vset.pattern.permute.xlu0 0
          %5679 = vperm.xlu0 %5678, %v5145
          %v5680 = vpop.permute.xlu0 %5679
          %5683 = vset.pattern.permute.xlu0 0
          %5684 = vperm.xlu0 %5683, %v5146
          %v5685 = vpop.permute.xlu0 %5684
          %5688 = vset.pattern.permute.xlu0 0
          %5689 = vperm.xlu0 %5688, %v5147
          %v5690 = vpop.permute.xlu0 %5689
          %5693 = vset.pattern.permute.xlu0 0
          %5694 = vperm.xlu0 %5693, %v5148
          %v5695 = vpop.permute.xlu0 %5694
          %5698 = vset.pattern.permute.xlu0 0
          %5699 = vperm.xlu0 %5698, %v5149
          %v5700 = vpop.permute.xlu0 %5699
          %5703 = vset.pattern.permute.xlu0 0
          %5704 = vperm.xlu0 %5703, %v5150
          %v5705 = vpop.permute.xlu0 %5704
          %5708 = vset.pattern.permute.xlu0 0
          %5709 = vperm.xlu0 %5708, %v5151
          %v5710 = vpop.permute.xlu0 %5709
          %5713 = vset.pattern.permute.xlu0 0
          %5714 = vperm.xlu0 %5713, %v5152
          %v5715 = vpop.permute.xlu0 %5714
          %5718 = vset.pattern.permute.xlu0 0
          %5719 = vperm.xlu0 %5718, %v5153
          %v5720 = vpop.permute.xlu0 %5719
          %5723 = vset.pattern.permute.xlu0 0
          %5724 = vperm.xlu0 %5723, %v5154
          %v5725 = vpop.permute.xlu0 %5724
          %5728 = vset.pattern.permute.xlu0 0
          %5729 = vperm.xlu0 %5728, %v5155
          %v5730 = vpop.permute.xlu0 %5729
          %5733 = vset.pattern.permute.xlu0 0
          %5734 = vperm.xlu0 %5733, %v5156
          %v5735 = vpop.permute.xlu0 %5734
          %5738 = vset.pattern.permute.xlu0 0
          %5739 = vperm.xlu0 %5738, %v5157
          %v5740 = vpop.permute.xlu0 %5739
          %5743 = vset.pattern.permute.xlu0 0
          %5744 = vperm.xlu0 %5743, %v5158
          %v5745 = vpop.permute.xlu0 %5744
          %5748 = vset.pattern.permute.xlu0 0
          %5749 = vperm.xlu0 %5748, %v5159
          %v5750 = vpop.permute.xlu0 %5749
          %5753 = vset.pattern.permute.xlu0 0
          %5754 = vperm.xlu0 %5753, %v5160
          %v5755 = vpop.permute.xlu0 %5754
          %5758 = vset.pattern.permute.xlu0 0
          %5759 = vperm.xlu0 %5758, %v5161
          %v5760 = vpop.permute.xlu0 %5759
          %5763 = vset.pattern.permute.xlu0 0
          %5764 = vperm.xlu0 %5763, %v5162
          %v5765 = vpop.permute.xlu0 %5764
          %5768 = vset.pattern.permute.xlu0 0
          %5769 = vperm.xlu0 %5768, %v5163
          %v5770 = vpop.permute.xlu0 %5769
          %5773 = vset.pattern.permute.xlu0 0
          %5774 = vperm.xlu0 %5773, %v5164
          %v5775 = vpop.permute.xlu0 %5774
          %5778 = vset.pattern.permute.xlu0 0
          %5779 = vperm.xlu0 %5778, %v5165
          %v5780 = vpop.permute.xlu0 %5779
          %5783 = vset.pattern.permute.xlu0 0
          %5784 = vperm.xlu0 %5783, %v5166
          %v5785 = vpop.permute.xlu0 %5784
          %5788 = vset.pattern.permute.xlu0 0
          %5789 = vperm.xlu0 %5788, %v5167
          %v5790 = vpop.permute.xlu0 %5789
          %5793 = vset.pattern.permute.xlu0 0
          %5794 = vperm.xlu0 %5793, %v5168
          %v5795 = vpop.permute.xlu0 %5794
          %5798 = vset.pattern.permute.xlu0 0
          %5799 = vperm.xlu0 %5798, %v5169
          %v5800 = vpop.permute.xlu0 %5799
          %5803 = vset.pattern.permute.xlu0 0
          %5804 = vperm.xlu0 %5803, %v5170
          %v5805 = vpop.permute.xlu0 %5804
          %5808 = vset.pattern.permute.xlu0 0
          %5809 = vperm.xlu0 %5808, %v5171
          %v5810 = vpop.permute.xlu0 %5809
          %v5812 = vpack.c.bf16 %v5180, %v5175
          %v5813 = vpack.c.bf16 %v5190, %v5185
          %v5814 = vpack.c.bf16 %v5200, %v5195
          %v5815 = vpack.c.bf16 %v5210, %v5205
          %v5816 = vpack.c.bf16 %v5220, %v5215
          %v5817 = vpack.c.bf16 %v5230, %v5225
          %v5818 = vpack.c.bf16 %v5240, %v5235
          %v5819 = vpack.c.bf16 %v5250, %v5245
          %v5820 = vpack.c.bf16 %v5260, %v5255
          %v5821 = vpack.c.bf16 %v5270, %v5265
          %v5822 = vpack.c.bf16 %v5280, %v5275
          %v5823 = vpack.c.bf16 %v5290, %v5285
          %v5824 = vpack.c.bf16 %v5300, %v5295
          %v5825 = vpack.c.bf16 %v5310, %v5305
          %v5826 = vpack.c.bf16 %v5320, %v5315
          %v5827 = vpack.c.bf16 %v5330, %v5325
          %v5828 = vpack.c.bf16 %v5340, %v5335
          %v5829 = vpack.c.bf16 %v5350, %v5345
          %v5830 = vpack.c.bf16 %v5360, %v5355
          %v5831 = vpack.c.bf16 %v5370, %v5365
          %v5832 = vpack.c.bf16 %v5380, %v5375
          %v5833 = vpack.c.bf16 %v5390, %v5385
          %v5834 = vpack.c.bf16 %v5400, %v5395
          %v5835 = vpack.c.bf16 %v5410, %v5405
          %v5836 = vpack.c.bf16 %v5420, %v5415
          %v5837 = vpack.c.bf16 %v5430, %v5425
          %v5838 = vpack.c.bf16 %v5440, %v5435
          %v5839 = vpack.c.bf16 %v5450, %v5445
          %v5840 = vpack.c.bf16 %v5460, %v5455
          %v5841 = vpack.c.bf16 %v5470, %v5465
          %v5842 = vpack.c.bf16 %v5480, %v5475
          %v5843 = vpack.c.bf16 %v5490, %v5485
          %v5844 = vpack.c.bf16 %v5500, %v5495
          %v5845 = vpack.c.bf16 %v5510, %v5505
          %v5846 = vpack.c.bf16 %v5520, %v5515
          %v5847 = vpack.c.bf16 %v5530, %v5525
          %v5848 = vpack.c.bf16 %v5540, %v5535
          %v5849 = vpack.c.bf16 %v5550, %v5545
          %v5850 = vpack.c.bf16 %v5560, %v5555
          %v5851 = vpack.c.bf16 %v5570, %v5565
          %v5852 = vpack.c.bf16 %v5580, %v5575
          %v5853 = vpack.c.bf16 %v5590, %v5585
          %v5854 = vpack.c.bf16 %v5600, %v5595
          %v5855 = vpack.c.bf16 %v5610, %v5605
          %v5856 = vpack.c.bf16 %v5620, %v5615
          %v5857 = vpack.c.bf16 %v5630, %v5625
          %v5858 = vpack.c.bf16 %v5640, %v5635
          %v5859 = vpack.c.bf16 %v5650, %v5645
          %v5860 = vpack.c.bf16 %v5660, %v5655
          %v5861 = vpack.c.bf16 %v5670, %v5665
          %v5862 = vpack.c.bf16 %v5680, %v5675
          %v5863 = vpack.c.bf16 %v5690, %v5685
          %v5864 = vpack.c.bf16 %v5700, %v5695
          %v5865 = vpack.c.bf16 %v5710, %v5705
          %v5866 = vpack.c.bf16 %v5720, %v5715
          %v5867 = vpack.c.bf16 %v5730, %v5725
          %v5868 = vpack.c.bf16 %v5740, %v5735
          %v5869 = vpack.c.bf16 %v5750, %v5745
          %v5870 = vpack.c.bf16 %v5760, %v5755
          %v5871 = vpack.c.bf16 %v5770, %v5765
          %v5872 = vpack.c.bf16 %v5780, %v5775
          %v5873 = vpack.c.bf16 %v5790, %v5785
          %v5874 = vpack.c.bf16 %v5800, %v5795
          %v5875 = vpack.c.bf16 %v5810, %v5805
          %v5876 = vld [vmem:[%s7] sm:$0xff]
          %v5877 = vld [vmem:[%s7 + $0x8] sm:$0xff]
          %v5878 = vld [vmem:[%s7 + $0x10] sm:$0xff]
          %v5879 = vld [vmem:[%s7 + $0x18] sm:$0xff]
          %v5880 = vld [vmem:[%s7 + $0x20] sm:$0xff]
          %v5881 = vld [vmem:[%s7 + $0x28] sm:$0xff]
          %v5882 = vld [vmem:[%s7 + $0x30] sm:$0xff]
          %v5883 = vld [vmem:[%s7 + $0x38] sm:$0xff]
          %v5884 = vld [vmem:[%s7 + $0x40] sm:$0xff]
          %v5885 = vld [vmem:[%s7 + $0x48] sm:$0xff]
          %v5886 = vld [vmem:[%s7 + $0x50] sm:$0xff]
          %v5887 = vld [vmem:[%s7 + $0x58] sm:$0xff]
          %v5888 = vld [vmem:[%s7 + $0x60] sm:$0xff]
          %v5889 = vld [vmem:[%s7 + $0x68] sm:$0xff]
          %v5890 = vld [vmem:[%s7 + $0x70] sm:$0xff]
          %v5891 = vld [vmem:[%s7 + $0x78] sm:$0xff]
          %v5892 = vld [vmem:[%s7 + $0x80] sm:$0xff]
          %v5893 = vld [vmem:[%s7 + $0x88] sm:$0xff]
          %v5894 = vld [vmem:[%s7 + $0x90] sm:$0xff]
          %v5895 = vld [vmem:[%s7 + $0x98] sm:$0xff]
          %v5896 = vld [vmem:[%s7 + $0xa0] sm:$0xff]
          %v5897 = vld [vmem:[%s7 + $0xa8] sm:$0xff]
          %v5898 = vld [vmem:[%s7 + $0xb0] sm:$0xff]
          %v5899 = vld [vmem:[%s7 + $0xb8] sm:$0xff]
          %v5900 = vld [vmem:[%s7 + $0xc0] sm:$0xff]
          %v5901 = vld [vmem:[%s7 + $0xc8] sm:$0xff]
          %v5902 = vld [vmem:[%s7 + $0xd0] sm:$0xff]
          %v5903 = vld [vmem:[%s7 + $0xd8] sm:$0xff]
          %v5904 = vld [vmem:[%s7 + $0xe0] sm:$0xff]
          %v5905 = vld [vmem:[%s7 + $0xe8] sm:$0xff]
          %v5906 = vld [vmem:[%s7 + $0xf0] sm:$0xff]
          %v5907 = vld [vmem:[%s7 + $0xf8] sm:$0xff]
          %v5908 = vld [vmem:[%s7 + $0x100] sm:$0xff]
          %v5909 = vld [vmem:[%s7 + $0x108] sm:$0xff]
          %v5910 = vld [vmem:[%s7 + $0x110] sm:$0xff]
          %v5911 = vld [vmem:[%s7 + $0x118] sm:$0xff]
          %v5912 = vld [vmem:[%s7 + $0x120] sm:$0xff]
          %v5913 = vld [vmem:[%s7 + $0x128] sm:$0xff]
          %v5914 = vld [vmem:[%s7 + $0x130] sm:$0xff]
          %v5915 = vld [vmem:[%s7 + $0x138] sm:$0xff]
          %v5916 = vld [vmem:[%s7 + $0x140] sm:$0xff]
          %v5917 = vld [vmem:[%s7 + $0x148] sm:$0xff]
          %v5918 = vld [vmem:[%s7 + $0x150] sm:$0xff]
          %v5919 = vld [vmem:[%s7 + $0x158] sm:$0xff]
          %v5920 = vld [vmem:[%s7 + $0x160] sm:$0xff]
          %v5921 = vld [vmem:[%s7 + $0x168] sm:$0xff]
          %v5922 = vld [vmem:[%s7 + $0x170] sm:$0xff]
          %v5923 = vld [vmem:[%s7 + $0x178] sm:$0xff]
          %v5924 = vld [vmem:[%s7 + $0x180] sm:$0xff]
          %v5925 = vld [vmem:[%s7 + $0x188] sm:$0xff]
          %v5926 = vld [vmem:[%s7 + $0x190] sm:$0xff]
          %v5927 = vld [vmem:[%s7 + $0x198] sm:$0xff]
          %v5928 = vld [vmem:[%s7 + $0x1a0] sm:$0xff]
          %v5929 = vld [vmem:[%s7 + $0x1a8] sm:$0xff]
          %v5930 = vld [vmem:[%s7 + $0x1b0] sm:$0xff]
          %v5931 = vld [vmem:[%s7 + $0x1b8] sm:$0xff]
          %v5932 = vld [vmem:[%s7 + $0x1c0] sm:$0xff]
          %v5933 = vld [vmem:[%s7 + $0x1c8] sm:$0xff]
          %v5934 = vld [vmem:[%s7 + $0x1d0] sm:$0xff]
          %v5935 = vld [vmem:[%s7 + $0x1d8] sm:$0xff]
          %v5936 = vld [vmem:[%s7 + $0x1e0] sm:$0xff]
          %v5937 = vld [vmem:[%s7 + $0x1e8] sm:$0xff]
          %v5938 = vld [vmem:[%s7 + $0x1f0] sm:$0xff]
          %v5939 = vld [vmem:[%s7 + $0x1f8] sm:$0xff]
          %v5940 = vld [vmem:[%s7 + $0x200] sm:$0xff]
          %v5941 = vld [vmem:[%s7 + $0x208] sm:$0xff]
          %v5942 = vld [vmem:[%s7 + $0x210] sm:$0xff]
          %v5943 = vld [vmem:[%s7 + $0x218] sm:$0xff]
          %v5944 = vld [vmem:[%s7 + $0x220] sm:$0xff]
          %v5945 = vld [vmem:[%s7 + $0x228] sm:$0xff]
          %v5946 = vld [vmem:[%s7 + $0x230] sm:$0xff]
          %v5947 = vld [vmem:[%s7 + $0x238] sm:$0xff]
          %v5948 = vld [vmem:[%s7 + $0x240] sm:$0xff]
          %v5949 = vld [vmem:[%s7 + $0x248] sm:$0xff]
          %v5950 = vld [vmem:[%s7 + $0x250] sm:$0xff]
          %v5951 = vld [vmem:[%s7 + $0x258] sm:$0xff]
          %v5952 = vld [vmem:[%s7 + $0x260] sm:$0xff]
          %v5953 = vld [vmem:[%s7 + $0x268] sm:$0xff]
          %v5954 = vld [vmem:[%s7 + $0x270] sm:$0xff]
          %v5955 = vld [vmem:[%s7 + $0x278] sm:$0xff]
          %v5956 = vld [vmem:[%s7 + $0x280] sm:$0xff]
          %v5957 = vld [vmem:[%s7 + $0x288] sm:$0xff]
          %v5958 = vld [vmem:[%s7 + $0x290] sm:$0xff]
          %v5959 = vld [vmem:[%s7 + $0x298] sm:$0xff]
          %v5960 = vld [vmem:[%s7 + $0x2a0] sm:$0xff]
          %v5961 = vld [vmem:[%s7 + $0x2a8] sm:$0xff]
          %v5962 = vld [vmem:[%s7 + $0x2b0] sm:$0xff]
          %v5963 = vld [vmem:[%s7 + $0x2b8] sm:$0xff]
          %v5964 = vld [vmem:[%s7 + $0x2c0] sm:$0xff]
          %v5965 = vld [vmem:[%s7 + $0x2c8] sm:$0xff]
          %v5966 = vld [vmem:[%s7 + $0x2d0] sm:$0xff]
          %v5967 = vld [vmem:[%s7 + $0x2d8] sm:$0xff]
          %v5968 = vld [vmem:[%s7 + $0x2e0] sm:$0xff]
          %v5969 = vld [vmem:[%s7 + $0x2e8] sm:$0xff]
          %v5970 = vld [vmem:[%s7 + $0x2f0] sm:$0xff]
          %v5971 = vld [vmem:[%s7 + $0x2f8] sm:$0xff]
          %v5972 = vld [vmem:[%s7 + $0x300] sm:$0xff]
          %v5973 = vld [vmem:[%s7 + $0x308] sm:$0xff]
          %v5974 = vld [vmem:[%s7 + $0x310] sm:$0xff]
          %v5975 = vld [vmem:[%s7 + $0x318] sm:$0xff]
          %v5976 = vld [vmem:[%s7 + $0x320] sm:$0xff]
          %v5977 = vld [vmem:[%s7 + $0x328] sm:$0xff]
          %v5978 = vld [vmem:[%s7 + $0x330] sm:$0xff]
          %v5979 = vld [vmem:[%s7 + $0x338] sm:$0xff]
          %v5980 = vld [vmem:[%s7 + $0x340] sm:$0xff]
          %v5981 = vld [vmem:[%s7 + $0x348] sm:$0xff]
          %v5982 = vld [vmem:[%s7 + $0x350] sm:$0xff]
          %v5983 = vld [vmem:[%s7 + $0x358] sm:$0xff]
          %v5984 = vld [vmem:[%s7 + $0x360] sm:$0xff]
          %v5985 = vld [vmem:[%s7 + $0x368] sm:$0xff]
          %v5986 = vld [vmem:[%s7 + $0x370] sm:$0xff]
          %v5987 = vld [vmem:[%s7 + $0x378] sm:$0xff]
          %v5988 = vld [vmem:[%s7 + $0x380] sm:$0xff]
          %v5989 = vld [vmem:[%s7 + $0x388] sm:$0xff]
          %v5990 = vld [vmem:[%s7 + $0x390] sm:$0xff]
          %v5991 = vld [vmem:[%s7 + $0x398] sm:$0xff]
          %v5992 = vld [vmem:[%s7 + $0x3a0] sm:$0xff]
          %v5993 = vld [vmem:[%s7 + $0x3a8] sm:$0xff]
          %v5994 = vld [vmem:[%s7 + $0x3b0] sm:$0xff]
          %v5995 = vld [vmem:[%s7 + $0x3b8] sm:$0xff]
          %v5996 = vld [vmem:[%s7 + $0x3c0] sm:$0xff]
          %v5997 = vld [vmem:[%s7 + $0x3c8] sm:$0xff]
          %v5998 = vld [vmem:[%s7 + $0x3d0] sm:$0xff]
          %v5999 = vld [vmem:[%s7 + $0x3d8] sm:$0xff]
          %v6000 = vld [vmem:[%s7 + $0x3e0] sm:$0xff]
          %v6001 = vld [vmem:[%s7 + $0x3e8] sm:$0xff]
          %v6002 = vld [vmem:[%s7 + $0x3f0] sm:$0xff]
          %v6003 = vld [vmem:[%s7 + $0x3f8] sm:$0xff]
          %v6004 = vld [vmem:[%s7 + $0x400] sm:$0xff]
          %v6005 = vld [vmem:[%s7 + $0x408] sm:$0xff]
          %v6006 = vld [vmem:[%s7 + $0x410] sm:$0xff]
          %v6007 = vld [vmem:[%s7 + $0x418] sm:$0xff]
          %v6008 = vld [vmem:[%s7 + $0x420] sm:$0xff]
          %v6009 = vld [vmem:[%s7 + $0x428] sm:$0xff]
          %v6010 = vld [vmem:[%s7 + $0x430] sm:$0xff]
          %v6011 = vld [vmem:[%s7 + $0x438] sm:$0xff]
          %v6012 = vld [vmem:[%s7 + $0x440] sm:$0xff]
          %v6013 = vld [vmem:[%s7 + $0x448] sm:$0xff]
          %v6014 = vld [vmem:[%s7 + $0x450] sm:$0xff]
          %v6015 = vld [vmem:[%s7 + $0x458] sm:$0xff]
          %v6016 = vld [vmem:[%s7 + $0x460] sm:$0xff]
          %v6017 = vld [vmem:[%s7 + $0x468] sm:$0xff]
          %v6018 = vld [vmem:[%s7 + $0x470] sm:$0xff]
          %v6019 = vld [vmem:[%s7 + $0x478] sm:$0xff]
          %v6020 = vld [vmem:[%s7 + $0x480] sm:$0xff]
          %v6021 = vld [vmem:[%s7 + $0x488] sm:$0xff]
          %v6022 = vld [vmem:[%s7 + $0x490] sm:$0xff]
          %v6023 = vld [vmem:[%s7 + $0x498] sm:$0xff]
          %v6024 = vld [vmem:[%s7 + $0x4a0] sm:$0xff]
          %v6025 = vld [vmem:[%s7 + $0x4a8] sm:$0xff]
          %v6026 = vld [vmem:[%s7 + $0x4b0] sm:$0xff]
          %v6027 = vld [vmem:[%s7 + $0x4b8] sm:$0xff]
          %v6028 = vld [vmem:[%s7 + $0x4c0] sm:$0xff]
          %v6029 = vld [vmem:[%s7 + $0x4c8] sm:$0xff]
          %v6030 = vld [vmem:[%s7 + $0x4d0] sm:$0xff]
          %v6031 = vld [vmem:[%s7 + $0x4d8] sm:$0xff]
          %v6032 = vld [vmem:[%s7 + $0x4e0] sm:$0xff]
          %v6033 = vld [vmem:[%s7 + $0x4e8] sm:$0xff]
          %v6034 = vld [vmem:[%s7 + $0x4f0] sm:$0xff]
          %v6035 = vld [vmem:[%s7 + $0x4f8] sm:$0xff]
          %v6036 = vld [vmem:[%s7 + $0x500] sm:$0xff]
          %v6037 = vld [vmem:[%s7 + $0x508] sm:$0xff]
          %v6038 = vld [vmem:[%s7 + $0x510] sm:$0xff]
          %v6039 = vld [vmem:[%s7 + $0x518] sm:$0xff]
          %v6040 = vld [vmem:[%s7 + $0x520] sm:$0xff]
          %v6041 = vld [vmem:[%s7 + $0x528] sm:$0xff]
          %v6042 = vld [vmem:[%s7 + $0x530] sm:$0xff]
          %v6043 = vld [vmem:[%s7 + $0x538] sm:$0xff]
          %v6044 = vld [vmem:[%s7 + $0x540] sm:$0xff]
          %v6045 = vld [vmem:[%s7 + $0x548] sm:$0xff]
          %v6046 = vld [vmem:[%s7 + $0x550] sm:$0xff]
          %v6047 = vld [vmem:[%s7 + $0x558] sm:$0xff]
          %v6048 = vld [vmem:[%s7 + $0x560] sm:$0xff]
          %v6049 = vld [vmem:[%s7 + $0x568] sm:$0xff]
          %v6050 = vld [vmem:[%s7 + $0x570] sm:$0xff]
          %v6051 = vld [vmem:[%s7 + $0x578] sm:$0xff]
          %v6052 = vld [vmem:[%s7 + $0x580] sm:$0xff]
          %v6053 = vld [vmem:[%s7 + $0x588] sm:$0xff]
          %v6054 = vld [vmem:[%s7 + $0x590] sm:$0xff]
          %v6055 = vld [vmem:[%s7 + $0x598] sm:$0xff]
          %v6056 = vld [vmem:[%s7 + $0x5a0] sm:$0xff]
          %v6057 = vld [vmem:[%s7 + $0x5a8] sm:$0xff]
          %v6058 = vld [vmem:[%s7 + $0x5b0] sm:$0xff]
          %v6059 = vld [vmem:[%s7 + $0x5b8] sm:$0xff]
          %v6060 = vld [vmem:[%s7 + $0x5c0] sm:$0xff]
          %v6061 = vld [vmem:[%s7 + $0x5c8] sm:$0xff]
          %v6062 = vld [vmem:[%s7 + $0x5d0] sm:$0xff]
          %v6063 = vld [vmem:[%s7 + $0x5d8] sm:$0xff]
          %v6064 = vld [vmem:[%s7 + $0x5e0] sm:$0xff]
          %v6065 = vld [vmem:[%s7 + $0x5e8] sm:$0xff]
          %v6066 = vld [vmem:[%s7 + $0x5f0] sm:$0xff]
          %v6067 = vld [vmem:[%s7 + $0x5f8] sm:$0xff]
          %v6068 = vld [vmem:[%s7 + $0x600] sm:$0xff]
          %v6069 = vld [vmem:[%s7 + $0x608] sm:$0xff]
          %v6070 = vld [vmem:[%s7 + $0x610] sm:$0xff]
          %v6071 = vld [vmem:[%s7 + $0x618] sm:$0xff]
          %v6072 = vld [vmem:[%s7 + $0x620] sm:$0xff]
          %v6073 = vld [vmem:[%s7 + $0x628] sm:$0xff]
          %v6074 = vld [vmem:[%s7 + $0x630] sm:$0xff]
          %v6075 = vld [vmem:[%s7 + $0x638] sm:$0xff]
          %v6076 = vld [vmem:[%s7 + $0x640] sm:$0xff]
          %v6077 = vld [vmem:[%s7 + $0x648] sm:$0xff]
          %v6078 = vld [vmem:[%s7 + $0x650] sm:$0xff]
          %v6079 = vld [vmem:[%s7 + $0x658] sm:$0xff]
          %v6080 = vld [vmem:[%s7 + $0x660] sm:$0xff]
          %v6081 = vld [vmem:[%s7 + $0x668] sm:$0xff]
          %v6082 = vld [vmem:[%s7 + $0x670] sm:$0xff]
          %v6083 = vld [vmem:[%s7 + $0x678] sm:$0xff]
          %v6084 = vld [vmem:[%s7 + $0x680] sm:$0xff]
          %v6085 = vld [vmem:[%s7 + $0x688] sm:$0xff]
          %v6086 = vld [vmem:[%s7 + $0x690] sm:$0xff]
          %v6087 = vld [vmem:[%s7 + $0x698] sm:$0xff]
          %v6088 = vld [vmem:[%s7 + $0x6a0] sm:$0xff]
          %v6089 = vld [vmem:[%s7 + $0x6a8] sm:$0xff]
          %v6090 = vld [vmem:[%s7 + $0x6b0] sm:$0xff]
          %v6091 = vld [vmem:[%s7 + $0x6b8] sm:$0xff]
          %v6092 = vld [vmem:[%s7 + $0x6c0] sm:$0xff]
          %v6093 = vld [vmem:[%s7 + $0x6c8] sm:$0xff]
          %v6094 = vld [vmem:[%s7 + $0x6d0] sm:$0xff]
          %v6095 = vld [vmem:[%s7 + $0x6d8] sm:$0xff]
          %v6096 = vld [vmem:[%s7 + $0x6e0] sm:$0xff]
          %v6097 = vld [vmem:[%s7 + $0x6e8] sm:$0xff]
          %v6098 = vld [vmem:[%s7 + $0x6f0] sm:$0xff]
          %v6099 = vld [vmem:[%s7 + $0x6f8] sm:$0xff]
          %v6100 = vld [vmem:[%s7 + $0x700] sm:$0xff]
          %v6101 = vld [vmem:[%s7 + $0x708] sm:$0xff]
          %v6102 = vld [vmem:[%s7 + $0x710] sm:$0xff]
          %v6103 = vld [vmem:[%s7 + $0x718] sm:$0xff]
          %v6104 = vld [vmem:[%s7 + $0x720] sm:$0xff]
          %v6105 = vld [vmem:[%s7 + $0x728] sm:$0xff]
          %v6106 = vld [vmem:[%s7 + $0x730] sm:$0xff]
          %v6107 = vld [vmem:[%s7 + $0x738] sm:$0xff]
          %v6108 = vld [vmem:[%s7 + $0x740] sm:$0xff]
          %v6109 = vld [vmem:[%s7 + $0x748] sm:$0xff]
          %v6110 = vld [vmem:[%s7 + $0x750] sm:$0xff]
          %v6111 = vld [vmem:[%s7 + $0x758] sm:$0xff]
          %v6112 = vld [vmem:[%s7 + $0x760] sm:$0xff]
          %v6113 = vld [vmem:[%s7 + $0x768] sm:$0xff]
          %v6114 = vld [vmem:[%s7 + $0x770] sm:$0xff]
          %v6115 = vld [vmem:[%s7 + $0x778] sm:$0xff]
          %v6116 = vld [vmem:[%s7 + $0x780] sm:$0xff]
          %v6117 = vld [vmem:[%s7 + $0x788] sm:$0xff]
          %v6118 = vld [vmem:[%s7 + $0x790] sm:$0xff]
          %v6119 = vld [vmem:[%s7 + $0x798] sm:$0xff]
          %v6120 = vld [vmem:[%s7 + $0x7a0] sm:$0xff]
          %v6121 = vld [vmem:[%s7 + $0x7a8] sm:$0xff]
          %v6122 = vld [vmem:[%s7 + $0x7b0] sm:$0xff]
          %v6123 = vld [vmem:[%s7 + $0x7b8] sm:$0xff]
          %v6124 = vld [vmem:[%s7 + $0x7c0] sm:$0xff]
          %v6125 = vld [vmem:[%s7 + $0x7c8] sm:$0xff]
          %v6126 = vld [vmem:[%s7 + $0x7d0] sm:$0xff]
          %v6127 = vld [vmem:[%s7 + $0x7d8] sm:$0xff]
          %v6128 = vld [vmem:[%s7 + $0x7e0] sm:$0xff]
          %v6129 = vld [vmem:[%s7 + $0x7e8] sm:$0xff]
          %v6130 = vld [vmem:[%s7 + $0x7f0] sm:$0xff]
          %v6131 = vld [vmem:[%s7 + $0x7f8] sm:$0xff]
          %v6132 = vld [vmem:[%s8] sm:$0xff]
          %v6133 = vld [vmem:[%s8 + $0x8] sm:$0xff]
          %v6134 = vld [vmem:[%s8 + $0x10] sm:$0xff]
          %v6135 = vld [vmem:[%s8 + $0x18] sm:$0xff]
          %v6136 = vld [vmem:[%s8 + $0x20] sm:$0xff]
          %v6137 = vld [vmem:[%s8 + $0x28] sm:$0xff]
          %v6138 = vld [vmem:[%s8 + $0x30] sm:$0xff]
          %v6139 = vld [vmem:[%s8 + $0x38] sm:$0xff]
          %v6140 = vld [vmem:[%s8 + $0x40] sm:$0xff]
          %v6141 = vld [vmem:[%s8 + $0x48] sm:$0xff]
          %v6142 = vld [vmem:[%s8 + $0x50] sm:$0xff]
          %v6143 = vld [vmem:[%s8 + $0x58] sm:$0xff]
          %v6144 = vld [vmem:[%s8 + $0x60] sm:$0xff]
          %v6145 = vld [vmem:[%s8 + $0x68] sm:$0xff]
          %v6146 = vld [vmem:[%s8 + $0x70] sm:$0xff]
          %v6147 = vld [vmem:[%s8 + $0x78] sm:$0xff]
          %v6148 = vld [vmem:[%s8 + $0x80] sm:$0xff]
          %v6149 = vld [vmem:[%s8 + $0x88] sm:$0xff]
          %v6150 = vld [vmem:[%s8 + $0x90] sm:$0xff]
          %v6151 = vld [vmem:[%s8 + $0x98] sm:$0xff]
          %v6152 = vld [vmem:[%s8 + $0xa0] sm:$0xff]
          %v6153 = vld [vmem:[%s8 + $0xa8] sm:$0xff]
          %v6154 = vld [vmem:[%s8 + $0xb0] sm:$0xff]
          %v6155 = vld [vmem:[%s8 + $0xb8] sm:$0xff]
          %v6156 = vld [vmem:[%s8 + $0xc0] sm:$0xff]
          %v6157 = vld [vmem:[%s8 + $0xc8] sm:$0xff]
          %v6158 = vld [vmem:[%s8 + $0xd0] sm:$0xff]
          %v6159 = vld [vmem:[%s8 + $0xd8] sm:$0xff]
          %v6160 = vld [vmem:[%s8 + $0xe0] sm:$0xff]
          %v6161 = vld [vmem:[%s8 + $0xe8] sm:$0xff]
          %v6162 = vld [vmem:[%s8 + $0xf0] sm:$0xff]
          %v6163 = vld [vmem:[%s8 + $0xf8] sm:$0xff]
          %v6164 = vld [vmem:[%s8 + $0x100] sm:$0xff]
          %v6165 = vld [vmem:[%s8 + $0x108] sm:$0xff]
          %v6166 = vld [vmem:[%s8 + $0x110] sm:$0xff]
          %v6167 = vld [vmem:[%s8 + $0x118] sm:$0xff]
          %v6168 = vld [vmem:[%s8 + $0x120] sm:$0xff]
          %v6169 = vld [vmem:[%s8 + $0x128] sm:$0xff]
          %v6170 = vld [vmem:[%s8 + $0x130] sm:$0xff]
          %v6171 = vld [vmem:[%s8 + $0x138] sm:$0xff]
          %v6172 = vld [vmem:[%s8 + $0x140] sm:$0xff]
          %v6173 = vld [vmem:[%s8 + $0x148] sm:$0xff]
          %v6174 = vld [vmem:[%s8 + $0x150] sm:$0xff]
          %v6175 = vld [vmem:[%s8 + $0x158] sm:$0xff]
          %v6176 = vld [vmem:[%s8 + $0x160] sm:$0xff]
          %v6177 = vld [vmem:[%s8 + $0x168] sm:$0xff]
          %v6178 = vld [vmem:[%s8 + $0x170] sm:$0xff]
          %v6179 = vld [vmem:[%s8 + $0x178] sm:$0xff]
          %v6180 = vld [vmem:[%s8 + $0x180] sm:$0xff]
          %v6181 = vld [vmem:[%s8 + $0x188] sm:$0xff]
          %v6182 = vld [vmem:[%s8 + $0x190] sm:$0xff]
          %v6183 = vld [vmem:[%s8 + $0x198] sm:$0xff]
          %v6184 = vld [vmem:[%s8 + $0x1a0] sm:$0xff]
          %v6185 = vld [vmem:[%s8 + $0x1a8] sm:$0xff]
          %v6186 = vld [vmem:[%s8 + $0x1b0] sm:$0xff]
          %v6187 = vld [vmem:[%s8 + $0x1b8] sm:$0xff]
          %v6188 = vld [vmem:[%s8 + $0x1c0] sm:$0xff]
          %v6189 = vld [vmem:[%s8 + $0x1c8] sm:$0xff]
          %v6190 = vld [vmem:[%s8 + $0x1d0] sm:$0xff]
          %v6191 = vld [vmem:[%s8 + $0x1d8] sm:$0xff]
          %v6192 = vld [vmem:[%s8 + $0x1e0] sm:$0xff]
          %v6193 = vld [vmem:[%s8 + $0x1e8] sm:$0xff]
          %v6194 = vld [vmem:[%s8 + $0x1f0] sm:$0xff]
          %v6195 = vld [vmem:[%s8 + $0x1f8] sm:$0xff]
          %6197 = vset.pattern.permute.xlu0 0
          %6198 = vperm.xlu0 %6197, %v6132
          %v6199 = vpop.permute.xlu0 %6198
          %6202 = vset.pattern.permute.xlu0 0
          %6203 = vperm.xlu0 %6202, %v6133
          %v6204 = vpop.permute.xlu0 %6203
          %6207 = vset.pattern.permute.xlu0 0
          %6208 = vperm.xlu0 %6207, %v6134
          %v6209 = vpop.permute.xlu0 %6208
          %6212 = vset.pattern.permute.xlu0 0
          %6213 = vperm.xlu0 %6212, %v6135
          %v6214 = vpop.permute.xlu0 %6213
          %6217 = vset.pattern.permute.xlu0 0
          %6218 = vperm.xlu0 %6217, %v6136
          %v6219 = vpop.permute.xlu0 %6218
          %6222 = vset.pattern.permute.xlu0 0
          %6223 = vperm.xlu0 %6222, %v6137
          %v6224 = vpop.permute.xlu0 %6223
          %6227 = vset.pattern.permute.xlu0 0
          %6228 = vperm.xlu0 %6227, %v6138
          %v6229 = vpop.permute.xlu0 %6228
          %6232 = vset.pattern.permute.xlu0 0
          %6233 = vperm.xlu0 %6232, %v6139
          %v6234 = vpop.permute.xlu0 %6233
          %6237 = vset.pattern.permute.xlu0 0
          %6238 = vperm.xlu0 %6237, %v6140
          %v6239 = vpop.permute.xlu0 %6238
          %6242 = vset.pattern.permute.xlu0 0
          %6243 = vperm.xlu0 %6242, %v6141
          %v6244 = vpop.permute.xlu0 %6243
          %6247 = vset.pattern.permute.xlu0 0
          %6248 = vperm.xlu0 %6247, %v6142
          %v6249 = vpop.permute.xlu0 %6248
          %6252 = vset.pattern.permute.xlu0 0
          %6253 = vperm.xlu0 %6252, %v6143
          %v6254 = vpop.permute.xlu0 %6253
          %6257 = vset.pattern.permute.xlu0 0
          %6258 = vperm.xlu0 %6257, %v6144
          %v6259 = vpop.permute.xlu0 %6258
          %6262 = vset.pattern.permute.xlu0 0
          %6263 = vperm.xlu0 %6262, %v6145
          %v6264 = vpop.permute.xlu0 %6263
          %6267 = vset.pattern.permute.xlu0 0
          %6268 = vperm.xlu0 %6267, %v6146
          %v6269 = vpop.permute.xlu0 %6268
          %6272 = vset.pattern.permute.xlu0 0
          %6273 = vperm.xlu0 %6272, %v6147
          %v6274 = vpop.permute.xlu0 %6273
          %6277 = vset.pattern.permute.xlu0 0
          %6278 = vperm.xlu0 %6277, %v6148
          %v6279 = vpop.permute.xlu0 %6278
          %6282 = vset.pattern.permute.xlu0 0
          %6283 = vperm.xlu0 %6282, %v6149
          %v6284 = vpop.permute.xlu0 %6283
          %6287 = vset.pattern.permute.xlu0 0
          %6288 = vperm.xlu0 %6287, %v6150
          %v6289 = vpop.permute.xlu0 %6288
          %6292 = vset.pattern.permute.xlu0 0
          %6293 = vperm.xlu0 %6292, %v6151
          %v6294 = vpop.permute.xlu0 %6293
          %6297 = vset.pattern.permute.xlu0 0
          %6298 = vperm.xlu0 %6297, %v6152
          %v6299 = vpop.permute.xlu0 %6298
          %6302 = vset.pattern.permute.xlu0 0
          %6303 = vperm.xlu0 %6302, %v6153
          %v6304 = vpop.permute.xlu0 %6303
          %6307 = vset.pattern.permute.xlu0 0
          %6308 = vperm.xlu0 %6307, %v6154
          %v6309 = vpop.permute.xlu0 %6308
          %6312 = vset.pattern.permute.xlu0 0
          %6313 = vperm.xlu0 %6312, %v6155
          %v6314 = vpop.permute.xlu0 %6313
          %6317 = vset.pattern.permute.xlu0 0
          %6318 = vperm.xlu0 %6317, %v6156
          %v6319 = vpop.permute.xlu0 %6318
          %6322 = vset.pattern.permute.xlu0 0
          %6323 = vperm.xlu0 %6322, %v6157
          %v6324 = vpop.permute.xlu0 %6323
          %6327 = vset.pattern.permute.xlu0 0
          %6328 = vperm.xlu0 %6327, %v6158
          %v6329 = vpop.permute.xlu0 %6328
          %6332 = vset.pattern.permute.xlu0 0
          %6333 = vperm.xlu0 %6332, %v6159
          %v6334 = vpop.permute.xlu0 %6333
          %6337 = vset.pattern.permute.xlu0 0
          %6338 = vperm.xlu0 %6337, %v6160
          %v6339 = vpop.permute.xlu0 %6338
          %6342 = vset.pattern.permute.xlu0 0
          %6343 = vperm.xlu0 %6342, %v6161
          %v6344 = vpop.permute.xlu0 %6343
          %6347 = vset.pattern.permute.xlu0 0
          %6348 = vperm.xlu0 %6347, %v6162
          %v6349 = vpop.permute.xlu0 %6348
          %6352 = vset.pattern.permute.xlu0 0
          %6353 = vperm.xlu0 %6352, %v6163
          %v6354 = vpop.permute.xlu0 %6353
          %6357 = vset.pattern.permute.xlu0 0
          %6358 = vperm.xlu0 %6357, %v6164
          %v6359 = vpop.permute.xlu0 %6358
          %6362 = vset.pattern.permute.xlu0 0
          %6363 = vperm.xlu0 %6362, %v6165
          %v6364 = vpop.permute.xlu0 %6363
          %6367 = vset.pattern.permute.xlu0 0
          %6368 = vperm.xlu0 %6367, %v6166
          %v6369 = vpop.permute.xlu0 %6368
          %6372 = vset.pattern.permute.xlu0 0
          %6373 = vperm.xlu0 %6372, %v6167
          %v6374 = vpop.permute.xlu0 %6373
          %6377 = vset.pattern.permute.xlu0 0
          %6378 = vperm.xlu0 %6377, %v6168
          %v6379 = vpop.permute.xlu0 %6378
          %6382 = vset.pattern.permute.xlu0 0
          %6383 = vperm.xlu0 %6382, %v6169
          %v6384 = vpop.permute.xlu0 %6383
          %6387 = vset.pattern.permute.xlu0 0
          %6388 = vperm.xlu0 %6387, %v6170
          %v6389 = vpop.permute.xlu0 %6388
          %6392 = vset.pattern.permute.xlu0 0
          %6393 = vperm.xlu0 %6392, %v6171
          %v6394 = vpop.permute.xlu0 %6393
          %6397 = vset.pattern.permute.xlu0 0
          %6398 = vperm.xlu0 %6397, %v6172
          %v6399 = vpop.permute.xlu0 %6398
          %6402 = vset.pattern.permute.xlu0 0
          %6403 = vperm.xlu0 %6402, %v6173
          %v6404 = vpop.permute.xlu0 %6403
          %6407 = vset.pattern.permute.xlu0 0
          %6408 = vperm.xlu0 %6407, %v6174
          %v6409 = vpop.permute.xlu0 %6408
          %6412 = vset.pattern.permute.xlu0 0
          %6413 = vperm.xlu0 %6412, %v6175
          %v6414 = vpop.permute.xlu0 %6413
          %6417 = vset.pattern.permute.xlu0 0
          %6418 = vperm.xlu0 %6417, %v6176
          %v6419 = vpop.permute.xlu0 %6418
          %6422 = vset.pattern.permute.xlu0 0
          %6423 = vperm.xlu0 %6422, %v6177
          %v6424 = vpop.permute.xlu0 %6423
          %6427 = vset.pattern.permute.xlu0 0
          %6428 = vperm.xlu0 %6427, %v6178
          %v6429 = vpop.permute.xlu0 %6428
          %6432 = vset.pattern.permute.xlu0 0
          %6433 = vperm.xlu0 %6432, %v6179
          %v6434 = vpop.permute.xlu0 %6433
          %6437 = vset.pattern.permute.xlu0 0
          %6438 = vperm.xlu0 %6437, %v6180
          %v6439 = vpop.permute.xlu0 %6438
          %6442 = vset.pattern.permute.xlu0 0
          %6443 = vperm.xlu0 %6442, %v6181
          %v6444 = vpop.permute.xlu0 %6443
          %6447 = vset.pattern.permute.xlu0 0
          %6448 = vperm.xlu0 %6447, %v6182
          %v6449 = vpop.permute.xlu0 %6448
          %6452 = vset.pattern.permute.xlu0 0
          %6453 = vperm.xlu0 %6452, %v6183
          %v6454 = vpop.permute.xlu0 %6453
          %6457 = vset.pattern.permute.xlu0 0
          %6458 = vperm.xlu0 %6457, %v6184
          %v6459 = vpop.permute.xlu0 %6458
          %6462 = vset.pattern.permute.xlu0 0
          %6463 = vperm.xlu0 %6462, %v6185
          %v6464 = vpop.permute.xlu0 %6463
          %6467 = vset.pattern.permute.xlu0 0
          %6468 = vperm.xlu0 %6467, %v6186
          %v6469 = vpop.permute.xlu0 %6468
          %6472 = vset.pattern.permute.xlu0 0
          %6473 = vperm.xlu0 %6472, %v6187
          %v6474 = vpop.permute.xlu0 %6473
          %6477 = vset.pattern.permute.xlu0 0
          %6478 = vperm.xlu0 %6477, %v6188
          %v6479 = vpop.permute.xlu0 %6478
          %6482 = vset.pattern.permute.xlu0 0
          %6483 = vperm.xlu0 %6482, %v6189
          %v6484 = vpop.permute.xlu0 %6483
          %6487 = vset.pattern.permute.xlu0 0
          %6488 = vperm.xlu0 %6487, %v6190
          %v6489 = vpop.permute.xlu0 %6488
          %6492 = vset.pattern.permute.xlu0 0
          %6493 = vperm.xlu0 %6492, %v6191
          %v6494 = vpop.permute.xlu0 %6493
          %6497 = vset.pattern.permute.xlu0 0
          %6498 = vperm.xlu0 %6497, %v6192
          %v6499 = vpop.permute.xlu0 %6498
          %6502 = vset.pattern.permute.xlu0 0
          %6503 = vperm.xlu0 %6502, %v6193
          %v6504 = vpop.permute.xlu0 %6503
          %6507 = vset.pattern.permute.xlu0 0
          %6508 = vperm.xlu0 %6507, %v6194
          %v6509 = vpop.permute.xlu0 %6508
          %6512 = vset.pattern.permute.xlu0 0
          %6513 = vperm.xlu0 %6512, %v6195
          %v6514 = vpop.permute.xlu0 %6513
          %v6772 = vunpack.c.l.b16 %v5876
          %v6773 = vunpack.c.h.b16 %v5876
          %v6774 = vunpack.c.l.b16 %v5877
          %v6775 = vunpack.c.h.b16 %v5877
          %v6776 = vunpack.c.l.b16 %v5878
          %v6777 = vunpack.c.h.b16 %v5878
          %v6778 = vunpack.c.l.b16 %v5879
          %v6779 = vunpack.c.h.b16 %v5879
          %v6780 = vunpack.c.l.b16 %v5880
          %v6781 = vunpack.c.h.b16 %v5880
          %v6782 = vunpack.c.l.b16 %v5881
          %v6783 = vunpack.c.h.b16 %v5881
          %v6784 = vunpack.c.l.b16 %v5882
          %v6785 = vunpack.c.h.b16 %v5882
          %v6786 = vunpack.c.l.b16 %v5883
          %v6787 = vunpack.c.h.b16 %v5883
          %v6788 = vunpack.c.l.b16 %v5884
          %v6789 = vunpack.c.h.b16 %v5884
          %v6790 = vunpack.c.l.b16 %v5885
          %v6791 = vunpack.c.h.b16 %v5885
          %v6792 = vunpack.c.l.b16 %v5886
          %v6793 = vunpack.c.h.b16 %v5886
          %v6794 = vunpack.c.l.b16 %v5887
          %v6795 = vunpack.c.h.b16 %v5887
          %v6796 = vunpack.c.l.b16 %v5888
          %v6797 = vunpack.c.h.b16 %v5888
          %v6798 = vunpack.c.l.b16 %v5889
          %v6799 = vunpack.c.h.b16 %v5889
          %v6800 = vunpack.c.l.b16 %v5890
          %v6801 = vunpack.c.h.b16 %v5890
          %v6802 = vunpack.c.l.b16 %v5891
          %v6803 = vunpack.c.h.b16 %v5891
          %v6804 = vunpack.c.l.b16 %v5892
          %v6805 = vunpack.c.h.b16 %v5892
          %v6806 = vunpack.c.l.b16 %v5893
          %v6807 = vunpack.c.h.b16 %v5893
          %v6808 = vunpack.c.l.b16 %v5894
          %v6809 = vunpack.c.h.b16 %v5894
          %v6810 = vunpack.c.l.b16 %v5895
          %v6811 = vunpack.c.h.b16 %v5895
          %v6812 = vunpack.c.l.b16 %v5896
          %v6813 = vunpack.c.h.b16 %v5896
          %v6814 = vunpack.c.l.b16 %v5897
          %v6815 = vunpack.c.h.b16 %v5897
          %v6816 = vunpack.c.l.b16 %v5898
          %v6817 = vunpack.c.h.b16 %v5898
          %v6818 = vunpack.c.l.b16 %v5899
          %v6819 = vunpack.c.h.b16 %v5899
          %v6820 = vunpack.c.l.b16 %v5900
          %v6821 = vunpack.c.h.b16 %v5900
          %v6822 = vunpack.c.l.b16 %v5901
          %v6823 = vunpack.c.h.b16 %v5901
          %v6824 = vunpack.c.l.b16 %v5902
          %v6825 = vunpack.c.h.b16 %v5902
          %v6826 = vunpack.c.l.b16 %v5903
          %v6827 = vunpack.c.h.b16 %v5903
          %v6828 = vunpack.c.l.b16 %v5904
          %v6829 = vunpack.c.h.b16 %v5904
          %v6830 = vunpack.c.l.b16 %v5905
          %v6831 = vunpack.c.h.b16 %v5905
          %v6832 = vunpack.c.l.b16 %v5906
          %v6833 = vunpack.c.h.b16 %v5906
          %v6834 = vunpack.c.l.b16 %v5907
          %v6835 = vunpack.c.h.b16 %v5907
          %v6836 = vunpack.c.l.b16 %v5908
          %v6837 = vunpack.c.h.b16 %v5908
          %v6838 = vunpack.c.l.b16 %v5909
          %v6839 = vunpack.c.h.b16 %v5909
          %v6840 = vunpack.c.l.b16 %v5910
          %v6841 = vunpack.c.h.b16 %v5910
          %v6842 = vunpack.c.l.b16 %v5911
          %v6843 = vunpack.c.h.b16 %v5911
          %v6844 = vunpack.c.l.b16 %v5912
          %v6845 = vunpack.c.h.b16 %v5912
          %v6846 = vunpack.c.l.b16 %v5913
          %v6847 = vunpack.c.h.b16 %v5913
          %v6848 = vunpack.c.l.b16 %v5914
          %v6849 = vunpack.c.h.b16 %v5914
          %v6850 = vunpack.c.l.b16 %v5915
          %v6851 = vunpack.c.h.b16 %v5915
          %v6852 = vunpack.c.l.b16 %v5916
          %v6853 = vunpack.c.h.b16 %v5916
          %v6854 = vunpack.c.l.b16 %v5917
          %v6855 = vunpack.c.h.b16 %v5917
          %v6856 = vunpack.c.l.b16 %v5918
          %v6857 = vunpack.c.h.b16 %v5918
          %v6858 = vunpack.c.l.b16 %v5919
          %v6859 = vunpack.c.h.b16 %v5919
          %v6860 = vunpack.c.l.b16 %v5920
          %v6861 = vunpack.c.h.b16 %v5920
          %v6862 = vunpack.c.l.b16 %v5921
          %v6863 = vunpack.c.h.b16 %v5921
          %v6864 = vunpack.c.l.b16 %v5922
          %v6865 = vunpack.c.h.b16 %v5922
          %v6866 = vunpack.c.l.b16 %v5923
          %v6867 = vunpack.c.h.b16 %v5923
          %v6868 = vunpack.c.l.b16 %v5924
          %v6869 = vunpack.c.h.b16 %v5924
          %v6870 = vunpack.c.l.b16 %v5925
          %v6871 = vunpack.c.h.b16 %v5925
          %v6872 = vunpack.c.l.b16 %v5926
          %v6873 = vunpack.c.h.b16 %v5926
          %v6874 = vunpack.c.l.b16 %v5927
          %v6875 = vunpack.c.h.b16 %v5927
          %v6876 = vunpack.c.l.b16 %v5928
          %v6877 = vunpack.c.h.b16 %v5928
          %v6878 = vunpack.c.l.b16 %v5929
          %v6879 = vunpack.c.h.b16 %v5929
          %v6880 = vunpack.c.l.b16 %v5930
          %v6881 = vunpack.c.h.b16 %v5930
          %v6882 = vunpack.c.l.b16 %v5931
          %v6883 = vunpack.c.h.b16 %v5931
          %v6884 = vunpack.c.l.b16 %v5932
          %v6885 = vunpack.c.h.b16 %v5932
          %v6886 = vunpack.c.l.b16 %v5933
          %v6887 = vunpack.c.h.b16 %v5933
          %v6888 = vunpack.c.l.b16 %v5934
          %v6889 = vunpack.c.h.b16 %v5934
          %v6890 = vunpack.c.l.b16 %v5935
          %v6891 = vunpack.c.h.b16 %v5935
          %v6892 = vunpack.c.l.b16 %v5936
          %v6893 = vunpack.c.h.b16 %v5936
          %v6894 = vunpack.c.l.b16 %v5937
          %v6895 = vunpack.c.h.b16 %v5937
          %v6896 = vunpack.c.l.b16 %v5938
          %v6897 = vunpack.c.h.b16 %v5938
          %v6898 = vunpack.c.l.b16 %v5939
          %v6899 = vunpack.c.h.b16 %v5939
          %v6900 = vunpack.c.l.b16 %v5940
          %v6901 = vunpack.c.h.b16 %v5940
          %v6902 = vunpack.c.l.b16 %v5941
          %v6903 = vunpack.c.h.b16 %v5941
          %v6904 = vunpack.c.l.b16 %v5942
          %v6905 = vunpack.c.h.b16 %v5942
          %v6906 = vunpack.c.l.b16 %v5943
          %v6907 = vunpack.c.h.b16 %v5943
          %v6908 = vunpack.c.l.b16 %v5944
          %v6909 = vunpack.c.h.b16 %v5944
          %v6910 = vunpack.c.l.b16 %v5945
          %v6911 = vunpack.c.h.b16 %v5945
          %v6912 = vunpack.c.l.b16 %v5946
          %v6913 = vunpack.c.h.b16 %v5946
          %v6914 = vunpack.c.l.b16 %v5947
          %v6915 = vunpack.c.h.b16 %v5947
          %v6916 = vunpack.c.l.b16 %v5948
          %v6917 = vunpack.c.h.b16 %v5948
          %v6918 = vunpack.c.l.b16 %v5949
          %v6919 = vunpack.c.h.b16 %v5949
          %v6920 = vunpack.c.l.b16 %v5950
          %v6921 = vunpack.c.h.b16 %v5950
          %v6922 = vunpack.c.l.b16 %v5951
          %v6923 = vunpack.c.h.b16 %v5951
          %v6924 = vunpack.c.l.b16 %v5952
          %v6925 = vunpack.c.h.b16 %v5952
          %v6926 = vunpack.c.l.b16 %v5953
          %v6927 = vunpack.c.h.b16 %v5953
          %v6928 = vunpack.c.l.b16 %v5954
          %v6929 = vunpack.c.h.b16 %v5954
          %v6930 = vunpack.c.l.b16 %v5955
          %v6931 = vunpack.c.h.b16 %v5955
          %v6932 = vunpack.c.l.b16 %v5956
          %v6933 = vunpack.c.h.b16 %v5956
          %v6934 = vunpack.c.l.b16 %v5957
          %v6935 = vunpack.c.h.b16 %v5957
          %v6936 = vunpack.c.l.b16 %v5958
          %v6937 = vunpack.c.h.b16 %v5958
          %v6938 = vunpack.c.l.b16 %v5959
          %v6939 = vunpack.c.h.b16 %v5959
          %v6940 = vunpack.c.l.b16 %v5960
          %v6941 = vunpack.c.h.b16 %v5960
          %v6942 = vunpack.c.l.b16 %v5961
          %v6943 = vunpack.c.h.b16 %v5961
          %v6944 = vunpack.c.l.b16 %v5962
          %v6945 = vunpack.c.h.b16 %v5962
          %v6946 = vunpack.c.l.b16 %v5963
          %v6947 = vunpack.c.h.b16 %v5963
          %v6948 = vunpack.c.l.b16 %v5964
          %v6949 = vunpack.c.h.b16 %v5964
          %v6950 = vunpack.c.l.b16 %v5965
          %v6951 = vunpack.c.h.b16 %v5965
          %v6952 = vunpack.c.l.b16 %v5966
          %v6953 = vunpack.c.h.b16 %v5966
          %v6954 = vunpack.c.l.b16 %v5967
          %v6955 = vunpack.c.h.b16 %v5967
          %v6956 = vunpack.c.l.b16 %v5968
          %v6957 = vunpack.c.h.b16 %v5968
          %v6958 = vunpack.c.l.b16 %v5969
          %v6959 = vunpack.c.h.b16 %v5969
          %v6960 = vunpack.c.l.b16 %v5970
          %v6961 = vunpack.c.h.b16 %v5970
          %v6962 = vunpack.c.l.b16 %v5971
          %v6963 = vunpack.c.h.b16 %v5971
          %v6964 = vunpack.c.l.b16 %v5972
          %v6965 = vunpack.c.h.b16 %v5972
          %v6966 = vunpack.c.l.b16 %v5973
          %v6967 = vunpack.c.h.b16 %v5973
          %v6968 = vunpack.c.l.b16 %v5974
          %v6969 = vunpack.c.h.b16 %v5974
          %v6970 = vunpack.c.l.b16 %v5975
          %v6971 = vunpack.c.h.b16 %v5975
          %v6972 = vunpack.c.l.b16 %v5976
          %v6973 = vunpack.c.h.b16 %v5976
          %v6974 = vunpack.c.l.b16 %v5977
          %v6975 = vunpack.c.h.b16 %v5977
          %v6976 = vunpack.c.l.b16 %v5978
          %v6977 = vunpack.c.h.b16 %v5978
          %v6978 = vunpack.c.l.b16 %v5979
          %v6979 = vunpack.c.h.b16 %v5979
          %v6980 = vunpack.c.l.b16 %v5980
          %v6981 = vunpack.c.h.b16 %v5980
          %v6982 = vunpack.c.l.b16 %v5981
          %v6983 = vunpack.c.h.b16 %v5981
          %v6984 = vunpack.c.l.b16 %v5982
          %v6985 = vunpack.c.h.b16 %v5982
          %v6986 = vunpack.c.l.b16 %v5983
          %v6987 = vunpack.c.h.b16 %v5983
          %v6988 = vunpack.c.l.b16 %v5984
          %v6989 = vunpack.c.h.b16 %v5984
          %v6990 = vunpack.c.l.b16 %v5985
          %v6991 = vunpack.c.h.b16 %v5985
          %v6992 = vunpack.c.l.b16 %v5986
          %v6993 = vunpack.c.h.b16 %v5986
          %v6994 = vunpack.c.l.b16 %v5987
          %v6995 = vunpack.c.h.b16 %v5987
          %v6996 = vunpack.c.l.b16 %v5988
          %v6997 = vunpack.c.h.b16 %v5988
          %v6998 = vunpack.c.l.b16 %v5989
          %v6999 = vunpack.c.h.b16 %v5989
          %v7000 = vunpack.c.l.b16 %v5990
          %v7001 = vunpack.c.h.b16 %v5990
          %v7002 = vunpack.c.l.b16 %v5991
          %v7003 = vunpack.c.h.b16 %v5991
          %v7004 = vunpack.c.l.b16 %v5992
          %v7005 = vunpack.c.h.b16 %v5992
          %v7006 = vunpack.c.l.b16 %v5993
          %v7007 = vunpack.c.h.b16 %v5993
          %v7008 = vunpack.c.l.b16 %v5994
          %v7009 = vunpack.c.h.b16 %v5994
          %v7010 = vunpack.c.l.b16 %v5995
          %v7011 = vunpack.c.h.b16 %v5995
          %v7012 = vunpack.c.l.b16 %v5996
          %v7013 = vunpack.c.h.b16 %v5996
          %v7014 = vunpack.c.l.b16 %v5997
          %v7015 = vunpack.c.h.b16 %v5997
          %v7016 = vunpack.c.l.b16 %v5998
          %v7017 = vunpack.c.h.b16 %v5998
          %v7018 = vunpack.c.l.b16 %v5999
          %v7019 = vunpack.c.h.b16 %v5999
          %v7020 = vunpack.c.l.b16 %v6000
          %v7021 = vunpack.c.h.b16 %v6000
          %v7022 = vunpack.c.l.b16 %v6001
          %v7023 = vunpack.c.h.b16 %v6001
          %v7024 = vunpack.c.l.b16 %v6002
          %v7025 = vunpack.c.h.b16 %v6002
          %v7026 = vunpack.c.l.b16 %v6003
          %v7027 = vunpack.c.h.b16 %v6003
          %v7028 = vunpack.c.l.b16 %v6004
          %v7029 = vunpack.c.h.b16 %v6004
          %v7030 = vunpack.c.l.b16 %v6005
          %v7031 = vunpack.c.h.b16 %v6005
          %v7032 = vunpack.c.l.b16 %v6006
          %v7033 = vunpack.c.h.b16 %v6006
          %v7034 = vunpack.c.l.b16 %v6007
          %v7035 = vunpack.c.h.b16 %v6007
          %v7036 = vunpack.c.l.b16 %v6008
          %v7037 = vunpack.c.h.b16 %v6008
          %v7038 = vunpack.c.l.b16 %v6009
          %v7039 = vunpack.c.h.b16 %v6009
          %v7040 = vunpack.c.l.b16 %v6010
          %v7041 = vunpack.c.h.b16 %v6010
          %v7042 = vunpack.c.l.b16 %v6011
          %v7043 = vunpack.c.h.b16 %v6011
          %v7044 = vunpack.c.l.b16 %v6012
          %v7045 = vunpack.c.h.b16 %v6012
          %v7046 = vunpack.c.l.b16 %v6013
          %v7047 = vunpack.c.h.b16 %v6013
          %v7048 = vunpack.c.l.b16 %v6014
          %v7049 = vunpack.c.h.b16 %v6014
          %v7050 = vunpack.c.l.b16 %v6015
          %v7051 = vunpack.c.h.b16 %v6015
          %v7052 = vunpack.c.l.b16 %v6016
          %v7053 = vunpack.c.h.b16 %v6016
          %v7054 = vunpack.c.l.b16 %v6017
          %v7055 = vunpack.c.h.b16 %v6017
          %v7056 = vunpack.c.l.b16 %v6018
          %v7057 = vunpack.c.h.b16 %v6018
          %v7058 = vunpack.c.l.b16 %v6019
          %v7059 = vunpack.c.h.b16 %v6019
          %v7060 = vunpack.c.l.b16 %v6020
          %v7061 = vunpack.c.h.b16 %v6020
          %v7062 = vunpack.c.l.b16 %v6021
          %v7063 = vunpack.c.h.b16 %v6021
          %v7064 = vunpack.c.l.b16 %v6022
          %v7065 = vunpack.c.h.b16 %v6022
          %v7066 = vunpack.c.l.b16 %v6023
          %v7067 = vunpack.c.h.b16 %v6023
          %v7068 = vunpack.c.l.b16 %v6024
          %v7069 = vunpack.c.h.b16 %v6024
          %v7070 = vunpack.c.l.b16 %v6025
          %v7071 = vunpack.c.h.b16 %v6025
          %v7072 = vunpack.c.l.b16 %v6026
          %v7073 = vunpack.c.h.b16 %v6026
          %v7074 = vunpack.c.l.b16 %v6027
          %v7075 = vunpack.c.h.b16 %v6027
          %v7076 = vunpack.c.l.b16 %v6028
          %v7077 = vunpack.c.h.b16 %v6028
          %v7078 = vunpack.c.l.b16 %v6029
          %v7079 = vunpack.c.h.b16 %v6029
          %v7080 = vunpack.c.l.b16 %v6030
          %v7081 = vunpack.c.h.b16 %v6030
          %v7082 = vunpack.c.l.b16 %v6031
          %v7083 = vunpack.c.h.b16 %v6031
          %v7084 = vunpack.c.l.b16 %v6032
          %v7085 = vunpack.c.h.b16 %v6032
          %v7086 = vunpack.c.l.b16 %v6033
          %v7087 = vunpack.c.h.b16 %v6033
          %v7088 = vunpack.c.l.b16 %v6034
          %v7089 = vunpack.c.h.b16 %v6034
          %v7090 = vunpack.c.l.b16 %v6035
          %v7091 = vunpack.c.h.b16 %v6035
          %v7092 = vunpack.c.l.b16 %v6036
          %v7093 = vunpack.c.h.b16 %v6036
          %v7094 = vunpack.c.l.b16 %v6037
          %v7095 = vunpack.c.h.b16 %v6037
          %v7096 = vunpack.c.l.b16 %v6038
          %v7097 = vunpack.c.h.b16 %v6038
          %v7098 = vunpack.c.l.b16 %v6039
          %v7099 = vunpack.c.h.b16 %v6039
          %v7100 = vunpack.c.l.b16 %v6040
          %v7101 = vunpack.c.h.b16 %v6040
          %v7102 = vunpack.c.l.b16 %v6041
          %v7103 = vunpack.c.h.b16 %v6041
          %v7104 = vunpack.c.l.b16 %v6042
          %v7105 = vunpack.c.h.b16 %v6042
          %v7106 = vunpack.c.l.b16 %v6043
          %v7107 = vunpack.c.h.b16 %v6043
          %v7108 = vunpack.c.l.b16 %v6044
          %v7109 = vunpack.c.h.b16 %v6044
          %v7110 = vunpack.c.l.b16 %v6045
          %v7111 = vunpack.c.h.b16 %v6045
          %v7112 = vunpack.c.l.b16 %v6046
          %v7113 = vunpack.c.h.b16 %v6046
          %v7114 = vunpack.c.l.b16 %v6047
          %v7115 = vunpack.c.h.b16 %v6047
          %v7116 = vunpack.c.l.b16 %v6048
          %v7117 = vunpack.c.h.b16 %v6048
          %v7118 = vunpack.c.l.b16 %v6049
          %v7119 = vunpack.c.h.b16 %v6049
          %v7120 = vunpack.c.l.b16 %v6050
          %v7121 = vunpack.c.h.b16 %v6050
          %v7122 = vunpack.c.l.b16 %v6051
          %v7123 = vunpack.c.h.b16 %v6051
          %v7124 = vunpack.c.l.b16 %v6052
          %v7125 = vunpack.c.h.b16 %v6052
          %v7126 = vunpack.c.l.b16 %v6053
          %v7127 = vunpack.c.h.b16 %v6053
          %v7128 = vunpack.c.l.b16 %v6054
          %v7129 = vunpack.c.h.b16 %v6054
          %v7130 = vunpack.c.l.b16 %v6055
          %v7131 = vunpack.c.h.b16 %v6055
          %v7132 = vunpack.c.l.b16 %v6056
          %v7133 = vunpack.c.h.b16 %v6056
          %v7134 = vunpack.c.l.b16 %v6057
          %v7135 = vunpack.c.h.b16 %v6057
          %v7136 = vunpack.c.l.b16 %v6058
          %v7137 = vunpack.c.h.b16 %v6058
          %v7138 = vunpack.c.l.b16 %v6059
          %v7139 = vunpack.c.h.b16 %v6059
          %v7140 = vunpack.c.l.b16 %v6060
          %v7141 = vunpack.c.h.b16 %v6060
          %v7142 = vunpack.c.l.b16 %v6061
          %v7143 = vunpack.c.h.b16 %v6061
          %v7144 = vunpack.c.l.b16 %v6062
          %v7145 = vunpack.c.h.b16 %v6062
          %v7146 = vunpack.c.l.b16 %v6063
          %v7147 = vunpack.c.h.b16 %v6063
          %v7148 = vunpack.c.l.b16 %v6064
          %v7149 = vunpack.c.h.b16 %v6064
          %v7150 = vunpack.c.l.b16 %v6065
          %v7151 = vunpack.c.h.b16 %v6065
          %v7152 = vunpack.c.l.b16 %v6066
          %v7153 = vunpack.c.h.b16 %v6066
          %v7154 = vunpack.c.l.b16 %v6067
          %v7155 = vunpack.c.h.b16 %v6067
          %v7156 = vunpack.c.l.b16 %v6068
          %v7157 = vunpack.c.h.b16 %v6068
          %v7158 = vunpack.c.l.b16 %v6069
          %v7159 = vunpack.c.h.b16 %v6069
          %v7160 = vunpack.c.l.b16 %v6070
          %v7161 = vunpack.c.h.b16 %v6070
          %v7162 = vunpack.c.l.b16 %v6071
          %v7163 = vunpack.c.h.b16 %v6071
          %v7164 = vunpack.c.l.b16 %v6072
          %v7165 = vunpack.c.h.b16 %v6072
          %v7166 = vunpack.c.l.b16 %v6073
          %v7167 = vunpack.c.h.b16 %v6073
          %v7168 = vunpack.c.l.b16 %v6074
          %v7169 = vunpack.c.h.b16 %v6074
          %v7170 = vunpack.c.l.b16 %v6075
          %v7171 = vunpack.c.h.b16 %v6075
          %v7172 = vunpack.c.l.b16 %v6076
          %v7173 = vunpack.c.h.b16 %v6076
          %v7174 = vunpack.c.l.b16 %v6077
          %v7175 = vunpack.c.h.b16 %v6077
          %v7176 = vunpack.c.l.b16 %v6078
          %v7177 = vunpack.c.h.b16 %v6078
          %v7178 = vunpack.c.l.b16 %v6079
          %v7179 = vunpack.c.h.b16 %v6079
          %v7180 = vunpack.c.l.b16 %v6080
          %v7181 = vunpack.c.h.b16 %v6080
          %v7182 = vunpack.c.l.b16 %v6081
          %v7183 = vunpack.c.h.b16 %v6081
          %v7184 = vunpack.c.l.b16 %v6082
          %v7185 = vunpack.c.h.b16 %v6082
          %v7186 = vunpack.c.l.b16 %v6083
          %v7187 = vunpack.c.h.b16 %v6083
          %v7188 = vunpack.c.l.b16 %v6084
          %v7189 = vunpack.c.h.b16 %v6084
          %v7190 = vunpack.c.l.b16 %v6085
          %v7191 = vunpack.c.h.b16 %v6085
          %v7192 = vunpack.c.l.b16 %v6086
          %v7193 = vunpack.c.h.b16 %v6086
          %v7194 = vunpack.c.l.b16 %v6087
          %v7195 = vunpack.c.h.b16 %v6087
          %v7196 = vunpack.c.l.b16 %v6088
          %v7197 = vunpack.c.h.b16 %v6088
          %v7198 = vunpack.c.l.b16 %v6089
          %v7199 = vunpack.c.h.b16 %v6089
          %v7200 = vunpack.c.l.b16 %v6090
          %v7201 = vunpack.c.h.b16 %v6090
          %v7202 = vunpack.c.l.b16 %v6091
          %v7203 = vunpack.c.h.b16 %v6091
          %v7204 = vunpack.c.l.b16 %v6092
          %v7205 = vunpack.c.h.b16 %v6092
          %v7206 = vunpack.c.l.b16 %v6093
          %v7207 = vunpack.c.h.b16 %v6093
          %v7208 = vunpack.c.l.b16 %v6094
          %v7209 = vunpack.c.h.b16 %v6094
          %v7210 = vunpack.c.l.b16 %v6095
          %v7211 = vunpack.c.h.b16 %v6095
          %v7212 = vunpack.c.l.b16 %v6096
          %v7213 = vunpack.c.h.b16 %v6096
          %v7214 = vunpack.c.l.b16 %v6097
          %v7215 = vunpack.c.h.b16 %v6097
          %v7216 = vunpack.c.l.b16 %v6098
          %v7217 = vunpack.c.h.b16 %v6098
          %v7218 = vunpack.c.l.b16 %v6099
          %v7219 = vunpack.c.h.b16 %v6099
          %v7220 = vunpack.c.l.b16 %v6100
          %v7221 = vunpack.c.h.b16 %v6100
          %v7222 = vunpack.c.l.b16 %v6101
          %v7223 = vunpack.c.h.b16 %v6101
          %v7224 = vunpack.c.l.b16 %v6102
          %v7225 = vunpack.c.h.b16 %v6102
          %v7226 = vunpack.c.l.b16 %v6103
          %v7227 = vunpack.c.h.b16 %v6103
          %v7228 = vunpack.c.l.b16 %v6104
          %v7229 = vunpack.c.h.b16 %v6104
          %v7230 = vunpack.c.l.b16 %v6105
          %v7231 = vunpack.c.h.b16 %v6105
          %v7232 = vunpack.c.l.b16 %v6106
          %v7233 = vunpack.c.h.b16 %v6106
          %v7234 = vunpack.c.l.b16 %v6107
          %v7235 = vunpack.c.h.b16 %v6107
          %v7236 = vunpack.c.l.b16 %v6108
          %v7237 = vunpack.c.h.b16 %v6108
          %v7238 = vunpack.c.l.b16 %v6109
          %v7239 = vunpack.c.h.b16 %v6109
          %v7240 = vunpack.c.l.b16 %v6110
          %v7241 = vunpack.c.h.b16 %v6110
          %v7242 = vunpack.c.l.b16 %v6111
          %v7243 = vunpack.c.h.b16 %v6111
          %v7244 = vunpack.c.l.b16 %v6112
          %v7245 = vunpack.c.h.b16 %v6112
          %v7246 = vunpack.c.l.b16 %v6113
          %v7247 = vunpack.c.h.b16 %v6113
          %v7248 = vunpack.c.l.b16 %v6114
          %v7249 = vunpack.c.h.b16 %v6114
          %v7250 = vunpack.c.l.b16 %v6115
          %v7251 = vunpack.c.h.b16 %v6115
          %v7252 = vunpack.c.l.b16 %v6116
          %v7253 = vunpack.c.h.b16 %v6116
          %v7254 = vunpack.c.l.b16 %v6117
          %v7255 = vunpack.c.h.b16 %v6117
          %v7256 = vunpack.c.l.b16 %v6118
          %v7257 = vunpack.c.h.b16 %v6118
          %v7258 = vunpack.c.l.b16 %v6119
          %v7259 = vunpack.c.h.b16 %v6119
          %v7260 = vunpack.c.l.b16 %v6120
          %v7261 = vunpack.c.h.b16 %v6120
          %v7262 = vunpack.c.l.b16 %v6121
          %v7263 = vunpack.c.h.b16 %v6121
          %v7264 = vunpack.c.l.b16 %v6122
          %v7265 = vunpack.c.h.b16 %v6122
          %v7266 = vunpack.c.l.b16 %v6123
          %v7267 = vunpack.c.h.b16 %v6123
          %v7268 = vunpack.c.l.b16 %v6124
          %v7269 = vunpack.c.h.b16 %v6124
          %v7270 = vunpack.c.l.b16 %v6125
          %v7271 = vunpack.c.h.b16 %v6125
          %v7272 = vunpack.c.l.b16 %v6126
          %v7273 = vunpack.c.h.b16 %v6126
          %v7274 = vunpack.c.l.b16 %v6127
          %v7275 = vunpack.c.h.b16 %v6127
          %v7276 = vunpack.c.l.b16 %v6128
          %v7277 = vunpack.c.h.b16 %v6128
          %v7278 = vunpack.c.l.b16 %v6129
          %v7279 = vunpack.c.h.b16 %v6129
          %v7280 = vunpack.c.l.b16 %v6130
          %v7281 = vunpack.c.h.b16 %v6130
          %v7282 = vunpack.c.l.b16 %v6131
          %v7283 = vunpack.c.h.b16 %v6131
          %v7284 = vpack.c.b16 %v6780, %v6772
          %v7285 = vpack.c.b16 %v6781, %v6773
          %v7286 = vpack.c.b16 %v6782, %v6774
          %v7287 = vpack.c.b16 %v6783, %v6775
          %v7288 = vpack.c.b16 %v6784, %v6776
          %v7289 = vpack.c.b16 %v6785, %v6777
          %v7290 = vpack.c.b16 %v6786, %v6778
          %v7291 = vpack.c.b16 %v6787, %v6779
          %v7292 = vpack.c.b16 %v6796, %v6788
          %v7293 = vpack.c.b16 %v6797, %v6789
          %v7294 = vpack.c.b16 %v6798, %v6790
          %v7295 = vpack.c.b16 %v6799, %v6791
          %v7296 = vpack.c.b16 %v6800, %v6792
          %v7297 = vpack.c.b16 %v6801, %v6793
          %v7298 = vpack.c.b16 %v6802, %v6794
          %v7299 = vpack.c.b16 %v6803, %v6795
          %v7300 = vpack.c.b16 %v6812, %v6804
          %v7301 = vpack.c.b16 %v6813, %v6805
          %v7302 = vpack.c.b16 %v6814, %v6806
          %v7303 = vpack.c.b16 %v6815, %v6807
          %v7304 = vpack.c.b16 %v6816, %v6808
          %v7305 = vpack.c.b16 %v6817, %v6809
          %v7306 = vpack.c.b16 %v6818, %v6810
          %v7307 = vpack.c.b16 %v6819, %v6811
          %v7308 = vpack.c.b16 %v6828, %v6820
          %v7309 = vpack.c.b16 %v6829, %v6821
          %v7310 = vpack.c.b16 %v6830, %v6822
          %v7311 = vpack.c.b16 %v6831, %v6823
          %v7312 = vpack.c.b16 %v6832, %v6824
          %v7313 = vpack.c.b16 %v6833, %v6825
          %v7314 = vpack.c.b16 %v6834, %v6826
          %v7315 = vpack.c.b16 %v6835, %v6827
          %v7316 = vpack.c.b16 %v6844, %v6836
          %v7317 = vpack.c.b16 %v6845, %v6837
          %v7318 = vpack.c.b16 %v6846, %v6838
          %v7319 = vpack.c.b16 %v6847, %v6839
          %v7320 = vpack.c.b16 %v6848, %v6840
          %v7321 = vpack.c.b16 %v6849, %v6841
          %v7322 = vpack.c.b16 %v6850, %v6842
          %v7323 = vpack.c.b16 %v6851, %v6843
          %v7324 = vpack.c.b16 %v6860, %v6852
          %v7325 = vpack.c.b16 %v6861, %v6853
          %v7326 = vpack.c.b16 %v6862, %v6854
          %v7327 = vpack.c.b16 %v6863, %v6855
          %v7328 = vpack.c.b16 %v6864, %v6856
          %v7329 = vpack.c.b16 %v6865, %v6857
          %v7330 = vpack.c.b16 %v6866, %v6858
          %v7331 = vpack.c.b16 %v6867, %v6859
          %v7332 = vpack.c.b16 %v6876, %v6868
          %v7333 = vpack.c.b16 %v6877, %v6869
          %v7334 = vpack.c.b16 %v6878, %v6870
          %v7335 = vpack.c.b16 %v6879, %v6871
          %v7336 = vpack.c.b16 %v6880, %v6872
          %v7337 = vpack.c.b16 %v6881, %v6873
          %v7338 = vpack.c.b16 %v6882, %v6874
          %v7339 = vpack.c.b16 %v6883, %v6875
          %v7340 = vpack.c.b16 %v6892, %v6884
          %v7341 = vpack.c.b16 %v6893, %v6885
          %v7342 = vpack.c.b16 %v6894, %v6886
          %v7343 = vpack.c.b16 %v6895, %v6887
          %v7344 = vpack.c.b16 %v6896, %v6888
          %v7345 = vpack.c.b16 %v6897, %v6889
          %v7346 = vpack.c.b16 %v6898, %v6890
          %v7347 = vpack.c.b16 %v6899, %v6891
          %v7348 = vpack.c.b16 %v6908, %v6900
          %v7349 = vpack.c.b16 %v6909, %v6901
          %v7350 = vpack.c.b16 %v6910, %v6902
          %v7351 = vpack.c.b16 %v6911, %v6903
          %v7352 = vpack.c.b16 %v6912, %v6904
          %v7353 = vpack.c.b16 %v6913, %v6905
          %v7354 = vpack.c.b16 %v6914, %v6906
          %v7355 = vpack.c.b16 %v6915, %v6907
          %v7356 = vpack.c.b16 %v6924, %v6916
          %v7357 = vpack.c.b16 %v6925, %v6917
          %v7358 = vpack.c.b16 %v6926, %v6918
          %v7359 = vpack.c.b16 %v6927, %v6919
          %v7360 = vpack.c.b16 %v6928, %v6920
          %v7361 = vpack.c.b16 %v6929, %v6921
          %v7362 = vpack.c.b16 %v6930, %v6922
          %v7363 = vpack.c.b16 %v6931, %v6923
          %v7364 = vpack.c.b16 %v6940, %v6932
          %v7365 = vpack.c.b16 %v6941, %v6933
          %v7366 = vpack.c.b16 %v6942, %v6934
          %v7367 = vpack.c.b16 %v6943, %v6935
          %v7368 = vpack.c.b16 %v6944, %v6936
          %v7369 = vpack.c.b16 %v6945, %v6937
          %v7370 = vpack.c.b16 %v6946, %v6938
          %v7371 = vpack.c.b16 %v6947, %v6939
          %v7372 = vpack.c.b16 %v6956, %v6948
          %v7373 = vpack.c.b16 %v6957, %v6949
          %v7374 = vpack.c.b16 %v6958, %v6950
          %v7375 = vpack.c.b16 %v6959, %v6951
          %v7376 = vpack.c.b16 %v6960, %v6952
          %v7377 = vpack.c.b16 %v6961, %v6953
          %v7378 = vpack.c.b16 %v6962, %v6954
          %v7379 = vpack.c.b16 %v6963, %v6955
          %v7380 = vpack.c.b16 %v6972, %v6964
          %v7381 = vpack.c.b16 %v6973, %v6965
          %v7382 = vpack.c.b16 %v6974, %v6966
          %v7383 = vpack.c.b16 %v6975, %v6967
          %v7384 = vpack.c.b16 %v6976, %v6968
          %v7385 = vpack.c.b16 %v6977, %v6969
          %v7386 = vpack.c.b16 %v6978, %v6970
          %v7387 = vpack.c.b16 %v6979, %v6971
          %v7388 = vpack.c.b16 %v6988, %v6980
          %v7389 = vpack.c.b16 %v6989, %v6981
          %v7390 = vpack.c.b16 %v6990, %v6982
          %v7391 = vpack.c.b16 %v6991, %v6983
          %v7392 = vpack.c.b16 %v6992, %v6984
          %v7393 = vpack.c.b16 %v6993, %v6985
          %v7394 = vpack.c.b16 %v6994, %v6986
          %v7395 = vpack.c.b16 %v6995, %v6987
          %v7396 = vpack.c.b16 %v7004, %v6996
          %v7397 = vpack.c.b16 %v7005, %v6997
          %v7398 = vpack.c.b16 %v7006, %v6998
          %v7399 = vpack.c.b16 %v7007, %v6999
          %v7400 = vpack.c.b16 %v7008, %v7000
          %v7401 = vpack.c.b16 %v7009, %v7001
          %v7402 = vpack.c.b16 %v7010, %v7002
          %v7403 = vpack.c.b16 %v7011, %v7003
          %v7404 = vpack.c.b16 %v7020, %v7012
          %v7405 = vpack.c.b16 %v7021, %v7013
          %v7406 = vpack.c.b16 %v7022, %v7014
          %v7407 = vpack.c.b16 %v7023, %v7015
          %v7408 = vpack.c.b16 %v7024, %v7016
          %v7409 = vpack.c.b16 %v7025, %v7017
          %v7410 = vpack.c.b16 %v7026, %v7018
          %v7411 = vpack.c.b16 %v7027, %v7019
          %v7412 = vpack.c.b16 %v7036, %v7028
          %v7413 = vpack.c.b16 %v7037, %v7029
          %v7414 = vpack.c.b16 %v7038, %v7030
          %v7415 = vpack.c.b16 %v7039, %v7031
          %v7416 = vpack.c.b16 %v7040, %v7032
          %v7417 = vpack.c.b16 %v7041, %v7033
          %v7418 = vpack.c.b16 %v7042, %v7034
          %v7419 = vpack.c.b16 %v7043, %v7035
          %v7420 = vpack.c.b16 %v7052, %v7044
          %v7421 = vpack.c.b16 %v7053, %v7045
          %v7422 = vpack.c.b16 %v7054, %v7046
          %v7423 = vpack.c.b16 %v7055, %v7047
          %v7424 = vpack.c.b16 %v7056, %v7048
          %v7425 = vpack.c.b16 %v7057, %v7049
          %v7426 = vpack.c.b16 %v7058, %v7050
          %v7427 = vpack.c.b16 %v7059, %v7051
          %v7428 = vpack.c.b16 %v7068, %v7060
          %v7429 = vpack.c.b16 %v7069, %v7061
          %v7430 = vpack.c.b16 %v7070, %v7062
          %v7431 = vpack.c.b16 %v7071, %v7063
          %v7432 = vpack.c.b16 %v7072, %v7064
          %v7433 = vpack.c.b16 %v7073, %v7065
          %v7434 = vpack.c.b16 %v7074, %v7066
          %v7435 = vpack.c.b16 %v7075, %v7067
          %v7436 = vpack.c.b16 %v7084, %v7076
          %v7437 = vpack.c.b16 %v7085, %v7077
          %v7438 = vpack.c.b16 %v7086, %v7078
          %v7439 = vpack.c.b16 %v7087, %v7079
          %v7440 = vpack.c.b16 %v7088, %v7080
          %v7441 = vpack.c.b16 %v7089, %v7081
          %v7442 = vpack.c.b16 %v7090, %v7082
          %v7443 = vpack.c.b16 %v7091, %v7083
          %v7444 = vpack.c.b16 %v7100, %v7092
          %v7445 = vpack.c.b16 %v7101, %v7093
          %v7446 = vpack.c.b16 %v7102, %v7094
          %v7447 = vpack.c.b16 %v7103, %v7095
          %v7448 = vpack.c.b16 %v7104, %v7096
          %v7449 = vpack.c.b16 %v7105, %v7097
          %v7450 = vpack.c.b16 %v7106, %v7098
          %v7451 = vpack.c.b16 %v7107, %v7099
          %v7452 = vpack.c.b16 %v7116, %v7108
          %v7453 = vpack.c.b16 %v7117, %v7109
          %v7454 = vpack.c.b16 %v7118, %v7110
          %v7455 = vpack.c.b16 %v7119, %v7111
          %v7456 = vpack.c.b16 %v7120, %v7112
          %v7457 = vpack.c.b16 %v7121, %v7113
          %v7458 = vpack.c.b16 %v7122, %v7114
          %v7459 = vpack.c.b16 %v7123, %v7115
          %v7460 = vpack.c.b16 %v7132, %v7124
          %v7461 = vpack.c.b16 %v7133, %v7125
          %v7462 = vpack.c.b16 %v7134, %v7126
          %v7463 = vpack.c.b16 %v7135, %v7127
          %v7464 = vpack.c.b16 %v7136, %v7128
          %v7465 = vpack.c.b16 %v7137, %v7129
          %v7466 = vpack.c.b16 %v7138, %v7130
          %v7467 = vpack.c.b16 %v7139, %v7131
          %v7468 = vpack.c.b16 %v7148, %v7140
          %v7469 = vpack.c.b16 %v7149, %v7141
          %v7470 = vpack.c.b16 %v7150, %v7142
          %v7471 = vpack.c.b16 %v7151, %v7143
          %v7472 = vpack.c.b16 %v7152, %v7144
          %v7473 = vpack.c.b16 %v7153, %v7145
          %v7474 = vpack.c.b16 %v7154, %v7146
          %v7475 = vpack.c.b16 %v7155, %v7147
          %v7476 = vpack.c.b16 %v7164, %v7156
          %v7477 = vpack.c.b16 %v7165, %v7157
          %v7478 = vpack.c.b16 %v7166, %v7158
          %v7479 = vpack.c.b16 %v7167, %v7159
          %v7480 = vpack.c.b16 %v7168, %v7160
          %v7481 = vpack.c.b16 %v7169, %v7161
          %v7482 = vpack.c.b16 %v7170, %v7162
          %v7483 = vpack.c.b16 %v7171, %v7163
          %v7484 = vpack.c.b16 %v7180, %v7172
          %v7485 = vpack.c.b16 %v7181, %v7173
          %v7486 = vpack.c.b16 %v7182, %v7174
          %v7487 = vpack.c.b16 %v7183, %v7175
          %v7488 = vpack.c.b16 %v7184, %v7176
          %v7489 = vpack.c.b16 %v7185, %v7177
          %v7490 = vpack.c.b16 %v7186, %v7178
          %v7491 = vpack.c.b16 %v7187, %v7179
          %v7492 = vpack.c.b16 %v7196, %v7188
          %v7493 = vpack.c.b16 %v7197, %v7189
          %v7494 = vpack.c.b16 %v7198, %v7190
          %v7495 = vpack.c.b16 %v7199, %v7191
          %v7496 = vpack.c.b16 %v7200, %v7192
          %v7497 = vpack.c.b16 %v7201, %v7193
          %v7498 = vpack.c.b16 %v7202, %v7194
          %v7499 = vpack.c.b16 %v7203, %v7195
          %v7500 = vpack.c.b16 %v7212, %v7204
          %v7501 = vpack.c.b16 %v7213, %v7205
          %v7502 = vpack.c.b16 %v7214, %v7206
          %v7503 = vpack.c.b16 %v7215, %v7207
          %v7504 = vpack.c.b16 %v7216, %v7208
          %v7505 = vpack.c.b16 %v7217, %v7209
          %v7506 = vpack.c.b16 %v7218, %v7210
          %v7507 = vpack.c.b16 %v7219, %v7211
          %v7508 = vpack.c.b16 %v7228, %v7220
          %v7509 = vpack.c.b16 %v7229, %v7221
          %v7510 = vpack.c.b16 %v7230, %v7222
          %v7511 = vpack.c.b16 %v7231, %v7223
          %v7512 = vpack.c.b16 %v7232, %v7224
          %v7513 = vpack.c.b16 %v7233, %v7225
          %v7514 = vpack.c.b16 %v7234, %v7226
          %v7515 = vpack.c.b16 %v7235, %v7227
          %v7516 = vpack.c.b16 %v7244, %v7236
          %v7517 = vpack.c.b16 %v7245, %v7237
          %v7518 = vpack.c.b16 %v7246, %v7238
          %v7519 = vpack.c.b16 %v7247, %v7239
          %v7520 = vpack.c.b16 %v7248, %v7240
          %v7521 = vpack.c.b16 %v7249, %v7241
          %v7522 = vpack.c.b16 %v7250, %v7242
          %v7523 = vpack.c.b16 %v7251, %v7243
          %v7524 = vpack.c.b16 %v7260, %v7252
          %v7525 = vpack.c.b16 %v7261, %v7253
          %v7526 = vpack.c.b16 %v7262, %v7254
          %v7527 = vpack.c.b16 %v7263, %v7255
          %v7528 = vpack.c.b16 %v7264, %v7256
          %v7529 = vpack.c.b16 %v7265, %v7257
          %v7530 = vpack.c.b16 %v7266, %v7258
          %v7531 = vpack.c.b16 %v7267, %v7259
          %v7532 = vpack.c.b16 %v7276, %v7268
          %v7533 = vpack.c.b16 %v7277, %v7269
          %v7534 = vpack.c.b16 %v7278, %v7270
          %v7535 = vpack.c.b16 %v7279, %v7271
          %v7536 = vpack.c.b16 %v7280, %v7272
          %v7537 = vpack.c.b16 %v7281, %v7273
          %v7538 = vpack.c.b16 %v7282, %v7274
          %v7539 = vpack.c.b16 %v7283, %v7275
          %7796 = vmatprep.subr.bf16.mxu0 0
          %7797 = vmatpush1.bf16.msra.mxu0 %v5819
          %7798 = vmatprep.subr.bf16.mxu0 0
          %7799 = vmatpush1.bf16.msra.mxu0 %v5818
          %7800 = vmatprep.subr.bf16.mxu0 0
          %7801 = vmatpush1.bf16.msra.mxu0 %v5817
          %7802 = vmatprep.subr.bf16.mxu0 0
          %7803 = vmatpush1.bf16.msra.mxu0 %v5816
          %7804 = vmatprep.subr.bf16.mxu0 0
          %7805 = vmatpush1.bf16.msra.mxu0 %v5815
          %7806 = vmatprep.subr.bf16.mxu0 0
          %7807 = vmatpush1.bf16.msra.mxu0 %v5814
          %7808 = vmatprep.subr.bf16.mxu0 0
          %7809 = vmatpush1.bf16.msra.mxu0 %v5813
          %7810 = vmatprep.subr.bf16.mxu0 0
          %7811 = vmatpush1.bf16.msra.mxu0 %v5812
          %7812 = vmatprep.subr.bf16.mxu0 0
          %7813 = vmatpush2.bf16.msra.mxu0 %v5827
          %7814 = vmatprep.subr.bf16.mxu0 0
          %7815 = vmatpush2.bf16.msra.mxu0 %v5826
          %7816 = vmatprep.subr.bf16.mxu0 0
          %7817 = vmatpush2.bf16.msra.mxu0 %v5825
          %7818 = vmatprep.subr.bf16.mxu0 0
          %7819 = vmatpush2.bf16.msra.mxu0 %v5824
          %7820 = vmatprep.subr.bf16.mxu0 0
          %7821 = vmatpush2.bf16.msra.mxu0 %v5823
          %7822 = vmatprep.subr.bf16.mxu0 0
          %7823 = vmatpush2.bf16.msra.mxu0 %v5822
          %7824 = vmatprep.subr.bf16.mxu0 0
          %7825 = vmatpush2.bf16.msra.mxu0 %v5821
          %7826 = vmatprep.subr.bf16.mxu0 0
          %7827 = vmatpush2.bf16.msra.mxu0 %v5820
          %7828 = vmatprep.mubr.bf16.mxu0 %v7285
          %7829 = vmatmul.mubr.bf16.gmra.mxu0 %v7284
          %v7830 = vpop.f32.mrf.mxu0
          %v7831 = vadd.f32 %v6199, %v7830
          %v7832 = vpop.f32.mrf.mxu0
          %v7833 = vpop.f32.mrf.mxu0
          %v7834 = vadd.f32 %v6204, %v7833
          %v7835 = vpop.f32.mrf.mxu0
          %7836 = vmatprep.mubr.bf16.mxu0 %v7293
          %7837 = vmatmul.mubr.bf16.gmra.mxu0 %v7292
          %v7838 = vpop.f32.mrf.mxu0
          %v7839 = vadd.f32 %v6209, %v7838
          %v7840 = vpop.f32.mrf.mxu0
          %v7841 = vpop.f32.mrf.mxu0
          %v7842 = vadd.f32 %v6214, %v7841
          %v7843 = vpop.f32.mrf.mxu0
          %7844 = vmatprep.mubr.bf16.mxu0 %v7301
          %7845 = vmatmul.mubr.bf16.gmra.mxu0 %v7300
          %v7846 = vpop.f32.mrf.mxu0
          %v7847 = vadd.f32 %v6219, %v7846
          %v7848 = vpop.f32.mrf.mxu0
          %v7849 = vpop.f32.mrf.mxu0
          %v7850 = vadd.f32 %v6224, %v7849
          %v7851 = vpop.f32.mrf.mxu0
          %7852 = vmatprep.mubr.bf16.mxu0 %v7309
          %7853 = vmatmul.mubr.bf16.gmra.mxu0 %v7308
          %v7854 = vpop.f32.mrf.mxu0
          %v7855 = vadd.f32 %v6229, %v7854
          %v7856 = vpop.f32.mrf.mxu0
          %v7857 = vpop.f32.mrf.mxu0
          %v7858 = vadd.f32 %v6234, %v7857
          %v7859 = vpop.f32.mrf.mxu0
          %7860 = vmatprep.mubr.bf16.mxu0 %v7317
          %7861 = vmatmul.mubr.bf16.gmra.mxu0 %v7316
          %v7862 = vpop.f32.mrf.mxu0
          %v7863 = vadd.f32 %v6239, %v7862
          %v7864 = vpop.f32.mrf.mxu0
          %v7865 = vpop.f32.mrf.mxu0
          %v7866 = vadd.f32 %v6244, %v7865
          %v7867 = vpop.f32.mrf.mxu0
          %7868 = vmatprep.mubr.bf16.mxu0 %v7325
          %7869 = vmatmul.mubr.bf16.gmra.mxu0 %v7324
          %v7870 = vpop.f32.mrf.mxu0
          %v7871 = vadd.f32 %v6249, %v7870
          %v7872 = vpop.f32.mrf.mxu0
          %v7873 = vpop.f32.mrf.mxu0
          %v7874 = vadd.f32 %v6254, %v7873
          %v7875 = vpop.f32.mrf.mxu0
          %7876 = vmatprep.mubr.bf16.mxu0 %v7333
          %7877 = vmatmul.mubr.bf16.gmra.mxu0 %v7332
          %v7878 = vpop.f32.mrf.mxu0
          %v7879 = vadd.f32 %v6259, %v7878
          %v7880 = vpop.f32.mrf.mxu0
          %v7881 = vpop.f32.mrf.mxu0
          %v7882 = vadd.f32 %v6264, %v7881
          %v7883 = vpop.f32.mrf.mxu0
          %7884 = vmatprep.mubr.bf16.mxu0 %v7341
          %7885 = vmatmul.mubr.bf16.gmra.mxu0 %v7340
          %v7886 = vpop.f32.mrf.mxu0
          %v7887 = vadd.f32 %v6269, %v7886
          %v7888 = vpop.f32.mrf.mxu0
          %v7889 = vpop.f32.mrf.mxu0
          %v7890 = vadd.f32 %v6274, %v7889
          %v7891 = vpop.f32.mrf.mxu0
          %7892 = vmatprep.mubr.bf16.mxu0 %v7349
          %7893 = vmatmul.mubr.bf16.gmra.mxu0 %v7348
          %v7894 = vpop.f32.mrf.mxu0
          %v7895 = vadd.f32 %v6279, %v7894
          %v7896 = vpop.f32.mrf.mxu0
          %v7897 = vpop.f32.mrf.mxu0
          %v7898 = vadd.f32 %v6284, %v7897
          %v7899 = vpop.f32.mrf.mxu0
          %7900 = vmatprep.mubr.bf16.mxu0 %v7357
          %7901 = vmatmul.mubr.bf16.gmra.mxu0 %v7356
          %v7902 = vpop.f32.mrf.mxu0
          %v7903 = vadd.f32 %v6289, %v7902
          %v7904 = vpop.f32.mrf.mxu0
          %v7905 = vpop.f32.mrf.mxu0
          %v7906 = vadd.f32 %v6294, %v7905
          %v7907 = vpop.f32.mrf.mxu0
          %7908 = vmatprep.mubr.bf16.mxu0 %v7365
          %7909 = vmatmul.mubr.bf16.gmra.mxu0 %v7364
          %v7910 = vpop.f32.mrf.mxu0
          %v7911 = vadd.f32 %v6299, %v7910
          %v7912 = vpop.f32.mrf.mxu0
          %v7913 = vpop.f32.mrf.mxu0
          %v7914 = vadd.f32 %v6304, %v7913
          %v7915 = vpop.f32.mrf.mxu0
          %7916 = vmatprep.mubr.bf16.mxu0 %v7373
          %7917 = vmatmul.mubr.bf16.gmra.mxu0 %v7372
          %v7918 = vpop.f32.mrf.mxu0
          %v7919 = vadd.f32 %v6309, %v7918
          %v7920 = vpop.f32.mrf.mxu0
          %v7921 = vpop.f32.mrf.mxu0
          %v7922 = vadd.f32 %v6314, %v7921
          %v7923 = vpop.f32.mrf.mxu0
          %7924 = vmatprep.mubr.bf16.mxu0 %v7381
          %7925 = vmatmul.mubr.bf16.gmra.mxu0 %v7380
          %v7926 = vpop.f32.mrf.mxu0
          %v7927 = vadd.f32 %v6319, %v7926
          %v7928 = vpop.f32.mrf.mxu0
          %v7929 = vpop.f32.mrf.mxu0
          %v7930 = vadd.f32 %v6324, %v7929
          %v7931 = vpop.f32.mrf.mxu0
          %7932 = vmatprep.mubr.bf16.mxu0 %v7389
          %7933 = vmatmul.mubr.bf16.gmra.mxu0 %v7388
          %v7934 = vpop.f32.mrf.mxu0
          %v7935 = vadd.f32 %v6329, %v7934
          %v7936 = vpop.f32.mrf.mxu0
          %v7937 = vpop.f32.mrf.mxu0
          %v7938 = vadd.f32 %v6334, %v7937
          %v7939 = vpop.f32.mrf.mxu0
          %7940 = vmatprep.mubr.bf16.mxu0 %v7397
          %7941 = vmatmul.mubr.bf16.gmra.mxu0 %v7396
          %v7942 = vpop.f32.mrf.mxu0
          %v7943 = vadd.f32 %v6339, %v7942
          %v7944 = vpop.f32.mrf.mxu0
          %v7945 = vpop.f32.mrf.mxu0
          %v7946 = vadd.f32 %v6344, %v7945
          %v7947 = vpop.f32.mrf.mxu0
          %7948 = vmatprep.mubr.bf16.mxu0 %v7405
          %7949 = vmatmul.mubr.bf16.gmra.mxu0 %v7404
          %v7950 = vpop.f32.mrf.mxu0
          %v7951 = vadd.f32 %v6349, %v7950
          %v7952 = vpop.f32.mrf.mxu0
          %v7953 = vpop.f32.mrf.mxu0
          %v7954 = vadd.f32 %v6354, %v7953
          %v7955 = vpop.f32.mrf.mxu0
          %7956 = vmatprep.mubr.bf16.mxu0 %v7413
          %7957 = vmatmul.mubr.bf16.gmra.mxu0 %v7412
          %v7958 = vpop.f32.mrf.mxu0
          %v7959 = vadd.f32 %v6359, %v7958
          %v7960 = vpop.f32.mrf.mxu0
          %v7961 = vpop.f32.mrf.mxu0
          %v7962 = vadd.f32 %v6364, %v7961
          %v7963 = vpop.f32.mrf.mxu0
          %7964 = vmatprep.mubr.bf16.mxu0 %v7421
          %7965 = vmatmul.mubr.bf16.gmra.mxu0 %v7420
          %v7966 = vpop.f32.mrf.mxu0
          %v7967 = vadd.f32 %v6369, %v7966
          %v7968 = vpop.f32.mrf.mxu0
          %v7969 = vpop.f32.mrf.mxu0
          %v7970 = vadd.f32 %v6374, %v7969
          %v7971 = vpop.f32.mrf.mxu0
          %7972 = vmatprep.mubr.bf16.mxu0 %v7429
          %7973 = vmatmul.mubr.bf16.gmra.mxu0 %v7428
          %v7974 = vpop.f32.mrf.mxu0
          %v7975 = vadd.f32 %v6379, %v7974
          %v7976 = vpop.f32.mrf.mxu0
          %v7977 = vpop.f32.mrf.mxu0
          %v7978 = vadd.f32 %v6384, %v7977
          %v7979 = vpop.f32.mrf.mxu0
          %7980 = vmatprep.mubr.bf16.mxu0 %v7437
          %7981 = vmatmul.mubr.bf16.gmra.mxu0 %v7436
          %v7982 = vpop.f32.mrf.mxu0
          %v7983 = vadd.f32 %v6389, %v7982
          %v7984 = vpop.f32.mrf.mxu0
          %v7985 = vpop.f32.mrf.mxu0
          %v7986 = vadd.f32 %v6394, %v7985
          %v7987 = vpop.f32.mrf.mxu0
          %7988 = vmatprep.mubr.bf16.mxu0 %v7445
          %7989 = vmatmul.mubr.bf16.gmra.mxu0 %v7444
          %v7990 = vpop.f32.mrf.mxu0
          %v7991 = vadd.f32 %v6399, %v7990
          %v7992 = vpop.f32.mrf.mxu0
          %v7993 = vpop.f32.mrf.mxu0
          %v7994 = vadd.f32 %v6404, %v7993
          %v7995 = vpop.f32.mrf.mxu0
          %7996 = vmatprep.mubr.bf16.mxu0 %v7453
          %7997 = vmatmul.mubr.bf16.gmra.mxu0 %v7452
          %v7998 = vpop.f32.mrf.mxu0
          %v7999 = vadd.f32 %v6409, %v7998
          %v8000 = vpop.f32.mrf.mxu0
          %v8001 = vpop.f32.mrf.mxu0
          %v8002 = vadd.f32 %v6414, %v8001
          %v8003 = vpop.f32.mrf.mxu0
          %8004 = vmatprep.mubr.bf16.mxu0 %v7461
          %8005 = vmatmul.mubr.bf16.gmra.mxu0 %v7460
          %v8006 = vpop.f32.mrf.mxu0
          %v8007 = vadd.f32 %v6419, %v8006
          %v8008 = vpop.f32.mrf.mxu0
          %v8009 = vpop.f32.mrf.mxu0
          %v8010 = vadd.f32 %v6424, %v8009
          %v8011 = vpop.f32.mrf.mxu0
          %8012 = vmatprep.mubr.bf16.mxu0 %v7469
          %8013 = vmatmul.mubr.bf16.gmra.mxu0 %v7468
          %v8014 = vpop.f32.mrf.mxu0
          %v8015 = vadd.f32 %v6429, %v8014
          %v8016 = vpop.f32.mrf.mxu0
          %v8017 = vpop.f32.mrf.mxu0
          %v8018 = vadd.f32 %v6434, %v8017
          %v8019 = vpop.f32.mrf.mxu0
          %8020 = vmatprep.mubr.bf16.mxu0 %v7477
          %8021 = vmatmul.mubr.bf16.gmra.mxu0 %v7476
          %v8022 = vpop.f32.mrf.mxu0
          %v8023 = vadd.f32 %v6439, %v8022
          %v8024 = vpop.f32.mrf.mxu0
          %v8025 = vpop.f32.mrf.mxu0
          %v8026 = vadd.f32 %v6444, %v8025
          %v8027 = vpop.f32.mrf.mxu0
          %8028 = vmatprep.mubr.bf16.mxu0 %v7485
          %8029 = vmatmul.mubr.bf16.gmra.mxu0 %v7484
          %v8030 = vpop.f32.mrf.mxu0
          %v8031 = vadd.f32 %v6449, %v8030
          %v8032 = vpop.f32.mrf.mxu0
          %v8033 = vpop.f32.mrf.mxu0
          %v8034 = vadd.f32 %v6454, %v8033
          %v8035 = vpop.f32.mrf.mxu0
          %8036 = vmatprep.mubr.bf16.mxu0 %v7493
          %8037 = vmatmul.mubr.bf16.gmra.mxu0 %v7492
          %v8038 = vpop.f32.mrf.mxu0
          %v8039 = vadd.f32 %v6459, %v8038
          %v8040 = vpop.f32.mrf.mxu0
          %v8041 = vpop.f32.mrf.mxu0
          %v8042 = vadd.f32 %v6464, %v8041
          %v8043 = vpop.f32.mrf.mxu0
          %8044 = vmatprep.mubr.bf16.mxu0 %v7501
          %8045 = vmatmul.mubr.bf16.gmra.mxu0 %v7500
          %v8046 = vpop.f32.mrf.mxu0
          %v8047 = vadd.f32 %v6469, %v8046
          %v8048 = vpop.f32.mrf.mxu0
          %v8049 = vpop.f32.mrf.mxu0
          %v8050 = vadd.f32 %v6474, %v8049
          %v8051 = vpop.f32.mrf.mxu0
          %8052 = vmatprep.mubr.bf16.mxu0 %v7509
          %8053 = vmatmul.mubr.bf16.gmra.mxu0 %v7508
          %v8054 = vpop.f32.mrf.mxu0
          %v8055 = vadd.f32 %v6479, %v8054
          %v8056 = vpop.f32.mrf.mxu0
          %v8057 = vpop.f32.mrf.mxu0
          %v8058 = vadd.f32 %v6484, %v8057
          %v8059 = vpop.f32.mrf.mxu0
          %8060 = vmatprep.mubr.bf16.mxu0 %v7517
          %8061 = vmatmul.mubr.bf16.gmra.mxu0 %v7516
          %v8062 = vpop.f32.mrf.mxu0
          %v8063 = vadd.f32 %v6489, %v8062
          %v8064 = vpop.f32.mrf.mxu0
          %v8065 = vpop.f32.mrf.mxu0
          %v8066 = vadd.f32 %v6494, %v8065
          %v8067 = vpop.f32.mrf.mxu0
          %8068 = vmatprep.mubr.bf16.mxu0 %v7525
          %8069 = vmatmul.mubr.bf16.gmra.mxu0 %v7524
          %v8070 = vpop.f32.mrf.mxu0
          %v8071 = vadd.f32 %v6499, %v8070
          %v8072 = vpop.f32.mrf.mxu0
          %v8073 = vpop.f32.mrf.mxu0
          %v8074 = vadd.f32 %v6504, %v8073
          %v8075 = vpop.f32.mrf.mxu0
          %8076 = vmatprep.mubr.bf16.mxu0 %v7533
          %8077 = vmatmul.mubr.bf16.gmra.mxu0 %v7532
          %v8078 = vpop.f32.mrf.mxu0
          %v8079 = vadd.f32 %v6509, %v8078
          %v8080 = vpop.f32.mrf.mxu0
          %v8081 = vpop.f32.mrf.mxu0
          %v8082 = vadd.f32 %v6514, %v8081
          %v8083 = vpop.f32.mrf.mxu0
          %8084 = vdwg.mxu0
          %8085 = vmatprep.subr.bf16.mxu0 0
          %8086 = vmatpush1.bf16.msra.mxu0 %v5835
          %8087 = vmatprep.subr.bf16.mxu0 0
          %8088 = vmatpush1.bf16.msra.mxu0 %v5834
          %8089 = vmatprep.subr.bf16.mxu0 0
          %8090 = vmatpush1.bf16.msra.mxu0 %v5833
          %8091 = vmatprep.subr.bf16.mxu0 0
          %8092 = vmatpush1.bf16.msra.mxu0 %v5832
          %8093 = vmatprep.subr.bf16.mxu0 0
          %8094 = vmatpush1.bf16.msra.mxu0 %v5831
          %8095 = vmatprep.subr.bf16.mxu0 0
          %8096 = vmatpush1.bf16.msra.mxu0 %v5830
          %8097 = vmatprep.subr.bf16.mxu0 0
          %8098 = vmatpush1.bf16.msra.mxu0 %v5829
          %8099 = vmatprep.subr.bf16.mxu0 0
          %8100 = vmatpush1.bf16.msra.mxu0 %v5828
          %8101 = vmatprep.subr.bf16.mxu0 0
          %8102 = vmatpush2.bf16.msra.mxu0 %v5843
          %8103 = vmatprep.subr.bf16.mxu0 0
          %8104 = vmatpush2.bf16.msra.mxu0 %v5842
          %8105 = vmatprep.subr.bf16.mxu0 0
          %8106 = vmatpush2.bf16.msra.mxu0 %v5841
          %8107 = vmatprep.subr.bf16.mxu0 0
          %8108 = vmatpush2.bf16.msra.mxu0 %v5840
          %8109 = vmatprep.subr.bf16.mxu0 0
          %8110 = vmatpush2.bf16.msra.mxu0 %v5839
          %8111 = vmatprep.subr.bf16.mxu0 0
          %8112 = vmatpush2.bf16.msra.mxu0 %v5838
          %8113 = vmatprep.subr.bf16.mxu0 0
          %8114 = vmatpush2.bf16.msra.mxu0 %v5837
          %8115 = vmatprep.subr.bf16.mxu0 0
          %8116 = vmatpush2.bf16.msra.mxu0 %v5836
          %8117 = vmatprep.mubr.bf16.mxu0 %v7287
          %8118 = vmatmul.mubr.bf16.gmra.mxu0 %v7286
          %v8119 = vpop.f32.mrf.mxu0
          %v8120 = vadd.f32 %v7831, %v8119
          %v8121 = vpop.f32.mrf.mxu0
          %v8122 = vpop.f32.mrf.mxu0
          %v8123 = vadd.f32 %v7834, %v8122
          %v8124 = vpop.f32.mrf.mxu0
          %8125 = vmatprep.mubr.bf16.mxu0 %v7295
          %8126 = vmatmul.mubr.bf16.gmra.mxu0 %v7294
          %v8127 = vpop.f32.mrf.mxu0
          %v8128 = vadd.f32 %v7839, %v8127
          %v8129 = vpop.f32.mrf.mxu0
          %v8130 = vpop.f32.mrf.mxu0
          %v8131 = vadd.f32 %v7842, %v8130
          %v8132 = vpop.f32.mrf.mxu0
          %8133 = vmatprep.mubr.bf16.mxu0 %v7303
          %8134 = vmatmul.mubr.bf16.gmra.mxu0 %v7302
          %v8135 = vpop.f32.mrf.mxu0
          %v8136 = vadd.f32 %v7847, %v8135
          %v8137 = vpop.f32.mrf.mxu0
          %v8138 = vpop.f32.mrf.mxu0
          %v8139 = vadd.f32 %v7850, %v8138
          %v8140 = vpop.f32.mrf.mxu0
          %8141 = vmatprep.mubr.bf16.mxu0 %v7311
          %8142 = vmatmul.mubr.bf16.gmra.mxu0 %v7310
          %v8143 = vpop.f32.mrf.mxu0
          %v8144 = vadd.f32 %v7855, %v8143
          %v8145 = vpop.f32.mrf.mxu0
          %v8146 = vpop.f32.mrf.mxu0
          %v8147 = vadd.f32 %v7858, %v8146
          %v8148 = vpop.f32.mrf.mxu0
          %8149 = vmatprep.mubr.bf16.mxu0 %v7319
          %8150 = vmatmul.mubr.bf16.gmra.mxu0 %v7318
          %v8151 = vpop.f32.mrf.mxu0
          %v8152 = vadd.f32 %v7863, %v8151
          %v8153 = vpop.f32.mrf.mxu0
          %v8154 = vpop.f32.mrf.mxu0
          %v8155 = vadd.f32 %v7866, %v8154
          %v8156 = vpop.f32.mrf.mxu0
          %8157 = vmatprep.mubr.bf16.mxu0 %v7327
          %8158 = vmatmul.mubr.bf16.gmra.mxu0 %v7326
          %v8159 = vpop.f32.mrf.mxu0
          %v8160 = vadd.f32 %v7871, %v8159
          %v8161 = vpop.f32.mrf.mxu0
          %v8162 = vpop.f32.mrf.mxu0
          %v8163 = vadd.f32 %v7874, %v8162
          %v8164 = vpop.f32.mrf.mxu0
          %8165 = vmatprep.mubr.bf16.mxu0 %v7335
          %8166 = vmatmul.mubr.bf16.gmra.mxu0 %v7334
          %v8167 = vpop.f32.mrf.mxu0
          %v8168 = vadd.f32 %v7879, %v8167
          %v8169 = vpop.f32.mrf.mxu0
          %v8170 = vpop.f32.mrf.mxu0
          %v8171 = vadd.f32 %v7882, %v8170
          %v8172 = vpop.f32.mrf.mxu0
          %8173 = vmatprep.mubr.bf16.mxu0 %v7343
          %8174 = vmatmul.mubr.bf16.gmra.mxu0 %v7342
          %v8175 = vpop.f32.mrf.mxu0
          %v8176 = vadd.f32 %v7887, %v8175
          %v8177 = vpop.f32.mrf.mxu0
          %v8178 = vpop.f32.mrf.mxu0
          %v8179 = vadd.f32 %v7890, %v8178
          %v8180 = vpop.f32.mrf.mxu0
          %8181 = vmatprep.mubr.bf16.mxu0 %v7351
          %8182 = vmatmul.mubr.bf16.gmra.mxu0 %v7350
          %v8183 = vpop.f32.mrf.mxu0
          %v8184 = vadd.f32 %v7895, %v8183
          %v8185 = vpop.f32.mrf.mxu0
          %v8186 = vpop.f32.mrf.mxu0
          %v8187 = vadd.f32 %v7898, %v8186
          %v8188 = vpop.f32.mrf.mxu0
          %8189 = vmatprep.mubr.bf16.mxu0 %v7359
          %8190 = vmatmul.mubr.bf16.gmra.mxu0 %v7358
          %v8191 = vpop.f32.mrf.mxu0
          %v8192 = vadd.f32 %v7903, %v8191
          %v8193 = vpop.f32.mrf.mxu0
          %v8194 = vpop.f32.mrf.mxu0
          %v8195 = vadd.f32 %v7906, %v8194
          %v8196 = vpop.f32.mrf.mxu0
          %8197 = vmatprep.mubr.bf16.mxu0 %v7367
          %8198 = vmatmul.mubr.bf16.gmra.mxu0 %v7366
          %v8199 = vpop.f32.mrf.mxu0
          %v8200 = vadd.f32 %v7911, %v8199
          %v8201 = vpop.f32.mrf.mxu0
          %v8202 = vpop.f32.mrf.mxu0
          %v8203 = vadd.f32 %v7914, %v8202
          %v8204 = vpop.f32.mrf.mxu0
          %8205 = vmatprep.mubr.bf16.mxu0 %v7375
          %8206 = vmatmul.mubr.bf16.gmra.mxu0 %v7374
          %v8207 = vpop.f32.mrf.mxu0
          %v8208 = vadd.f32 %v7919, %v8207
          %v8209 = vpop.f32.mrf.mxu0
          %v8210 = vpop.f32.mrf.mxu0
          %v8211 = vadd.f32 %v7922, %v8210
          %v8212 = vpop.f32.mrf.mxu0
          %8213 = vmatprep.mubr.bf16.mxu0 %v7383
          %8214 = vmatmul.mubr.bf16.gmra.mxu0 %v7382
          %v8215 = vpop.f32.mrf.mxu0
          %v8216 = vadd.f32 %v7927, %v8215
          %v8217 = vpop.f32.mrf.mxu0
          %v8218 = vpop.f32.mrf.mxu0
          %v8219 = vadd.f32 %v7930, %v8218
          %v8220 = vpop.f32.mrf.mxu0
          %8221 = vmatprep.mubr.bf16.mxu0 %v7391
          %8222 = vmatmul.mubr.bf16.gmra.mxu0 %v7390
          %v8223 = vpop.f32.mrf.mxu0
          %v8224 = vadd.f32 %v7935, %v8223
          %v8225 = vpop.f32.mrf.mxu0
          %v8226 = vpop.f32.mrf.mxu0
          %v8227 = vadd.f32 %v7938, %v8226
          %v8228 = vpop.f32.mrf.mxu0
          %8229 = vmatprep.mubr.bf16.mxu0 %v7399
          %8230 = vmatmul.mubr.bf16.gmra.mxu0 %v7398
          %v8231 = vpop.f32.mrf.mxu0
          %v8232 = vadd.f32 %v7943, %v8231
          %v8233 = vpop.f32.mrf.mxu0
          %v8234 = vpop.f32.mrf.mxu0
          %v8235 = vadd.f32 %v7946, %v8234
          %v8236 = vpop.f32.mrf.mxu0
          %8237 = vmatprep.mubr.bf16.mxu0 %v7407
          %8238 = vmatmul.mubr.bf16.gmra.mxu0 %v7406
          %v8239 = vpop.f32.mrf.mxu0
          %v8240 = vadd.f32 %v7951, %v8239
          %v8241 = vpop.f32.mrf.mxu0
          %v8242 = vpop.f32.mrf.mxu0
          %v8243 = vadd.f32 %v7954, %v8242
          %v8244 = vpop.f32.mrf.mxu0
          %8245 = vmatprep.mubr.bf16.mxu0 %v7415
          %8246 = vmatmul.mubr.bf16.gmra.mxu0 %v7414
          %v8247 = vpop.f32.mrf.mxu0
          %v8248 = vadd.f32 %v7959, %v8247
          %v8249 = vpop.f32.mrf.mxu0
          %v8250 = vpop.f32.mrf.mxu0
          %v8251 = vadd.f32 %v7962, %v8250
          %v8252 = vpop.f32.mrf.mxu0
          %8253 = vmatprep.mubr.bf16.mxu0 %v7423
          %8254 = vmatmul.mubr.bf16.gmra.mxu0 %v7422
          %v8255 = vpop.f32.mrf.mxu0
          %v8256 = vadd.f32 %v7967, %v8255
          %v8257 = vpop.f32.mrf.mxu0
          %v8258 = vpop.f32.mrf.mxu0
          %v8259 = vadd.f32 %v7970, %v8258
          %v8260 = vpop.f32.mrf.mxu0
          %8261 = vmatprep.mubr.bf16.mxu0 %v7431
          %8262 = vmatmul.mubr.bf16.gmra.mxu0 %v7430
          %v8263 = vpop.f32.mrf.mxu0
          %v8264 = vadd.f32 %v7975, %v8263
          %v8265 = vpop.f32.mrf.mxu0
          %v8266 = vpop.f32.mrf.mxu0
          %v8267 = vadd.f32 %v7978, %v8266
          %v8268 = vpop.f32.mrf.mxu0
          %8269 = vmatprep.mubr.bf16.mxu0 %v7439
          %8270 = vmatmul.mubr.bf16.gmra.mxu0 %v7438
          %v8271 = vpop.f32.mrf.mxu0
          %v8272 = vadd.f32 %v7983, %v8271
          %v8273 = vpop.f32.mrf.mxu0
          %v8274 = vpop.f32.mrf.mxu0
          %v8275 = vadd.f32 %v7986, %v8274
          %v8276 = vpop.f32.mrf.mxu0
          %8277 = vmatprep.mubr.bf16.mxu0 %v7447
          %8278 = vmatmul.mubr.bf16.gmra.mxu0 %v7446
          %v8279 = vpop.f32.mrf.mxu0
          %v8280 = vadd.f32 %v7991, %v8279
          %v8281 = vpop.f32.mrf.mxu0
          %v8282 = vpop.f32.mrf.mxu0
          %v8283 = vadd.f32 %v7994, %v8282
          %v8284 = vpop.f32.mrf.mxu0
          %8285 = vmatprep.mubr.bf16.mxu0 %v7455
          %8286 = vmatmul.mubr.bf16.gmra.mxu0 %v7454
          %v8287 = vpop.f32.mrf.mxu0
          %v8288 = vadd.f32 %v7999, %v8287
          %v8289 = vpop.f32.mrf.mxu0
          %v8290 = vpop.f32.mrf.mxu0
          %v8291 = vadd.f32 %v8002, %v8290
          %v8292 = vpop.f32.mrf.mxu0
          %8293 = vmatprep.mubr.bf16.mxu0 %v7463
          %8294 = vmatmul.mubr.bf16.gmra.mxu0 %v7462
          %v8295 = vpop.f32.mrf.mxu0
          %v8296 = vadd.f32 %v8007, %v8295
          %v8297 = vpop.f32.mrf.mxu0
          %v8298 = vpop.f32.mrf.mxu0
          %v8299 = vadd.f32 %v8010, %v8298
          %v8300 = vpop.f32.mrf.mxu0
          %8301 = vmatprep.mubr.bf16.mxu0 %v7471
          %8302 = vmatmul.mubr.bf16.gmra.mxu0 %v7470
          %v8303 = vpop.f32.mrf.mxu0
          %v8304 = vadd.f32 %v8015, %v8303
          %v8305 = vpop.f32.mrf.mxu0
          %v8306 = vpop.f32.mrf.mxu0
          %v8307 = vadd.f32 %v8018, %v8306
          %v8308 = vpop.f32.mrf.mxu0
          %8309 = vmatprep.mubr.bf16.mxu0 %v7479
          %8310 = vmatmul.mubr.bf16.gmra.mxu0 %v7478
          %v8311 = vpop.f32.mrf.mxu0
          %v8312 = vadd.f32 %v8023, %v8311
          %v8313 = vpop.f32.mrf.mxu0
          %v8314 = vpop.f32.mrf.mxu0
          %v8315 = vadd.f32 %v8026, %v8314
          %v8316 = vpop.f32.mrf.mxu0
          %8317 = vmatprep.mubr.bf16.mxu0 %v7487
          %8318 = vmatmul.mubr.bf16.gmra.mxu0 %v7486
          %v8319 = vpop.f32.mrf.mxu0
          %v8320 = vadd.f32 %v8031, %v8319
          %v8321 = vpop.f32.mrf.mxu0
          %v8322 = vpop.f32.mrf.mxu0
          %v8323 = vadd.f32 %v8034, %v8322
          %v8324 = vpop.f32.mrf.mxu0
          %8325 = vmatprep.mubr.bf16.mxu0 %v7495
          %8326 = vmatmul.mubr.bf16.gmra.mxu0 %v7494
          %v8327 = vpop.f32.mrf.mxu0
          %v8328 = vadd.f32 %v8039, %v8327
          %v8329 = vpop.f32.mrf.mxu0
          %v8330 = vpop.f32.mrf.mxu0
          %v8331 = vadd.f32 %v8042, %v8330
          %v8332 = vpop.f32.mrf.mxu0
          %8333 = vmatprep.mubr.bf16.mxu0 %v7503
          %8334 = vmatmul.mubr.bf16.gmra.mxu0 %v7502
          %v8335 = vpop.f32.mrf.mxu0
          %v8336 = vadd.f32 %v8047, %v8335
          %v8337 = vpop.f32.mrf.mxu0
          %v8338 = vpop.f32.mrf.mxu0
          %v8339 = vadd.f32 %v8050, %v8338
          %v8340 = vpop.f32.mrf.mxu0
          %8341 = vmatprep.mubr.bf16.mxu0 %v7511
          %8342 = vmatmul.mubr.bf16.gmra.mxu0 %v7510
          %v8343 = vpop.f32.mrf.mxu0
          %v8344 = vadd.f32 %v8055, %v8343
          %v8345 = vpop.f32.mrf.mxu0
          %v8346 = vpop.f32.mrf.mxu0
          %v8347 = vadd.f32 %v8058, %v8346
          %v8348 = vpop.f32.mrf.mxu0
          %8349 = vmatprep.mubr.bf16.mxu0 %v7519
          %8350 = vmatmul.mubr.bf16.gmra.mxu0 %v7518
          %v8351 = vpop.f32.mrf.mxu0
          %v8352 = vadd.f32 %v8063, %v8351
          %v8353 = vpop.f32.mrf.mxu0
          %v8354 = vpop.f32.mrf.mxu0
          %v8355 = vadd.f32 %v8066, %v8354
          %v8356 = vpop.f32.mrf.mxu0
          %8357 = vmatprep.mubr.bf16.mxu0 %v7527
          %8358 = vmatmul.mubr.bf16.gmra.mxu0 %v7526
          %v8359 = vpop.f32.mrf.mxu0
          %v8360 = vadd.f32 %v8071, %v8359
          %v8361 = vpop.f32.mrf.mxu0
          %v8362 = vpop.f32.mrf.mxu0
          %v8363 = vadd.f32 %v8074, %v8362
          %v8364 = vpop.f32.mrf.mxu0
          %8365 = vmatprep.mubr.bf16.mxu0 %v7535
          %8366 = vmatmul.mubr.bf16.gmra.mxu0 %v7534
          %v8367 = vpop.f32.mrf.mxu0
          %v8368 = vadd.f32 %v8079, %v8367
          %v8369 = vpop.f32.mrf.mxu0
          %v8370 = vpop.f32.mrf.mxu0
          %v8371 = vadd.f32 %v8082, %v8370
          %v8372 = vpop.f32.mrf.mxu0
          %8373 = vdwg.mxu0
          %8374 = vmatprep.subr.bf16.mxu0 0
          %8375 = vmatpush1.bf16.msra.mxu0 %v5851
          %8376 = vmatprep.subr.bf16.mxu0 0
          %8377 = vmatpush1.bf16.msra.mxu0 %v5850
          %8378 = vmatprep.subr.bf16.mxu0 0
          %8379 = vmatpush1.bf16.msra.mxu0 %v5849
          %8380 = vmatprep.subr.bf16.mxu0 0
          %8381 = vmatpush1.bf16.msra.mxu0 %v5848
          %8382 = vmatprep.subr.bf16.mxu0 0
          %8383 = vmatpush1.bf16.msra.mxu0 %v5847
          %8384 = vmatprep.subr.bf16.mxu0 0
          %8385 = vmatpush1.bf16.msra.mxu0 %v5846
          %8386 = vmatprep.subr.bf16.mxu0 0
          %8387 = vmatpush1.bf16.msra.mxu0 %v5845
          %8388 = vmatprep.subr.bf16.mxu0 0
          %8389 = vmatpush1.bf16.msra.mxu0 %v5844
          %8390 = vmatprep.subr.bf16.mxu0 0
          %8391 = vmatpush2.bf16.msra.mxu0 %v5859
          %8392 = vmatprep.subr.bf16.mxu0 0
          %8393 = vmatpush2.bf16.msra.mxu0 %v5858
          %8394 = vmatprep.subr.bf16.mxu0 0
          %8395 = vmatpush2.bf16.msra.mxu0 %v5857
          %8396 = vmatprep.subr.bf16.mxu0 0
          %8397 = vmatpush2.bf16.msra.mxu0 %v5856
          %8398 = vmatprep.subr.bf16.mxu0 0
          %8399 = vmatpush2.bf16.msra.mxu0 %v5855
          %8400 = vmatprep.subr.bf16.mxu0 0
          %8401 = vmatpush2.bf16.msra.mxu0 %v5854
          %8402 = vmatprep.subr.bf16.mxu0 0
          %8403 = vmatpush2.bf16.msra.mxu0 %v5853
          %8404 = vmatprep.subr.bf16.mxu0 0
          %8405 = vmatpush2.bf16.msra.mxu0 %v5852
          %8406 = vmatprep.mubr.bf16.mxu0 %v7289
          %8407 = vmatmul.mubr.bf16.gmra.mxu0 %v7288
          %v8408 = vpop.f32.mrf.mxu0
          %v8409 = vadd.f32 %v8120, %v8408
          %v8410 = vpop.f32.mrf.mxu0
          %v8411 = vpop.f32.mrf.mxu0
          %v8412 = vadd.f32 %v8123, %v8411
          %v8413 = vpop.f32.mrf.mxu0
          %8414 = vmatprep.mubr.bf16.mxu0 %v7297
          %8415 = vmatmul.mubr.bf16.gmra.mxu0 %v7296
          %v8416 = vpop.f32.mrf.mxu0
          %v8417 = vadd.f32 %v8128, %v8416
          %v8418 = vpop.f32.mrf.mxu0
          %v8419 = vpop.f32.mrf.mxu0
          %v8420 = vadd.f32 %v8131, %v8419
          %v8421 = vpop.f32.mrf.mxu0
          %8422 = vmatprep.mubr.bf16.mxu0 %v7305
          %8423 = vmatmul.mubr.bf16.gmra.mxu0 %v7304
          %v8424 = vpop.f32.mrf.mxu0
          %v8425 = vadd.f32 %v8136, %v8424
          %v8426 = vpop.f32.mrf.mxu0
          %v8427 = vpop.f32.mrf.mxu0
          %v8428 = vadd.f32 %v8139, %v8427
          %v8429 = vpop.f32.mrf.mxu0
          %8430 = vmatprep.mubr.bf16.mxu0 %v7313
          %8431 = vmatmul.mubr.bf16.gmra.mxu0 %v7312
          %v8432 = vpop.f32.mrf.mxu0
          %v8433 = vadd.f32 %v8144, %v8432
          %v8434 = vpop.f32.mrf.mxu0
          %v8435 = vpop.f32.mrf.mxu0
          %v8436 = vadd.f32 %v8147, %v8435
          %v8437 = vpop.f32.mrf.mxu0
          %8438 = vmatprep.mubr.bf16.mxu0 %v7321
          %8439 = vmatmul.mubr.bf16.gmra.mxu0 %v7320
          %v8440 = vpop.f32.mrf.mxu0
          %v8441 = vadd.f32 %v8152, %v8440
          %v8442 = vpop.f32.mrf.mxu0
          %v8443 = vpop.f32.mrf.mxu0
          %v8444 = vadd.f32 %v8155, %v8443
          %v8445 = vpop.f32.mrf.mxu0
          %8446 = vmatprep.mubr.bf16.mxu0 %v7329
          %8447 = vmatmul.mubr.bf16.gmra.mxu0 %v7328
          %v8448 = vpop.f32.mrf.mxu0
          %v8449 = vadd.f32 %v8160, %v8448
          %v8450 = vpop.f32.mrf.mxu0
          %v8451 = vpop.f32.mrf.mxu0
          %v8452 = vadd.f32 %v8163, %v8451
          %v8453 = vpop.f32.mrf.mxu0
          %8454 = vmatprep.mubr.bf16.mxu0 %v7337
          %8455 = vmatmul.mubr.bf16.gmra.mxu0 %v7336
          %v8456 = vpop.f32.mrf.mxu0
          %v8457 = vadd.f32 %v8168, %v8456
          %v8458 = vpop.f32.mrf.mxu0
          %v8459 = vpop.f32.mrf.mxu0
          %v8460 = vadd.f32 %v8171, %v8459
          %v8461 = vpop.f32.mrf.mxu0
          %8462 = vmatprep.mubr.bf16.mxu0 %v7345
          %8463 = vmatmul.mubr.bf16.gmra.mxu0 %v7344
          %v8464 = vpop.f32.mrf.mxu0
          %v8465 = vadd.f32 %v8176, %v8464
          %v8466 = vpop.f32.mrf.mxu0
          %v8467 = vpop.f32.mrf.mxu0
          %v8468 = vadd.f32 %v8179, %v8467
          %v8469 = vpop.f32.mrf.mxu0
          %8470 = vmatprep.mubr.bf16.mxu0 %v7353
          %8471 = vmatmul.mubr.bf16.gmra.mxu0 %v7352
          %v8472 = vpop.f32.mrf.mxu0
          %v8473 = vadd.f32 %v8184, %v8472
          %v8474 = vpop.f32.mrf.mxu0
          %v8475 = vpop.f32.mrf.mxu0
          %v8476 = vadd.f32 %v8187, %v8475
          %v8477 = vpop.f32.mrf.mxu0
          %8478 = vmatprep.mubr.bf16.mxu0 %v7361
          %8479 = vmatmul.mubr.bf16.gmra.mxu0 %v7360
          %v8480 = vpop.f32.mrf.mxu0
          %v8481 = vadd.f32 %v8192, %v8480
          %v8482 = vpop.f32.mrf.mxu0
          %v8483 = vpop.f32.mrf.mxu0
          %v8484 = vadd.f32 %v8195, %v8483
          %v8485 = vpop.f32.mrf.mxu0
          %8486 = vmatprep.mubr.bf16.mxu0 %v7369
          %8487 = vmatmul.mubr.bf16.gmra.mxu0 %v7368
          %v8488 = vpop.f32.mrf.mxu0
          %v8489 = vadd.f32 %v8200, %v8488
          %v8490 = vpop.f32.mrf.mxu0
          %v8491 = vpop.f32.mrf.mxu0
          %v8492 = vadd.f32 %v8203, %v8491
          %v8493 = vpop.f32.mrf.mxu0
          %8494 = vmatprep.mubr.bf16.mxu0 %v7377
          %8495 = vmatmul.mubr.bf16.gmra.mxu0 %v7376
          %v8496 = vpop.f32.mrf.mxu0
          %v8497 = vadd.f32 %v8208, %v8496
          %v8498 = vpop.f32.mrf.mxu0
          %v8499 = vpop.f32.mrf.mxu0
          %v8500 = vadd.f32 %v8211, %v8499
          %v8501 = vpop.f32.mrf.mxu0
          %8502 = vmatprep.mubr.bf16.mxu0 %v7385
          %8503 = vmatmul.mubr.bf16.gmra.mxu0 %v7384
          %v8504 = vpop.f32.mrf.mxu0
          %v8505 = vadd.f32 %v8216, %v8504
          %v8506 = vpop.f32.mrf.mxu0
          %v8507 = vpop.f32.mrf.mxu0
          %v8508 = vadd.f32 %v8219, %v8507
          %v8509 = vpop.f32.mrf.mxu0
          %8510 = vmatprep.mubr.bf16.mxu0 %v7393
          %8511 = vmatmul.mubr.bf16.gmra.mxu0 %v7392
          %v8512 = vpop.f32.mrf.mxu0
          %v8513 = vadd.f32 %v8224, %v8512
          %v8514 = vpop.f32.mrf.mxu0
          %v8515 = vpop.f32.mrf.mxu0
          %v8516 = vadd.f32 %v8227, %v8515
          %v8517 = vpop.f32.mrf.mxu0
          %8518 = vmatprep.mubr.bf16.mxu0 %v7401
          %8519 = vmatmul.mubr.bf16.gmra.mxu0 %v7400
          %v8520 = vpop.f32.mrf.mxu0
          %v8521 = vadd.f32 %v8232, %v8520
          %v8522 = vpop.f32.mrf.mxu0
          %v8523 = vpop.f32.mrf.mxu0
          %v8524 = vadd.f32 %v8235, %v8523
          %v8525 = vpop.f32.mrf.mxu0
          %8526 = vmatprep.mubr.bf16.mxu0 %v7409
          %8527 = vmatmul.mubr.bf16.gmra.mxu0 %v7408
          %v8528 = vpop.f32.mrf.mxu0
          %v8529 = vadd.f32 %v8240, %v8528
          %v8530 = vpop.f32.mrf.mxu0
          %v8531 = vpop.f32.mrf.mxu0
          %v8532 = vadd.f32 %v8243, %v8531
          %v8533 = vpop.f32.mrf.mxu0
          %8534 = vmatprep.mubr.bf16.mxu0 %v7417
          %8535 = vmatmul.mubr.bf16.gmra.mxu0 %v7416
          %v8536 = vpop.f32.mrf.mxu0
          %v8537 = vadd.f32 %v8248, %v8536
          %v8538 = vpop.f32.mrf.mxu0
          %v8539 = vpop.f32.mrf.mxu0
          %v8540 = vadd.f32 %v8251, %v8539
          %v8541 = vpop.f32.mrf.mxu0
          %8542 = vmatprep.mubr.bf16.mxu0 %v7425
          %8543 = vmatmul.mubr.bf16.gmra.mxu0 %v7424
          %v8544 = vpop.f32.mrf.mxu0
          %v8545 = vadd.f32 %v8256, %v8544
          %v8546 = vpop.f32.mrf.mxu0
          %v8547 = vpop.f32.mrf.mxu0
          %v8548 = vadd.f32 %v8259, %v8547
          %v8549 = vpop.f32.mrf.mxu0
          %8550 = vmatprep.mubr.bf16.mxu0 %v7433
          %8551 = vmatmul.mubr.bf16.gmra.mxu0 %v7432
          %v8552 = vpop.f32.mrf.mxu0
          %v8553 = vadd.f32 %v8264, %v8552
          %v8554 = vpop.f32.mrf.mxu0
          %v8555 = vpop.f32.mrf.mxu0
          %v8556 = vadd.f32 %v8267, %v8555
          %v8557 = vpop.f32.mrf.mxu0
          %8558 = vmatprep.mubr.bf16.mxu0 %v7441
          %8559 = vmatmul.mubr.bf16.gmra.mxu0 %v7440
          %v8560 = vpop.f32.mrf.mxu0
          %v8561 = vadd.f32 %v8272, %v8560
          %v8562 = vpop.f32.mrf.mxu0
          %v8563 = vpop.f32.mrf.mxu0
          %v8564 = vadd.f32 %v8275, %v8563
          %v8565 = vpop.f32.mrf.mxu0
          %8566 = vmatprep.mubr.bf16.mxu0 %v7449
          %8567 = vmatmul.mubr.bf16.gmra.mxu0 %v7448
          %v8568 = vpop.f32.mrf.mxu0
          %v8569 = vadd.f32 %v8280, %v8568
          %v8570 = vpop.f32.mrf.mxu0
          %v8571 = vpop.f32.mrf.mxu0
          %v8572 = vadd.f32 %v8283, %v8571
          %v8573 = vpop.f32.mrf.mxu0
          %8574 = vmatprep.mubr.bf16.mxu0 %v7457
          %8575 = vmatmul.mubr.bf16.gmra.mxu0 %v7456
          %v8576 = vpop.f32.mrf.mxu0
          %v8577 = vadd.f32 %v8288, %v8576
          %v8578 = vpop.f32.mrf.mxu0
          %v8579 = vpop.f32.mrf.mxu0
          %v8580 = vadd.f32 %v8291, %v8579
          %v8581 = vpop.f32.mrf.mxu0
          %8582 = vmatprep.mubr.bf16.mxu0 %v7465
          %8583 = vmatmul.mubr.bf16.gmra.mxu0 %v7464
          %v8584 = vpop.f32.mrf.mxu0
          %v8585 = vadd.f32 %v8296, %v8584
          %v8586 = vpop.f32.mrf.mxu0
          %v8587 = vpop.f32.mrf.mxu0
          %v8588 = vadd.f32 %v8299, %v8587
          %v8589 = vpop.f32.mrf.mxu0
          %8590 = vmatprep.mubr.bf16.mxu0 %v7473
          %8591 = vmatmul.mubr.bf16.gmra.mxu0 %v7472
          %v8592 = vpop.f32.mrf.mxu0
          %v8593 = vadd.f32 %v8304, %v8592
          %v8594 = vpop.f32.mrf.mxu0
          %v8595 = vpop.f32.mrf.mxu0
          %v8596 = vadd.f32 %v8307, %v8595
          %v8597 = vpop.f32.mrf.mxu0
          %8598 = vmatprep.mubr.bf16.mxu0 %v7481
          %8599 = vmatmul.mubr.bf16.gmra.mxu0 %v7480
          %v8600 = vpop.f32.mrf.mxu0
          %v8601 = vadd.f32 %v8312, %v8600
          %v8602 = vpop.f32.mrf.mxu0
          %v8603 = vpop.f32.mrf.mxu0
          %v8604 = vadd.f32 %v8315, %v8603
          %v8605 = vpop.f32.mrf.mxu0
          %8606 = vmatprep.mubr.bf16.mxu0 %v7489
          %8607 = vmatmul.mubr.bf16.gmra.mxu0 %v7488
          %v8608 = vpop.f32.mrf.mxu0
          %v8609 = vadd.f32 %v8320, %v8608
          %v8610 = vpop.f32.mrf.mxu0
          %v8611 = vpop.f32.mrf.mxu0
          %v8612 = vadd.f32 %v8323, %v8611
          %v8613 = vpop.f32.mrf.mxu0
          %8614 = vmatprep.mubr.bf16.mxu0 %v7497
          %8615 = vmatmul.mubr.bf16.gmra.mxu0 %v7496
          %v8616 = vpop.f32.mrf.mxu0
          %v8617 = vadd.f32 %v8328, %v8616
          %v8618 = vpop.f32.mrf.mxu0
          %v8619 = vpop.f32.mrf.mxu0
          %v8620 = vadd.f32 %v8331, %v8619
          %v8621 = vpop.f32.mrf.mxu0
          %8622 = vmatprep.mubr.bf16.mxu0 %v7505
          %8623 = vmatmul.mubr.bf16.gmra.mxu0 %v7504
          %v8624 = vpop.f32.mrf.mxu0
          %v8625 = vadd.f32 %v8336, %v8624
          %v8626 = vpop.f32.mrf.mxu0
          %v8627 = vpop.f32.mrf.mxu0
          %v8628 = vadd.f32 %v8339, %v8627
          %v8629 = vpop.f32.mrf.mxu0
          %8630 = vmatprep.mubr.bf16.mxu0 %v7513
          %8631 = vmatmul.mubr.bf16.gmra.mxu0 %v7512
          %v8632 = vpop.f32.mrf.mxu0
          %v8633 = vadd.f32 %v8344, %v8632
          %v8634 = vpop.f32.mrf.mxu0
          %v8635 = vpop.f32.mrf.mxu0
          %v8636 = vadd.f32 %v8347, %v8635
          %v8637 = vpop.f32.mrf.mxu0
          %8638 = vmatprep.mubr.bf16.mxu0 %v7521
          %8639 = vmatmul.mubr.bf16.gmra.mxu0 %v7520
          %v8640 = vpop.f32.mrf.mxu0
          %v8641 = vadd.f32 %v8352, %v8640
          %v8642 = vpop.f32.mrf.mxu0
          %v8643 = vpop.f32.mrf.mxu0
          %v8644 = vadd.f32 %v8355, %v8643
          %v8645 = vpop.f32.mrf.mxu0
          %8646 = vmatprep.mubr.bf16.mxu0 %v7529
          %8647 = vmatmul.mubr.bf16.gmra.mxu0 %v7528
          %v8648 = vpop.f32.mrf.mxu0
          %v8649 = vadd.f32 %v8360, %v8648
          %v8650 = vpop.f32.mrf.mxu0
          %v8651 = vpop.f32.mrf.mxu0
          %v8652 = vadd.f32 %v8363, %v8651
          %v8653 = vpop.f32.mrf.mxu0
          %8654 = vmatprep.mubr.bf16.mxu0 %v7537
          %8655 = vmatmul.mubr.bf16.gmra.mxu0 %v7536
          %v8656 = vpop.f32.mrf.mxu0
          %v8657 = vadd.f32 %v8368, %v8656
          %v8658 = vpop.f32.mrf.mxu0
          %v8659 = vpop.f32.mrf.mxu0
          %v8660 = vadd.f32 %v8371, %v8659
          %v8661 = vpop.f32.mrf.mxu0
          %8662 = vdwg.mxu0
          %8663 = vmatprep.subr.bf16.mxu0 0
          %8664 = vmatpush1.bf16.msra.mxu0 %v5867
          %8665 = vmatprep.subr.bf16.mxu0 0
          %8666 = vmatpush1.bf16.msra.mxu0 %v5866
          %8667 = vmatprep.subr.bf16.mxu0 0
          %8668 = vmatpush1.bf16.msra.mxu0 %v5865
          %8669 = vmatprep.subr.bf16.mxu0 0
          %8670 = vmatpush1.bf16.msra.mxu0 %v5864
          %8671 = vmatprep.subr.bf16.mxu0 0
          %8672 = vmatpush1.bf16.msra.mxu0 %v5863
          %8673 = vmatprep.subr.bf16.mxu0 0
          %8674 = vmatpush1.bf16.msra.mxu0 %v5862
          %8675 = vmatprep.subr.bf16.mxu0 0
          %8676 = vmatpush1.bf16.msra.mxu0 %v5861
          %8677 = vmatprep.subr.bf16.mxu0 0
          %8678 = vmatpush1.bf16.msra.mxu0 %v5860
          %8679 = vmatprep.subr.bf16.mxu0 0
          %8680 = vmatpush2.bf16.msra.mxu0 %v5875
          %8681 = vmatprep.subr.bf16.mxu0 0
          %8682 = vmatpush2.bf16.msra.mxu0 %v5874
          %8683 = vmatprep.subr.bf16.mxu0 0
          %8684 = vmatpush2.bf16.msra.mxu0 %v5873
          %8685 = vmatprep.subr.bf16.mxu0 0
          %8686 = vmatpush2.bf16.msra.mxu0 %v5872
          %8687 = vmatprep.subr.bf16.mxu0 0
          %8688 = vmatpush2.bf16.msra.mxu0 %v5871
          %8689 = vmatprep.subr.bf16.mxu0 0
          %8690 = vmatpush2.bf16.msra.mxu0 %v5870
          %8691 = vmatprep.subr.bf16.mxu0 0
          %8692 = vmatpush2.bf16.msra.mxu0 %v5869
          %8693 = vmatprep.subr.bf16.mxu0 0
          %8694 = vmatpush2.bf16.msra.mxu0 %v5868
          %8695 = vmatprep.mubr.bf16.mxu0 %v7291
          %8696 = vmatmul.mubr.bf16.gmra.mxu0 %v7290
          %v8697 = vpop.f32.mrf.mxu0
          %v8698 = vadd.f32 %v8409, %v8697
          %v8699 = vpop.f32.mrf.mxu0
          %v8700 = vpop.f32.mrf.mxu0
          %v8701 = vadd.f32 %v8412, %v8700
          %v8702 = vpop.f32.mrf.mxu0
          %8703 = vmatprep.mubr.bf16.mxu0 %v7299
          %8704 = vmatmul.mubr.bf16.gmra.mxu0 %v7298
          %v8705 = vpop.f32.mrf.mxu0
          %v8706 = vadd.f32 %v8417, %v8705
          %v8707 = vpop.f32.mrf.mxu0
          %v8708 = vpop.f32.mrf.mxu0
          %v8709 = vadd.f32 %v8420, %v8708
          %v8710 = vpop.f32.mrf.mxu0
          %8711 = vmatprep.mubr.bf16.mxu0 %v7307
          %8712 = vmatmul.mubr.bf16.gmra.mxu0 %v7306
          %v8713 = vpop.f32.mrf.mxu0
          %v8714 = vadd.f32 %v8425, %v8713
          %v8715 = vpop.f32.mrf.mxu0
          %v8716 = vpop.f32.mrf.mxu0
          %v8717 = vadd.f32 %v8428, %v8716
          %v8718 = vpop.f32.mrf.mxu0
          %8719 = vmatprep.mubr.bf16.mxu0 %v7315
          %8720 = vmatmul.mubr.bf16.gmra.mxu0 %v7314
          %v8721 = vpop.f32.mrf.mxu0
          %v8722 = vadd.f32 %v8433, %v8721
          %v8723 = vpop.f32.mrf.mxu0
          %v8724 = vpop.f32.mrf.mxu0
          %v8725 = vadd.f32 %v8436, %v8724
          %v8726 = vpop.f32.mrf.mxu0
          %8727 = vmatprep.mubr.bf16.mxu0 %v7323
          %8728 = vmatmul.mubr.bf16.gmra.mxu0 %v7322
          %v8729 = vpop.f32.mrf.mxu0
          %v8730 = vadd.f32 %v8441, %v8729
          %v8731 = vpop.f32.mrf.mxu0
          %v8732 = vpop.f32.mrf.mxu0
          %v8733 = vadd.f32 %v8444, %v8732
          %v8734 = vpop.f32.mrf.mxu0
          %8735 = vmatprep.mubr.bf16.mxu0 %v7331
          %8736 = vmatmul.mubr.bf16.gmra.mxu0 %v7330
          %v8737 = vpop.f32.mrf.mxu0
          %v8738 = vadd.f32 %v8449, %v8737
          %v8739 = vpop.f32.mrf.mxu0
          %v8740 = vpop.f32.mrf.mxu0
          %v8741 = vadd.f32 %v8452, %v8740
          %v8742 = vpop.f32.mrf.mxu0
          %8743 = vmatprep.mubr.bf16.mxu0 %v7339
          %8744 = vmatmul.mubr.bf16.gmra.mxu0 %v7338
          %v8745 = vpop.f32.mrf.mxu0
          %v8746 = vadd.f32 %v8457, %v8745
          %v8747 = vpop.f32.mrf.mxu0
          %v8748 = vpop.f32.mrf.mxu0
          %v8749 = vadd.f32 %v8460, %v8748
          %v8750 = vpop.f32.mrf.mxu0
          %8751 = vmatprep.mubr.bf16.mxu0 %v7347
          %8752 = vmatmul.mubr.bf16.gmra.mxu0 %v7346
          %v8753 = vpop.f32.mrf.mxu0
          %v8754 = vadd.f32 %v8465, %v8753
          %v8755 = vpop.f32.mrf.mxu0
          %v8756 = vpop.f32.mrf.mxu0
          %v8757 = vadd.f32 %v8468, %v8756
          %v8758 = vpop.f32.mrf.mxu0
          %8759 = vmatprep.mubr.bf16.mxu0 %v7355
          %8760 = vmatmul.mubr.bf16.gmra.mxu0 %v7354
          %v8761 = vpop.f32.mrf.mxu0
          %v8762 = vadd.f32 %v8473, %v8761
          %v8763 = vpop.f32.mrf.mxu0
          %v8764 = vpop.f32.mrf.mxu0
          %v8765 = vadd.f32 %v8476, %v8764
          %v8766 = vpop.f32.mrf.mxu0
          %8767 = vmatprep.mubr.bf16.mxu0 %v7363
          %8768 = vmatmul.mubr.bf16.gmra.mxu0 %v7362
          %v8769 = vpop.f32.mrf.mxu0
          %v8770 = vadd.f32 %v8481, %v8769
          %v8771 = vpop.f32.mrf.mxu0
          %v8772 = vpop.f32.mrf.mxu0
          %v8773 = vadd.f32 %v8484, %v8772
          %v8774 = vpop.f32.mrf.mxu0
          %8775 = vmatprep.mubr.bf16.mxu0 %v7371
          %8776 = vmatmul.mubr.bf16.gmra.mxu0 %v7370
          %v8777 = vpop.f32.mrf.mxu0
          %v8778 = vadd.f32 %v8489, %v8777
          %v8779 = vpop.f32.mrf.mxu0
          %v8780 = vpop.f32.mrf.mxu0
          %v8781 = vadd.f32 %v8492, %v8780
          %v8782 = vpop.f32.mrf.mxu0
          %8783 = vmatprep.mubr.bf16.mxu0 %v7379
          %8784 = vmatmul.mubr.bf16.gmra.mxu0 %v7378
          %v8785 = vpop.f32.mrf.mxu0
          %v8786 = vadd.f32 %v8497, %v8785
          %v8787 = vpop.f32.mrf.mxu0
          %v8788 = vpop.f32.mrf.mxu0
          %v8789 = vadd.f32 %v8500, %v8788
          %v8790 = vpop.f32.mrf.mxu0
          %8791 = vmatprep.mubr.bf16.mxu0 %v7387
          %8792 = vmatmul.mubr.bf16.gmra.mxu0 %v7386
          %v8793 = vpop.f32.mrf.mxu0
          %v8794 = vadd.f32 %v8505, %v8793
          %v8795 = vpop.f32.mrf.mxu0
          %v8796 = vpop.f32.mrf.mxu0
          %v8797 = vadd.f32 %v8508, %v8796
          %v8798 = vpop.f32.mrf.mxu0
          %8799 = vmatprep.mubr.bf16.mxu0 %v7395
          %8800 = vmatmul.mubr.bf16.gmra.mxu0 %v7394
          %v8801 = vpop.f32.mrf.mxu0
          %v8802 = vadd.f32 %v8513, %v8801
          %v8803 = vpop.f32.mrf.mxu0
          %v8804 = vpop.f32.mrf.mxu0
          %v8805 = vadd.f32 %v8516, %v8804
          %v8806 = vpop.f32.mrf.mxu0
          %8807 = vmatprep.mubr.bf16.mxu0 %v7403
          %8808 = vmatmul.mubr.bf16.gmra.mxu0 %v7402
          %v8809 = vpop.f32.mrf.mxu0
          %v8810 = vadd.f32 %v8521, %v8809
          %v8811 = vpop.f32.mrf.mxu0
          %v8812 = vpop.f32.mrf.mxu0
          %v8813 = vadd.f32 %v8524, %v8812
          %v8814 = vpop.f32.mrf.mxu0
          %8815 = vmatprep.mubr.bf16.mxu0 %v7411
          %8816 = vmatmul.mubr.bf16.gmra.mxu0 %v7410
          %v8817 = vpop.f32.mrf.mxu0
          %v8818 = vadd.f32 %v8529, %v8817
          %v8819 = vpop.f32.mrf.mxu0
          %v8820 = vpop.f32.mrf.mxu0
          %v8821 = vadd.f32 %v8532, %v8820
          %v8822 = vpop.f32.mrf.mxu0
          %8823 = vmatprep.mubr.bf16.mxu0 %v7419
          %8824 = vmatmul.mubr.bf16.gmra.mxu0 %v7418
          %v8825 = vpop.f32.mrf.mxu0
          %v8826 = vadd.f32 %v8537, %v8825
          %v8827 = vpop.f32.mrf.mxu0
          %v8828 = vpop.f32.mrf.mxu0
          %v8829 = vadd.f32 %v8540, %v8828
          %v8830 = vpop.f32.mrf.mxu0
          %8831 = vmatprep.mubr.bf16.mxu0 %v7427
          %8832 = vmatmul.mubr.bf16.gmra.mxu0 %v7426
          %v8833 = vpop.f32.mrf.mxu0
          %v8834 = vadd.f32 %v8545, %v8833
          %v8835 = vpop.f32.mrf.mxu0
          %v8836 = vpop.f32.mrf.mxu0
          %v8837 = vadd.f32 %v8548, %v8836
          %v8838 = vpop.f32.mrf.mxu0
          %8839 = vmatprep.mubr.bf16.mxu0 %v7435
          %8840 = vmatmul.mubr.bf16.gmra.mxu0 %v7434
          %v8841 = vpop.f32.mrf.mxu0
          %v8842 = vadd.f32 %v8553, %v8841
          %v8843 = vpop.f32.mrf.mxu0
          %v8844 = vpop.f32.mrf.mxu0
          %v8845 = vadd.f32 %v8556, %v8844
          %v8846 = vpop.f32.mrf.mxu0
          %8847 = vmatprep.mubr.bf16.mxu0 %v7443
          %8848 = vmatmul.mubr.bf16.gmra.mxu0 %v7442
          %v8849 = vpop.f32.mrf.mxu0
          %v8850 = vadd.f32 %v8561, %v8849
          %v8851 = vpop.f32.mrf.mxu0
          %v8852 = vpop.f32.mrf.mxu0
          %v8853 = vadd.f32 %v8564, %v8852
          %v8854 = vpop.f32.mrf.mxu0
          %8855 = vmatprep.mubr.bf16.mxu0 %v7451
          %8856 = vmatmul.mubr.bf16.gmra.mxu0 %v7450
          %v8857 = vpop.f32.mrf.mxu0
          %v8858 = vadd.f32 %v8569, %v8857
          %v8859 = vpop.f32.mrf.mxu0
          %v8860 = vpop.f32.mrf.mxu0
          %v8861 = vadd.f32 %v8572, %v8860
          %v8862 = vpop.f32.mrf.mxu0
          %8863 = vmatprep.mubr.bf16.mxu0 %v7459
          %8864 = vmatmul.mubr.bf16.gmra.mxu0 %v7458
          %v8865 = vpop.f32.mrf.mxu0
          %v8866 = vadd.f32 %v8577, %v8865
          %v8867 = vpop.f32.mrf.mxu0
          %v8868 = vpop.f32.mrf.mxu0
          %v8869 = vadd.f32 %v8580, %v8868
          %v8870 = vpop.f32.mrf.mxu0
          %8871 = vmatprep.mubr.bf16.mxu0 %v7467
          %8872 = vmatmul.mubr.bf16.gmra.mxu0 %v7466
          %v8873 = vpop.f32.mrf.mxu0
          %v8874 = vadd.f32 %v8585, %v8873
          %v8875 = vpop.f32.mrf.mxu0
          %v8876 = vpop.f32.mrf.mxu0
          %v8877 = vadd.f32 %v8588, %v8876
          %v8878 = vpop.f32.mrf.mxu0
          %8879 = vmatprep.mubr.bf16.mxu0 %v7475
          %8880 = vmatmul.mubr.bf16.gmra.mxu0 %v7474
          %v8881 = vpop.f32.mrf.mxu0
          %v8882 = vadd.f32 %v8593, %v8881
          %v8883 = vpop.f32.mrf.mxu0
          %v8884 = vpop.f32.mrf.mxu0
          %v8885 = vadd.f32 %v8596, %v8884
          %v8886 = vpop.f32.mrf.mxu0
          %8887 = vmatprep.mubr.bf16.mxu0 %v7483
          %8888 = vmatmul.mubr.bf16.gmra.mxu0 %v7482
          %v8889 = vpop.f32.mrf.mxu0
          %v8890 = vadd.f32 %v8601, %v8889
          %v8891 = vpop.f32.mrf.mxu0
          %v8892 = vpop.f32.mrf.mxu0
          %v8893 = vadd.f32 %v8604, %v8892
          %v8894 = vpop.f32.mrf.mxu0
          %8895 = vmatprep.mubr.bf16.mxu0 %v7491
          %8896 = vmatmul.mubr.bf16.gmra.mxu0 %v7490
          %v8897 = vpop.f32.mrf.mxu0
          %v8898 = vadd.f32 %v8609, %v8897
          %v8899 = vpop.f32.mrf.mxu0
          %v8900 = vpop.f32.mrf.mxu0
          %v8901 = vadd.f32 %v8612, %v8900
          %v8902 = vpop.f32.mrf.mxu0
          %8903 = vmatprep.mubr.bf16.mxu0 %v7499
          %8904 = vmatmul.mubr.bf16.gmra.mxu0 %v7498
          %v8905 = vpop.f32.mrf.mxu0
          %v8906 = vadd.f32 %v8617, %v8905
          %v8907 = vpop.f32.mrf.mxu0
          %v8908 = vpop.f32.mrf.mxu0
          %v8909 = vadd.f32 %v8620, %v8908
          %v8910 = vpop.f32.mrf.mxu0
          %8911 = vmatprep.mubr.bf16.mxu0 %v7507
          %8912 = vmatmul.mubr.bf16.gmra.mxu0 %v7506
          %v8913 = vpop.f32.mrf.mxu0
          %v8914 = vadd.f32 %v8625, %v8913
          %v8915 = vpop.f32.mrf.mxu0
          %v8916 = vpop.f32.mrf.mxu0
          %v8917 = vadd.f32 %v8628, %v8916
          %v8918 = vpop.f32.mrf.mxu0
          %8919 = vmatprep.mubr.bf16.mxu0 %v7515
          %8920 = vmatmul.mubr.bf16.gmra.mxu0 %v7514
          %v8921 = vpop.f32.mrf.mxu0
          %v8922 = vadd.f32 %v8633, %v8921
          %v8923 = vpop.f32.mrf.mxu0
          %v8924 = vpop.f32.mrf.mxu0
          %v8925 = vadd.f32 %v8636, %v8924
          %v8926 = vpop.f32.mrf.mxu0
          %8927 = vmatprep.mubr.bf16.mxu0 %v7523
          %8928 = vmatmul.mubr.bf16.gmra.mxu0 %v7522
          %v8929 = vpop.f32.mrf.mxu0
          %v8930 = vadd.f32 %v8641, %v8929
          %v8931 = vpop.f32.mrf.mxu0
          %v8932 = vpop.f32.mrf.mxu0
          %v8933 = vadd.f32 %v8644, %v8932
          %v8934 = vpop.f32.mrf.mxu0
          %8935 = vmatprep.mubr.bf16.mxu0 %v7531
          %8936 = vmatmul.mubr.bf16.gmra.mxu0 %v7530
          %v8937 = vpop.f32.mrf.mxu0
          %v8938 = vadd.f32 %v8649, %v8937
          %v8939 = vpop.f32.mrf.mxu0
          %v8940 = vpop.f32.mrf.mxu0
          %v8941 = vadd.f32 %v8652, %v8940
          %v8942 = vpop.f32.mrf.mxu0
          %8943 = vmatprep.mubr.bf16.mxu0 %v7539
          %8944 = vmatmul.mubr.bf16.gmra.mxu0 %v7538
          %v8945 = vpop.f32.mrf.mxu0
          %v8946 = vadd.f32 %v8657, %v8945
          %v8947 = vpop.f32.mrf.mxu0
          %v8948 = vpop.f32.mrf.mxu0
          %v8949 = vadd.f32 %v8660, %v8948
          %v8950 = vpop.f32.mrf.mxu0
          %8951 = vdwg.mxu0
          %v8952 = vmax.f32 %v8698, 0.0
          %v8953 = vmax.f32 %v8701, 0.0
          %v8954 = vmax.f32 %v8706, 0.0
          %v8955 = vmax.f32 %v8709, 0.0
          %v8956 = vmax.f32 %v8714, 0.0
          %v8957 = vmax.f32 %v8717, 0.0
          %v8958 = vmax.f32 %v8722, 0.0
          %v8959 = vmax.f32 %v8725, 0.0
          %v8960 = vmax.f32 %v8730, 0.0
          %v8961 = vmax.f32 %v8733, 0.0
          %v8962 = vmax.f32 %v8738, 0.0
          %v8963 = vmax.f32 %v8741, 0.0
          %v8964 = vmax.f32 %v8746, 0.0
          %v8965 = vmax.f32 %v8749, 0.0
          %v8966 = vmax.f32 %v8754, 0.0
          %v8967 = vmax.f32 %v8757, 0.0
          %v8968 = vmax.f32 %v8762, 0.0
          %v8969 = vmax.f32 %v8765, 0.0
          %v8970 = vmax.f32 %v8770, 0.0
          %v8971 = vmax.f32 %v8773, 0.0
          %v8972 = vmax.f32 %v8778, 0.0
          %v8973 = vmax.f32 %v8781, 0.0
          %v8974 = vmax.f32 %v8786, 0.0
          %v8975 = vmax.f32 %v8789, 0.0
          %v8976 = vmax.f32 %v8794, 0.0
          %v8977 = vmax.f32 %v8797, 0.0
          %v8978 = vmax.f32 %v8802, 0.0
          %v8979 = vmax.f32 %v8805, 0.0
          %v8980 = vmax.f32 %v8810, 0.0
          %v8981 = vmax.f32 %v8813, 0.0
          %v8982 = vmax.f32 %v8818, 0.0
          %v8983 = vmax.f32 %v8821, 0.0
          %v8984 = vmax.f32 %v8826, 0.0
          %v8985 = vmax.f32 %v8829, 0.0
          %v8986 = vmax.f32 %v8834, 0.0
          %v8987 = vmax.f32 %v8837, 0.0
          %v8988 = vmax.f32 %v8842, 0.0
          %v8989 = vmax.f32 %v8845, 0.0
          %v8990 = vmax.f32 %v8850, 0.0
          %v8991 = vmax.f32 %v8853, 0.0
          %v8992 = vmax.f32 %v8858, 0.0
          %v8993 = vmax.f32 %v8861, 0.0
          %v8994 = vmax.f32 %v8866, 0.0
          %v8995 = vmax.f32 %v8869, 0.0
          %v8996 = vmax.f32 %v8874, 0.0
          %v8997 = vmax.f32 %v8877, 0.0
          %v8998 = vmax.f32 %v8882, 0.0
          %v8999 = vmax.f32 %v8885, 0.0
          %v9000 = vmax.f32 %v8890, 0.0
          %v9001 = vmax.f32 %v8893, 0.0
          %v9002 = vmax.f32 %v8898, 0.0
          %v9003 = vmax.f32 %v8901, 0.0
          %v9004 = vmax.f32 %v8906, 0.0
          %v9005 = vmax.f32 %v8909, 0.0
          %v9006 = vmax.f32 %v8914, 0.0
          %v9007 = vmax.f32 %v8917, 0.0
          %v9008 = vmax.f32 %v8922, 0.0
          %v9009 = vmax.f32 %v8925, 0.0
          %v9010 = vmax.f32 %v8930, 0.0
          %v9011 = vmax.f32 %v8933, 0.0
          %v9012 = vmax.f32 %v8938, 0.0
          %v9013 = vmax.f32 %v8941, 0.0
          %v9014 = vmax.f32 %v8946, 0.0
          %v9015 = vmax.f32 %v8949, 0.0
          %v9016 = vld [vmem:[#allocation5] sm:$0xff]
          %v9017 = vld [vmem:[#allocation5 + $0x8] sm:$0xff]
          %v9018 = vld [vmem:[#allocation5 + $0x10] sm:$0xff]
          %v9019 = vld [vmem:[#allocation5 + $0x18] sm:$0xff]
          %v9020 = vld [vmem:[#allocation5 + $0x20] sm:$0xff]
          %v9021 = vld [vmem:[#allocation5 + $0x28] sm:$0xff]
          %v9022 = vld [vmem:[#allocation5 + $0x30] sm:$0xff]
          %v9023 = vld [vmem:[#allocation5 + $0x38] sm:$0xff]
          %v9024 = vld [vmem:[#allocation5 + $0x40] sm:$0xff]
          %v9025 = vld [vmem:[#allocation5 + $0x48] sm:$0xff]
          %v9026 = vld [vmem:[#allocation5 + $0x50] sm:$0xff]
          %v9027 = vld [vmem:[#allocation5 + $0x58] sm:$0xff]
          %v9028 = vld [vmem:[#allocation5 + $0x60] sm:$0xff]
          %v9029 = vld [vmem:[#allocation5 + $0x68] sm:$0xff]
          %v9030 = vld [vmem:[#allocation5 + $0x70] sm:$0xff]
          %v9031 = vld [vmem:[#allocation5 + $0x78] sm:$0xff]
          %v9032 = vld [vmem:[#allocation5 + $0x80] sm:$0xff]
          %v9033 = vld [vmem:[#allocation5 + $0x88] sm:$0xff]
          %v9034 = vld [vmem:[#allocation5 + $0x90] sm:$0xff]
          %v9035 = vld [vmem:[#allocation5 + $0x98] sm:$0xff]
          %v9036 = vld [vmem:[#allocation5 + $0xa0] sm:$0xff]
          %v9037 = vld [vmem:[#allocation5 + $0xa8] sm:$0xff]
          %v9038 = vld [vmem:[#allocation5 + $0xb0] sm:$0xff]
          %v9039 = vld [vmem:[#allocation5 + $0xb8] sm:$0xff]
          %v9040 = vld [vmem:[#allocation5 + $0xc0] sm:$0xff]
          %v9041 = vld [vmem:[#allocation5 + $0xc8] sm:$0xff]
          %v9042 = vld [vmem:[#allocation5 + $0xd0] sm:$0xff]
          %v9043 = vld [vmem:[#allocation5 + $0xd8] sm:$0xff]
          %v9044 = vld [vmem:[#allocation5 + $0xe0] sm:$0xff]
          %v9045 = vld [vmem:[#allocation5 + $0xe8] sm:$0xff]
          %v9046 = vld [vmem:[#allocation5 + $0xf0] sm:$0xff]
          %v9047 = vld [vmem:[#allocation5 + $0xf8] sm:$0xff]
          %v9048 = vld [vmem:[#allocation5 + $0x100] sm:$0xff]
          %v9049 = vld [vmem:[#allocation5 + $0x108] sm:$0xff]
          %v9050 = vld [vmem:[#allocation5 + $0x110] sm:$0xff]
          %v9051 = vld [vmem:[#allocation5 + $0x118] sm:$0xff]
          %v9052 = vld [vmem:[#allocation5 + $0x120] sm:$0xff]
          %v9053 = vld [vmem:[#allocation5 + $0x128] sm:$0xff]
          %v9054 = vld [vmem:[#allocation5 + $0x130] sm:$0xff]
          %v9055 = vld [vmem:[#allocation5 + $0x138] sm:$0xff]
          %v9056 = vld [vmem:[#allocation5 + $0x140] sm:$0xff]
          %v9057 = vld [vmem:[#allocation5 + $0x148] sm:$0xff]
          %v9058 = vld [vmem:[#allocation5 + $0x150] sm:$0xff]
          %v9059 = vld [vmem:[#allocation5 + $0x158] sm:$0xff]
          %v9060 = vld [vmem:[#allocation5 + $0x160] sm:$0xff]
          %v9061 = vld [vmem:[#allocation5 + $0x168] sm:$0xff]
          %v9062 = vld [vmem:[#allocation5 + $0x170] sm:$0xff]
          %v9063 = vld [vmem:[#allocation5 + $0x178] sm:$0xff]
          %v9064 = vld [vmem:[#allocation5 + $0x180] sm:$0xff]
          %v9065 = vld [vmem:[#allocation5 + $0x188] sm:$0xff]
          %v9066 = vld [vmem:[#allocation5 + $0x190] sm:$0xff]
          %v9067 = vld [vmem:[#allocation5 + $0x198] sm:$0xff]
          %v9068 = vld [vmem:[#allocation5 + $0x1a0] sm:$0xff]
          %v9069 = vld [vmem:[#allocation5 + $0x1a8] sm:$0xff]
          %v9070 = vld [vmem:[#allocation5 + $0x1b0] sm:$0xff]
          %v9071 = vld [vmem:[#allocation5 + $0x1b8] sm:$0xff]
          %v9072 = vld [vmem:[#allocation5 + $0x1c0] sm:$0xff]
          %v9073 = vld [vmem:[#allocation5 + $0x1c8] sm:$0xff]
          %v9074 = vld [vmem:[#allocation5 + $0x1d0] sm:$0xff]
          %v9075 = vld [vmem:[#allocation5 + $0x1d8] sm:$0xff]
          %v9076 = vld [vmem:[#allocation5 + $0x1e0] sm:$0xff]
          %v9077 = vld [vmem:[#allocation5 + $0x1e8] sm:$0xff]
          %v9078 = vld [vmem:[#allocation5 + $0x1f0] sm:$0xff]
          %v9079 = vld [vmem:[#allocation5 + $0x1f8] sm:$0xff]
          %v9080 = vpack.c.bf16 %v8953, %v8952
          %v9081 = vpack.c.bf16 %v8955, %v8954
          %v9082 = vpack.c.bf16 %v8957, %v8956
          %v9083 = vpack.c.bf16 %v8959, %v8958
          %v9084 = vpack.c.bf16 %v8961, %v8960
          %v9085 = vpack.c.bf16 %v8963, %v8962
          %v9086 = vpack.c.bf16 %v8965, %v8964
          %v9087 = vpack.c.bf16 %v8967, %v8966
          %v9088 = vpack.c.bf16 %v8969, %v8968
          %v9089 = vpack.c.bf16 %v8971, %v8970
          %v9090 = vpack.c.bf16 %v8973, %v8972
          %v9091 = vpack.c.bf16 %v8975, %v8974
          %v9092 = vpack.c.bf16 %v8977, %v8976
          %v9093 = vpack.c.bf16 %v8979, %v8978
          %v9094 = vpack.c.bf16 %v8981, %v8980
          %v9095 = vpack.c.bf16 %v8983, %v8982
          %v9096 = vpack.c.bf16 %v8985, %v8984
          %v9097 = vpack.c.bf16 %v8987, %v8986
          %v9098 = vpack.c.bf16 %v8989, %v8988
          %v9099 = vpack.c.bf16 %v8991, %v8990
          %v9100 = vpack.c.bf16 %v8993, %v8992
          %v9101 = vpack.c.bf16 %v8995, %v8994
          %v9102 = vpack.c.bf16 %v8997, %v8996
          %v9103 = vpack.c.bf16 %v8999, %v8998
          %v9104 = vpack.c.bf16 %v9001, %v9000
          %v9105 = vpack.c.bf16 %v9003, %v9002
          %v9106 = vpack.c.bf16 %v9005, %v9004
          %v9107 = vpack.c.bf16 %v9007, %v9006
          %v9108 = vpack.c.bf16 %v9009, %v9008
          %v9109 = vpack.c.bf16 %v9011, %v9010
          %v9110 = vpack.c.bf16 %v9013, %v9012
          %v9111 = vpack.c.bf16 %v9015, %v9014
          %v9112 = vld [vmem:[%s10] sm:$0xff]
          %v9113 = vld [vmem:[%s10 + $0x8] sm:$0xff]
          %v9114 = vld [vmem:[%s10 + $0x10] sm:$0xff]
          %v9115 = vld [vmem:[%s10 + $0x18] sm:$0xff]
          %v9116 = vld [vmem:[%s10 + $0x20] sm:$0xff]
          %v9117 = vld [vmem:[%s10 + $0x28] sm:$0xff]
          %v9118 = vld [vmem:[%s10 + $0x30] sm:$0xff]
          %v9119 = vld [vmem:[%s10 + $0x38] sm:$0xff]
          %v9120 = vld [vmem:[%s10 + $0x40] sm:$0xff]
          %v9121 = vld [vmem:[%s10 + $0x48] sm:$0xff]
          %v9122 = vld [vmem:[%s10 + $0x50] sm:$0xff]
          %v9123 = vld [vmem:[%s10 + $0x58] sm:$0xff]
          %v9124 = vld [vmem:[%s10 + $0x60] sm:$0xff]
          %v9125 = vld [vmem:[%s10 + $0x68] sm:$0xff]
          %v9126 = vld [vmem:[%s10 + $0x70] sm:$0xff]
          %v9127 = vld [vmem:[%s10 + $0x78] sm:$0xff]
          %v9128 = vld [vmem:[%s10 + $0x80] sm:$0xff]
          %v9129 = vld [vmem:[%s10 + $0x88] sm:$0xff]
          %v9130 = vld [vmem:[%s10 + $0x90] sm:$0xff]
          %v9131 = vld [vmem:[%s10 + $0x98] sm:$0xff]
          %v9132 = vld [vmem:[%s10 + $0xa0] sm:$0xff]
          %v9133 = vld [vmem:[%s10 + $0xa8] sm:$0xff]
          %v9134 = vld [vmem:[%s10 + $0xb0] sm:$0xff]
          %v9135 = vld [vmem:[%s10 + $0xb8] sm:$0xff]
          %v9136 = vld [vmem:[%s10 + $0xc0] sm:$0xff]
          %v9137 = vld [vmem:[%s10 + $0xc8] sm:$0xff]
          %v9138 = vld [vmem:[%s10 + $0xd0] sm:$0xff]
          %v9139 = vld [vmem:[%s10 + $0xd8] sm:$0xff]
          %v9140 = vld [vmem:[%s10 + $0xe0] sm:$0xff]
          %v9141 = vld [vmem:[%s10 + $0xe8] sm:$0xff]
          %v9142 = vld [vmem:[%s10 + $0xf0] sm:$0xff]
          %v9143 = vld [vmem:[%s10 + $0xf8] sm:$0xff]
          %9145 = vset.pattern.permute.xlu0 0
          %9146 = vperm.xlu0 %9145, %v9112
          %v9147 = vpop.permute.xlu0 %9146
          %9150 = vset.pattern.permute.xlu0 0
          %9151 = vperm.xlu0 %9150, %v9113
          %v9152 = vpop.permute.xlu0 %9151
          %9155 = vset.pattern.permute.xlu0 0
          %9156 = vperm.xlu0 %9155, %v9114
          %v9157 = vpop.permute.xlu0 %9156
          %9160 = vset.pattern.permute.xlu0 0
          %9161 = vperm.xlu0 %9160, %v9115
          %v9162 = vpop.permute.xlu0 %9161
          %9165 = vset.pattern.permute.xlu0 0
          %9166 = vperm.xlu0 %9165, %v9116
          %v9167 = vpop.permute.xlu0 %9166
          %9170 = vset.pattern.permute.xlu0 0
          %9171 = vperm.xlu0 %9170, %v9117
          %v9172 = vpop.permute.xlu0 %9171
          %9175 = vset.pattern.permute.xlu0 0
          %9176 = vperm.xlu0 %9175, %v9118
          %v9177 = vpop.permute.xlu0 %9176
          %9180 = vset.pattern.permute.xlu0 0
          %9181 = vperm.xlu0 %9180, %v9119
          %v9182 = vpop.permute.xlu0 %9181
          %9185 = vset.pattern.permute.xlu0 0
          %9186 = vperm.xlu0 %9185, %v9120
          %v9187 = vpop.permute.xlu0 %9186
          %9190 = vset.pattern.permute.xlu0 0
          %9191 = vperm.xlu0 %9190, %v9121
          %v9192 = vpop.permute.xlu0 %9191
          %9195 = vset.pattern.permute.xlu0 0
          %9196 = vperm.xlu0 %9195, %v9122
          %v9197 = vpop.permute.xlu0 %9196
          %9200 = vset.pattern.permute.xlu0 0
          %9201 = vperm.xlu0 %9200, %v9123
          %v9202 = vpop.permute.xlu0 %9201
          %9205 = vset.pattern.permute.xlu0 0
          %9206 = vperm.xlu0 %9205, %v9124
          %v9207 = vpop.permute.xlu0 %9206
          %9210 = vset.pattern.permute.xlu0 0
          %9211 = vperm.xlu0 %9210, %v9125
          %v9212 = vpop.permute.xlu0 %9211
          %9215 = vset.pattern.permute.xlu0 0
          %9216 = vperm.xlu0 %9215, %v9126
          %v9217 = vpop.permute.xlu0 %9216
          %9220 = vset.pattern.permute.xlu0 0
          %9221 = vperm.xlu0 %9220, %v9127
          %v9222 = vpop.permute.xlu0 %9221
          %9225 = vset.pattern.permute.xlu0 0
          %9226 = vperm.xlu0 %9225, %v9128
          %v9227 = vpop.permute.xlu0 %9226
          %9230 = vset.pattern.permute.xlu0 0
          %9231 = vperm.xlu0 %9230, %v9129
          %v9232 = vpop.permute.xlu0 %9231
          %9235 = vset.pattern.permute.xlu0 0
          %9236 = vperm.xlu0 %9235, %v9130
          %v9237 = vpop.permute.xlu0 %9236
          %9240 = vset.pattern.permute.xlu0 0
          %9241 = vperm.xlu0 %9240, %v9131
          %v9242 = vpop.permute.xlu0 %9241
          %9245 = vset.pattern.permute.xlu0 0
          %9246 = vperm.xlu0 %9245, %v9132
          %v9247 = vpop.permute.xlu0 %9246
          %9250 = vset.pattern.permute.xlu0 0
          %9251 = vperm.xlu0 %9250, %v9133
          %v9252 = vpop.permute.xlu0 %9251
          %9255 = vset.pattern.permute.xlu0 0
          %9256 = vperm.xlu0 %9255, %v9134
          %v9257 = vpop.permute.xlu0 %9256
          %9260 = vset.pattern.permute.xlu0 0
          %9261 = vperm.xlu0 %9260, %v9135
          %v9262 = vpop.permute.xlu0 %9261
          %9265 = vset.pattern.permute.xlu0 0
          %9266 = vperm.xlu0 %9265, %v9136
          %v9267 = vpop.permute.xlu0 %9266
          %9270 = vset.pattern.permute.xlu0 0
          %9271 = vperm.xlu0 %9270, %v9137
          %v9272 = vpop.permute.xlu0 %9271
          %9275 = vset.pattern.permute.xlu0 0
          %9276 = vperm.xlu0 %9275, %v9138
          %v9277 = vpop.permute.xlu0 %9276
          %9280 = vset.pattern.permute.xlu0 0
          %9281 = vperm.xlu0 %9280, %v9139
          %v9282 = vpop.permute.xlu0 %9281
          %9285 = vset.pattern.permute.xlu0 0
          %9286 = vperm.xlu0 %9285, %v9140
          %v9287 = vpop.permute.xlu0 %9286
          %9290 = vset.pattern.permute.xlu0 0
          %9291 = vperm.xlu0 %9290, %v9141
          %v9292 = vpop.permute.xlu0 %9291
          %9295 = vset.pattern.permute.xlu0 0
          %9296 = vperm.xlu0 %9295, %v9142
          %v9297 = vpop.permute.xlu0 %9296
          %9300 = vset.pattern.permute.xlu0 0
          %9301 = vperm.xlu0 %9300, %v9143
          %v9302 = vpop.permute.xlu0 %9301
          %v9368 = vunpack.c.l.b16 %v9016
          %v9369 = vunpack.c.h.b16 %v9016
          %v9370 = vunpack.c.l.b16 %v9017
          %v9371 = vunpack.c.h.b16 %v9017
          %v9372 = vunpack.c.l.b16 %v9018
          %v9373 = vunpack.c.h.b16 %v9018
          %v9374 = vunpack.c.l.b16 %v9019
          %v9375 = vunpack.c.h.b16 %v9019
          %v9376 = vunpack.c.l.b16 %v9020
          %v9377 = vunpack.c.h.b16 %v9020
          %v9378 = vunpack.c.l.b16 %v9021
          %v9379 = vunpack.c.h.b16 %v9021
          %v9380 = vunpack.c.l.b16 %v9022
          %v9381 = vunpack.c.h.b16 %v9022
          %v9382 = vunpack.c.l.b16 %v9023
          %v9383 = vunpack.c.h.b16 %v9023
          %v9384 = vunpack.c.l.b16 %v9024
          %v9385 = vunpack.c.h.b16 %v9024
          %v9386 = vunpack.c.l.b16 %v9025
          %v9387 = vunpack.c.h.b16 %v9025
          %v9388 = vunpack.c.l.b16 %v9026
          %v9389 = vunpack.c.h.b16 %v9026
          %v9390 = vunpack.c.l.b16 %v9027
          %v9391 = vunpack.c.h.b16 %v9027
          %v9392 = vunpack.c.l.b16 %v9028
          %v9393 = vunpack.c.h.b16 %v9028
          %v9394 = vunpack.c.l.b16 %v9029
          %v9395 = vunpack.c.h.b16 %v9029
          %v9396 = vunpack.c.l.b16 %v9030
          %v9397 = vunpack.c.h.b16 %v9030
          %v9398 = vunpack.c.l.b16 %v9031
          %v9399 = vunpack.c.h.b16 %v9031
          %v9400 = vunpack.c.l.b16 %v9032
          %v9401 = vunpack.c.h.b16 %v9032
          %v9402 = vunpack.c.l.b16 %v9033
          %v9403 = vunpack.c.h.b16 %v9033
          %v9404 = vunpack.c.l.b16 %v9034
          %v9405 = vunpack.c.h.b16 %v9034
          %v9406 = vunpack.c.l.b16 %v9035
          %v9407 = vunpack.c.h.b16 %v9035
          %v9408 = vunpack.c.l.b16 %v9036
          %v9409 = vunpack.c.h.b16 %v9036
          %v9410 = vunpack.c.l.b16 %v9037
          %v9411 = vunpack.c.h.b16 %v9037
          %v9412 = vunpack.c.l.b16 %v9038
          %v9413 = vunpack.c.h.b16 %v9038
          %v9414 = vunpack.c.l.b16 %v9039
          %v9415 = vunpack.c.h.b16 %v9039
          %v9416 = vunpack.c.l.b16 %v9040
          %v9417 = vunpack.c.h.b16 %v9040
          %v9418 = vunpack.c.l.b16 %v9041
          %v9419 = vunpack.c.h.b16 %v9041
          %v9420 = vunpack.c.l.b16 %v9042
          %v9421 = vunpack.c.h.b16 %v9042
          %v9422 = vunpack.c.l.b16 %v9043
          %v9423 = vunpack.c.h.b16 %v9043
          %v9424 = vunpack.c.l.b16 %v9044
          %v9425 = vunpack.c.h.b16 %v9044
          %v9426 = vunpack.c.l.b16 %v9045
          %v9427 = vunpack.c.h.b16 %v9045
          %v9428 = vunpack.c.l.b16 %v9046
          %v9429 = vunpack.c.h.b16 %v9046
          %v9430 = vunpack.c.l.b16 %v9047
          %v9431 = vunpack.c.h.b16 %v9047
          %v9432 = vunpack.c.l.b16 %v9048
          %v9433 = vunpack.c.h.b16 %v9048
          %v9434 = vunpack.c.l.b16 %v9049
          %v9435 = vunpack.c.h.b16 %v9049
          %v9436 = vunpack.c.l.b16 %v9050
          %v9437 = vunpack.c.h.b16 %v9050
          %v9438 = vunpack.c.l.b16 %v9051
          %v9439 = vunpack.c.h.b16 %v9051
          %v9440 = vunpack.c.l.b16 %v9052
          %v9441 = vunpack.c.h.b16 %v9052
          %v9442 = vunpack.c.l.b16 %v9053
          %v9443 = vunpack.c.h.b16 %v9053
          %v9444 = vunpack.c.l.b16 %v9054
          %v9445 = vunpack.c.h.b16 %v9054
          %v9446 = vunpack.c.l.b16 %v9055
          %v9447 = vunpack.c.h.b16 %v9055
          %v9448 = vunpack.c.l.b16 %v9056
          %v9449 = vunpack.c.h.b16 %v9056
          %v9450 = vunpack.c.l.b16 %v9057
          %v9451 = vunpack.c.h.b16 %v9057
          %v9452 = vunpack.c.l.b16 %v9058
          %v9453 = vunpack.c.h.b16 %v9058
          %v9454 = vunpack.c.l.b16 %v9059
          %v9455 = vunpack.c.h.b16 %v9059
          %v9456 = vunpack.c.l.b16 %v9060
          %v9457 = vunpack.c.h.b16 %v9060
          %v9458 = vunpack.c.l.b16 %v9061
          %v9459 = vunpack.c.h.b16 %v9061
          %v9460 = vunpack.c.l.b16 %v9062
          %v9461 = vunpack.c.h.b16 %v9062
          %v9462 = vunpack.c.l.b16 %v9063
          %v9463 = vunpack.c.h.b16 %v9063
          %v9464 = vunpack.c.l.b16 %v9064
          %v9465 = vunpack.c.h.b16 %v9064
          %v9466 = vunpack.c.l.b16 %v9065
          %v9467 = vunpack.c.h.b16 %v9065
          %v9468 = vunpack.c.l.b16 %v9066
          %v9469 = vunpack.c.h.b16 %v9066
          %v9470 = vunpack.c.l.b16 %v9067
          %v9471 = vunpack.c.h.b16 %v9067
          %v9472 = vunpack.c.l.b16 %v9068
          %v9473 = vunpack.c.h.b16 %v9068
          %v9474 = vunpack.c.l.b16 %v9069
          %v9475 = vunpack.c.h.b16 %v9069
          %v9476 = vunpack.c.l.b16 %v9070
          %v9477 = vunpack.c.h.b16 %v9070
          %v9478 = vunpack.c.l.b16 %v9071
          %v9479 = vunpack.c.h.b16 %v9071
          %v9480 = vunpack.c.l.b16 %v9072
          %v9481 = vunpack.c.h.b16 %v9072
          %v9482 = vunpack.c.l.b16 %v9073
          %v9483 = vunpack.c.h.b16 %v9073
          %v9484 = vunpack.c.l.b16 %v9074
          %v9485 = vunpack.c.h.b16 %v9074
          %v9486 = vunpack.c.l.b16 %v9075
          %v9487 = vunpack.c.h.b16 %v9075
          %v9488 = vunpack.c.l.b16 %v9076
          %v9489 = vunpack.c.h.b16 %v9076
          %v9490 = vunpack.c.l.b16 %v9077
          %v9491 = vunpack.c.h.b16 %v9077
          %v9492 = vunpack.c.l.b16 %v9078
          %v9493 = vunpack.c.h.b16 %v9078
          %v9494 = vunpack.c.l.b16 %v9079
          %v9495 = vunpack.c.h.b16 %v9079
          %v9496 = vpack.c.b16 %v9372, %v9368
          %v9497 = vpack.c.b16 %v9373, %v9369
          %v9498 = vpack.c.b16 %v9374, %v9370
          %v9499 = vpack.c.b16 %v9375, %v9371
          %v9500 = vpack.c.b16 %v9380, %v9376
          %v9501 = vpack.c.b16 %v9381, %v9377
          %v9502 = vpack.c.b16 %v9382, %v9378
          %v9503 = vpack.c.b16 %v9383, %v9379
          %v9504 = vpack.c.b16 %v9388, %v9384
          %v9505 = vpack.c.b16 %v9389, %v9385
          %v9506 = vpack.c.b16 %v9390, %v9386
          %v9507 = vpack.c.b16 %v9391, %v9387
          %v9508 = vpack.c.b16 %v9396, %v9392
          %v9509 = vpack.c.b16 %v9397, %v9393
          %v9510 = vpack.c.b16 %v9398, %v9394
          %v9511 = vpack.c.b16 %v9399, %v9395
          %v9512 = vpack.c.b16 %v9404, %v9400
          %v9513 = vpack.c.b16 %v9405, %v9401
          %v9514 = vpack.c.b16 %v9406, %v9402
          %v9515 = vpack.c.b16 %v9407, %v9403
          %v9516 = vpack.c.b16 %v9412, %v9408
          %v9517 = vpack.c.b16 %v9413, %v9409
          %v9518 = vpack.c.b16 %v9414, %v9410
          %v9519 = vpack.c.b16 %v9415, %v9411
          %v9520 = vpack.c.b16 %v9420, %v9416
          %v9521 = vpack.c.b16 %v9421, %v9417
          %v9522 = vpack.c.b16 %v9422, %v9418
          %v9523 = vpack.c.b16 %v9423, %v9419
          %v9524 = vpack.c.b16 %v9428, %v9424
          %v9525 = vpack.c.b16 %v9429, %v9425
          %v9526 = vpack.c.b16 %v9430, %v9426
          %v9527 = vpack.c.b16 %v9431, %v9427
          %v9528 = vpack.c.b16 %v9436, %v9432
          %v9529 = vpack.c.b16 %v9437, %v9433
          %v9530 = vpack.c.b16 %v9438, %v9434
          %v9531 = vpack.c.b16 %v9439, %v9435
          %v9532 = vpack.c.b16 %v9444, %v9440
          %v9533 = vpack.c.b16 %v9445, %v9441
          %v9534 = vpack.c.b16 %v9446, %v9442
          %v9535 = vpack.c.b16 %v9447, %v9443
          %v9536 = vpack.c.b16 %v9452, %v9448
          %v9537 = vpack.c.b16 %v9453, %v9449
          %v9538 = vpack.c.b16 %v9454, %v9450
          %v9539 = vpack.c.b16 %v9455, %v9451
          %v9540 = vpack.c.b16 %v9460, %v9456
          %v9541 = vpack.c.b16 %v9461, %v9457
          %v9542 = vpack.c.b16 %v9462, %v9458
          %v9543 = vpack.c.b16 %v9463, %v9459
          %v9544 = vpack.c.b16 %v9468, %v9464
          %v9545 = vpack.c.b16 %v9469, %v9465
          %v9546 = vpack.c.b16 %v9470, %v9466
          %v9547 = vpack.c.b16 %v9471, %v9467
          %v9548 = vpack.c.b16 %v9476, %v9472
          %v9549 = vpack.c.b16 %v9477, %v9473
          %v9550 = vpack.c.b16 %v9478, %v9474
          %v9551 = vpack.c.b16 %v9479, %v9475
          %v9552 = vpack.c.b16 %v9484, %v9480
          %v9553 = vpack.c.b16 %v9485, %v9481
          %v9554 = vpack.c.b16 %v9486, %v9482
          %v9555 = vpack.c.b16 %v9487, %v9483
          %v9556 = vpack.c.b16 %v9492, %v9488
          %v9557 = vpack.c.b16 %v9493, %v9489
          %v9558 = vpack.c.b16 %v9494, %v9490
          %v9559 = vpack.c.b16 %v9495, %v9491
          %9624 = vmatprep.subr.bf16.mxu0 0
          %9625 = vmatpush1.bf16.msra.mxu0 %v9087
          %9626 = vmatprep.subr.bf16.mxu0 0
          %9627 = vmatpush1.bf16.msra.mxu0 %v9086
          %9628 = vmatprep.subr.bf16.mxu0 0
          %9629 = vmatpush1.bf16.msra.mxu0 %v9085
          %9630 = vmatprep.subr.bf16.mxu0 0
          %9631 = vmatpush1.bf16.msra.mxu0 %v9084
          %9632 = vmatprep.subr.bf16.mxu0 0
          %9633 = vmatpush1.bf16.msra.mxu0 %v9083
          %9634 = vmatprep.subr.bf16.mxu0 0
          %9635 = vmatpush1.bf16.msra.mxu0 %v9082
          %9636 = vmatprep.subr.bf16.mxu0 0
          %9637 = vmatpush1.bf16.msra.mxu0 %v9081
          %9638 = vmatprep.subr.bf16.mxu0 0
          %9639 = vmatpush1.bf16.msra.mxu0 %v9080
          %9640 = vmatprep.subr.bf16.mxu0 0
          %9641 = vmatpush2.bf16.msra.mxu0 %v9095
          %9642 = vmatprep.subr.bf16.mxu0 0
          %9643 = vmatpush2.bf16.msra.mxu0 %v9094
          %9644 = vmatprep.subr.bf16.mxu0 0
          %9645 = vmatpush2.bf16.msra.mxu0 %v9093
          %9646 = vmatprep.subr.bf16.mxu0 0
          %9647 = vmatpush2.bf16.msra.mxu0 %v9092
          %9648 = vmatprep.subr.bf16.mxu0 0
          %9649 = vmatpush2.bf16.msra.mxu0 %v9091
          %9650 = vmatprep.subr.bf16.mxu0 0
          %9651 = vmatpush2.bf16.msra.mxu0 %v9090
          %9652 = vmatprep.subr.bf16.mxu0 0
          %9653 = vmatpush2.bf16.msra.mxu0 %v9089
          %9654 = vmatprep.subr.bf16.mxu0 0
          %9655 = vmatpush2.bf16.msra.mxu0 %v9088
          %9656 = vmatprep.mubr.bf16.mxu0 %v9497
          %9657 = vmatmul.mubr.bf16.gmra.mxu0 %v9496
          %v9658 = vpop.f32.mrf.mxu0
          %v9659 = vadd.f32 %v9147, %v9658
          %v9660 = vpop.f32.mrf.mxu0
          %v9661 = vpop.f32.mrf.mxu0
          %v9662 = vadd.f32 %v9152, %v9661
          %v9663 = vpop.f32.mrf.mxu0
          %9664 = vmatprep.mubr.bf16.mxu0 %v9501
          %9665 = vmatmul.mubr.bf16.gmra.mxu0 %v9500
          %v9666 = vpop.f32.mrf.mxu0
          %v9667 = vadd.f32 %v9157, %v9666
          %v9668 = vpop.f32.mrf.mxu0
          %v9669 = vpop.f32.mrf.mxu0
          %v9670 = vadd.f32 %v9162, %v9669
          %v9671 = vpop.f32.mrf.mxu0
          %9672 = vmatprep.mubr.bf16.mxu0 %v9505
          %9673 = vmatmul.mubr.bf16.gmra.mxu0 %v9504
          %v9674 = vpop.f32.mrf.mxu0
          %v9675 = vadd.f32 %v9167, %v9674
          %v9676 = vpop.f32.mrf.mxu0
          %v9677 = vpop.f32.mrf.mxu0
          %v9678 = vadd.f32 %v9172, %v9677
          %v9679 = vpop.f32.mrf.mxu0
          %9680 = vmatprep.mubr.bf16.mxu0 %v9509
          %9681 = vmatmul.mubr.bf16.gmra.mxu0 %v9508
          %v9682 = vpop.f32.mrf.mxu0
          %v9683 = vadd.f32 %v9177, %v9682
          %v9684 = vpop.f32.mrf.mxu0
          %v9685 = vpop.f32.mrf.mxu0
          %v9686 = vadd.f32 %v9182, %v9685
          %v9687 = vpop.f32.mrf.mxu0
          %9688 = vmatprep.mubr.bf16.mxu0 %v9513
          %9689 = vmatmul.mubr.bf16.gmra.mxu0 %v9512
          %v9690 = vpop.f32.mrf.mxu0
          %v9691 = vadd.f32 %v9187, %v9690
          %v9692 = vpop.f32.mrf.mxu0
          %v9693 = vpop.f32.mrf.mxu0
          %v9694 = vadd.f32 %v9192, %v9693
          %v9695 = vpop.f32.mrf.mxu0
          %9696 = vmatprep.mubr.bf16.mxu0 %v9517
          %9697 = vmatmul.mubr.bf16.gmra.mxu0 %v9516
          %v9698 = vpop.f32.mrf.mxu0
          %v9699 = vadd.f32 %v9197, %v9698
          %v9700 = vpop.f32.mrf.mxu0
          %v9701 = vpop.f32.mrf.mxu0
          %v9702 = vadd.f32 %v9202, %v9701
          %v9703 = vpop.f32.mrf.mxu0
          %9704 = vmatprep.mubr.bf16.mxu0 %v9521
          %9705 = vmatmul.mubr.bf16.gmra.mxu0 %v9520
          %v9706 = vpop.f32.mrf.mxu0
          %v9707 = vadd.f32 %v9207, %v9706
          %v9708 = vpop.f32.mrf.mxu0
          %v9709 = vpop.f32.mrf.mxu0
          %v9710 = vadd.f32 %v9212, %v9709
          %v9711 = vpop.f32.mrf.mxu0
          %9712 = vmatprep.mubr.bf16.mxu0 %v9525
          %9713 = vmatmul.mubr.bf16.gmra.mxu0 %v9524
          %v9714 = vpop.f32.mrf.mxu0
          %v9715 = vadd.f32 %v9217, %v9714
          %v9716 = vpop.f32.mrf.mxu0
          %v9717 = vpop.f32.mrf.mxu0
          %v9718 = vadd.f32 %v9222, %v9717
          %v9719 = vpop.f32.mrf.mxu0
          %9720 = vmatprep.mubr.bf16.mxu0 %v9529
          %9721 = vmatmul.mubr.bf16.gmra.mxu0 %v9528
          %v9722 = vpop.f32.mrf.mxu0
          %v9723 = vadd.f32 %v9227, %v9722
          %v9724 = vpop.f32.mrf.mxu0
          %v9725 = vpop.f32.mrf.mxu0
          %v9726 = vadd.f32 %v9232, %v9725
          %v9727 = vpop.f32.mrf.mxu0
          %9728 = vmatprep.mubr.bf16.mxu0 %v9533
          %9729 = vmatmul.mubr.bf16.gmra.mxu0 %v9532
          %v9730 = vpop.f32.mrf.mxu0
          %v9731 = vadd.f32 %v9237, %v9730
          %v9732 = vpop.f32.mrf.mxu0
          %v9733 = vpop.f32.mrf.mxu0
          %v9734 = vadd.f32 %v9242, %v9733
          %v9735 = vpop.f32.mrf.mxu0
          %9736 = vmatprep.mubr.bf16.mxu0 %v9537
          %9737 = vmatmul.mubr.bf16.gmra.mxu0 %v9536
          %v9738 = vpop.f32.mrf.mxu0
          %v9739 = vadd.f32 %v9247, %v9738
          %v9740 = vpop.f32.mrf.mxu0
          %v9741 = vpop.f32.mrf.mxu0
          %v9742 = vadd.f32 %v9252, %v9741
          %v9743 = vpop.f32.mrf.mxu0
          %9744 = vmatprep.mubr.bf16.mxu0 %v9541
          %9745 = vmatmul.mubr.bf16.gmra.mxu0 %v9540
          %v9746 = vpop.f32.mrf.mxu0
          %v9747 = vadd.f32 %v9257, %v9746
          %v9748 = vpop.f32.mrf.mxu0
          %v9749 = vpop.f32.mrf.mxu0
          %v9750 = vadd.f32 %v9262, %v9749
          %v9751 = vpop.f32.mrf.mxu0
          %9752 = vmatprep.mubr.bf16.mxu0 %v9545
          %9753 = vmatmul.mubr.bf16.gmra.mxu0 %v9544
          %v9754 = vpop.f32.mrf.mxu0
          %v9755 = vadd.f32 %v9267, %v9754
          %v9756 = vpop.f32.mrf.mxu0
          %v9757 = vpop.f32.mrf.mxu0
          %v9758 = vadd.f32 %v9272, %v9757
          %v9759 = vpop.f32.mrf.mxu0
          %9760 = vmatprep.mubr.bf16.mxu0 %v9549
          %9761 = vmatmul.mubr.bf16.gmra.mxu0 %v9548
          %v9762 = vpop.f32.mrf.mxu0
          %v9763 = vadd.f32 %v9277, %v9762
          %v9764 = vpop.f32.mrf.mxu0
          %v9765 = vpop.f32.mrf.mxu0
          %v9766 = vadd.f32 %v9282, %v9765
          %v9767 = vpop.f32.mrf.mxu0
          %9768 = vmatprep.mubr.bf16.mxu0 %v9553
          %9769 = vmatmul.mubr.bf16.gmra.mxu0 %v9552
          %v9770 = vpop.f32.mrf.mxu0
          %v9771 = vadd.f32 %v9287, %v9770
          %v9772 = vpop.f32.mrf.mxu0
          %v9773 = vpop.f32.mrf.mxu0
          %v9774 = vadd.f32 %v9292, %v9773
          %v9775 = vpop.f32.mrf.mxu0
          %9776 = vmatprep.mubr.bf16.mxu0 %v9557
          %9777 = vmatmul.mubr.bf16.gmra.mxu0 %v9556
          %v9778 = vpop.f32.mrf.mxu0
          %v9779 = vadd.f32 %v9297, %v9778
          %v9780 = vpop.f32.mrf.mxu0
          %v9781 = vpop.f32.mrf.mxu0
          %v9782 = vadd.f32 %v9302, %v9781
          %v9783 = vpop.f32.mrf.mxu0
          %9784 = vdwg.mxu0
          %9785 = vmatprep.subr.bf16.mxu0 0
          %9786 = vmatpush1.bf16.msra.mxu0 %v9103
          %9787 = vmatprep.subr.bf16.mxu0 0
          %9788 = vmatpush1.bf16.msra.mxu0 %v9102
          %9789 = vmatprep.subr.bf16.mxu0 0
          %9790 = vmatpush1.bf16.msra.mxu0 %v9101
          %9791 = vmatprep.subr.bf16.mxu0 0
          %9792 = vmatpush1.bf16.msra.mxu0 %v9100
          %9793 = vmatprep.subr.bf16.mxu0 0
          %9794 = vmatpush1.bf16.msra.mxu0 %v9099
          %9795 = vmatprep.subr.bf16.mxu0 0
          %9796 = vmatpush1.bf16.msra.mxu0 %v9098
          %9797 = vmatprep.subr.bf16.mxu0 0
          %9798 = vmatpush1.bf16.msra.mxu0 %v9097
          %9799 = vmatprep.subr.bf16.mxu0 0
          %9800 = vmatpush1.bf16.msra.mxu0 %v9096
          %9801 = vmatprep.subr.bf16.mxu0 0
          %9802 = vmatpush2.bf16.msra.mxu0 %v9111
          %9803 = vmatprep.subr.bf16.mxu0 0
          %9804 = vmatpush2.bf16.msra.mxu0 %v9110
          %9805 = vmatprep.subr.bf16.mxu0 0
          %9806 = vmatpush2.bf16.msra.mxu0 %v9109
          %9807 = vmatprep.subr.bf16.mxu0 0
          %9808 = vmatpush2.bf16.msra.mxu0 %v9108
          %9809 = vmatprep.subr.bf16.mxu0 0
          %9810 = vmatpush2.bf16.msra.mxu0 %v9107
          %9811 = vmatprep.subr.bf16.mxu0 0
          %9812 = vmatpush2.bf16.msra.mxu0 %v9106
          %9813 = vmatprep.subr.bf16.mxu0 0
          %9814 = vmatpush2.bf16.msra.mxu0 %v9105
          %9815 = vmatprep.subr.bf16.mxu0 0
          %9816 = vmatpush2.bf16.msra.mxu0 %v9104
          %9817 = vmatprep.mubr.bf16.mxu0 %v9499
          %9818 = vmatmul.mubr.bf16.gmra.mxu0 %v9498
          %v9819 = vpop.f32.mrf.mxu0
          %v9820 = vadd.f32 %v9659, %v9819
          %v9821 = vpop.f32.mrf.mxu0
          %v9822 = vpop.f32.mrf.mxu0
          %v9823 = vadd.f32 %v9662, %v9822
          %v9824 = vpop.f32.mrf.mxu0
          %9825 = vmatprep.mubr.bf16.mxu0 %v9503
          %9826 = vmatmul.mubr.bf16.gmra.mxu0 %v9502
          %v9827 = vpop.f32.mrf.mxu0
          %v9828 = vadd.f32 %v9667, %v9827
          %v9829 = vpop.f32.mrf.mxu0
          %v9830 = vpop.f32.mrf.mxu0
          %v9831 = vadd.f32 %v9670, %v9830
          %v9832 = vpop.f32.mrf.mxu0
          %9833 = vmatprep.mubr.bf16.mxu0 %v9507
          %9834 = vmatmul.mubr.bf16.gmra.mxu0 %v9506
          %v9835 = vpop.f32.mrf.mxu0
          %v9836 = vadd.f32 %v9675, %v9835
          %v9837 = vpop.f32.mrf.mxu0
          %v9838 = vpop.f32.mrf.mxu0
          %v9839 = vadd.f32 %v9678, %v9838
          %v9840 = vpop.f32.mrf.mxu0
          %9841 = vmatprep.mubr.bf16.mxu0 %v9511
          %9842 = vmatmul.mubr.bf16.gmra.mxu0 %v9510
          %v9843 = vpop.f32.mrf.mxu0
          %v9844 = vadd.f32 %v9683, %v9843
          %v9845 = vpop.f32.mrf.mxu0
          %v9846 = vpop.f32.mrf.mxu0
          %v9847 = vadd.f32 %v9686, %v9846
          %v9848 = vpop.f32.mrf.mxu0
          %9849 = vmatprep.mubr.bf16.mxu0 %v9515
          %9850 = vmatmul.mubr.bf16.gmra.mxu0 %v9514
          %v9851 = vpop.f32.mrf.mxu0
          %v9852 = vadd.f32 %v9691, %v9851
          %v9853 = vpop.f32.mrf.mxu0
          %v9854 = vpop.f32.mrf.mxu0
          %v9855 = vadd.f32 %v9694, %v9854
          %v9856 = vpop.f32.mrf.mxu0
          %9857 = vmatprep.mubr.bf16.mxu0 %v9519
          %9858 = vmatmul.mubr.bf16.gmra.mxu0 %v9518
          %v9859 = vpop.f32.mrf.mxu0
          %v9860 = vadd.f32 %v9699, %v9859
          %v9861 = vpop.f32.mrf.mxu0
          %v9862 = vpop.f32.mrf.mxu0
          %v9863 = vadd.f32 %v9702, %v9862
          %v9864 = vpop.f32.mrf.mxu0
          %9865 = vmatprep.mubr.bf16.mxu0 %v9523
          %9866 = vmatmul.mubr.bf16.gmra.mxu0 %v9522
          %v9867 = vpop.f32.mrf.mxu0
          %v9868 = vadd.f32 %v9707, %v9867
          %v9869 = vpop.f32.mrf.mxu0
          %v9870 = vpop.f32.mrf.mxu0
          %v9871 = vadd.f32 %v9710, %v9870
          %v9872 = vpop.f32.mrf.mxu0
          %9873 = vmatprep.mubr.bf16.mxu0 %v9527
          %9874 = vmatmul.mubr.bf16.gmra.mxu0 %v9526
          %v9875 = vpop.f32.mrf.mxu0
          %v9876 = vadd.f32 %v9715, %v9875
          %v9877 = vpop.f32.mrf.mxu0
          %v9878 = vpop.f32.mrf.mxu0
          %v9879 = vadd.f32 %v9718, %v9878
          %v9880 = vpop.f32.mrf.mxu0
          %9881 = vmatprep.mubr.bf16.mxu0 %v9531
          %9882 = vmatmul.mubr.bf16.gmra.mxu0 %v9530
          %v9883 = vpop.f32.mrf.mxu0
          %v9884 = vadd.f32 %v9723, %v9883
          %v9885 = vpop.f32.mrf.mxu0
          %v9886 = vpop.f32.mrf.mxu0
          %v9887 = vadd.f32 %v9726, %v9886
          %v9888 = vpop.f32.mrf.mxu0
          %9889 = vmatprep.mubr.bf16.mxu0 %v9535
          %9890 = vmatmul.mubr.bf16.gmra.mxu0 %v9534
          %v9891 = vpop.f32.mrf.mxu0
          %v9892 = vadd.f32 %v9731, %v9891
          %v9893 = vpop.f32.mrf.mxu0
          %v9894 = vpop.f32.mrf.mxu0
          %v9895 = vadd.f32 %v9734, %v9894
          %v9896 = vpop.f32.mrf.mxu0
          %9897 = vmatprep.mubr.bf16.mxu0 %v9539
          %9898 = vmatmul.mubr.bf16.gmra.mxu0 %v9538
          %v9899 = vpop.f32.mrf.mxu0
          %v9900 = vadd.f32 %v9739, %v9899
          %v9901 = vpop.f32.mrf.mxu0
          %v9902 = vpop.f32.mrf.mxu0
          %v9903 = vadd.f32 %v9742, %v9902
          %v9904 = vpop.f32.mrf.mxu0
          %9905 = vmatprep.mubr.bf16.mxu0 %v9543
          %9906 = vmatmul.mubr.bf16.gmra.mxu0 %v9542
          %v9907 = vpop.f32.mrf.mxu0
          %v9908 = vadd.f32 %v9747, %v9907
          %v9909 = vpop.f32.mrf.mxu0
          %v9910 = vpop.f32.mrf.mxu0
          %v9911 = vadd.f32 %v9750, %v9910
          %v9912 = vpop.f32.mrf.mxu0
          %9913 = vmatprep.mubr.bf16.mxu0 %v9547
          %9914 = vmatmul.mubr.bf16.gmra.mxu0 %v9546
          %v9915 = vpop.f32.mrf.mxu0
          %v9916 = vadd.f32 %v9755, %v9915
          %v9917 = vpop.f32.mrf.mxu0
          %v9918 = vpop.f32.mrf.mxu0
          %v9919 = vadd.f32 %v9758, %v9918
          %v9920 = vpop.f32.mrf.mxu0
          %9921 = vmatprep.mubr.bf16.mxu0 %v9551
          %9922 = vmatmul.mubr.bf16.gmra.mxu0 %v9550
          %v9923 = vpop.f32.mrf.mxu0
          %v9924 = vadd.f32 %v9763, %v9923
          %v9925 = vpop.f32.mrf.mxu0
          %v9926 = vpop.f32.mrf.mxu0
          %v9927 = vadd.f32 %v9766, %v9926
          %v9928 = vpop.f32.mrf.mxu0
          %9929 = vmatprep.mubr.bf16.mxu0 %v9555
          %9930 = vmatmul.mubr.bf16.gmra.mxu0 %v9554
          %v9931 = vpop.f32.mrf.mxu0
          %v9932 = vadd.f32 %v9771, %v9931
          %v9933 = vpop.f32.mrf.mxu0
          %v9934 = vpop.f32.mrf.mxu0
          %v9935 = vadd.f32 %v9774, %v9934
          %v9936 = vpop.f32.mrf.mxu0
          %9937 = vmatprep.mubr.bf16.mxu0 %v9559
          %9938 = vmatmul.mubr.bf16.gmra.mxu0 %v9558
          %v9939 = vpop.f32.mrf.mxu0
          %v9940 = vadd.f32 %v9779, %v9939
          %v9941 = vpop.f32.mrf.mxu0
          %v9942 = vpop.f32.mrf.mxu0
          %v9943 = vadd.f32 %v9782, %v9942
          %v9944 = vpop.f32.mrf.mxu0
          %9945 = vdwg.mxu0
          %v9946 = vmax.f32 %v9820, 0.0
          %v9947 = vmax.f32 %v9823, 0.0
          %v9948 = vmax.f32 %v9828, 0.0
          %v9949 = vmax.f32 %v9831, 0.0
          %v9950 = vmax.f32 %v9836, 0.0
          %v9951 = vmax.f32 %v9839, 0.0
          %v9952 = vmax.f32 %v9844, 0.0
          %v9953 = vmax.f32 %v9847, 0.0
          %v9954 = vmax.f32 %v9852, 0.0
          %v9955 = vmax.f32 %v9855, 0.0
          %v9956 = vmax.f32 %v9860, 0.0
          %v9957 = vmax.f32 %v9863, 0.0
          %v9958 = vmax.f32 %v9868, 0.0
          %v9959 = vmax.f32 %v9871, 0.0
          %v9960 = vmax.f32 %v9876, 0.0
          %v9961 = vmax.f32 %v9879, 0.0
          %v9962 = vmax.f32 %v9884, 0.0
          %v9963 = vmax.f32 %v9887, 0.0
          %v9964 = vmax.f32 %v9892, 0.0
          %v9965 = vmax.f32 %v9895, 0.0
          %v9966 = vmax.f32 %v9900, 0.0
          %v9967 = vmax.f32 %v9903, 0.0
          %v9968 = vmax.f32 %v9908, 0.0
          %v9969 = vmax.f32 %v9911, 0.0
          %v9970 = vmax.f32 %v9916, 0.0
          %v9971 = vmax.f32 %v9919, 0.0
          %v9972 = vmax.f32 %v9924, 0.0
          %v9973 = vmax.f32 %v9927, 0.0
          %v9974 = vmax.f32 %v9932, 0.0
          %v9975 = vmax.f32 %v9935, 0.0
          %v9976 = vmax.f32 %v9940, 0.0
          %v9977 = vmax.f32 %v9943, 0.0
          %v9978 = vld [vmem:[%s11] sm:$0xff]
          %v9979 = vld [vmem:[%s11 + $0x8] sm:$0xff]
          %v9980 = vpack.c.bf16 %v9947, %v9946
          %v9981 = vpack.c.bf16 %v9949, %v9948
          %v9982 = vpack.c.bf16 %v9951, %v9950
          %v9983 = vpack.c.bf16 %v9953, %v9952
          %v9984 = vpack.c.bf16 %v9955, %v9954
          %v9985 = vpack.c.bf16 %v9957, %v9956
          %v9986 = vpack.c.bf16 %v9959, %v9958
          %v9987 = vpack.c.bf16 %v9961, %v9960
          %v9988 = vpack.c.bf16 %v9963, %v9962
          %v9989 = vpack.c.bf16 %v9965, %v9964
          %v9990 = vpack.c.bf16 %v9967, %v9966
          %v9991 = vpack.c.bf16 %v9969, %v9968
          %v9992 = vpack.c.bf16 %v9971, %v9970
          %v9993 = vpack.c.bf16 %v9973, %v9972
          %v9994 = vpack.c.bf16 %v9975, %v9974
          %v9995 = vpack.c.bf16 %v9977, %v9976
          %v9998 = vunpack.c.l.b16 %v9978
          %v9999 = vunpack.c.h.b16 %v9978
          %v10000 = vunpack.c.l.b16 %v9979
          %v10001 = vunpack.c.h.b16 %v9979
          %v10002 = vpack.c.b16 %v10000, %v9998
          %v10003 = vpack.c.b16 %v10001, %v9999
          %10006 = vmatprep.subr.bf16.mxu0 0
          %10007 = vmatpush1.bf16.msra.mxu0 %v9987
          %10008 = vmatprep.subr.bf16.mxu0 0
          %10009 = vmatpush1.bf16.msra.mxu0 %v9986
          %10010 = vmatprep.subr.bf16.mxu0 0
          %10011 = vmatpush1.bf16.msra.mxu0 %v9985
          %10012 = vmatprep.subr.bf16.mxu0 0
          %10013 = vmatpush1.bf16.msra.mxu0 %v9984
          %10014 = vmatprep.subr.bf16.mxu0 0
          %10015 = vmatpush1.bf16.msra.mxu0 %v9983
          %10016 = vmatprep.subr.bf16.mxu0 0
          %10017 = vmatpush1.bf16.msra.mxu0 %v9982
          %10018 = vmatprep.subr.bf16.mxu0 0
          %10019 = vmatpush1.bf16.msra.mxu0 %v9981
          %10020 = vmatprep.subr.bf16.mxu0 0
          %10021 = vmatpush1.bf16.msra.mxu0 %v9980
          %10022 = vmatprep.subr.bf16.mxu0 0
          %10023 = vmatpush2.bf16.msra.mxu0 %v9995
          %10024 = vmatprep.subr.bf16.mxu0 0
          %10025 = vmatpush2.bf16.msra.mxu0 %v9994
          %10026 = vmatprep.subr.bf16.mxu0 0
          %10027 = vmatpush2.bf16.msra.mxu0 %v9993
          %10028 = vmatprep.subr.bf16.mxu0 0
          %10029 = vmatpush2.bf16.msra.mxu0 %v9992
          %10030 = vmatprep.subr.bf16.mxu0 0
          %10031 = vmatpush2.bf16.msra.mxu0 %v9991
          %10032 = vmatprep.subr.bf16.mxu0 0
          %10033 = vmatpush2.bf16.msra.mxu0 %v9990
          %10034 = vmatprep.subr.bf16.mxu0 0
          %10035 = vmatpush2.bf16.msra.mxu0 %v9989
          %10036 = vmatprep.subr.bf16.mxu0 0
          %10037 = vmatpush2.bf16.msra.mxu0 %v9988
          %10038 = vmatprep.mubr.bf16.mxu0 %v10003
          %10039 = vmatmul.mubr.bf16.gmra.mxu0 %v10002
          %v10040 = vpop.f32.mrf.mxu0
          %v10041 = vadd.f32 0.0, %v10040
          %v10042 = vpop.f32.mrf.mxu0
          %v10043 = vpop.f32.mrf.mxu0
          %v10044 = vadd.f32 0.0, %v10043
          %v10045 = vpop.f32.mrf.mxu0
          %10046 = vdwg.mxu0
          %v10047 = vld [vmem:[%s12] sm:$0xff]
          %v10048 = vld [vmem:[%s12 + $0x8] sm:$0xff]
          %v10049 = vadd.f32 %v10041, %v10047
          %v10050 = vadd.f32 %v10044, %v10048
          %vm10051 = vcmask 7168
          %10052 = vst.msk [vmem:[%s498] sm:$0xff] %vm10051, %v10049
          %10053 = vst.msk [vmem:[%s498 + $0x8] sm:$0xff] %vm10051, %v10050
        $region88: #{transform_module_forward.2} parent=71 // pred_fallthru
          _
        %p10054 = scmp.lt.s32.totalorder %s30, 1
        %s10055 = scalar_select %p10054, %s30, 1
        %s10056 = smul.addr %s10055, 2
        %s10057 = smul.addr %s10056, 8
        %s10058 = scalar_lea.vmem %s13, %s10057
        // Predicated region
        $region89: #{transform_module_forward.2} parent=71 // pred_check
          %p10059 = pneg %p336
        $region90: #{transform_module_forward.2} parent=71 // pred_check_branch
          %10061 = sbr.rel (%p10059) target = $region92
        $region91: #{transform_module_forward.2} parent=71 // pred_region
          _
        $region92: #{transform_module_forward.2} parent=71 // pred_fallthru
          _
      $region72: #{transform_module_forward.2} parent=5 // pred_fallthru
        _
      %p10062 = scmp.le.s32.totalorder 2, %s21
      // Predicated region
      $region93: #{transform_module_forward.2} parent=5 // pred_check
        %p10063 = pneg %p10062
      $region94: #{transform_module_forward.2} parent=5 // pred_check_branch
        %10065 = sbr.rel (%p10063) target = $region96
      $region95: #{transform_module_forward.2} parent=5 // pred_region
        %s10066 = ssub.s32 %s21, 2
        // Predicated region
        $region97: #{transform_module_forward.2} parent=95 // pred_check
          %p10067 = pneg %p342
        $region98: #{transform_module_forward.2} parent=95 // pred_check_branch
          %10069 = sbr.rel (%p10067) target = $region100
        $region99: #{transform_module_forward.2} parent=95 // pred_region
          %p10070 = scmp.lt.s32.totalorder %s32, 1
          %s10071 = scalar_select %p10070, %s32, 1
          %s10072 = smul.addr %s10071, 2
          %s10073 = smul.addr %s10072, 8
          %s10074 = scalar_lea.vmem %s13, %s10073
        $region100: #{transform_module_forward.2} parent=95 // pred_fallthru
          _
      $region96: #{transform_module_forward.2} parent=5 // pred_fallthru
        _
    $region6: #{transform_module_forward.2} parent=1 // loop_footer
      %s25 = sadd.s32 1, %s21
    $region7: #{transform_module_forward.2} parent=1 // loop_footer_branch
      %20 = sbr.rel target = $region3
    $region8: #{transform_module_forward.2} parent=1 // loop_exit
      _
    %10075 = vsyncpa [#allocation4], 1
    %s10076 = scalar_lea.sflag [#allocation4], 1
    %10077 = vsyncpa %s10076, 1
    %10078 = vsyncpa [#allocation6], 1

</llo_original>
